<compile_context>
chip_gen: v5e
topology: v5e:2x2
jax: 0.10.0
libtpu: 0.0.40
codegen_flags: <defaults>
</compile_context>

<pallas_src>
import jax
import jax.numpy as jnp
from jax.experimental import pallas as pl
from jax.experimental.pallas import tpu as pltpu

EPS = 1e-5  # PyTorch BatchNorm2d default eps
_MIB = 1024 * 1024


def _per_channel_sum(t):
    """Sum a (B, Cb, H, W) tile over (B, H, W) -> (1, Cb, 1, 1)."""
    s = jnp.sum(t, axis=0, keepdims=True)   # cheap cross-slab vreg adds first
    s = jnp.sum(s, axis=3, keepdims=True)   # lane reduce (XLU)
    s = jnp.sum(s, axis=2, keepdims=True)   # sublane reduce
    return s


def residual_block_kernel(x_ref, g1_ref, b1_ref, g2_ref, b2_ref,
                          w_in_ref, w_out_ref, bias_ref, out_ref):
    x = x_ref[...]                                        # (B, Cb, H, D) f32
    nb, cb, nh, d = x.shape
    dh = w_in_ref.shape[1]
    rows = nb * cb * nh
    inv_n1 = 1.0 / float(nb * nh * d)
    inv_n2 = 1.0 / float(nb * nh * dh)

    # ---- in_norm: training-mode BatchNorm (per-channel batch stats, single pass) + ReLU
    s1 = _per_channel_sum(x)
    q1 = _per_channel_sum(x * x)
    mean1 = s1 * inv_n1
    var1 = jnp.maximum(q1 * inv_n1 - mean1 * mean1, 0.0)  # clamp: avoid rsqrt(negative)
    a1 = g1_ref[...] * jax.lax.rsqrt(var1 + EPS)          # (1, Cb, 1, 1)
    c1 = b1_ref[...] - mean1 * a1
    # fused bf16 cast: the f32 copy of h1 never materializes
    h1 = jnp.maximum(x * a1 + c1, 0.0).astype(jnp.bfloat16)   # (B, Cb, H, D) bf16

    # ---- in_fc: one big (rows, D) @ (D, Dh) matmul on the MXU (bf16 in, f32 accumulate)
    y = jnp.dot(h1.reshape(rows, d), w_in_ref[...],
                preferred_element_type=jnp.float32)       # (rows, Dh) f32
    y4 = y.reshape(nb, cb, nh, dh)

    # ---- out_norm (channel dim is still dim 1) + ReLU
    s2 = _per_channel_sum(y4)
    q2 = _per_channel_sum(y4 * y4)
    mean2 = s2 * inv_n2
    var2 = jnp.maximum(q2 * inv_n2 - mean2 * mean2, 0.0)
    a2 = g2_ref[...] * jax.lax.rsqrt(var2 + EPS)
    c2 = b2_ref[...] - mean2 * a2
    h2 = jnp.maximum(y4 * a2 + c2, 0.0).astype(jnp.bfloat16)  # (B, Cb, H, Dh) bf16

    # ---- out_fc (+bias), then the residual skip (re-read x_ref to keep vreg pressure low)
    o = jnp.dot(h2.reshape(rows, dh), w_out_ref[...],
                preferred_element_type=jnp.float32)       # (rows, D) f32
    o = o + bias_ref[...]                                 # (1, D) broadcast
    out_ref[...] = o.reshape(nb, cb, nh, d) + x_ref[...]


def _detect_vmem_capacity_bytes():
    """Per-core VMEM capacity; conservative (v7x) fallback if the query fails."""
    try:
        info = pltpu.get_tpu_info()
        cap = int(getattr(info, "vmem_capacity_bytes", 0))
        if cap > 0:
            return cap
    except Exception:
        pass
    return 64 * _MIB   # v7x per-TC floor: safe on every generation


def _pad(n, m):
    return -(-n // m) * m


def _block_vmem_bytes(B, cb, H, W, Dh):
    """Explicit per-grid-step VMEM byte estimate ((8,128)-tile padded)."""
    Hp, Wp, Dhp = _pad(H, 8), _pad(W, 128), _pad(Dh, 128)
    s_w = B * cb * Hp * Wp          # elements of a (B,cb,H,W)-shaped slab
    s_h = B * cb * Hp * Dhp         # elements of a (B,cb,H,Dh)-shaped slab
    # 2x f32 input bufs + 2x f32 output bufs + f32 'o' temp + bf16 h1   (W-shaped)
    # f32 'y' temp + bf16 h2                                            (Dh-shaped)
    return s_w * (2 * 4 + 2 * 4 + 4 + 2) + s_h * (4 + 2)


def _weight_vmem_bytes(D, Dh):
    """Resident bf16 weights + f32 bias row (count against the slab budget)."""
    Dp, Dhp = _pad(D, 128), _pad(Dh, 128)
    return 2 * Dp * Dhp * 2 + Dhp * 4


def _choose_channels_per_block(B, C, H, W, Dh, slab_budget_bytes, min_grid_steps):
    """Largest channel block (divisor of C) fitting the byte budget.

    Prefers blocks whose row count B*cb*H is a multiple of the 256 MXU cadence,
    as long as that costs at most a 2x smaller block.
    """
    divisors = [d for d in range(1, C + 1) if C % d == 0]
    feasible = [d for d in divisors
                if _block_vmem_bytes(B, d, H, W, Dh) <= slab_budget_bytes
                and (min_grid_steps <= 1 or C // d >= min_grid_steps or d == 1)]
    if not feasible:
        feasible = [1]
    best = max(feasible)
    aligned = [d for d in feasible if (B * d * H) % 256 == 0 and 2 * d >= best]
    return max(aligned) if aligned else best


def residual_block(x_nchw, gamma1, beta1, gamma2, beta2, w_in, w_out, b_out):
    """Fused ResidualBlock forward on an NCHW float32 input."""
    B, C, H, W = x_nchw.shape
    D = W                          # d_embed
    Dh = w_in.shape[0]             # d_hidden
    # The PyTorch module itself only runs when these hold -- fail loudly otherwise.
    assert C == D and Dh == D and w_in.shape == (Dh, D) and w_out.shape == (D, Dh), \
        "ResidualBlock requires C == W == d_embed and d_hidden == d_embed"
    # Performance note: D % 128 == 0 and H % 8 == 0 keep every slab/store/reshape
    # (8,128)-tile aligned and lane-dense (the demo uses D=128, H=8).

    # Generation-aware VMEM budgeting.
    vmem_cap = _detect_vmem_capacity_bytes()
    if vmem_cap >= 100 * _MIB:
        # v5e / v6e: 128 MiB VMEM, single TensorCore -> big blocks, no >=2-step clamp.
        vmem_limit = 100 * _MIB
        slab_budget = 64 * _MIB
        min_grid_steps = 1
    else:
        # v7x: 64 MiB VMEM per TC, 2 TCs -> tight explicit budget, keep >=2 grid steps.
        vmem_limit = 48 * _MIB
        slab_budget = 36 * _MIB
        min_grid_steps = 2
    slab_budget = max(slab_budget - _weight_vmem_bytes(D, Dh), 2 * _MIB)

    cb = _choose_channels_per_block(B, C, H, W, Dh, slab_budget, min_grid_steps)
    grid = (C // cb,)

    # One-time, tiny parameter reshuffles (negligible vs. the activation tensor).
    w_in_t = jnp.asarray(w_in.T, dtype=jnp.bfloat16)       # (D, Dh)
    w_out_t = jnp.asarray(w_out.T, dtype=jnp.bfloat16)     # (Dh, D)
    bias2d = b_out.reshape(1, D).astype(jnp.float32)
    g1 = gamma1.reshape(1, C, 1, 1).astype(jnp.float32)
    be1 = beta1.reshape(1, C, 1, 1).astype(jnp.float32)
    g2 = gamma2.reshape(1, C, 1, 1).astype(jnp.float32)
    be2 = beta2.reshape(1, C, 1, 1).astype(jnp.float32)

    ch_blk = lambda c: (0, c, 0, 0)
    out = pl.pallas_call(
        residual_block_kernel,
        out_shape=jax.ShapeDtypeStruct((B, C, H, W), jnp.float32),
        grid=grid,
        in_specs=[
            pl.BlockSpec((B, cb, H, W), ch_blk),                 # x: strided NCHW slab
            pl.BlockSpec((1, cb, 1, 1), ch_blk),                 # gamma1
            pl.BlockSpec((1, cb, 1, 1), ch_blk),                 # beta1
            pl.BlockSpec((1, cb, 1, 1), ch_blk),                 # gamma2
            pl.BlockSpec((1, cb, 1, 1), ch_blk),                 # beta2
            pl.BlockSpec(memory_space=pltpu.MemorySpace.VMEM),   # w_in_t  (D, Dh) bf16
            pl.BlockSpec(memory_space=pltpu.MemorySpace.VMEM),   # w_out_t (Dh, D) bf16
            pl.BlockSpec(memory_space=pltpu.MemorySpace.VMEM),   # bias    (1, D)  f32
        ],
        out_specs=pl.BlockSpec((B, cb, H, W), ch_blk),
        compiler_params=pltpu.CompilerParams(
            dimension_semantics=("parallel",),
            vmem_limit_bytes=vmem_limit,
        ),
    )(x_nchw, g1, be1, g2, be2, w_in_t, w_out_t, bias2d)
    return out


def reference(x, gamma1, beta1, gamma2, beta2, w_in, w_out, b_out):
    """Pure-JAX f32 reference of the PyTorch forward (training-mode BN), NCHW layout."""
    def bn(t, g, b):
        mean = t.mean(axis=(0, 2, 3), keepdims=True)
        var = jnp.square(t - mean).mean(axis=(0, 2, 3), keepdims=True)
        return (t - mean) / jnp.sqrt(var + EPS) * g.reshape(1, -1, 1, 1) + b.reshape(1, -1, 1, 1)

    skip = x
    h = jnp.maximum(bn(x, gamma1, beta1), 0.0)
    y = jnp.einsum("nchd,ed->nche", h, w_in)
    h2 = jnp.maximum(bn(y, gamma2, beta2), 0.0)
    out = jnp.einsum("nche,de->nchd", h2, w_out) + b_out.reshape(1, 1, 1, -1)
    return out + skip


if __name__ == "__main__":
    # Shapes consistent with the module constraints (C == W == d_embed, d_hidden == d_embed)
    # and lane-dense / tile-aligned: d_embed = 128, H = 8.
    B, H = 2, 8
    d_embed = 128
    d_hidden = d_embed

    key = jax.random.PRNGKey(0)
    kx, kw1, kw2, kb, kg1, kb1, kg2, kb2 = jax.random.split(key, 8)

    x = jax.random.normal(kx, (B, d_embed, H, d_embed), dtype=jnp.float32)   # NCHW

    w_in = jax.random.normal(kw1, (d_hidden, d_embed), jnp.float32) / jnp.sqrt(d_embed)
    w_out = jax.random.normal(kw2, (d_embed, d_hidden), jnp.float32) / jnp.sqrt(d_hidden)
    b_out = 0.1 * jax.random.normal(kb, (d_embed,), jnp.float32)
    gamma1 = 1.0 + 0.1 * jax.random.normal(kg1, (d_embed,), jnp.float32)
    beta1 = 0.1 * jax.random.normal(kb1, (d_embed,), jnp.float32)
    gamma2 = 1.0 + 0.1 * jax.random.normal(kg2, (d_hidden,), jnp.float32)
    beta2 = 0.1 * jax.random.normal(kb2, (d_hidden,), jnp.float32)

    out = residual_block(x, gamma1, beta1, gamma2, beta2, w_in, w_out, b_out)
    out = jax.block_until_ready(out)

    ref = reference(x, gamma1, beta1, gamma2, beta2, w_in, w_out, b_out)
    assert out.shape == x.shape and out.dtype == x.dtype
    # bf16 matmul inputs (f32 accumulation) vs. the all-f32 reference -> relative check.
    rel_err = float(jnp.max(jnp.abs(out - ref)) / (jnp.max(jnp.abs(ref)) + 1e-12))
    assert rel_err < 5e-2, f"mismatch vs reference: max relative err = {rel_err}"

    print("KERNEL_OK")
</pallas_src>

<mosaic_0001>
module attributes {stable_mosaic.version = 11 : i64} {
  func.func @residual_block_kernel(%arg0: i32, %arg1: memref<2x64x8x128xf32, #tpu.memory_space<vmem>>, %arg2: memref<1x64x1x1xf32, #tpu.memory_space<vmem>>, %arg3: memref<1x64x1x1xf32, #tpu.memory_space<vmem>>, %arg4: memref<1x64x1x1xf32, #tpu.memory_space<vmem>>, %arg5: memref<1x64x1x1xf32, #tpu.memory_space<vmem>>, %arg6: memref<128x128xbf16, #tpu.memory_space<vmem>>, %arg7: memref<128x128xbf16, #tpu.memory_space<vmem>>, %arg8: memref<1x128xf32, #tpu.memory_space<vmem>>, %arg9: memref<2x64x8x128xf32, #tpu.memory_space<vmem>>) attributes {dimension_semantics = [#tpu.dimension_semantics<parallel>], iteration_bounds = array<i64: 2>, scalar_prefetch = 0 : i64, scratch_operands = 0 : i64, tpu.core_type = #tpu.core_type<tc>, window_params = [{transform_indices = @transform_0, window_bounds = array<i64: 2, 64, 8, 128>}, {transform_indices = @transform_1, window_bounds = array<i64: 1, 64, 1, 1>}, {transform_indices = @transform_2, window_bounds = array<i64: 1, 64, 1, 1>}, {transform_indices = @transform_3, window_bounds = array<i64: 1, 64, 1, 1>}, {transform_indices = @transform_4, window_bounds = array<i64: 1, 64, 1, 1>}, {pipeline_mode = #tpu.pipeline_mode<synchronous>, transform_indices = @transform_5, window_bounds = array<i64: 128, 128>}, {pipeline_mode = #tpu.pipeline_mode<synchronous>, transform_indices = @transform_6, window_bounds = array<i64: 128, 128>}, {pipeline_mode = #tpu.pipeline_mode<synchronous>, transform_indices = @transform_7, window_bounds = array<i64: 1, 128>}, {transform_indices = @transform_8, window_bounds = array<i64: 2, 64, 8, 128>}]} {
    %c0 = arith.constant 0 : index
    %c0_0 = arith.constant 0 : index
    %c0_1 = arith.constant 0 : index
    %c0_2 = arith.constant 0 : index
    %0 = vector.load %arg1[%c0, %c0_0, %c0_1, %c0_2] : memref<2x64x8x128xf32, #tpu.memory_space<vmem>>, vector<2x64x8x128xf32>
    %cst = arith.constant dense<0.000000e+00> : vector<64x8x128xf32>
    %1 = vector.multi_reduction <add>, %0, %cst [0] : vector<2x64x8x128xf32> to vector<64x8x128xf32>
    %2 = vector.shape_cast %1 : vector<64x8x128xf32> to vector<1x64x8x128xf32>
    %cst_3 = arith.constant dense<0.000000e+00> : vector<1x64x8xf32>
    %3 = vector.multi_reduction <add>, %2, %cst_3 [3] : vector<1x64x8x128xf32> to vector<1x64x8xf32>
    %4 = vector.shape_cast %3 : vector<1x64x8xf32> to vector<1x64x8x1xf32>
    %cst_4 = arith.constant dense<0.000000e+00> : vector<1x64x1xf32>
    %5 = vector.multi_reduction <add>, %4, %cst_4 [2] : vector<1x64x8x1xf32> to vector<1x64x1xf32>
    %6 = vector.shape_cast %5 : vector<1x64x1xf32> to vector<1x64x1x1xf32>
    %7 = arith.mulf %0, %0 : vector<2x64x8x128xf32>
    %cst_5 = arith.constant dense<0.000000e+00> : vector<64x8x128xf32>
    %8 = vector.multi_reduction <add>, %7, %cst_5 [0] : vector<2x64x8x128xf32> to vector<64x8x128xf32>
    %9 = vector.shape_cast %8 : vector<64x8x128xf32> to vector<1x64x8x128xf32>
    %cst_6 = arith.constant dense<0.000000e+00> : vector<1x64x8xf32>
    %10 = vector.multi_reduction <add>, %9, %cst_6 [3] : vector<1x64x8x128xf32> to vector<1x64x8xf32>
    %11 = vector.shape_cast %10 : vector<1x64x8xf32> to vector<1x64x8x1xf32>
    %cst_7 = arith.constant dense<0.000000e+00> : vector<1x64x1xf32>
    %12 = vector.multi_reduction <add>, %11, %cst_7 [2] : vector<1x64x8x1xf32> to vector<1x64x1xf32>
    %13 = vector.shape_cast %12 : vector<1x64x1xf32> to vector<1x64x1x1xf32>
    %cst_8 = arith.constant 4.8828125E-4 : f32
    %14 = vector.broadcast %cst_8 : f32 to vector<1x64x1x1xf32>
    %15 = arith.mulf %6, %14 : vector<1x64x1x1xf32>
    %cst_9 = arith.constant 4.8828125E-4 : f32
    %16 = vector.broadcast %cst_9 : f32 to vector<1x64x1x1xf32>
    %17 = arith.mulf %13, %16 : vector<1x64x1x1xf32>
    %18 = arith.mulf %15, %15 : vector<1x64x1x1xf32>
    %19 = arith.subf %17, %18 : vector<1x64x1x1xf32>
    %cst_10 = arith.constant 0.000000e+00 : f32
    %20 = vector.broadcast %cst_10 : f32 to vector<1x64x1x1xf32>
    %21 = arith.maximumf %19, %20 : vector<1x64x1x1xf32>
    %c0_11 = arith.constant 0 : index
    %c0_12 = arith.constant 0 : index
    %c0_13 = arith.constant 0 : index
    %c0_14 = arith.constant 0 : index
    %22 = vector.load %arg2[%c0_11, %c0_12, %c0_13, %c0_14] : memref<1x64x1x1xf32, #tpu.memory_space<vmem>>, vector<1x64x1x1xf32>
    %cst_15 = arith.constant 9.99999974E-6 : f32
    %23 = vector.broadcast %cst_15 : f32 to vector<1x64x1x1xf32>
    %24 = arith.addf %21, %23 : vector<1x64x1x1xf32>
    %25 = math.rsqrt %24 : vector<1x64x1x1xf32>
    %26 = arith.mulf %22, %25 : vector<1x64x1x1xf32>
    %c0_16 = arith.constant 0 : index
    %c0_17 = arith.constant 0 : index
    %c0_18 = arith.constant 0 : index
    %c0_19 = arith.constant 0 : index
    %27 = vector.load %arg3[%c0_16, %c0_17, %c0_18, %c0_19] : memref<1x64x1x1xf32, #tpu.memory_space<vmem>>, vector<1x64x1x1xf32>
    %28 = arith.mulf %15, %26 : vector<1x64x1x1xf32>
    %29 = arith.subf %27, %28 : vector<1x64x1x1xf32>
    %30 = vector.broadcast %26 : vector<1x64x1x1xf32> to vector<2x64x8x128xf32>
    %31 = arith.mulf %0, %30 : vector<2x64x8x128xf32>
    %32 = vector.broadcast %29 : vector<1x64x1x1xf32> to vector<2x64x8x128xf32>
    %33 = arith.addf %31, %32 : vector<2x64x8x128xf32>
    %cst_20 = arith.constant 0.000000e+00 : f32
    %34 = vector.broadcast %cst_20 : f32 to vector<2x64x8x128xf32>
    %35 = arith.maximumf %33, %34 : vector<2x64x8x128xf32>
    %36 = arith.truncf %35 : vector<2x64x8x128xf32> to vector<2x64x8x128xbf16>
    %37 = vector.shape_cast %36 : vector<2x64x8x128xbf16> to vector<1024x128xbf16>
    %c0_21 = arith.constant 0 : index
    %c0_22 = arith.constant 0 : index
    %38 = vector.load %arg6[%c0_21, %c0_22] : memref<128x128xbf16, #tpu.memory_space<vmem>>, vector<128x128xbf16>
    %cst_23 = arith.constant dense<0.000000e+00> : vector<1024x128xf32>
    %39 = tpu.matmul %37, %38, %cst_23 {dimension_numbers = #tpu.dot_dimension_numbers<[1], [0], [0], [1], [0, 0, 1, 1], [], []>} : vector<1024x128xbf16>, vector<128x128xbf16>, vector<1024x128xf32> -> vector<1024x128xf32>
    %40 = vector.shape_cast %39 : vector<1024x128xf32> to vector<2x64x8x128xf32>
    %cst_24 = arith.constant dense<0.000000e+00> : vector<64x8x128xf32>
    %41 = vector.multi_reduction <add>, %40, %cst_24 [0] : vector<2x64x8x128xf32> to vector<64x8x128xf32>
    %42 = vector.shape_cast %41 : vector<64x8x128xf32> to vector<1x64x8x128xf32>
    %cst_25 = arith.constant dense<0.000000e+00> : vector<1x64x8xf32>
    %43 = vector.multi_reduction <add>, %42, %cst_25 [3] : vector<1x64x8x128xf32> to vector<1x64x8xf32>
    %44 = vector.shape_cast %43 : vector<1x64x8xf32> to vector<1x64x8x1xf32>
    %cst_26 = arith.constant dense<0.000000e+00> : vector<1x64x1xf32>
    %45 = vector.multi_reduction <add>, %44, %cst_26 [2] : vector<1x64x8x1xf32> to vector<1x64x1xf32>
    %46 = vector.shape_cast %45 : vector<1x64x1xf32> to vector<1x64x1x1xf32>
    %47 = arith.mulf %40, %40 : vector<2x64x8x128xf32>
    %cst_27 = arith.constant dense<0.000000e+00> : vector<64x8x128xf32>
    %48 = vector.multi_reduction <add>, %47, %cst_27 [0] : vector<2x64x8x128xf32> to vector<64x8x128xf32>
    %49 = vector.shape_cast %48 : vector<64x8x128xf32> to vector<1x64x8x128xf32>
    %cst_28 = arith.constant dense<0.000000e+00> : vector<1x64x8xf32>
    %50 = vector.multi_reduction <add>, %49, %cst_28 [3] : vector<1x64x8x128xf32> to vector<1x64x8xf32>
    %51 = vector.shape_cast %50 : vector<1x64x8xf32> to vector<1x64x8x1xf32>
    %cst_29 = arith.constant dense<0.000000e+00> : vector<1x64x1xf32>
    %52 = vector.multi_reduction <add>, %51, %cst_29 [2] : vector<1x64x8x1xf32> to vector<1x64x1xf32>
    %53 = vector.shape_cast %52 : vector<1x64x1xf32> to vector<1x64x1x1xf32>
    %cst_30 = arith.constant 4.8828125E-4 : f32
    %54 = vector.broadcast %cst_30 : f32 to vector<1x64x1x1xf32>
    %55 = arith.mulf %46, %54 : vector<1x64x1x1xf32>
    %cst_31 = arith.constant 4.8828125E-4 : f32
    %56 = vector.broadcast %cst_31 : f32 to vector<1x64x1x1xf32>
    %57 = arith.mulf %53, %56 : vector<1x64x1x1xf32>
    %58 = arith.mulf %55, %55 : vector<1x64x1x1xf32>
    %59 = arith.subf %57, %58 : vector<1x64x1x1xf32>
    %cst_32 = arith.constant 0.000000e+00 : f32
    %60 = vector.broadcast %cst_32 : f32 to vector<1x64x1x1xf32>
    %61 = arith.maximumf %59, %60 : vector<1x64x1x1xf32>
    %c0_33 = arith.constant 0 : index
    %c0_34 = arith.constant 0 : index
    %c0_35 = arith.constant 0 : index
    %c0_36 = arith.constant 0 : index
    %62 = vector.load %arg4[%c0_33, %c0_34, %c0_35, %c0_36] : memref<1x64x1x1xf32, #tpu.memory_space<vmem>>, vector<1x64x1x1xf32>
    %cst_37 = arith.constant 9.99999974E-6 : f32
    %63 = vector.broadcast %cst_37 : f32 to vector<1x64x1x1xf32>
    %64 = arith.addf %61, %63 : vector<1x64x1x1xf32>
    %65 = math.rsqrt %64 : vector<1x64x1x1xf32>
    %66 = arith.mulf %62, %65 : vector<1x64x1x1xf32>
    %c0_38 = arith.constant 0 : index
    %c0_39 = arith.constant 0 : index
    %c0_40 = arith.constant 0 : index
    %c0_41 = arith.constant 0 : index
    %67 = vector.load %arg5[%c0_38, %c0_39, %c0_40, %c0_41] : memref<1x64x1x1xf32, #tpu.memory_space<vmem>>, vector<1x64x1x1xf32>
    %68 = arith.mulf %55, %66 : vector<1x64x1x1xf32>
    %69 = arith.subf %67, %68 : vector<1x64x1x1xf32>
    %70 = vector.broadcast %66 : vector<1x64x1x1xf32> to vector<2x64x8x128xf32>
    %71 = arith.mulf %40, %70 : vector<2x64x8x128xf32>
    %72 = vector.broadcast %69 : vector<1x64x1x1xf32> to vector<2x64x8x128xf32>
    %73 = arith.addf %71, %72 : vector<2x64x8x128xf32>
    %cst_42 = arith.constant 0.000000e+00 : f32
    %74 = vector.broadcast %cst_42 : f32 to vector<2x64x8x128xf32>
    %75 = arith.maximumf %73, %74 : vector<2x64x8x128xf32>
    %76 = arith.truncf %75 : vector<2x64x8x128xf32> to vector<2x64x8x128xbf16>
    %77 = vector.shape_cast %76 : vector<2x64x8x128xbf16> to vector<1024x128xbf16>
    %c0_43 = arith.constant 0 : index
    %c0_44 = arith.constant 0 : index
    %78 = vector.load %arg7[%c0_43, %c0_44] : memref<128x128xbf16, #tpu.memory_space<vmem>>, vector<128x128xbf16>
    %cst_45 = arith.constant dense<0.000000e+00> : vector<1024x128xf32>
    %79 = tpu.matmul %77, %78, %cst_45 {dimension_numbers = #tpu.dot_dimension_numbers<[1], [0], [0], [1], [0, 0, 1, 1], [], []>} : vector<1024x128xbf16>, vector<128x128xbf16>, vector<1024x128xf32> -> vector<1024x128xf32>
    %c0_46 = arith.constant 0 : index
    %c0_47 = arith.constant 0 : index
    %80 = vector.load %arg8[%c0_46, %c0_47] : memref<1x128xf32, #tpu.memory_space<vmem>>, vector<1x128xf32>
    %81 = vector.broadcast %80 : vector<1x128xf32> to vector<1024x128xf32>
    %82 = arith.addf %79, %81 : vector<1024x128xf32>
    %83 = vector.shape_cast %82 : vector<1024x128xf32> to vector<2x64x8x128xf32>
    %c0_48 = arith.constant 0 : index
    %c0_49 = arith.constant 0 : index
    %c0_50 = arith.constant 0 : index
    %c0_51 = arith.constant 0 : index
    %84 = vector.load %arg1[%c0_48, %c0_49, %c0_50, %c0_51] : memref<2x64x8x128xf32, #tpu.memory_space<vmem>>, vector<2x64x8x128xf32>
    %85 = arith.addf %83, %84 : vector<2x64x8x128xf32>
    %c0_52 = arith.constant 0 : index
    %c0_53 = arith.constant 0 : index
    %c0_54 = arith.constant 0 : index
    %c0_55 = arith.constant 0 : index
    %86 = vector.load %arg9[%c0_52, %c0_53, %c0_54, %c0_55] : memref<2x64x8x128xf32, #tpu.memory_space<vmem>>, vector<2x64x8x128xf32>
    tpu.vector_store %arg9[%c0_52, %c0_53, %c0_54, %c0_55], %85 {strides = array<i32>} : memref<2x64x8x128xf32, #tpu.memory_space<vmem>>, vector<2x64x8x128xf32>,
    return
  }
  func.func @transform_0(%arg0: i32) -> (i32, i32, i32, i32) {
    %c0_i32 = arith.constant 0 : i32
    %c0_i32_0 = arith.constant 0 : i32
    %c0_i32_1 = arith.constant 0 : i32
    %c0_i32_2 = arith.constant 0 : i32
    return %c0_i32, %arg0, %c0_i32_0, %c0_i32_1 : i32, i32, i32, i32
  }
  func.func @transform_1(%arg0: i32) -> (i32, i32, i32, i32) {
    %c0_i32 = arith.constant 0 : i32
    %c0_i32_0 = arith.constant 0 : i32
    %c0_i32_1 = arith.constant 0 : i32
    %c0_i32_2 = arith.constant 0 : i32
    return %c0_i32, %arg0, %c0_i32_0, %c0_i32_1 : i32, i32, i32, i32
  }
  func.func @transform_2(%arg0: i32) -> (i32, i32, i32, i32) {
    %c0_i32 = arith.constant 0 : i32
    %c0_i32_0 = arith.constant 0 : i32
    %c0_i32_1 = arith.constant 0 : i32
    %c0_i32_2 = arith.constant 0 : i32
    return %c0_i32, %arg0, %c0_i32_0, %c0_i32_1 : i32, i32, i32, i32
  }
  func.func @transform_3(%arg0: i32) -> (i32, i32, i32, i32) {
    %c0_i32 = arith.constant 0 : i32
    %c0_i32_0 = arith.constant 0 : i32
    %c0_i32_1 = arith.constant 0 : i32
    %c0_i32_2 = arith.constant 0 : i32
    return %c0_i32, %arg0, %c0_i32_0, %c0_i32_1 : i32, i32, i32, i32
  }
  func.func @transform_4(%arg0: i32) -> (i32, i32, i32, i32) {
    %c0_i32 = arith.constant 0 : i32
    %c0_i32_0 = arith.constant 0 : i32
    %c0_i32_1 = arith.constant 0 : i32
    %c0_i32_2 = arith.constant 0 : i32
    return %c0_i32, %arg0, %c0_i32_0, %c0_i32_1 : i32, i32, i32, i32
  }
  func.func @transform_5(%arg0: i32) -> (i32, i32) {
    %c0_i32 = arith.constant 0 : i32
    %c0_i32_0 = arith.constant 0 : i32
    %c0_i32_1 = arith.constant 0 : i32
    return %c0_i32, %c0_i32_0 : i32, i32
  }
  func.func @transform_6(%arg0: i32) -> (i32, i32) {
    %c0_i32 = arith.constant 0 : i32
    %c0_i32_0 = arith.constant 0 : i32
    %c0_i32_1 = arith.constant 0 : i32
    return %c0_i32, %c0_i32_0 : i32, i32
  }
  func.func @transform_7(%arg0: i32) -> (i32, i32) {
    %c0_i32 = arith.constant 0 : i32
    %c0_i32_0 = arith.constant 0 : i32
    %c0_i32_1 = arith.constant 0 : i32
    return %c0_i32, %c0_i32_0 : i32, i32
  }
  func.func @transform_8(%arg0: i32) -> (i32, i32, i32, i32) {
    %c0_i32 = arith.constant 0 : i32
    %c0_i32_0 = arith.constant 0 : i32
    %c0_i32_1 = arith.constant 0 : i32
    %c0_i32_2 = arith.constant 0 : i32
    return %c0_i32, %arg0, %c0_i32_0, %c0_i32_1 : i32, i32, i32, i32
  }
}

</mosaic_0001>

<llo_original>
// kernel: tpu_custom_call.1
$region0: #{tpu_custom_call.1}
  #allocation0 [shape = 'u32[]', space=smem, size = 0x4, offset = 0x4, fixed_abs, tag = 'smem constant byte address 0x4 - core index']
  #allocation1 [shape = 'u32[72,128]{1,0:T(1,128)}', space=vmem, size = 0x9000, scoped, tag = 'internal scratch']
  #allocation6 [shape = 's32[]', space=sflag, size = 0x4, offset = 0, fixed_abs, tag = 'sflag constant byte address 0x0 - dummy sync flag']
  #allocation8 [shape = 's32[]', space=sflag, size = 0x4, offset = 0, fixed_abs, tag = 'sflag constant byte address 0x0 - dummy sync flag']
  %s0 = inlined_call_operand.hbm [shape: f32[2,128,8,128], index: 0, kind: input, shape index: {}]
  %s1 = inlined_call_operand.vmem [shape: f32[1,128,1,1], index: 1, kind: input, shape index: {}]
  %s2 = inlined_call_operand.vmem [shape: f32[1,128,1,1], index: 2, kind: input, shape index: {}]
  %s3 = inlined_call_operand.vmem [shape: f32[1,128,1,1], index: 3, kind: input, shape index: {}]
  %s4 = inlined_call_operand.vmem [shape: f32[1,128,1,1], index: 4, kind: input, shape index: {}]
  %s5 = inlined_call_operand.vmem [shape: bf16[128,128], index: 5, kind: input, shape index: {}]
  %s6 = inlined_call_operand.vmem [shape: bf16[128,128], index: 6, kind: input, shape index: {}]
  %s7 = inlined_call_operand.vmem [shape: f32[1,128], index: 7, kind: input, shape index: {}]
  %s8 = inlined_call_operand.hbm [shape: f32[2,128,8,128], index: 8, kind: output, shape index: {}]
  %s9 = sld [smem:[#allocation0]]
  $region69: #{tpu_custom_call.1} parent=0
    _
  %s11 = ssub.s32 1, %s9
  %s12 = scalar_select 0, %s11, %s9
  $region1: #{tpu_custom_call.1} parent=0
    #allocation2 [shape = 'u8[1048576]{0}', space=vmem, size = 0x100000, scoped, tag = 'input window, operand 0']
    #allocation3 [shape = 's32[2]{0}', space=sflag, size = 0x8, scoped, tag = 'scoped memory for tpu_custom_call.1']
    #allocation4 [shape = 's32[2]{0}', space=sflag, size = 0x8, scoped, tag = 'scoped memory for tpu_custom_call.1']
    #allocation5 [shape = 'u8[1048576]{0}', space=vmem, size = 0x100000, scoped, tag = 'output window, operand 0']
    %13 = vsyncpa [#allocation3], 0
    %s14 = scalar_lea.sflag [#allocation3], 1
    %15 = vsyncpa %s14, 0
    %16 = vsyncpa [#allocation4], 0
    %s17 = scalar_lea.sflag [#allocation4], 1
    %18 = vsyncpa %s17, 0
    loop: start=0, step=1, limit=4
    $region2: #{tpu_custom_call.1} parent=1 // loop_pre_header
      _
    $region3: #{tpu_custom_call.1} parent=1 // loop_header
      %s20 = sphi 0, %s24
      %p21 = scmp.ge.s32.totalorder %s20, 4
      %s30 = sphi 0, %s32
      %s33 = sphi 0, %s30
      %s34 = sphi 0, %s33
      %s50 = sphi 0, %s34
      %s56 = sphi 0, %s58
      %s59 = sphi 0, %s56
      %s60 = sphi 0, %s59
      %s76 = sphi 0, %s60
      %s82 = sphi 0, %s84
      %s85 = sphi 0, %s82
      %s86 = sphi 0, %s85
      %s102 = sphi 0, %s86
      %s108 = sphi 0, %s110
      %s111 = sphi 0, %s108
      %s112 = sphi 0, %s111
      %s128 = sphi 0, %s112
      %s134 = sphi 0, %s136
      %s137 = sphi 0, %s134
      %s138 = sphi 0, %s137
      %s154 = sphi 0, %s138
      %s158 = sphi 0, %s158
      %s160 = sphi 0, %s158
      %s161 = sphi 0, %s160
      %s175 = sphi 0, %s161
      %s179 = sphi 0, %s179
      %s181 = sphi 0, %s179
      %s182 = sphi 0, %s181
      %s196 = sphi 0, %s182
      %s200 = sphi 0, %s200
      %s202 = sphi 0, %s200
      %s203 = sphi 0, %s202
      %s217 = sphi 0, %s203
      %s223 = sphi 0, %s225
      %s226 = sphi 0, %s223
      %s227 = sphi 0, %s226
      %s243 = sphi 0, %s227
    $region4: #{tpu_custom_call.1} parent=1 // loop_header_branch
      %23 = sbr.rel (%p21) target = $region8
    $region5: #{tpu_custom_call.1} parent=1 // loop_body
      %s25 = ssub.s32 %s20, 1
      %s26 = ssub.s32 %s20, 2
      %s27 = sadd.s32 %s20, 1
      %s28 = ssub.s32 %s20, %s27
      %p29 = scmp.eq.s32.totalorder %s28, 0
      %s31 = sadd.s32 %s30, 1
      %s32 = scalar_select %p29, %s30, %s31
      %p35 = pneg %p29
      %p36 = scmp.eq.s32.totalorder %s20, 1
      %p37 = por %p35, %p36
      %p38 = scmp.ne.s32.totalorder %s30, %s33
      %p39 = scmp.eq.s32.totalorder %s20, 0
      %p40 = por %p38, %p39
      %p41 = scmp.ne.s32.totalorder %s30, %s33
      %p42 = scmp.eq.s32.totalorder %s25, 1
      %p43 = por %p41, %p42
      %p44 = scmp.ne.s32.totalorder %s33, %s34
      %p45 = scmp.eq.s32.totalorder %s25, 0
      %p46 = por %p44, %p45
      %p47 = scmp.ne.s32.totalorder %s33, %s34
      %p48 = scmp.eq.s32.totalorder %s26, 1
      %p49 = por %p47, %p48
      %p51 = scmp.ne.s32.totalorder %s34, %s50
      %p52 = scmp.eq.s32.totalorder %s26, 0
      %p53 = por %p51, %p52
      %s54 = ssub.s32 %s20, %s27
      %p55 = scmp.eq.s32.totalorder %s54, 0
      %s57 = sadd.s32 %s56, 1
      %s58 = scalar_select %p55, %s56, %s57
      %p61 = pneg %p55
      %p62 = scmp.eq.s32.totalorder %s20, 1
      %p63 = por %p61, %p62
      %p64 = scmp.ne.s32.totalorder %s56, %s59
      %p65 = scmp.eq.s32.totalorder %s20, 0
      %p66 = por %p64, %p65
      %p67 = scmp.ne.s32.totalorder %s56, %s59
      %p68 = scmp.eq.s32.totalorder %s25, 1
      %p69 = por %p67, %p68
      %p70 = scmp.ne.s32.totalorder %s59, %s60
      %p71 = scmp.eq.s32.totalorder %s25, 0
      %p72 = por %p70, %p71
      %p73 = scmp.ne.s32.totalorder %s59, %s60
      %p74 = scmp.eq.s32.totalorder %s26, 1
      %p75 = por %p73, %p74
      %p77 = scmp.ne.s32.totalorder %s60, %s76
      %p78 = scmp.eq.s32.totalorder %s26, 0
      %p79 = por %p77, %p78
      %s80 = ssub.s32 %s20, %s27
      %p81 = scmp.eq.s32.totalorder %s80, 0
      %s83 = sadd.s32 %s82, 1
      %s84 = scalar_select %p81, %s82, %s83
      %p87 = pneg %p81
      %p88 = scmp.eq.s32.totalorder %s20, 1
      %p89 = por %p87, %p88
      %p90 = scmp.ne.s32.totalorder %s82, %s85
      %p91 = scmp.eq.s32.totalorder %s20, 0
      %p92 = por %p90, %p91
      %p93 = scmp.ne.s32.totalorder %s82, %s85
      %p94 = scmp.eq.s32.totalorder %s25, 1
      %p95 = por %p93, %p94
      %p96 = scmp.ne.s32.totalorder %s85, %s86
      %p97 = scmp.eq.s32.totalorder %s25, 0
      %p98 = por %p96, %p97
      %p99 = scmp.ne.s32.totalorder %s85, %s86
      %p100 = scmp.eq.s32.totalorder %s26, 1
      %p101 = por %p99, %p100
      %p103 = scmp.ne.s32.totalorder %s86, %s102
      %p104 = scmp.eq.s32.totalorder %s26, 0
      %p105 = por %p103, %p104
      %s106 = ssub.s32 %s20, %s27
      %p107 = scmp.eq.s32.totalorder %s106, 0
      %s109 = sadd.s32 %s108, 1
      %s110 = scalar_select %p107, %s108, %s109
      %p113 = pneg %p107
      %p114 = scmp.eq.s32.totalorder %s20, 1
      %p115 = por %p113, %p114
      %p116 = scmp.ne.s32.totalorder %s108, %s111
      %p117 = scmp.eq.s32.totalorder %s20, 0
      %p118 = por %p116, %p117
      %p119 = scmp.ne.s32.totalorder %s108, %s111
      %p120 = scmp.eq.s32.totalorder %s25, 1
      %p121 = por %p119, %p120
      %p122 = scmp.ne.s32.totalorder %s111, %s112
      %p123 = scmp.eq.s32.totalorder %s25, 0
      %p124 = por %p122, %p123
      %p125 = scmp.ne.s32.totalorder %s111, %s112
      %p126 = scmp.eq.s32.totalorder %s26, 1
      %p127 = por %p125, %p126
      %p129 = scmp.ne.s32.totalorder %s112, %s128
      %p130 = scmp.eq.s32.totalorder %s26, 0
      %p131 = por %p129, %p130
      %s132 = ssub.s32 %s20, %s27
      %p133 = scmp.eq.s32.totalorder %s132, 0
      %s135 = sadd.s32 %s134, 1
      %s136 = scalar_select %p133, %s134, %s135
      %p139 = pneg %p133
      %p140 = scmp.eq.s32.totalorder %s20, 1
      %p141 = por %p139, %p140
      %p142 = scmp.ne.s32.totalorder %s134, %s137
      %p143 = scmp.eq.s32.totalorder %s20, 0
      %p144 = por %p142, %p143
      %p145 = scmp.ne.s32.totalorder %s134, %s137
      %p146 = scmp.eq.s32.totalorder %s25, 1
      %p147 = por %p145, %p146
      %p148 = scmp.ne.s32.totalorder %s137, %s138
      %p149 = scmp.eq.s32.totalorder %s25, 0
      %p150 = por %p148, %p149
      %p151 = scmp.ne.s32.totalorder %s137, %s138
      %p152 = scmp.eq.s32.totalorder %s26, 1
      %p153 = por %p151, %p152
      %p155 = scmp.ne.s32.totalorder %s138, %s154
      %p156 = scmp.eq.s32.totalorder %s26, 0
      %p157 = por %p155, %p156
      %s159 = sadd.s32 %s158, 1
      %p162 = scmp.eq.s32.totalorder %s20, 1
      %p163 = scmp.ne.s32.totalorder %s158, %s160
      %p164 = scmp.eq.s32.totalorder %s20, 0
      %p165 = por %p163, %p164
      %p166 = scmp.ne.s32.totalorder %s158, %s160
      %p167 = scmp.eq.s32.totalorder %s25, 1
      %p168 = por %p166, %p167
      %p169 = scmp.ne.s32.totalorder %s160, %s161
      %p170 = scmp.eq.s32.totalorder %s25, 0
      %p171 = por %p169, %p170
      %p172 = scmp.ne.s32.totalorder %s160, %s161
      %p173 = scmp.eq.s32.totalorder %s26, 1
      %p174 = por %p172, %p173
      %p176 = scmp.ne.s32.totalorder %s161, %s175
      %p177 = scmp.eq.s32.totalorder %s26, 0
      %p178 = por %p176, %p177
      %s180 = sadd.s32 %s179, 1
      %p183 = scmp.eq.s32.totalorder %s20, 1
      %p184 = scmp.ne.s32.totalorder %s179, %s181
      %p185 = scmp.eq.s32.totalorder %s20, 0
      %p186 = por %p184, %p185
      %p187 = scmp.ne.s32.totalorder %s179, %s181
      %p188 = scmp.eq.s32.totalorder %s25, 1
      %p189 = por %p187, %p188
      %p190 = scmp.ne.s32.totalorder %s181, %s182
      %p191 = scmp.eq.s32.totalorder %s25, 0
      %p192 = por %p190, %p191
      %p193 = scmp.ne.s32.totalorder %s181, %s182
      %p194 = scmp.eq.s32.totalorder %s26, 1
      %p195 = por %p193, %p194
      %p197 = scmp.ne.s32.totalorder %s182, %s196
      %p198 = scmp.eq.s32.totalorder %s26, 0
      %p199 = por %p197, %p198
      %s201 = sadd.s32 %s200, 1
      %p204 = scmp.eq.s32.totalorder %s20, 1
      %p205 = scmp.ne.s32.totalorder %s200, %s202
      %p206 = scmp.eq.s32.totalorder %s20, 0
      %p207 = por %p205, %p206
      %p208 = scmp.ne.s32.totalorder %s200, %s202
      %p209 = scmp.eq.s32.totalorder %s25, 1
      %p210 = por %p208, %p209
      %p211 = scmp.ne.s32.totalorder %s202, %s203
      %p212 = scmp.eq.s32.totalorder %s25, 0
      %p213 = por %p211, %p212
      %p214 = scmp.ne.s32.totalorder %s202, %s203
      %p215 = scmp.eq.s32.totalorder %s26, 1
      %p216 = por %p214, %p215
      %p218 = scmp.ne.s32.totalorder %s203, %s217
      %p219 = scmp.eq.s32.totalorder %s26, 0
      %p220 = por %p218, %p219
      %s221 = ssub.s32 %s20, %s27
      %p222 = scmp.eq.s32.totalorder %s221, 0
      %s224 = sadd.s32 %s223, 1
      %s225 = scalar_select %p222, %s223, %s224
      %p228 = pneg %p222
      %p229 = scmp.eq.s32.totalorder %s20, 1
      %p230 = por %p228, %p229
      %p231 = scmp.ne.s32.totalorder %s223, %s226
      %p232 = scmp.eq.s32.totalorder %s20, 0
      %p233 = por %p231, %p232
      %p234 = scmp.ne.s32.totalorder %s223, %s226
      %p235 = scmp.eq.s32.totalorder %s25, 1
      %p236 = por %p234, %p235
      %p237 = scmp.ne.s32.totalorder %s226, %s227
      %p238 = scmp.eq.s32.totalorder %s25, 0
      %p239 = por %p237, %p238
      %p240 = scmp.ne.s32.totalorder %s226, %s227
      %p241 = scmp.eq.s32.totalorder %s26, 1
      %p242 = por %p240, %p241
      %p244 = scmp.ne.s32.totalorder %s227, %s243
      %p245 = scmp.eq.s32.totalorder %s26, 0
      %p246 = por %p244, %p245
      %p247 = scmp.le.s32.totalorder 1, %s20
      %p248 = scmp.lt.s32.totalorder %s20, 3
      %p249 = pnand %p247, %p248
      %p250 = pneg %p249
      // Predicated region
      $region9: #{tpu_custom_call.1} parent=5 // pred_check
        _
      $region10: #{tpu_custom_call.1} parent=5 // pred_check_branch
        %252 = sbr.rel (%p249) target = $region12
      $region11: #{tpu_custom_call.1} parent=5 // pred_region
        %s253 = ssub.s32 %s20, 1
        // Predicated region
        $region13: #{tpu_custom_call.1} parent=11 // pred_check
          %p254 = pneg %p171
        $region14: #{tpu_custom_call.1} parent=11 // pred_check_branch
          %256 = sbr.rel (%p254) target = $region16
        $region15: #{tpu_custom_call.1} parent=11 // pred_region
          _
        $region16: #{tpu_custom_call.1} parent=11 // pred_fallthru
          _
        // Predicated region
        $region17: #{tpu_custom_call.1} parent=11 // pred_check
          %p257 = pneg %p192
        $region18: #{tpu_custom_call.1} parent=11 // pred_check_branch
          %259 = sbr.rel (%p257) target = $region20
        $region19: #{tpu_custom_call.1} parent=11 // pred_region
          _
        $region20: #{tpu_custom_call.1} parent=11 // pred_fallthru
          _
        // Predicated region
        $region21: #{tpu_custom_call.1} parent=11 // pred_check
          %p260 = pneg %p213
        $region22: #{tpu_custom_call.1} parent=11 // pred_check_branch
          %262 = sbr.rel (%p260) target = $region24
        $region23: #{tpu_custom_call.1} parent=11 // pred_region
          _
        $region24: #{tpu_custom_call.1} parent=11 // pred_fallthru
          _
      $region12: #{tpu_custom_call.1} parent=5 // pred_fallthru
        _
      %p263 = scmp.lt.s32.totalorder %s20, 2
      // Predicated region
      $region25: #{tpu_custom_call.1} parent=5 // pred_check
        %p264 = pneg %p263
      $region26: #{tpu_custom_call.1} parent=5 // pred_check_branch
        %266 = sbr.rel (%p264) target = $region28
      $region27: #{tpu_custom_call.1} parent=5 // pred_region
        // Predicated region
        $region29: #{tpu_custom_call.1} parent=27 // pred_check
          %p267 = pneg %p40
        $region30: #{tpu_custom_call.1} parent=27 // pred_check_branch
          %269 = sbr.rel (%p267) target = $region32
        $region31: #{tpu_custom_call.1} parent=27 // pred_region
          #allocation7 [shape = 'u32[6]{0}', space=smem, size = 0x18, scoped, tag = 'DMA stride descriptor']
          %s270 = sand.u32 %s30, 1
          %s271 = scalar_lea.sflag [#allocation3], %s270
          %s272 = sand.u32 %s30, 1
          %s273 = smul.addr %s272, 1024
          %s274 = scalar_lea.vmem [#allocation2], %s273
          %s275 = smul.u32 64, %s20
          %277 = vsyncadd %s271, 0
          %s278 = smul.addr %s275, 8
          %s279 = scalar_lea.hbm %s0, %s278
          %s281 = sshll.u32 1, 14
          %s282 = sxor.u32 4294967295, %s281
          %s284 = sld [smem:[#allocation0]]
          %s285 = sadd.s32 2, %s284
          %s287 = sshll.u32 7, 26
          %s288 = sxor.u32 4294967295, %s287
          %s289 = sand.u32 0, %s288
          %s290 = sshll.u32 %s285, 26
          %s291 = sor.u32 %s289, %s290
          %s292 = sshll.u32 %s279, 4
          %s293 = int_to_ptr.hbm [resolvable:$true] %s292
          %s294 = sshll.u32 %s274, 4
          %s295 = int_to_ptr.vmem [resolvable:$true] %s294
          %301 = sst [smem:[#allocation7]] 16384
          %s302 = scalar_lea.smem [#allocation7], 1
          %303 = sst [smem:[%s302]] 8192
          %s304 = scalar_lea.smem [#allocation7], 2
          %305 = sst [smem:[%s304]] 64
          %s306 = scalar_lea.smem [#allocation7], 3
          %307 = sst [smem:[%s306]] 128
          %s308 = scalar_lea.smem [#allocation7], 4
          %309 = sst [smem:[%s308]] 128
          %s310 = scalar_lea.smem [#allocation7], 5
          %311 = sst [smem:[%s310]] 8
          %313 = dma.general %s293, 16384, %s295, %s271, [#allocation6], [#allocation7], %s291, 0
        $region32: #{tpu_custom_call.1} parent=27 // pred_fallthru
          _
        // Predicated region
        $region33: #{tpu_custom_call.1} parent=27 // pred_check
          %p314 = pneg %p66
        $region34: #{tpu_custom_call.1} parent=27 // pred_check_branch
          %316 = sbr.rel (%p314) target = $region36
        $region35: #{tpu_custom_call.1} parent=27 // pred_region
          %s317 = smul.u32 64, %s20
          %p318 = scmp.lt.s32.totalorder %s317, 127
          %s319 = scalar_select %p318, %s317, 127
          %s320 = scalar_lea.vmem %s1, %s319
          %s321 = smul.u32 64, %s20
        $region36: #{tpu_custom_call.1} parent=27 // pred_fallthru
          _
        // Predicated region
        $region37: #{tpu_custom_call.1} parent=27 // pred_check
          %p322 = pneg %p92
        $region38: #{tpu_custom_call.1} parent=27 // pred_check_branch
          %324 = sbr.rel (%p322) target = $region40
        $region39: #{tpu_custom_call.1} parent=27 // pred_region
          %s325 = smul.u32 64, %s20
          %p326 = scmp.lt.s32.totalorder %s325, 127
          %s327 = scalar_select %p326, %s325, 127
          %s328 = scalar_lea.vmem %s2, %s327
          %s329 = smul.u32 64, %s20
        $region40: #{tpu_custom_call.1} parent=27 // pred_fallthru
          _
        // Predicated region
        $region41: #{tpu_custom_call.1} parent=27 // pred_check
          %p330 = pneg %p118
        $region42: #{tpu_custom_call.1} parent=27 // pred_check_branch
          %332 = sbr.rel (%p330) target = $region44
        $region43: #{tpu_custom_call.1} parent=27 // pred_region
          %s333 = smul.u32 64, %s20
          %p334 = scmp.lt.s32.totalorder %s333, 127
          %s335 = scalar_select %p334, %s333, 127
          %s336 = scalar_lea.vmem %s3, %s335
          %s337 = smul.u32 64, %s20
        $region44: #{tpu_custom_call.1} parent=27 // pred_fallthru
          _
        // Predicated region
        $region45: #{tpu_custom_call.1} parent=27 // pred_check
          %p338 = pneg %p144
        $region46: #{tpu_custom_call.1} parent=27 // pred_check_branch
          %340 = sbr.rel (%p338) target = $region48
        $region47: #{tpu_custom_call.1} parent=27 // pred_region
          %s341 = smul.u32 64, %s20
          %p342 = scmp.lt.s32.totalorder %s341, 127
          %s343 = scalar_select %p342, %s341, 127
          %s344 = scalar_lea.vmem %s4, %s343
          %s345 = smul.u32 64, %s20
        $region48: #{tpu_custom_call.1} parent=27 // pred_fallthru
          _
      $region28: #{tpu_custom_call.1} parent=5 // pred_fallthru
        _
      %p346 = scmp.le.s32.totalorder 1, %s20
      %p347 = scmp.lt.s32.totalorder %s20, 3
      %p348 = pnand %p346, %p347
      %p349 = pneg %p348
      // Predicated region
      $region49: #{tpu_custom_call.1} parent=5 // pred_check
        _
      $region50: #{tpu_custom_call.1} parent=5 // pred_check_branch
        %351 = sbr.rel (%p348) target = $region52
      $region51: #{tpu_custom_call.1} parent=5 // pred_region
        %s352 = ssub.s32 %s20, 1
        %s353 = sand.u32 %s33, 1
        %s354 = scalar_lea.sflag [#allocation3], %s353
        %s355 = sand.u32 %s33, 1
        %s356 = smul.addr %s355, 1024
        %s357 = scalar_lea.vmem [#allocation2], %s356
        // Predicated region
        $region53: #{tpu_custom_call.1} parent=51 // pred_check
          %p358 = pneg %p46
        $region54: #{tpu_custom_call.1} parent=51 // pred_check_branch
          %360 = sbr.rel (%p358) target = $region56
        $region55: #{tpu_custom_call.1} parent=51 // pred_region
          %362 = dma.done %s354, 16384
        $region56: #{tpu_custom_call.1} parent=51 // pred_fallthru
          _
        %s363 = sand.u32 %s33, 1
        %s364 = scalar_lea.sflag [#allocation3], %s363
        %s365 = sand.u32 %s33, 1
        %s366 = smul.addr %s365, 1024
        %s367 = scalar_lea.vmem [#allocation2], %s366
        %p368 = pneg %p46
        %p369 = pneg %p43
        %s370 = smul.u32 64, %s25
        %p371 = scmp.lt.s32.totalorder %s370, 127
        %s372 = scalar_select %p371, %s370, 127
        %s373 = scalar_lea.vmem %s1, %s372
        %p374 = pneg %p72
        %p375 = pneg %p69
        %s376 = smul.u32 64, %s25
        %p377 = scmp.lt.s32.totalorder %s376, 127
        %s378 = scalar_select %p377, %s376, 127
        %s379 = scalar_lea.vmem %s2, %s378
        %p380 = pneg %p98
        %p381 = pneg %p95
        %s382 = smul.u32 64, %s25
        %p383 = scmp.lt.s32.totalorder %s382, 127
        %s384 = scalar_select %p383, %s382, 127
        %s385 = scalar_lea.vmem %s3, %s384
        %p386 = pneg %p124
        %p387 = pneg %p121
        %s388 = smul.u32 64, %s25
        %p389 = scmp.lt.s32.totalorder %s388, 127
        %s390 = scalar_select %p389, %s388, 127
        %s391 = scalar_lea.vmem %s4, %s390
        %p392 = pneg %p150
        %p393 = pneg %p147
        %p394 = pneg %p171
        %p395 = pneg %p168
        %p396 = pneg %p192
        %p397 = pneg %p189
        %p398 = pneg %p213
        %p399 = pneg %p210
        %p400 = pneg %p239
        %p401 = pneg %p236
        %s402 = sand.u32 %s226, 1
        %s403 = scalar_lea.sflag [#allocation4], %s402
        %s404 = sand.u32 %s226, 1
        %s405 = smul.addr %s404, 1024
        %s406 = scalar_lea.vmem [#allocation5], %s405
        %s407 = smul.u32 64, %s25
        %s408 = smul.u32 64, %s25
        %p409 = scmp.lt.s32.totalorder %s408, 127
        %s410 = scalar_select %p409, %s408, 127
        %s411 = scalar_lea.vmem %s1, %s410
        %s412 = smul.u32 64, %s25
        %s413 = smul.u32 64, %s25
        %p414 = scmp.lt.s32.totalorder %s413, 127
        %s415 = scalar_select %p414, %s413, 127
        %s416 = scalar_lea.vmem %s2, %s415
        %s417 = smul.u32 64, %s25
        %s418 = smul.u32 64, %s25
        %p419 = scmp.lt.s32.totalorder %s418, 127
        %s420 = scalar_select %p419, %s418, 127
        %s421 = scalar_lea.vmem %s3, %s420
        %s422 = smul.u32 64, %s25
        %s423 = smul.u32 64, %s25
        %p424 = scmp.lt.s32.totalorder %s423, 127
        %s425 = scalar_select %p424, %s423, 127
        %s426 = scalar_lea.vmem %s4, %s425
        %s427 = smul.u32 64, %s25
        %s428 = smul.u32 64, %s25
        %v429 = vld [vmem:[%s357] sm:$0xff]
        %v430 = vld [vmem:[%s357 + $0x8] sm:$0xff]
        %v431 = vld [vmem:[%s357 + $0x10] sm:$0xff]
        %v432 = vld [vmem:[%s357 + $0x18] sm:$0xff]
        %v433 = vld [vmem:[%s357 + $0x20] sm:$0xff]
        %v434 = vld [vmem:[%s357 + $0x28] sm:$0xff]
        %v435 = vld [vmem:[%s357 + $0x30] sm:$0xff]
        %v436 = vld [vmem:[%s357 + $0x38] sm:$0xff]
        %v437 = vld [vmem:[%s357 + $0x40] sm:$0xff]
        %v438 = vld [vmem:[%s357 + $0x48] sm:$0xff]
        %v439 = vld [vmem:[%s357 + $0x50] sm:$0xff]
        %v440 = vld [vmem:[%s357 + $0x58] sm:$0xff]
        %v441 = vld [vmem:[%s357 + $0x60] sm:$0xff]
        %v442 = vld [vmem:[%s357 + $0x68] sm:$0xff]
        %v443 = vld [vmem:[%s357 + $0x70] sm:$0xff]
        %v444 = vld [vmem:[%s357 + $0x78] sm:$0xff]
        %v445 = vld [vmem:[%s357 + $0x80] sm:$0xff]
        %v446 = vld [vmem:[%s357 + $0x88] sm:$0xff]
        %v447 = vld [vmem:[%s357 + $0x90] sm:$0xff]
        %v448 = vld [vmem:[%s357 + $0x98] sm:$0xff]
        %v449 = vld [vmem:[%s357 + $0xa0] sm:$0xff]
        %v450 = vld [vmem:[%s357 + $0xa8] sm:$0xff]
        %v451 = vld [vmem:[%s357 + $0xb0] sm:$0xff]
        %v452 = vld [vmem:[%s357 + $0xb8] sm:$0xff]
        %v453 = vld [vmem:[%s357 + $0xc0] sm:$0xff]
        %v454 = vld [vmem:[%s357 + $0xc8] sm:$0xff]
        %v455 = vld [vmem:[%s357 + $0xd0] sm:$0xff]
        %v456 = vld [vmem:[%s357 + $0xd8] sm:$0xff]
        %v457 = vld [vmem:[%s357 + $0xe0] sm:$0xff]
        %v458 = vld [vmem:[%s357 + $0xe8] sm:$0xff]
        %v459 = vld [vmem:[%s357 + $0xf0] sm:$0xff]
        %v460 = vld [vmem:[%s357 + $0xf8] sm:$0xff]
        %v461 = vld [vmem:[%s357 + $0x100] sm:$0xff]
        %v462 = vld [vmem:[%s357 + $0x108] sm:$0xff]
        %v463 = vld [vmem:[%s357 + $0x110] sm:$0xff]
        %v464 = vld [vmem:[%s357 + $0x118] sm:$0xff]
        %v465 = vld [vmem:[%s357 + $0x120] sm:$0xff]
        %v466 = vld [vmem:[%s357 + $0x128] sm:$0xff]
        %v467 = vld [vmem:[%s357 + $0x130] sm:$0xff]
        %v468 = vld [vmem:[%s357 + $0x138] sm:$0xff]
        %v469 = vld [vmem:[%s357 + $0x140] sm:$0xff]
        %v470 = vld [vmem:[%s357 + $0x148] sm:$0xff]
        %v471 = vld [vmem:[%s357 + $0x150] sm:$0xff]
        %v472 = vld [vmem:[%s357 + $0x158] sm:$0xff]
        %v473 = vld [vmem:[%s357 + $0x160] sm:$0xff]
        %v474 = vld [vmem:[%s357 + $0x168] sm:$0xff]
        %v475 = vld [vmem:[%s357 + $0x170] sm:$0xff]
        %v476 = vld [vmem:[%s357 + $0x178] sm:$0xff]
        %v477 = vld [vmem:[%s357 + $0x180] sm:$0xff]
        %v478 = vld [vmem:[%s357 + $0x188] sm:$0xff]
        %v479 = vld [vmem:[%s357 + $0x190] sm:$0xff]
        %v480 = vld [vmem:[%s357 + $0x198] sm:$0xff]
        %v481 = vld [vmem:[%s357 + $0x1a0] sm:$0xff]
        %v482 = vld [vmem:[%s357 + $0x1a8] sm:$0xff]
        %v483 = vld [vmem:[%s357 + $0x1b0] sm:$0xff]
        %v484 = vld [vmem:[%s357 + $0x1b8] sm:$0xff]
        %v485 = vld [vmem:[%s357 + $0x1c0] sm:$0xff]
        %v486 = vld [vmem:[%s357 + $0x1c8] sm:$0xff]
        %v487 = vld [vmem:[%s357 + $0x1d0] sm:$0xff]
        %v488 = vld [vmem:[%s357 + $0x1d8] sm:$0xff]
        %v489 = vld [vmem:[%s357 + $0x1e0] sm:$0xff]
        %v490 = vld [vmem:[%s357 + $0x1e8] sm:$0xff]
        %v491 = vld [vmem:[%s357 + $0x1f0] sm:$0xff]
        %v492 = vld [vmem:[%s357 + $0x1f8] sm:$0xff]
        %v493 = vld [vmem:[%s357 + $0x200] sm:$0xff]
        %v494 = vld [vmem:[%s357 + $0x208] sm:$0xff]
        %v495 = vld [vmem:[%s357 + $0x210] sm:$0xff]
        %v496 = vld [vmem:[%s357 + $0x218] sm:$0xff]
        %v497 = vld [vmem:[%s357 + $0x220] sm:$0xff]
        %v498 = vld [vmem:[%s357 + $0x228] sm:$0xff]
        %v499 = vld [vmem:[%s357 + $0x230] sm:$0xff]
        %v500 = vld [vmem:[%s357 + $0x238] sm:$0xff]
        %v501 = vld [vmem:[%s357 + $0x240] sm:$0xff]
        %v502 = vld [vmem:[%s357 + $0x248] sm:$0xff]
        %v503 = vld [vmem:[%s357 + $0x250] sm:$0xff]
        %v504 = vld [vmem:[%s357 + $0x258] sm:$0xff]
        %v505 = vld [vmem:[%s357 + $0x260] sm:$0xff]
        %v506 = vld [vmem:[%s357 + $0x268] sm:$0xff]
        %v507 = vld [vmem:[%s357 + $0x270] sm:$0xff]
        %v508 = vld [vmem:[%s357 + $0x278] sm:$0xff]
        %v509 = vld [vmem:[%s357 + $0x280] sm:$0xff]
        %v510 = vld [vmem:[%s357 + $0x288] sm:$0xff]
        %v511 = vld [vmem:[%s357 + $0x290] sm:$0xff]
        %v512 = vld [vmem:[%s357 + $0x298] sm:$0xff]
        %v513 = vld [vmem:[%s357 + $0x2a0] sm:$0xff]
        %v514 = vld [vmem:[%s357 + $0x2a8] sm:$0xff]
        %v515 = vld [vmem:[%s357 + $0x2b0] sm:$0xff]
        %v516 = vld [vmem:[%s357 + $0x2b8] sm:$0xff]
        %v517 = vld [vmem:[%s357 + $0x2c0] sm:$0xff]
        %v518 = vld [vmem:[%s357 + $0x2c8] sm:$0xff]
        %v519 = vld [vmem:[%s357 + $0x2d0] sm:$0xff]
        %v520 = vld [vmem:[%s357 + $0x2d8] sm:$0xff]
        %v521 = vld [vmem:[%s357 + $0x2e0] sm:$0xff]
        %v522 = vld [vmem:[%s357 + $0x2e8] sm:$0xff]
        %v523 = vld [vmem:[%s357 + $0x2f0] sm:$0xff]
        %v524 = vld [vmem:[%s357 + $0x2f8] sm:$0xff]
        %v525 = vld [vmem:[%s357 + $0x300] sm:$0xff]
        %v526 = vld [vmem:[%s357 + $0x308] sm:$0xff]
        %v527 = vld [vmem:[%s357 + $0x310] sm:$0xff]
        %v528 = vld [vmem:[%s357 + $0x318] sm:$0xff]
        %v529 = vld [vmem:[%s357 + $0x320] sm:$0xff]
        %v530 = vld [vmem:[%s357 + $0x328] sm:$0xff]
        %v531 = vld [vmem:[%s357 + $0x330] sm:$0xff]
        %v532 = vld [vmem:[%s357 + $0x338] sm:$0xff]
        %v533 = vld [vmem:[%s357 + $0x340] sm:$0xff]
        %v534 = vld [vmem:[%s357 + $0x348] sm:$0xff]
        %v535 = vld [vmem:[%s357 + $0x350] sm:$0xff]
        %v536 = vld [vmem:[%s357 + $0x358] sm:$0xff]
        %v537 = vld [vmem:[%s357 + $0x360] sm:$0xff]
        %v538 = vld [vmem:[%s357 + $0x368] sm:$0xff]
        %v539 = vld [vmem:[%s357 + $0x370] sm:$0xff]
        %v540 = vld [vmem:[%s357 + $0x378] sm:$0xff]
        %v541 = vld [vmem:[%s357 + $0x380] sm:$0xff]
        %v542 = vld [vmem:[%s357 + $0x388] sm:$0xff]
        %v543 = vld [vmem:[%s357 + $0x390] sm:$0xff]
        %v544 = vld [vmem:[%s357 + $0x398] sm:$0xff]
        %v545 = vld [vmem:[%s357 + $0x3a0] sm:$0xff]
        %v546 = vld [vmem:[%s357 + $0x3a8] sm:$0xff]
        %v547 = vld [vmem:[%s357 + $0x3b0] sm:$0xff]
        %v548 = vld [vmem:[%s357 + $0x3b8] sm:$0xff]
        %v549 = vld [vmem:[%s357 + $0x3c0] sm:$0xff]
        %v550 = vld [vmem:[%s357 + $0x3c8] sm:$0xff]
        %v551 = vld [vmem:[%s357 + $0x3d0] sm:$0xff]
        %v552 = vld [vmem:[%s357 + $0x3d8] sm:$0xff]
        %v553 = vld [vmem:[%s357 + $0x3e0] sm:$0xff]
        %v554 = vld [vmem:[%s357 + $0x3e8] sm:$0xff]
        %v555 = vld [vmem:[%s357 + $0x3f0] sm:$0xff]
        %v556 = vld [vmem:[%s357 + $0x3f8] sm:$0xff]
        %v557 = vadd.f32 %v429, %v493
        %v558 = vadd.f32 %v430, %v494
        %v559 = vadd.f32 %v431, %v495
        %v560 = vadd.f32 %v432, %v496
        %v561 = vadd.f32 %v433, %v497
        %v562 = vadd.f32 %v434, %v498
        %v563 = vadd.f32 %v435, %v499
        %v564 = vadd.f32 %v436, %v500
        %v565 = vadd.f32 %v437, %v501
        %v566 = vadd.f32 %v438, %v502
        %v567 = vadd.f32 %v439, %v503
        %v568 = vadd.f32 %v440, %v504
        %v569 = vadd.f32 %v441, %v505
        %v570 = vadd.f32 %v442, %v506
        %v571 = vadd.f32 %v443, %v507
        %v572 = vadd.f32 %v444, %v508
        %v573 = vadd.f32 %v445, %v509
        %v574 = vadd.f32 %v446, %v510
        %v575 = vadd.f32 %v447, %v511
        %v576 = vadd.f32 %v448, %v512
        %v577 = vadd.f32 %v449, %v513
        %v578 = vadd.f32 %v450, %v514
        %v579 = vadd.f32 %v451, %v515
        %v580 = vadd.f32 %v452, %v516
        %v581 = vadd.f32 %v453, %v517
        %v582 = vadd.f32 %v454, %v518
        %v583 = vadd.f32 %v455, %v519
        %v584 = vadd.f32 %v456, %v520
        %v585 = vadd.f32 %v457, %v521
        %v586 = vadd.f32 %v458, %v522
        %v587 = vadd.f32 %v459, %v523
        %v588 = vadd.f32 %v460, %v524
        %v589 = vadd.f32 %v461, %v525
        %v590 = vadd.f32 %v462, %v526
        %v591 = vadd.f32 %v463, %v527
        %v592 = vadd.f32 %v464, %v528
        %v593 = vadd.f32 %v465, %v529
        %v594 = vadd.f32 %v466, %v530
        %v595 = vadd.f32 %v467, %v531
        %v596 = vadd.f32 %v468, %v532
        %v597 = vadd.f32 %v469, %v533
        %v598 = vadd.f32 %v470, %v534
        %v599 = vadd.f32 %v471, %v535
        %v600 = vadd.f32 %v472, %v536
        %v601 = vadd.f32 %v473, %v537
        %v602 = vadd.f32 %v474, %v538
        %v603 = vadd.f32 %v475, %v539
        %v604 = vadd.f32 %v476, %v540
        %v605 = vadd.f32 %v477, %v541
        %v606 = vadd.f32 %v478, %v542
        %v607 = vadd.f32 %v479, %v543
        %v608 = vadd.f32 %v480, %v544
        %v609 = vadd.f32 %v481, %v545
        %v610 = vadd.f32 %v482, %v546
        %v611 = vadd.f32 %v483, %v547
        %v612 = vadd.f32 %v484, %v548
        %v613 = vadd.f32 %v485, %v549
        %v614 = vadd.f32 %v486, %v550
        %v615 = vadd.f32 %v487, %v551
        %v616 = vadd.f32 %v488, %v552
        %v617 = vadd.f32 %v489, %v553
        %v618 = vadd.f32 %v490, %v554
        %v619 = vadd.f32 %v491, %v555
        %v620 = vadd.f32 %v492, %v556
        %621 = vadd.xlane.f32.xlu0 %v557
        %v622 = vpop.xlane.xlu0 %621
        %623 = vadd.xlane.f32.xlu0 %v558
        %v624 = vpop.xlane.xlu0 %623
        %625 = vadd.xlane.f32.xlu0 %v559
        %v626 = vpop.xlane.xlu0 %625
        %627 = vadd.xlane.f32.xlu0 %v560
        %v628 = vpop.xlane.xlu0 %627
        %629 = vadd.xlane.f32.xlu0 %v561
        %v630 = vpop.xlane.xlu0 %629
        %631 = vadd.xlane.f32.xlu0 %v562
        %v632 = vpop.xlane.xlu0 %631
        %633 = vadd.xlane.f32.xlu0 %v563
        %v634 = vpop.xlane.xlu0 %633
        %635 = vadd.xlane.f32.xlu0 %v564
        %v636 = vpop.xlane.xlu0 %635
        %637 = vadd.xlane.f32.xlu0 %v565
        %v638 = vpop.xlane.xlu0 %637
        %639 = vadd.xlane.f32.xlu0 %v566
        %v640 = vpop.xlane.xlu0 %639
        %641 = vadd.xlane.f32.xlu0 %v567
        %v642 = vpop.xlane.xlu0 %641
        %643 = vadd.xlane.f32.xlu0 %v568
        %v644 = vpop.xlane.xlu0 %643
        %645 = vadd.xlane.f32.xlu0 %v569
        %v646 = vpop.xlane.xlu0 %645
        %647 = vadd.xlane.f32.xlu0 %v570
        %v648 = vpop.xlane.xlu0 %647
        %649 = vadd.xlane.f32.xlu0 %v571
        %v650 = vpop.xlane.xlu0 %649
        %651 = vadd.xlane.f32.xlu0 %v572
        %v652 = vpop.xlane.xlu0 %651
        %653 = vadd.xlane.f32.xlu0 %v573
        %v654 = vpop.xlane.xlu0 %653
        %655 = vadd.xlane.f32.xlu0 %v574
        %v656 = vpop.xlane.xlu0 %655
        %657 = vadd.xlane.f32.xlu0 %v575
        %v658 = vpop.xlane.xlu0 %657
        %659 = vadd.xlane.f32.xlu0 %v576
        %v660 = vpop.xlane.xlu0 %659
        %661 = vadd.xlane.f32.xlu0 %v577
        %v662 = vpop.xlane.xlu0 %661
        %663 = vadd.xlane.f32.xlu0 %v578
        %v664 = vpop.xlane.xlu0 %663
        %665 = vadd.xlane.f32.xlu0 %v579
        %v666 = vpop.xlane.xlu0 %665
        %667 = vadd.xlane.f32.xlu0 %v580
        %v668 = vpop.xlane.xlu0 %667
        %669 = vadd.xlane.f32.xlu0 %v581
        %v670 = vpop.xlane.xlu0 %669
        %671 = vadd.xlane.f32.xlu0 %v582
        %v672 = vpop.xlane.xlu0 %671
        %673 = vadd.xlane.f32.xlu0 %v583
        %v674 = vpop.xlane.xlu0 %673
        %675 = vadd.xlane.f32.xlu0 %v584
        %v676 = vpop.xlane.xlu0 %675
        %677 = vadd.xlane.f32.xlu0 %v585
        %v678 = vpop.xlane.xlu0 %677
        %679 = vadd.xlane.f32.xlu0 %v586
        %v680 = vpop.xlane.xlu0 %679
        %681 = vadd.xlane.f32.xlu0 %v587
        %v682 = vpop.xlane.xlu0 %681
        %683 = vadd.xlane.f32.xlu0 %v588
        %v684 = vpop.xlane.xlu0 %683
        %685 = vadd.xlane.f32.xlu0 %v589
        %v686 = vpop.xlane.xlu0 %685
        %687 = vadd.xlane.f32.xlu0 %v590
        %v688 = vpop.xlane.xlu0 %687
        %689 = vadd.xlane.f32.xlu0 %v591
        %v690 = vpop.xlane.xlu0 %689
        %691 = vadd.xlane.f32.xlu0 %v592
        %v692 = vpop.xlane.xlu0 %691
        %693 = vadd.xlane.f32.xlu0 %v593
        %v694 = vpop.xlane.xlu0 %693
        %695 = vadd.xlane.f32.xlu0 %v594
        %v696 = vpop.xlane.xlu0 %695
        %697 = vadd.xlane.f32.xlu0 %v595
        %v698 = vpop.xlane.xlu0 %697
        %699 = vadd.xlane.f32.xlu0 %v596
        %v700 = vpop.xlane.xlu0 %699
        %701 = vadd.xlane.f32.xlu0 %v597
        %v702 = vpop.xlane.xlu0 %701
        %703 = vadd.xlane.f32.xlu0 %v598
        %v704 = vpop.xlane.xlu0 %703
        %705 = vadd.xlane.f32.xlu0 %v599
        %v706 = vpop.xlane.xlu0 %705
        %707 = vadd.xlane.f32.xlu0 %v600
        %v708 = vpop.xlane.xlu0 %707
        %709 = vadd.xlane.f32.xlu0 %v601
        %v710 = vpop.xlane.xlu0 %709
        %711 = vadd.xlane.f32.xlu0 %v602
        %v712 = vpop.xlane.xlu0 %711
        %713 = vadd.xlane.f32.xlu0 %v603
        %v714 = vpop.xlane.xlu0 %713
        %715 = vadd.xlane.f32.xlu0 %v604
        %v716 = vpop.xlane.xlu0 %715
        %717 = vadd.xlane.f32.xlu0 %v605
        %v718 = vpop.xlane.xlu0 %717
        %719 = vadd.xlane.f32.xlu0 %v606
        %v720 = vpop.xlane.xlu0 %719
        %721 = vadd.xlane.f32.xlu0 %v607
        %v722 = vpop.xlane.xlu0 %721
        %723 = vadd.xlane.f32.xlu0 %v608
        %v724 = vpop.xlane.xlu0 %723
        %725 = vadd.xlane.f32.xlu0 %v609
        %v726 = vpop.xlane.xlu0 %725
        %727 = vadd.xlane.f32.xlu0 %v610
        %v728 = vpop.xlane.xlu0 %727
        %729 = vadd.xlane.f32.xlu0 %v611
        %v730 = vpop.xlane.xlu0 %729
        %731 = vadd.xlane.f32.xlu0 %v612
        %v732 = vpop.xlane.xlu0 %731
        %733 = vadd.xlane.f32.xlu0 %v613
        %v734 = vpop.xlane.xlu0 %733
        %735 = vadd.xlane.f32.xlu0 %v614
        %v736 = vpop.xlane.xlu0 %735
        %737 = vadd.xlane.f32.xlu0 %v615
        %v738 = vpop.xlane.xlu0 %737
        %739 = vadd.xlane.f32.xlu0 %v616
        %v740 = vpop.xlane.xlu0 %739
        %741 = vadd.xlane.f32.xlu0 %v617
        %v742 = vpop.xlane.xlu0 %741
        %743 = vadd.xlane.f32.xlu0 %v618
        %v744 = vpop.xlane.xlu0 %743
        %745 = vadd.xlane.f32.xlu0 %v619
        %v746 = vpop.xlane.xlu0 %745
        %747 = vadd.xlane.f32.xlu0 %v620
        %v748 = vpop.xlane.xlu0 %747
        %v749 = vrot.slane %v622, 4
        %v750 = vadd.f32 %v622, %v749
        %v751 = vrot.slane %v750, 2
        %v752 = vadd.f32 %v750, %v751
        %v753 = vrot.slane %v752, 1
        %v754 = vadd.f32 %v752, %v753
        %v755 = vrot.slane %v624, 4
        %v756 = vadd.f32 %v624, %v755
        %v757 = vrot.slane %v756, 2
        %v758 = vadd.f32 %v756, %v757
        %v759 = vrot.slane %v758, 1
        %v760 = vadd.f32 %v758, %v759
        %v761 = vrot.slane %v626, 4
        %v762 = vadd.f32 %v626, %v761
        %v763 = vrot.slane %v762, 2
        %v764 = vadd.f32 %v762, %v763
        %v765 = vrot.slane %v764, 1
        %v766 = vadd.f32 %v764, %v765
        %v767 = vrot.slane %v628, 4
        %v768 = vadd.f32 %v628, %v767
        %v769 = vrot.slane %v768, 2
        %v770 = vadd.f32 %v768, %v769
        %v771 = vrot.slane %v770, 1
        %v772 = vadd.f32 %v770, %v771
        %v773 = vrot.slane %v630, 4
        %v774 = vadd.f32 %v630, %v773
        %v775 = vrot.slane %v774, 2
        %v776 = vadd.f32 %v774, %v775
        %v777 = vrot.slane %v776, 1
        %v778 = vadd.f32 %v776, %v777
        %v779 = vrot.slane %v632, 4
        %v780 = vadd.f32 %v632, %v779
        %v781 = vrot.slane %v780, 2
        %v782 = vadd.f32 %v780, %v781
        %v783 = vrot.slane %v782, 1
        %v784 = vadd.f32 %v782, %v783
        %v785 = vrot.slane %v634, 4
        %v786 = vadd.f32 %v634, %v785
        %v787 = vrot.slane %v786, 2
        %v788 = vadd.f32 %v786, %v787
        %v789 = vrot.slane %v788, 1
        %v790 = vadd.f32 %v788, %v789
        %v791 = vrot.slane %v636, 4
        %v792 = vadd.f32 %v636, %v791
        %v793 = vrot.slane %v792, 2
        %v794 = vadd.f32 %v792, %v793
        %v795 = vrot.slane %v794, 1
        %v796 = vadd.f32 %v794, %v795
        %v797 = vrot.slane %v638, 4
        %v798 = vadd.f32 %v638, %v797
        %v799 = vrot.slane %v798, 2
        %v800 = vadd.f32 %v798, %v799
        %v801 = vrot.slane %v800, 1
        %v802 = vadd.f32 %v800, %v801
        %v803 = vrot.slane %v640, 4
        %v804 = vadd.f32 %v640, %v803
        %v805 = vrot.slane %v804, 2
        %v806 = vadd.f32 %v804, %v805
        %v807 = vrot.slane %v806, 1
        %v808 = vadd.f32 %v806, %v807
        %v809 = vrot.slane %v642, 4
        %v810 = vadd.f32 %v642, %v809
        %v811 = vrot.slane %v810, 2
        %v812 = vadd.f32 %v810, %v811
        %v813 = vrot.slane %v812, 1
        %v814 = vadd.f32 %v812, %v813
        %v815 = vrot.slane %v644, 4
        %v816 = vadd.f32 %v644, %v815
        %v817 = vrot.slane %v816, 2
        %v818 = vadd.f32 %v816, %v817
        %v819 = vrot.slane %v818, 1
        %v820 = vadd.f32 %v818, %v819
        %v821 = vrot.slane %v646, 4
        %v822 = vadd.f32 %v646, %v821
        %v823 = vrot.slane %v822, 2
        %v824 = vadd.f32 %v822, %v823
        %v825 = vrot.slane %v824, 1
        %v826 = vadd.f32 %v824, %v825
        %v827 = vrot.slane %v648, 4
        %v828 = vadd.f32 %v648, %v827
        %v829 = vrot.slane %v828, 2
        %v830 = vadd.f32 %v828, %v829
        %v831 = vrot.slane %v830, 1
        %v832 = vadd.f32 %v830, %v831
        %v833 = vrot.slane %v650, 4
        %v834 = vadd.f32 %v650, %v833
        %v835 = vrot.slane %v834, 2
        %v836 = vadd.f32 %v834, %v835
        %v837 = vrot.slane %v836, 1
        %v838 = vadd.f32 %v836, %v837
        %v839 = vrot.slane %v652, 4
        %v840 = vadd.f32 %v652, %v839
        %v841 = vrot.slane %v840, 2
        %v842 = vadd.f32 %v840, %v841
        %v843 = vrot.slane %v842, 1
        %v844 = vadd.f32 %v842, %v843
        %v845 = vrot.slane %v654, 4
        %v846 = vadd.f32 %v654, %v845
        %v847 = vrot.slane %v846, 2
        %v848 = vadd.f32 %v846, %v847
        %v849 = vrot.slane %v848, 1
        %v850 = vadd.f32 %v848, %v849
        %v851 = vrot.slane %v656, 4
        %v852 = vadd.f32 %v656, %v851
        %v853 = vrot.slane %v852, 2
        %v854 = vadd.f32 %v852, %v853
        %v855 = vrot.slane %v854, 1
        %v856 = vadd.f32 %v854, %v855
        %v857 = vrot.slane %v658, 4
        %v858 = vadd.f32 %v658, %v857
        %v859 = vrot.slane %v858, 2
        %v860 = vadd.f32 %v858, %v859
        %v861 = vrot.slane %v860, 1
        %v862 = vadd.f32 %v860, %v861
        %v863 = vrot.slane %v660, 4
        %v864 = vadd.f32 %v660, %v863
        %v865 = vrot.slane %v864, 2
        %v866 = vadd.f32 %v864, %v865
        %v867 = vrot.slane %v866, 1
        %v868 = vadd.f32 %v866, %v867
        %v869 = vrot.slane %v662, 4
        %v870 = vadd.f32 %v662, %v869
        %v871 = vrot.slane %v870, 2
        %v872 = vadd.f32 %v870, %v871
        %v873 = vrot.slane %v872, 1
        %v874 = vadd.f32 %v872, %v873
        %v875 = vrot.slane %v664, 4
        %v876 = vadd.f32 %v664, %v875
        %v877 = vrot.slane %v876, 2
        %v878 = vadd.f32 %v876, %v877
        %v879 = vrot.slane %v878, 1
        %v880 = vadd.f32 %v878, %v879
        %v881 = vrot.slane %v666, 4
        %v882 = vadd.f32 %v666, %v881
        %v883 = vrot.slane %v882, 2
        %v884 = vadd.f32 %v882, %v883
        %v885 = vrot.slane %v884, 1
        %v886 = vadd.f32 %v884, %v885
        %v887 = vrot.slane %v668, 4
        %v888 = vadd.f32 %v668, %v887
        %v889 = vrot.slane %v888, 2
        %v890 = vadd.f32 %v888, %v889
        %v891 = vrot.slane %v890, 1
        %v892 = vadd.f32 %v890, %v891
        %v893 = vrot.slane %v670, 4
        %v894 = vadd.f32 %v670, %v893
        %v895 = vrot.slane %v894, 2
        %v896 = vadd.f32 %v894, %v895
        %v897 = vrot.slane %v896, 1
        %v898 = vadd.f32 %v896, %v897
        %v899 = vrot.slane %v672, 4
        %v900 = vadd.f32 %v672, %v899
        %v901 = vrot.slane %v900, 2
        %v902 = vadd.f32 %v900, %v901
        %v903 = vrot.slane %v902, 1
        %v904 = vadd.f32 %v902, %v903
        %v905 = vrot.slane %v674, 4
        %v906 = vadd.f32 %v674, %v905
        %v907 = vrot.slane %v906, 2
        %v908 = vadd.f32 %v906, %v907
        %v909 = vrot.slane %v908, 1
        %v910 = vadd.f32 %v908, %v909
        %v911 = vrot.slane %v676, 4
        %v912 = vadd.f32 %v676, %v911
        %v913 = vrot.slane %v912, 2
        %v914 = vadd.f32 %v912, %v913
        %v915 = vrot.slane %v914, 1
        %v916 = vadd.f32 %v914, %v915
        %v917 = vrot.slane %v678, 4
        %v918 = vadd.f32 %v678, %v917
        %v919 = vrot.slane %v918, 2
        %v920 = vadd.f32 %v918, %v919
        %v921 = vrot.slane %v920, 1
        %v922 = vadd.f32 %v920, %v921
        %v923 = vrot.slane %v680, 4
        %v924 = vadd.f32 %v680, %v923
        %v925 = vrot.slane %v924, 2
        %v926 = vadd.f32 %v924, %v925
        %v927 = vrot.slane %v926, 1
        %v928 = vadd.f32 %v926, %v927
        %v929 = vrot.slane %v682, 4
        %v930 = vadd.f32 %v682, %v929
        %v931 = vrot.slane %v930, 2
        %v932 = vadd.f32 %v930, %v931
        %v933 = vrot.slane %v932, 1
        %v934 = vadd.f32 %v932, %v933
        %v935 = vrot.slane %v684, 4
        %v936 = vadd.f32 %v684, %v935
        %v937 = vrot.slane %v936, 2
        %v938 = vadd.f32 %v936, %v937
        %v939 = vrot.slane %v938, 1
        %v940 = vadd.f32 %v938, %v939
        %v941 = vrot.slane %v686, 4
        %v942 = vadd.f32 %v686, %v941
        %v943 = vrot.slane %v942, 2
        %v944 = vadd.f32 %v942, %v943
        %v945 = vrot.slane %v944, 1
        %v946 = vadd.f32 %v944, %v945
        %v947 = vrot.slane %v688, 4
        %v948 = vadd.f32 %v688, %v947
        %v949 = vrot.slane %v948, 2
        %v950 = vadd.f32 %v948, %v949
        %v951 = vrot.slane %v950, 1
        %v952 = vadd.f32 %v950, %v951
        %v953 = vrot.slane %v690, 4
        %v954 = vadd.f32 %v690, %v953
        %v955 = vrot.slane %v954, 2
        %v956 = vadd.f32 %v954, %v955
        %v957 = vrot.slane %v956, 1
        %v958 = vadd.f32 %v956, %v957
        %v959 = vrot.slane %v692, 4
        %v960 = vadd.f32 %v692, %v959
        %v961 = vrot.slane %v960, 2
        %v962 = vadd.f32 %v960, %v961
        %v963 = vrot.slane %v962, 1
        %v964 = vadd.f32 %v962, %v963
        %v965 = vrot.slane %v694, 4
        %v966 = vadd.f32 %v694, %v965
        %v967 = vrot.slane %v966, 2
        %v968 = vadd.f32 %v966, %v967
        %v969 = vrot.slane %v968, 1
        %v970 = vadd.f32 %v968, %v969
        %v971 = vrot.slane %v696, 4
        %v972 = vadd.f32 %v696, %v971
        %v973 = vrot.slane %v972, 2
        %v974 = vadd.f32 %v972, %v973
        %v975 = vrot.slane %v974, 1
        %v976 = vadd.f32 %v974, %v975
        %v977 = vrot.slane %v698, 4
        %v978 = vadd.f32 %v698, %v977
        %v979 = vrot.slane %v978, 2
        %v980 = vadd.f32 %v978, %v979
        %v981 = vrot.slane %v980, 1
        %v982 = vadd.f32 %v980, %v981
        %v983 = vrot.slane %v700, 4
        %v984 = vadd.f32 %v700, %v983
        %v985 = vrot.slane %v984, 2
        %v986 = vadd.f32 %v984, %v985
        %v987 = vrot.slane %v986, 1
        %v988 = vadd.f32 %v986, %v987
        %v989 = vrot.slane %v702, 4
        %v990 = vadd.f32 %v702, %v989
        %v991 = vrot.slane %v990, 2
        %v992 = vadd.f32 %v990, %v991
        %v993 = vrot.slane %v992, 1
        %v994 = vadd.f32 %v992, %v993
        %v995 = vrot.slane %v704, 4
        %v996 = vadd.f32 %v704, %v995
        %v997 = vrot.slane %v996, 2
        %v998 = vadd.f32 %v996, %v997
        %v999 = vrot.slane %v998, 1
        %v1000 = vadd.f32 %v998, %v999
        %v1001 = vrot.slane %v706, 4
        %v1002 = vadd.f32 %v706, %v1001
        %v1003 = vrot.slane %v1002, 2
        %v1004 = vadd.f32 %v1002, %v1003
        %v1005 = vrot.slane %v1004, 1
        %v1006 = vadd.f32 %v1004, %v1005
        %v1007 = vrot.slane %v708, 4
        %v1008 = vadd.f32 %v708, %v1007
        %v1009 = vrot.slane %v1008, 2
        %v1010 = vadd.f32 %v1008, %v1009
        %v1011 = vrot.slane %v1010, 1
        %v1012 = vadd.f32 %v1010, %v1011
        %v1013 = vrot.slane %v710, 4
        %v1014 = vadd.f32 %v710, %v1013
        %v1015 = vrot.slane %v1014, 2
        %v1016 = vadd.f32 %v1014, %v1015
        %v1017 = vrot.slane %v1016, 1
        %v1018 = vadd.f32 %v1016, %v1017
        %v1019 = vrot.slane %v712, 4
        %v1020 = vadd.f32 %v712, %v1019
        %v1021 = vrot.slane %v1020, 2
        %v1022 = vadd.f32 %v1020, %v1021
        %v1023 = vrot.slane %v1022, 1
        %v1024 = vadd.f32 %v1022, %v1023
        %v1025 = vrot.slane %v714, 4
        %v1026 = vadd.f32 %v714, %v1025
        %v1027 = vrot.slane %v1026, 2
        %v1028 = vadd.f32 %v1026, %v1027
        %v1029 = vrot.slane %v1028, 1
        %v1030 = vadd.f32 %v1028, %v1029
        %v1031 = vrot.slane %v716, 4
        %v1032 = vadd.f32 %v716, %v1031
        %v1033 = vrot.slane %v1032, 2
        %v1034 = vadd.f32 %v1032, %v1033
        %v1035 = vrot.slane %v1034, 1
        %v1036 = vadd.f32 %v1034, %v1035
        %v1037 = vrot.slane %v718, 4
        %v1038 = vadd.f32 %v718, %v1037
        %v1039 = vrot.slane %v1038, 2
        %v1040 = vadd.f32 %v1038, %v1039
        %v1041 = vrot.slane %v1040, 1
        %v1042 = vadd.f32 %v1040, %v1041
        %v1043 = vrot.slane %v720, 4
        %v1044 = vadd.f32 %v720, %v1043
        %v1045 = vrot.slane %v1044, 2
        %v1046 = vadd.f32 %v1044, %v1045
        %v1047 = vrot.slane %v1046, 1
        %v1048 = vadd.f32 %v1046, %v1047
        %v1049 = vrot.slane %v722, 4
        %v1050 = vadd.f32 %v722, %v1049
        %v1051 = vrot.slane %v1050, 2
        %v1052 = vadd.f32 %v1050, %v1051
        %v1053 = vrot.slane %v1052, 1
        %v1054 = vadd.f32 %v1052, %v1053
        %v1055 = vrot.slane %v724, 4
        %v1056 = vadd.f32 %v724, %v1055
        %v1057 = vrot.slane %v1056, 2
        %v1058 = vadd.f32 %v1056, %v1057
        %v1059 = vrot.slane %v1058, 1
        %v1060 = vadd.f32 %v1058, %v1059
        %v1061 = vrot.slane %v726, 4
        %v1062 = vadd.f32 %v726, %v1061
        %v1063 = vrot.slane %v1062, 2
        %v1064 = vadd.f32 %v1062, %v1063
        %v1065 = vrot.slane %v1064, 1
        %v1066 = vadd.f32 %v1064, %v1065
        %v1067 = vrot.slane %v728, 4
        %v1068 = vadd.f32 %v728, %v1067
        %v1069 = vrot.slane %v1068, 2
        %v1070 = vadd.f32 %v1068, %v1069
        %v1071 = vrot.slane %v1070, 1
        %v1072 = vadd.f32 %v1070, %v1071
        %v1073 = vrot.slane %v730, 4
        %v1074 = vadd.f32 %v730, %v1073
        %v1075 = vrot.slane %v1074, 2
        %v1076 = vadd.f32 %v1074, %v1075
        %v1077 = vrot.slane %v1076, 1
        %v1078 = vadd.f32 %v1076, %v1077
        %v1079 = vrot.slane %v732, 4
        %v1080 = vadd.f32 %v732, %v1079
        %v1081 = vrot.slane %v1080, 2
        %v1082 = vadd.f32 %v1080, %v1081
        %v1083 = vrot.slane %v1082, 1
        %v1084 = vadd.f32 %v1082, %v1083
        %v1085 = vrot.slane %v734, 4
        %v1086 = vadd.f32 %v734, %v1085
        %v1087 = vrot.slane %v1086, 2
        %v1088 = vadd.f32 %v1086, %v1087
        %v1089 = vrot.slane %v1088, 1
        %v1090 = vadd.f32 %v1088, %v1089
        %v1091 = vrot.slane %v736, 4
        %v1092 = vadd.f32 %v736, %v1091
        %v1093 = vrot.slane %v1092, 2
        %v1094 = vadd.f32 %v1092, %v1093
        %v1095 = vrot.slane %v1094, 1
        %v1096 = vadd.f32 %v1094, %v1095
        %v1097 = vrot.slane %v738, 4
        %v1098 = vadd.f32 %v738, %v1097
        %v1099 = vrot.slane %v1098, 2
        %v1100 = vadd.f32 %v1098, %v1099
        %v1101 = vrot.slane %v1100, 1
        %v1102 = vadd.f32 %v1100, %v1101
        %v1103 = vrot.slane %v740, 4
        %v1104 = vadd.f32 %v740, %v1103
        %v1105 = vrot.slane %v1104, 2
        %v1106 = vadd.f32 %v1104, %v1105
        %v1107 = vrot.slane %v1106, 1
        %v1108 = vadd.f32 %v1106, %v1107
        %v1109 = vrot.slane %v742, 4
        %v1110 = vadd.f32 %v742, %v1109
        %v1111 = vrot.slane %v1110, 2
        %v1112 = vadd.f32 %v1110, %v1111
        %v1113 = vrot.slane %v1112, 1
        %v1114 = vadd.f32 %v1112, %v1113
        %v1115 = vrot.slane %v744, 4
        %v1116 = vadd.f32 %v744, %v1115
        %v1117 = vrot.slane %v1116, 2
        %v1118 = vadd.f32 %v1116, %v1117
        %v1119 = vrot.slane %v1118, 1
        %v1120 = vadd.f32 %v1118, %v1119
        %v1121 = vrot.slane %v746, 4
        %v1122 = vadd.f32 %v746, %v1121
        %v1123 = vrot.slane %v1122, 2
        %v1124 = vadd.f32 %v1122, %v1123
        %v1125 = vrot.slane %v1124, 1
        %v1126 = vadd.f32 %v1124, %v1125
        %v1127 = vrot.slane %v748, 4
        %v1128 = vadd.f32 %v748, %v1127
        %v1129 = vrot.slane %v1128, 2
        %v1130 = vadd.f32 %v1128, %v1129
        %v1131 = vrot.slane %v1130, 1
        %v1132 = vadd.f32 %v1130, %v1131
        %v1133 = vmul.f32 %v429, %v429
        %v1134 = vmul.f32 %v430, %v430
        %v1135 = vmul.f32 %v431, %v431
        %v1136 = vmul.f32 %v432, %v432
        %v1137 = vmul.f32 %v433, %v433
        %v1138 = vmul.f32 %v434, %v434
        %v1139 = vmul.f32 %v435, %v435
        %v1140 = vmul.f32 %v436, %v436
        %v1141 = vmul.f32 %v437, %v437
        %v1142 = vmul.f32 %v438, %v438
        %v1143 = vmul.f32 %v439, %v439
        %v1144 = vmul.f32 %v440, %v440
        %v1145 = vmul.f32 %v441, %v441
        %v1146 = vmul.f32 %v442, %v442
        %v1147 = vmul.f32 %v443, %v443
        %v1148 = vmul.f32 %v444, %v444
        %v1149 = vmul.f32 %v445, %v445
        %v1150 = vmul.f32 %v446, %v446
        %v1151 = vmul.f32 %v447, %v447
        %v1152 = vmul.f32 %v448, %v448
        %v1153 = vmul.f32 %v449, %v449
        %v1154 = vmul.f32 %v450, %v450
        %v1155 = vmul.f32 %v451, %v451
        %v1156 = vmul.f32 %v452, %v452
        %v1157 = vmul.f32 %v453, %v453
        %v1158 = vmul.f32 %v454, %v454
        %v1159 = vmul.f32 %v455, %v455
        %v1160 = vmul.f32 %v456, %v456
        %v1161 = vmul.f32 %v457, %v457
        %v1162 = vmul.f32 %v458, %v458
        %v1163 = vmul.f32 %v459, %v459
        %v1164 = vmul.f32 %v460, %v460
        %v1165 = vmul.f32 %v461, %v461
        %v1166 = vmul.f32 %v462, %v462
        %v1167 = vmul.f32 %v463, %v463
        %v1168 = vmul.f32 %v464, %v464
        %v1169 = vmul.f32 %v465, %v465
        %v1170 = vmul.f32 %v466, %v466
        %v1171 = vmul.f32 %v467, %v467
        %v1172 = vmul.f32 %v468, %v468
        %v1173 = vmul.f32 %v469, %v469
        %v1174 = vmul.f32 %v470, %v470
        %v1175 = vmul.f32 %v471, %v471
        %v1176 = vmul.f32 %v472, %v472
        %v1177 = vmul.f32 %v473, %v473
        %v1178 = vmul.f32 %v474, %v474
        %v1179 = vmul.f32 %v475, %v475
        %v1180 = vmul.f32 %v476, %v476
        %v1181 = vmul.f32 %v477, %v477
        %v1182 = vmul.f32 %v478, %v478
        %v1183 = vmul.f32 %v479, %v479
        %v1184 = vmul.f32 %v480, %v480
        %v1185 = vmul.f32 %v481, %v481
        %v1186 = vmul.f32 %v482, %v482
        %v1187 = vmul.f32 %v483, %v483
        %v1188 = vmul.f32 %v484, %v484
        %v1189 = vmul.f32 %v485, %v485
        %v1190 = vmul.f32 %v486, %v486
        %v1191 = vmul.f32 %v487, %v487
        %v1192 = vmul.f32 %v488, %v488
        %v1193 = vmul.f32 %v489, %v489
        %v1194 = vmul.f32 %v490, %v490
        %v1195 = vmul.f32 %v491, %v491
        %v1196 = vmul.f32 %v492, %v492
        %v1197 = vmul.f32 %v493, %v493
        %v1198 = vmul.f32 %v494, %v494
        %v1199 = vmul.f32 %v495, %v495
        %v1200 = vmul.f32 %v496, %v496
        %v1201 = vmul.f32 %v497, %v497
        %v1202 = vmul.f32 %v498, %v498
        %v1203 = vmul.f32 %v499, %v499
        %v1204 = vmul.f32 %v500, %v500
        %v1205 = vmul.f32 %v501, %v501
        %v1206 = vmul.f32 %v502, %v502
        %v1207 = vmul.f32 %v503, %v503
        %v1208 = vmul.f32 %v504, %v504
        %v1209 = vmul.f32 %v505, %v505
        %v1210 = vmul.f32 %v506, %v506
        %v1211 = vmul.f32 %v507, %v507
        %v1212 = vmul.f32 %v508, %v508
        %v1213 = vmul.f32 %v509, %v509
        %v1214 = vmul.f32 %v510, %v510
        %v1215 = vmul.f32 %v511, %v511
        %v1216 = vmul.f32 %v512, %v512
        %v1217 = vmul.f32 %v513, %v513
        %v1218 = vmul.f32 %v514, %v514
        %v1219 = vmul.f32 %v515, %v515
        %v1220 = vmul.f32 %v516, %v516
        %v1221 = vmul.f32 %v517, %v517
        %v1222 = vmul.f32 %v518, %v518
        %v1223 = vmul.f32 %v519, %v519
        %v1224 = vmul.f32 %v520, %v520
        %v1225 = vmul.f32 %v521, %v521
        %v1226 = vmul.f32 %v522, %v522
        %v1227 = vmul.f32 %v523, %v523
        %v1228 = vmul.f32 %v524, %v524
        %v1229 = vmul.f32 %v525, %v525
        %v1230 = vmul.f32 %v526, %v526
        %v1231 = vmul.f32 %v527, %v527
        %v1232 = vmul.f32 %v528, %v528
        %v1233 = vmul.f32 %v529, %v529
        %v1234 = vmul.f32 %v530, %v530
        %v1235 = vmul.f32 %v531, %v531
        %v1236 = vmul.f32 %v532, %v532
        %v1237 = vmul.f32 %v533, %v533
        %v1238 = vmul.f32 %v534, %v534
        %v1239 = vmul.f32 %v535, %v535
        %v1240 = vmul.f32 %v536, %v536
        %v1241 = vmul.f32 %v537, %v537
        %v1242 = vmul.f32 %v538, %v538
        %v1243 = vmul.f32 %v539, %v539
        %v1244 = vmul.f32 %v540, %v540
        %v1245 = vmul.f32 %v541, %v541
        %v1246 = vmul.f32 %v542, %v542
        %v1247 = vmul.f32 %v543, %v543
        %v1248 = vmul.f32 %v544, %v544
        %v1249 = vmul.f32 %v545, %v545
        %v1250 = vmul.f32 %v546, %v546
        %v1251 = vmul.f32 %v547, %v547
        %v1252 = vmul.f32 %v548, %v548
        %v1253 = vmul.f32 %v549, %v549
        %v1254 = vmul.f32 %v550, %v550
        %v1255 = vmul.f32 %v551, %v551
        %v1256 = vmul.f32 %v552, %v552
        %v1257 = vmul.f32 %v553, %v553
        %v1258 = vmul.f32 %v554, %v554
        %v1259 = vmul.f32 %v555, %v555
        %v1260 = vmul.f32 %v556, %v556
        %v1261 = vadd.f32 %v1133, %v1197
        %v1262 = vadd.f32 %v1134, %v1198
        %v1263 = vadd.f32 %v1135, %v1199
        %v1264 = vadd.f32 %v1136, %v1200
        %v1265 = vadd.f32 %v1137, %v1201
        %v1266 = vadd.f32 %v1138, %v1202
        %v1267 = vadd.f32 %v1139, %v1203
        %v1268 = vadd.f32 %v1140, %v1204
        %v1269 = vadd.f32 %v1141, %v1205
        %v1270 = vadd.f32 %v1142, %v1206
        %v1271 = vadd.f32 %v1143, %v1207
        %v1272 = vadd.f32 %v1144, %v1208
        %v1273 = vadd.f32 %v1145, %v1209
        %v1274 = vadd.f32 %v1146, %v1210
        %v1275 = vadd.f32 %v1147, %v1211
        %v1276 = vadd.f32 %v1148, %v1212
        %v1277 = vadd.f32 %v1149, %v1213
        %v1278 = vadd.f32 %v1150, %v1214
        %v1279 = vadd.f32 %v1151, %v1215
        %v1280 = vadd.f32 %v1152, %v1216
        %v1281 = vadd.f32 %v1153, %v1217
        %v1282 = vadd.f32 %v1154, %v1218
        %v1283 = vadd.f32 %v1155, %v1219
        %v1284 = vadd.f32 %v1156, %v1220
        %v1285 = vadd.f32 %v1157, %v1221
        %v1286 = vadd.f32 %v1158, %v1222
        %v1287 = vadd.f32 %v1159, %v1223
        %v1288 = vadd.f32 %v1160, %v1224
        %v1289 = vadd.f32 %v1161, %v1225
        %v1290 = vadd.f32 %v1162, %v1226
        %v1291 = vadd.f32 %v1163, %v1227
        %v1292 = vadd.f32 %v1164, %v1228
        %v1293 = vadd.f32 %v1165, %v1229
        %v1294 = vadd.f32 %v1166, %v1230
        %v1295 = vadd.f32 %v1167, %v1231
        %v1296 = vadd.f32 %v1168, %v1232
        %v1297 = vadd.f32 %v1169, %v1233
        %v1298 = vadd.f32 %v1170, %v1234
        %v1299 = vadd.f32 %v1171, %v1235
        %v1300 = vadd.f32 %v1172, %v1236
        %v1301 = vadd.f32 %v1173, %v1237
        %v1302 = vadd.f32 %v1174, %v1238
        %v1303 = vadd.f32 %v1175, %v1239
        %v1304 = vadd.f32 %v1176, %v1240
        %v1305 = vadd.f32 %v1177, %v1241
        %v1306 = vadd.f32 %v1178, %v1242
        %v1307 = vadd.f32 %v1179, %v1243
        %v1308 = vadd.f32 %v1180, %v1244
        %v1309 = vadd.f32 %v1181, %v1245
        %v1310 = vadd.f32 %v1182, %v1246
        %v1311 = vadd.f32 %v1183, %v1247
        %v1312 = vadd.f32 %v1184, %v1248
        %v1313 = vadd.f32 %v1185, %v1249
        %v1314 = vadd.f32 %v1186, %v1250
        %v1315 = vadd.f32 %v1187, %v1251
        %v1316 = vadd.f32 %v1188, %v1252
        %v1317 = vadd.f32 %v1189, %v1253
        %v1318 = vadd.f32 %v1190, %v1254
        %v1319 = vadd.f32 %v1191, %v1255
        %v1320 = vadd.f32 %v1192, %v1256
        %v1321 = vadd.f32 %v1193, %v1257
        %v1322 = vadd.f32 %v1194, %v1258
        %v1323 = vadd.f32 %v1195, %v1259
        %v1324 = vadd.f32 %v1196, %v1260
        %1325 = vadd.xlane.f32.xlu0 %v1261
        %v1326 = vpop.xlane.xlu0 %1325
        %1327 = vadd.xlane.f32.xlu0 %v1262
        %v1328 = vpop.xlane.xlu0 %1327
        %1329 = vadd.xlane.f32.xlu0 %v1263
        %v1330 = vpop.xlane.xlu0 %1329
        %1331 = vadd.xlane.f32.xlu0 %v1264
        %v1332 = vpop.xlane.xlu0 %1331
        %1333 = vadd.xlane.f32.xlu0 %v1265
        %v1334 = vpop.xlane.xlu0 %1333
        %1335 = vadd.xlane.f32.xlu0 %v1266
        %v1336 = vpop.xlane.xlu0 %1335
        %1337 = vadd.xlane.f32.xlu0 %v1267
        %v1338 = vpop.xlane.xlu0 %1337
        %1339 = vadd.xlane.f32.xlu0 %v1268
        %v1340 = vpop.xlane.xlu0 %1339
        %1341 = vadd.xlane.f32.xlu0 %v1269
        %v1342 = vpop.xlane.xlu0 %1341
        %1343 = vadd.xlane.f32.xlu0 %v1270
        %v1344 = vpop.xlane.xlu0 %1343
        %1345 = vadd.xlane.f32.xlu0 %v1271
        %v1346 = vpop.xlane.xlu0 %1345
        %1347 = vadd.xlane.f32.xlu0 %v1272
        %v1348 = vpop.xlane.xlu0 %1347
        %1349 = vadd.xlane.f32.xlu0 %v1273
        %v1350 = vpop.xlane.xlu0 %1349
        %1351 = vadd.xlane.f32.xlu0 %v1274
        %v1352 = vpop.xlane.xlu0 %1351
        %1353 = vadd.xlane.f32.xlu0 %v1275
        %v1354 = vpop.xlane.xlu0 %1353
        %1355 = vadd.xlane.f32.xlu0 %v1276
        %v1356 = vpop.xlane.xlu0 %1355
        %1357 = vadd.xlane.f32.xlu0 %v1277
        %v1358 = vpop.xlane.xlu0 %1357
        %1359 = vadd.xlane.f32.xlu0 %v1278
        %v1360 = vpop.xlane.xlu0 %1359
        %1361 = vadd.xlane.f32.xlu0 %v1279
        %v1362 = vpop.xlane.xlu0 %1361
        %1363 = vadd.xlane.f32.xlu0 %v1280
        %v1364 = vpop.xlane.xlu0 %1363
        %1365 = vadd.xlane.f32.xlu0 %v1281
        %v1366 = vpop.xlane.xlu0 %1365
        %1367 = vadd.xlane.f32.xlu0 %v1282
        %v1368 = vpop.xlane.xlu0 %1367
        %1369 = vadd.xlane.f32.xlu0 %v1283
        %v1370 = vpop.xlane.xlu0 %1369
        %1371 = vadd.xlane.f32.xlu0 %v1284
        %v1372 = vpop.xlane.xlu0 %1371
        %1373 = vadd.xlane.f32.xlu0 %v1285
        %v1374 = vpop.xlane.xlu0 %1373
        %1375 = vadd.xlane.f32.xlu0 %v1286
        %v1376 = vpop.xlane.xlu0 %1375
        %1377 = vadd.xlane.f32.xlu0 %v1287
        %v1378 = vpop.xlane.xlu0 %1377
        %1379 = vadd.xlane.f32.xlu0 %v1288
        %v1380 = vpop.xlane.xlu0 %1379
        %1381 = vadd.xlane.f32.xlu0 %v1289
        %v1382 = vpop.xlane.xlu0 %1381
        %1383 = vadd.xlane.f32.xlu0 %v1290
        %v1384 = vpop.xlane.xlu0 %1383
        %1385 = vadd.xlane.f32.xlu0 %v1291
        %v1386 = vpop.xlane.xlu0 %1385
        %1387 = vadd.xlane.f32.xlu0 %v1292
        %v1388 = vpop.xlane.xlu0 %1387
        %1389 = vadd.xlane.f32.xlu0 %v1293
        %v1390 = vpop.xlane.xlu0 %1389
        %1391 = vadd.xlane.f32.xlu0 %v1294
        %v1392 = vpop.xlane.xlu0 %1391
        %1393 = vadd.xlane.f32.xlu0 %v1295
        %v1394 = vpop.xlane.xlu0 %1393
        %1395 = vadd.xlane.f32.xlu0 %v1296
        %v1396 = vpop.xlane.xlu0 %1395
        %1397 = vadd.xlane.f32.xlu0 %v1297
        %v1398 = vpop.xlane.xlu0 %1397
        %1399 = vadd.xlane.f32.xlu0 %v1298
        %v1400 = vpop.xlane.xlu0 %1399
        %1401 = vadd.xlane.f32.xlu0 %v1299
        %v1402 = vpop.xlane.xlu0 %1401
        %1403 = vadd.xlane.f32.xlu0 %v1300
        %v1404 = vpop.xlane.xlu0 %1403
        %1405 = vadd.xlane.f32.xlu0 %v1301
        %v1406 = vpop.xlane.xlu0 %1405
        %1407 = vadd.xlane.f32.xlu0 %v1302
        %v1408 = vpop.xlane.xlu0 %1407
        %1409 = vadd.xlane.f32.xlu0 %v1303
        %v1410 = vpop.xlane.xlu0 %1409
        %1411 = vadd.xlane.f32.xlu0 %v1304
        %v1412 = vpop.xlane.xlu0 %1411
        %1413 = vadd.xlane.f32.xlu0 %v1305
        %v1414 = vpop.xlane.xlu0 %1413
        %1415 = vadd.xlane.f32.xlu0 %v1306
        %v1416 = vpop.xlane.xlu0 %1415
        %1417 = vadd.xlane.f32.xlu0 %v1307
        %v1418 = vpop.xlane.xlu0 %1417
        %1419 = vadd.xlane.f32.xlu0 %v1308
        %v1420 = vpop.xlane.xlu0 %1419
        %1421 = vadd.xlane.f32.xlu0 %v1309
        %v1422 = vpop.xlane.xlu0 %1421
        %1423 = vadd.xlane.f32.xlu0 %v1310
        %v1424 = vpop.xlane.xlu0 %1423
        %1425 = vadd.xlane.f32.xlu0 %v1311
        %v1426 = vpop.xlane.xlu0 %1425
        %1427 = vadd.xlane.f32.xlu0 %v1312
        %v1428 = vpop.xlane.xlu0 %1427
        %1429 = vadd.xlane.f32.xlu0 %v1313
        %v1430 = vpop.xlane.xlu0 %1429
        %1431 = vadd.xlane.f32.xlu0 %v1314
        %v1432 = vpop.xlane.xlu0 %1431
        %1433 = vadd.xlane.f32.xlu0 %v1315
        %v1434 = vpop.xlane.xlu0 %1433
        %1435 = vadd.xlane.f32.xlu0 %v1316
        %v1436 = vpop.xlane.xlu0 %1435
        %1437 = vadd.xlane.f32.xlu0 %v1317
        %v1438 = vpop.xlane.xlu0 %1437
        %1439 = vadd.xlane.f32.xlu0 %v1318
        %v1440 = vpop.xlane.xlu0 %1439
        %1441 = vadd.xlane.f32.xlu0 %v1319
        %v1442 = vpop.xlane.xlu0 %1441
        %1443 = vadd.xlane.f32.xlu0 %v1320
        %v1444 = vpop.xlane.xlu0 %1443
        %1445 = vadd.xlane.f32.xlu0 %v1321
        %v1446 = vpop.xlane.xlu0 %1445
        %1447 = vadd.xlane.f32.xlu0 %v1322
        %v1448 = vpop.xlane.xlu0 %1447
        %1449 = vadd.xlane.f32.xlu0 %v1323
        %v1450 = vpop.xlane.xlu0 %1449
        %1451 = vadd.xlane.f32.xlu0 %v1324
        %v1452 = vpop.xlane.xlu0 %1451
        %v1453 = vrot.slane %v1326, 4
        %v1454 = vadd.f32 %v1326, %v1453
        %v1455 = vrot.slane %v1454, 2
        %v1456 = vadd.f32 %v1454, %v1455
        %v1457 = vrot.slane %v1456, 1
        %v1458 = vadd.f32 %v1456, %v1457
        %v1459 = vrot.slane %v1328, 4
        %v1460 = vadd.f32 %v1328, %v1459
        %v1461 = vrot.slane %v1460, 2
        %v1462 = vadd.f32 %v1460, %v1461
        %v1463 = vrot.slane %v1462, 1
        %v1464 = vadd.f32 %v1462, %v1463
        %v1465 = vrot.slane %v1330, 4
        %v1466 = vadd.f32 %v1330, %v1465
        %v1467 = vrot.slane %v1466, 2
        %v1468 = vadd.f32 %v1466, %v1467
        %v1469 = vrot.slane %v1468, 1
        %v1470 = vadd.f32 %v1468, %v1469
        %v1471 = vrot.slane %v1332, 4
        %v1472 = vadd.f32 %v1332, %v1471
        %v1473 = vrot.slane %v1472, 2
        %v1474 = vadd.f32 %v1472, %v1473
        %v1475 = vrot.slane %v1474, 1
        %v1476 = vadd.f32 %v1474, %v1475
        %v1477 = vrot.slane %v1334, 4
        %v1478 = vadd.f32 %v1334, %v1477
        %v1479 = vrot.slane %v1478, 2
        %v1480 = vadd.f32 %v1478, %v1479
        %v1481 = vrot.slane %v1480, 1
        %v1482 = vadd.f32 %v1480, %v1481
        %v1483 = vrot.slane %v1336, 4
        %v1484 = vadd.f32 %v1336, %v1483
        %v1485 = vrot.slane %v1484, 2
        %v1486 = vadd.f32 %v1484, %v1485
        %v1487 = vrot.slane %v1486, 1
        %v1488 = vadd.f32 %v1486, %v1487
        %v1489 = vrot.slane %v1338, 4
        %v1490 = vadd.f32 %v1338, %v1489
        %v1491 = vrot.slane %v1490, 2
        %v1492 = vadd.f32 %v1490, %v1491
        %v1493 = vrot.slane %v1492, 1
        %v1494 = vadd.f32 %v1492, %v1493
        %v1495 = vrot.slane %v1340, 4
        %v1496 = vadd.f32 %v1340, %v1495
        %v1497 = vrot.slane %v1496, 2
        %v1498 = vadd.f32 %v1496, %v1497
        %v1499 = vrot.slane %v1498, 1
        %v1500 = vadd.f32 %v1498, %v1499
        %v1501 = vrot.slane %v1342, 4
        %v1502 = vadd.f32 %v1342, %v1501
        %v1503 = vrot.slane %v1502, 2
        %v1504 = vadd.f32 %v1502, %v1503
        %v1505 = vrot.slane %v1504, 1
        %v1506 = vadd.f32 %v1504, %v1505
        %v1507 = vrot.slane %v1344, 4
        %v1508 = vadd.f32 %v1344, %v1507
        %v1509 = vrot.slane %v1508, 2
        %v1510 = vadd.f32 %v1508, %v1509
        %v1511 = vrot.slane %v1510, 1
        %v1512 = vadd.f32 %v1510, %v1511
        %v1513 = vrot.slane %v1346, 4
        %v1514 = vadd.f32 %v1346, %v1513
        %v1515 = vrot.slane %v1514, 2
        %v1516 = vadd.f32 %v1514, %v1515
        %v1517 = vrot.slane %v1516, 1
        %v1518 = vadd.f32 %v1516, %v1517
        %v1519 = vrot.slane %v1348, 4
        %v1520 = vadd.f32 %v1348, %v1519
        %v1521 = vrot.slane %v1520, 2
        %v1522 = vadd.f32 %v1520, %v1521
        %v1523 = vrot.slane %v1522, 1
        %v1524 = vadd.f32 %v1522, %v1523
        %v1525 = vrot.slane %v1350, 4
        %v1526 = vadd.f32 %v1350, %v1525
        %v1527 = vrot.slane %v1526, 2
        %v1528 = vadd.f32 %v1526, %v1527
        %v1529 = vrot.slane %v1528, 1
        %v1530 = vadd.f32 %v1528, %v1529
        %v1531 = vrot.slane %v1352, 4
        %v1532 = vadd.f32 %v1352, %v1531
        %v1533 = vrot.slane %v1532, 2
        %v1534 = vadd.f32 %v1532, %v1533
        %v1535 = vrot.slane %v1534, 1
        %v1536 = vadd.f32 %v1534, %v1535
        %v1537 = vrot.slane %v1354, 4
        %v1538 = vadd.f32 %v1354, %v1537
        %v1539 = vrot.slane %v1538, 2
        %v1540 = vadd.f32 %v1538, %v1539
        %v1541 = vrot.slane %v1540, 1
        %v1542 = vadd.f32 %v1540, %v1541
        %v1543 = vrot.slane %v1356, 4
        %v1544 = vadd.f32 %v1356, %v1543
        %v1545 = vrot.slane %v1544, 2
        %v1546 = vadd.f32 %v1544, %v1545
        %v1547 = vrot.slane %v1546, 1
        %v1548 = vadd.f32 %v1546, %v1547
        %v1549 = vrot.slane %v1358, 4
        %v1550 = vadd.f32 %v1358, %v1549
        %v1551 = vrot.slane %v1550, 2
        %v1552 = vadd.f32 %v1550, %v1551
        %v1553 = vrot.slane %v1552, 1
        %v1554 = vadd.f32 %v1552, %v1553
        %v1555 = vrot.slane %v1360, 4
        %v1556 = vadd.f32 %v1360, %v1555
        %v1557 = vrot.slane %v1556, 2
        %v1558 = vadd.f32 %v1556, %v1557
        %v1559 = vrot.slane %v1558, 1
        %v1560 = vadd.f32 %v1558, %v1559
        %v1561 = vrot.slane %v1362, 4
        %v1562 = vadd.f32 %v1362, %v1561
        %v1563 = vrot.slane %v1562, 2
        %v1564 = vadd.f32 %v1562, %v1563
        %v1565 = vrot.slane %v1564, 1
        %v1566 = vadd.f32 %v1564, %v1565
        %v1567 = vrot.slane %v1364, 4
        %v1568 = vadd.f32 %v1364, %v1567
        %v1569 = vrot.slane %v1568, 2
        %v1570 = vadd.f32 %v1568, %v1569
        %v1571 = vrot.slane %v1570, 1
        %v1572 = vadd.f32 %v1570, %v1571
        %v1573 = vrot.slane %v1366, 4
        %v1574 = vadd.f32 %v1366, %v1573
        %v1575 = vrot.slane %v1574, 2
        %v1576 = vadd.f32 %v1574, %v1575
        %v1577 = vrot.slane %v1576, 1
        %v1578 = vadd.f32 %v1576, %v1577
        %v1579 = vrot.slane %v1368, 4
        %v1580 = vadd.f32 %v1368, %v1579
        %v1581 = vrot.slane %v1580, 2
        %v1582 = vadd.f32 %v1580, %v1581
        %v1583 = vrot.slane %v1582, 1
        %v1584 = vadd.f32 %v1582, %v1583
        %v1585 = vrot.slane %v1370, 4
        %v1586 = vadd.f32 %v1370, %v1585
        %v1587 = vrot.slane %v1586, 2
        %v1588 = vadd.f32 %v1586, %v1587
        %v1589 = vrot.slane %v1588, 1
        %v1590 = vadd.f32 %v1588, %v1589
        %v1591 = vrot.slane %v1372, 4
        %v1592 = vadd.f32 %v1372, %v1591
        %v1593 = vrot.slane %v1592, 2
        %v1594 = vadd.f32 %v1592, %v1593
        %v1595 = vrot.slane %v1594, 1
        %v1596 = vadd.f32 %v1594, %v1595
        %v1597 = vrot.slane %v1374, 4
        %v1598 = vadd.f32 %v1374, %v1597
        %v1599 = vrot.slane %v1598, 2
        %v1600 = vadd.f32 %v1598, %v1599
        %v1601 = vrot.slane %v1600, 1
        %v1602 = vadd.f32 %v1600, %v1601
        %v1603 = vrot.slane %v1376, 4
        %v1604 = vadd.f32 %v1376, %v1603
        %v1605 = vrot.slane %v1604, 2
        %v1606 = vadd.f32 %v1604, %v1605
        %v1607 = vrot.slane %v1606, 1
        %v1608 = vadd.f32 %v1606, %v1607
        %v1609 = vrot.slane %v1378, 4
        %v1610 = vadd.f32 %v1378, %v1609
        %v1611 = vrot.slane %v1610, 2
        %v1612 = vadd.f32 %v1610, %v1611
        %v1613 = vrot.slane %v1612, 1
        %v1614 = vadd.f32 %v1612, %v1613
        %v1615 = vrot.slane %v1380, 4
        %v1616 = vadd.f32 %v1380, %v1615
        %v1617 = vrot.slane %v1616, 2
        %v1618 = vadd.f32 %v1616, %v1617
        %v1619 = vrot.slane %v1618, 1
        %v1620 = vadd.f32 %v1618, %v1619
        %v1621 = vrot.slane %v1382, 4
        %v1622 = vadd.f32 %v1382, %v1621
        %v1623 = vrot.slane %v1622, 2
        %v1624 = vadd.f32 %v1622, %v1623
        %v1625 = vrot.slane %v1624, 1
        %v1626 = vadd.f32 %v1624, %v1625
        %v1627 = vrot.slane %v1384, 4
        %v1628 = vadd.f32 %v1384, %v1627
        %v1629 = vrot.slane %v1628, 2
        %v1630 = vadd.f32 %v1628, %v1629
        %v1631 = vrot.slane %v1630, 1
        %v1632 = vadd.f32 %v1630, %v1631
        %v1633 = vrot.slane %v1386, 4
        %v1634 = vadd.f32 %v1386, %v1633
        %v1635 = vrot.slane %v1634, 2
        %v1636 = vadd.f32 %v1634, %v1635
        %v1637 = vrot.slane %v1636, 1
        %v1638 = vadd.f32 %v1636, %v1637
        %v1639 = vrot.slane %v1388, 4
        %v1640 = vadd.f32 %v1388, %v1639
        %v1641 = vrot.slane %v1640, 2
        %v1642 = vadd.f32 %v1640, %v1641
        %v1643 = vrot.slane %v1642, 1
        %v1644 = vadd.f32 %v1642, %v1643
        %v1645 = vrot.slane %v1390, 4
        %v1646 = vadd.f32 %v1390, %v1645
        %v1647 = vrot.slane %v1646, 2
        %v1648 = vadd.f32 %v1646, %v1647
        %v1649 = vrot.slane %v1648, 1
        %v1650 = vadd.f32 %v1648, %v1649
        %v1651 = vrot.slane %v1392, 4
        %v1652 = vadd.f32 %v1392, %v1651
        %v1653 = vrot.slane %v1652, 2
        %v1654 = vadd.f32 %v1652, %v1653
        %v1655 = vrot.slane %v1654, 1
        %v1656 = vadd.f32 %v1654, %v1655
        %v1657 = vrot.slane %v1394, 4
        %v1658 = vadd.f32 %v1394, %v1657
        %v1659 = vrot.slane %v1658, 2
        %v1660 = vadd.f32 %v1658, %v1659
        %v1661 = vrot.slane %v1660, 1
        %v1662 = vadd.f32 %v1660, %v1661
        %v1663 = vrot.slane %v1396, 4
        %v1664 = vadd.f32 %v1396, %v1663
        %v1665 = vrot.slane %v1664, 2
        %v1666 = vadd.f32 %v1664, %v1665
        %v1667 = vrot.slane %v1666, 1
        %v1668 = vadd.f32 %v1666, %v1667
        %v1669 = vrot.slane %v1398, 4
        %v1670 = vadd.f32 %v1398, %v1669
        %v1671 = vrot.slane %v1670, 2
        %v1672 = vadd.f32 %v1670, %v1671
        %v1673 = vrot.slane %v1672, 1
        %v1674 = vadd.f32 %v1672, %v1673
        %v1675 = vrot.slane %v1400, 4
        %v1676 = vadd.f32 %v1400, %v1675
        %v1677 = vrot.slane %v1676, 2
        %v1678 = vadd.f32 %v1676, %v1677
        %v1679 = vrot.slane %v1678, 1
        %v1680 = vadd.f32 %v1678, %v1679
        %v1681 = vrot.slane %v1402, 4
        %v1682 = vadd.f32 %v1402, %v1681
        %v1683 = vrot.slane %v1682, 2
        %v1684 = vadd.f32 %v1682, %v1683
        %v1685 = vrot.slane %v1684, 1
        %v1686 = vadd.f32 %v1684, %v1685
        %v1687 = vrot.slane %v1404, 4
        %v1688 = vadd.f32 %v1404, %v1687
        %v1689 = vrot.slane %v1688, 2
        %v1690 = vadd.f32 %v1688, %v1689
        %v1691 = vrot.slane %v1690, 1
        %v1692 = vadd.f32 %v1690, %v1691
        %v1693 = vrot.slane %v1406, 4
        %v1694 = vadd.f32 %v1406, %v1693
        %v1695 = vrot.slane %v1694, 2
        %v1696 = vadd.f32 %v1694, %v1695
        %v1697 = vrot.slane %v1696, 1
        %v1698 = vadd.f32 %v1696, %v1697
        %v1699 = vrot.slane %v1408, 4
        %v1700 = vadd.f32 %v1408, %v1699
        %v1701 = vrot.slane %v1700, 2
        %v1702 = vadd.f32 %v1700, %v1701
        %v1703 = vrot.slane %v1702, 1
        %v1704 = vadd.f32 %v1702, %v1703
        %v1705 = vrot.slane %v1410, 4
        %v1706 = vadd.f32 %v1410, %v1705
        %v1707 = vrot.slane %v1706, 2
        %v1708 = vadd.f32 %v1706, %v1707
        %v1709 = vrot.slane %v1708, 1
        %v1710 = vadd.f32 %v1708, %v1709
        %v1711 = vrot.slane %v1412, 4
        %v1712 = vadd.f32 %v1412, %v1711
        %v1713 = vrot.slane %v1712, 2
        %v1714 = vadd.f32 %v1712, %v1713
        %v1715 = vrot.slane %v1714, 1
        %v1716 = vadd.f32 %v1714, %v1715
        %v1717 = vrot.slane %v1414, 4
        %v1718 = vadd.f32 %v1414, %v1717
        %v1719 = vrot.slane %v1718, 2
        %v1720 = vadd.f32 %v1718, %v1719
        %v1721 = vrot.slane %v1720, 1
        %v1722 = vadd.f32 %v1720, %v1721
        %v1723 = vrot.slane %v1416, 4
        %v1724 = vadd.f32 %v1416, %v1723
        %v1725 = vrot.slane %v1724, 2
        %v1726 = vadd.f32 %v1724, %v1725
        %v1727 = vrot.slane %v1726, 1
        %v1728 = vadd.f32 %v1726, %v1727
        %v1729 = vrot.slane %v1418, 4
        %v1730 = vadd.f32 %v1418, %v1729
        %v1731 = vrot.slane %v1730, 2
        %v1732 = vadd.f32 %v1730, %v1731
        %v1733 = vrot.slane %v1732, 1
        %v1734 = vadd.f32 %v1732, %v1733
        %v1735 = vrot.slane %v1420, 4
        %v1736 = vadd.f32 %v1420, %v1735
        %v1737 = vrot.slane %v1736, 2
        %v1738 = vadd.f32 %v1736, %v1737
        %v1739 = vrot.slane %v1738, 1
        %v1740 = vadd.f32 %v1738, %v1739
        %v1741 = vrot.slane %v1422, 4
        %v1742 = vadd.f32 %v1422, %v1741
        %v1743 = vrot.slane %v1742, 2
        %v1744 = vadd.f32 %v1742, %v1743
        %v1745 = vrot.slane %v1744, 1
        %v1746 = vadd.f32 %v1744, %v1745
        %v1747 = vrot.slane %v1424, 4
        %v1748 = vadd.f32 %v1424, %v1747
        %v1749 = vrot.slane %v1748, 2
        %v1750 = vadd.f32 %v1748, %v1749
        %v1751 = vrot.slane %v1750, 1
        %v1752 = vadd.f32 %v1750, %v1751
        %v1753 = vrot.slane %v1426, 4
        %v1754 = vadd.f32 %v1426, %v1753
        %v1755 = vrot.slane %v1754, 2
        %v1756 = vadd.f32 %v1754, %v1755
        %v1757 = vrot.slane %v1756, 1
        %v1758 = vadd.f32 %v1756, %v1757
        %v1759 = vrot.slane %v1428, 4
        %v1760 = vadd.f32 %v1428, %v1759
        %v1761 = vrot.slane %v1760, 2
        %v1762 = vadd.f32 %v1760, %v1761
        %v1763 = vrot.slane %v1762, 1
        %v1764 = vadd.f32 %v1762, %v1763
        %v1765 = vrot.slane %v1430, 4
        %v1766 = vadd.f32 %v1430, %v1765
        %v1767 = vrot.slane %v1766, 2
        %v1768 = vadd.f32 %v1766, %v1767
        %v1769 = vrot.slane %v1768, 1
        %v1770 = vadd.f32 %v1768, %v1769
        %v1771 = vrot.slane %v1432, 4
        %v1772 = vadd.f32 %v1432, %v1771
        %v1773 = vrot.slane %v1772, 2
        %v1774 = vadd.f32 %v1772, %v1773
        %v1775 = vrot.slane %v1774, 1
        %v1776 = vadd.f32 %v1774, %v1775
        %v1777 = vrot.slane %v1434, 4
        %v1778 = vadd.f32 %v1434, %v1777
        %v1779 = vrot.slane %v1778, 2
        %v1780 = vadd.f32 %v1778, %v1779
        %v1781 = vrot.slane %v1780, 1
        %v1782 = vadd.f32 %v1780, %v1781
        %v1783 = vrot.slane %v1436, 4
        %v1784 = vadd.f32 %v1436, %v1783
        %v1785 = vrot.slane %v1784, 2
        %v1786 = vadd.f32 %v1784, %v1785
        %v1787 = vrot.slane %v1786, 1
        %v1788 = vadd.f32 %v1786, %v1787
        %v1789 = vrot.slane %v1438, 4
        %v1790 = vadd.f32 %v1438, %v1789
        %v1791 = vrot.slane %v1790, 2
        %v1792 = vadd.f32 %v1790, %v1791
        %v1793 = vrot.slane %v1792, 1
        %v1794 = vadd.f32 %v1792, %v1793
        %v1795 = vrot.slane %v1440, 4
        %v1796 = vadd.f32 %v1440, %v1795
        %v1797 = vrot.slane %v1796, 2
        %v1798 = vadd.f32 %v1796, %v1797
        %v1799 = vrot.slane %v1798, 1
        %v1800 = vadd.f32 %v1798, %v1799
        %v1801 = vrot.slane %v1442, 4
        %v1802 = vadd.f32 %v1442, %v1801
        %v1803 = vrot.slane %v1802, 2
        %v1804 = vadd.f32 %v1802, %v1803
        %v1805 = vrot.slane %v1804, 1
        %v1806 = vadd.f32 %v1804, %v1805
        %v1807 = vrot.slane %v1444, 4
        %v1808 = vadd.f32 %v1444, %v1807
        %v1809 = vrot.slane %v1808, 2
        %v1810 = vadd.f32 %v1808, %v1809
        %v1811 = vrot.slane %v1810, 1
        %v1812 = vadd.f32 %v1810, %v1811
        %v1813 = vrot.slane %v1446, 4
        %v1814 = vadd.f32 %v1446, %v1813
        %v1815 = vrot.slane %v1814, 2
        %v1816 = vadd.f32 %v1814, %v1815
        %v1817 = vrot.slane %v1816, 1
        %v1818 = vadd.f32 %v1816, %v1817
        %v1819 = vrot.slane %v1448, 4
        %v1820 = vadd.f32 %v1448, %v1819
        %v1821 = vrot.slane %v1820, 2
        %v1822 = vadd.f32 %v1820, %v1821
        %v1823 = vrot.slane %v1822, 1
        %v1824 = vadd.f32 %v1822, %v1823
        %v1825 = vrot.slane %v1450, 4
        %v1826 = vadd.f32 %v1450, %v1825
        %v1827 = vrot.slane %v1826, 2
        %v1828 = vadd.f32 %v1826, %v1827
        %v1829 = vrot.slane %v1828, 1
        %v1830 = vadd.f32 %v1828, %v1829
        %v1831 = vrot.slane %v1452, 4
        %v1832 = vadd.f32 %v1452, %v1831
        %v1833 = vrot.slane %v1832, 2
        %v1834 = vadd.f32 %v1832, %v1833
        %v1835 = vrot.slane %v1834, 1
        %v1836 = vadd.f32 %v1834, %v1835
        %v1837 = vmul.f32 %v754, 0.00048828125
        %v1838 = vmul.f32 %v760, 0.00048828125
        %v1839 = vmul.f32 %v766, 0.00048828125
        %v1840 = vmul.f32 %v772, 0.00048828125
        %v1841 = vmul.f32 %v778, 0.00048828125
        %v1842 = vmul.f32 %v784, 0.00048828125
        %v1843 = vmul.f32 %v790, 0.00048828125
        %v1844 = vmul.f32 %v796, 0.00048828125
        %v1845 = vmul.f32 %v802, 0.00048828125
        %v1846 = vmul.f32 %v808, 0.00048828125
        %v1847 = vmul.f32 %v814, 0.00048828125
        %v1848 = vmul.f32 %v820, 0.00048828125
        %v1849 = vmul.f32 %v826, 0.00048828125
        %v1850 = vmul.f32 %v832, 0.00048828125
        %v1851 = vmul.f32 %v838, 0.00048828125
        %v1852 = vmul.f32 %v844, 0.00048828125
        %v1853 = vmul.f32 %v850, 0.00048828125
        %v1854 = vmul.f32 %v856, 0.00048828125
        %v1855 = vmul.f32 %v862, 0.00048828125
        %v1856 = vmul.f32 %v868, 0.00048828125
        %v1857 = vmul.f32 %v874, 0.00048828125
        %v1858 = vmul.f32 %v880, 0.00048828125
        %v1859 = vmul.f32 %v886, 0.00048828125
        %v1860 = vmul.f32 %v892, 0.00048828125
        %v1861 = vmul.f32 %v898, 0.00048828125
        %v1862 = vmul.f32 %v904, 0.00048828125
        %v1863 = vmul.f32 %v910, 0.00048828125
        %v1864 = vmul.f32 %v916, 0.00048828125
        %v1865 = vmul.f32 %v922, 0.00048828125
        %v1866 = vmul.f32 %v928, 0.00048828125
        %v1867 = vmul.f32 %v934, 0.00048828125
        %v1868 = vmul.f32 %v940, 0.00048828125
        %v1869 = vmul.f32 %v946, 0.00048828125
        %v1870 = vmul.f32 %v952, 0.00048828125
        %v1871 = vmul.f32 %v958, 0.00048828125
        %v1872 = vmul.f32 %v964, 0.00048828125
        %v1873 = vmul.f32 %v970, 0.00048828125
        %v1874 = vmul.f32 %v976, 0.00048828125
        %v1875 = vmul.f32 %v982, 0.00048828125
        %v1876 = vmul.f32 %v988, 0.00048828125
        %v1877 = vmul.f32 %v994, 0.00048828125
        %v1878 = vmul.f32 %v1000, 0.00048828125
        %v1879 = vmul.f32 %v1006, 0.00048828125
        %v1880 = vmul.f32 %v1012, 0.00048828125
        %v1881 = vmul.f32 %v1018, 0.00048828125
        %v1882 = vmul.f32 %v1024, 0.00048828125
        %v1883 = vmul.f32 %v1030, 0.00048828125
        %v1884 = vmul.f32 %v1036, 0.00048828125
        %v1885 = vmul.f32 %v1042, 0.00048828125
        %v1886 = vmul.f32 %v1048, 0.00048828125
        %v1887 = vmul.f32 %v1054, 0.00048828125
        %v1888 = vmul.f32 %v1060, 0.00048828125
        %v1889 = vmul.f32 %v1066, 0.00048828125
        %v1890 = vmul.f32 %v1072, 0.00048828125
        %v1891 = vmul.f32 %v1078, 0.00048828125
        %v1892 = vmul.f32 %v1084, 0.00048828125
        %v1893 = vmul.f32 %v1090, 0.00048828125
        %v1894 = vmul.f32 %v1096, 0.00048828125
        %v1895 = vmul.f32 %v1102, 0.00048828125
        %v1896 = vmul.f32 %v1108, 0.00048828125
        %v1897 = vmul.f32 %v1114, 0.00048828125
        %v1898 = vmul.f32 %v1120, 0.00048828125
        %v1899 = vmul.f32 %v1126, 0.00048828125
        %v1900 = vmul.f32 %v1132, 0.00048828125
        %v1901 = vmul.f32 %v1458, 0.00048828125
        %v1902 = vmul.f32 %v1464, 0.00048828125
        %v1903 = vmul.f32 %v1470, 0.00048828125
        %v1904 = vmul.f32 %v1476, 0.00048828125
        %v1905 = vmul.f32 %v1482, 0.00048828125
        %v1906 = vmul.f32 %v1488, 0.00048828125
        %v1907 = vmul.f32 %v1494, 0.00048828125
        %v1908 = vmul.f32 %v1500, 0.00048828125
        %v1909 = vmul.f32 %v1506, 0.00048828125
        %v1910 = vmul.f32 %v1512, 0.00048828125
        %v1911 = vmul.f32 %v1518, 0.00048828125
        %v1912 = vmul.f32 %v1524, 0.00048828125
        %v1913 = vmul.f32 %v1530, 0.00048828125
        %v1914 = vmul.f32 %v1536, 0.00048828125
        %v1915 = vmul.f32 %v1542, 0.00048828125
        %v1916 = vmul.f32 %v1548, 0.00048828125
        %v1917 = vmul.f32 %v1554, 0.00048828125
        %v1918 = vmul.f32 %v1560, 0.00048828125
        %v1919 = vmul.f32 %v1566, 0.00048828125
        %v1920 = vmul.f32 %v1572, 0.00048828125
        %v1921 = vmul.f32 %v1578, 0.00048828125
        %v1922 = vmul.f32 %v1584, 0.00048828125
        %v1923 = vmul.f32 %v1590, 0.00048828125
        %v1924 = vmul.f32 %v1596, 0.00048828125
        %v1925 = vmul.f32 %v1602, 0.00048828125
        %v1926 = vmul.f32 %v1608, 0.00048828125
        %v1927 = vmul.f32 %v1614, 0.00048828125
        %v1928 = vmul.f32 %v1620, 0.00048828125
        %v1929 = vmul.f32 %v1626, 0.00048828125
        %v1930 = vmul.f32 %v1632, 0.00048828125
        %v1931 = vmul.f32 %v1638, 0.00048828125
        %v1932 = vmul.f32 %v1644, 0.00048828125
        %v1933 = vmul.f32 %v1650, 0.00048828125
        %v1934 = vmul.f32 %v1656, 0.00048828125
        %v1935 = vmul.f32 %v1662, 0.00048828125
        %v1936 = vmul.f32 %v1668, 0.00048828125
        %v1937 = vmul.f32 %v1674, 0.00048828125
        %v1938 = vmul.f32 %v1680, 0.00048828125
        %v1939 = vmul.f32 %v1686, 0.00048828125
        %v1940 = vmul.f32 %v1692, 0.00048828125
        %v1941 = vmul.f32 %v1698, 0.00048828125
        %v1942 = vmul.f32 %v1704, 0.00048828125
        %v1943 = vmul.f32 %v1710, 0.00048828125
        %v1944 = vmul.f32 %v1716, 0.00048828125
        %v1945 = vmul.f32 %v1722, 0.00048828125
        %v1946 = vmul.f32 %v1728, 0.00048828125
        %v1947 = vmul.f32 %v1734, 0.00048828125
        %v1948 = vmul.f32 %v1740, 0.00048828125
        %v1949 = vmul.f32 %v1746, 0.00048828125
        %v1950 = vmul.f32 %v1752, 0.00048828125
        %v1951 = vmul.f32 %v1758, 0.00048828125
        %v1952 = vmul.f32 %v1764, 0.00048828125
        %v1953 = vmul.f32 %v1770, 0.00048828125
        %v1954 = vmul.f32 %v1776, 0.00048828125
        %v1955 = vmul.f32 %v1782, 0.00048828125
        %v1956 = vmul.f32 %v1788, 0.00048828125
        %v1957 = vmul.f32 %v1794, 0.00048828125
        %v1958 = vmul.f32 %v1800, 0.00048828125
        %v1959 = vmul.f32 %v1806, 0.00048828125
        %v1960 = vmul.f32 %v1812, 0.00048828125
        %v1961 = vmul.f32 %v1818, 0.00048828125
        %v1962 = vmul.f32 %v1824, 0.00048828125
        %v1963 = vmul.f32 %v1830, 0.00048828125
        %v1964 = vmul.f32 %v1836, 0.00048828125
        %v1965 = vmul.f32 %v1837, %v1837
        %v1966 = vmul.f32 %v1838, %v1838
        %v1967 = vmul.f32 %v1839, %v1839
        %v1968 = vmul.f32 %v1840, %v1840
        %v1969 = vmul.f32 %v1841, %v1841
        %v1970 = vmul.f32 %v1842, %v1842
        %v1971 = vmul.f32 %v1843, %v1843
        %v1972 = vmul.f32 %v1844, %v1844
        %v1973 = vmul.f32 %v1845, %v1845
        %v1974 = vmul.f32 %v1846, %v1846
        %v1975 = vmul.f32 %v1847, %v1847
        %v1976 = vmul.f32 %v1848, %v1848
        %v1977 = vmul.f32 %v1849, %v1849
        %v1978 = vmul.f32 %v1850, %v1850
        %v1979 = vmul.f32 %v1851, %v1851
        %v1980 = vmul.f32 %v1852, %v1852
        %v1981 = vmul.f32 %v1853, %v1853
        %v1982 = vmul.f32 %v1854, %v1854
        %v1983 = vmul.f32 %v1855, %v1855
        %v1984 = vmul.f32 %v1856, %v1856
        %v1985 = vmul.f32 %v1857, %v1857
        %v1986 = vmul.f32 %v1858, %v1858
        %v1987 = vmul.f32 %v1859, %v1859
        %v1988 = vmul.f32 %v1860, %v1860
        %v1989 = vmul.f32 %v1861, %v1861
        %v1990 = vmul.f32 %v1862, %v1862
        %v1991 = vmul.f32 %v1863, %v1863
        %v1992 = vmul.f32 %v1864, %v1864
        %v1993 = vmul.f32 %v1865, %v1865
        %v1994 = vmul.f32 %v1866, %v1866
        %v1995 = vmul.f32 %v1867, %v1867
        %v1996 = vmul.f32 %v1868, %v1868
        %v1997 = vmul.f32 %v1869, %v1869
        %v1998 = vmul.f32 %v1870, %v1870
        %v1999 = vmul.f32 %v1871, %v1871
        %v2000 = vmul.f32 %v1872, %v1872
        %v2001 = vmul.f32 %v1873, %v1873
        %v2002 = vmul.f32 %v1874, %v1874
        %v2003 = vmul.f32 %v1875, %v1875
        %v2004 = vmul.f32 %v1876, %v1876
        %v2005 = vmul.f32 %v1877, %v1877
        %v2006 = vmul.f32 %v1878, %v1878
        %v2007 = vmul.f32 %v1879, %v1879
        %v2008 = vmul.f32 %v1880, %v1880
        %v2009 = vmul.f32 %v1881, %v1881
        %v2010 = vmul.f32 %v1882, %v1882
        %v2011 = vmul.f32 %v1883, %v1883
        %v2012 = vmul.f32 %v1884, %v1884
        %v2013 = vmul.f32 %v1885, %v1885
        %v2014 = vmul.f32 %v1886, %v1886
        %v2015 = vmul.f32 %v1887, %v1887
        %v2016 = vmul.f32 %v1888, %v1888
        %v2017 = vmul.f32 %v1889, %v1889
        %v2018 = vmul.f32 %v1890, %v1890
        %v2019 = vmul.f32 %v1891, %v1891
        %v2020 = vmul.f32 %v1892, %v1892
        %v2021 = vmul.f32 %v1893, %v1893
        %v2022 = vmul.f32 %v1894, %v1894
        %v2023 = vmul.f32 %v1895, %v1895
        %v2024 = vmul.f32 %v1896, %v1896
        %v2025 = vmul.f32 %v1897, %v1897
        %v2026 = vmul.f32 %v1898, %v1898
        %v2027 = vmul.f32 %v1899, %v1899
        %v2028 = vmul.f32 %v1900, %v1900
        %v2029 = vsub.f32 %v1901, %v1965
        %v2030 = vsub.f32 %v1902, %v1966
        %v2031 = vsub.f32 %v1903, %v1967
        %v2032 = vsub.f32 %v1904, %v1968
        %v2033 = vsub.f32 %v1905, %v1969
        %v2034 = vsub.f32 %v1906, %v1970
        %v2035 = vsub.f32 %v1907, %v1971
        %v2036 = vsub.f32 %v1908, %v1972
        %v2037 = vsub.f32 %v1909, %v1973
        %v2038 = vsub.f32 %v1910, %v1974
        %v2039 = vsub.f32 %v1911, %v1975
        %v2040 = vsub.f32 %v1912, %v1976
        %v2041 = vsub.f32 %v1913, %v1977
        %v2042 = vsub.f32 %v1914, %v1978
        %v2043 = vsub.f32 %v1915, %v1979
        %v2044 = vsub.f32 %v1916, %v1980
        %v2045 = vsub.f32 %v1917, %v1981
        %v2046 = vsub.f32 %v1918, %v1982
        %v2047 = vsub.f32 %v1919, %v1983
        %v2048 = vsub.f32 %v1920, %v1984
        %v2049 = vsub.f32 %v1921, %v1985
        %v2050 = vsub.f32 %v1922, %v1986
        %v2051 = vsub.f32 %v1923, %v1987
        %v2052 = vsub.f32 %v1924, %v1988
        %v2053 = vsub.f32 %v1925, %v1989
        %v2054 = vsub.f32 %v1926, %v1990
        %v2055 = vsub.f32 %v1927, %v1991
        %v2056 = vsub.f32 %v1928, %v1992
        %v2057 = vsub.f32 %v1929, %v1993
        %v2058 = vsub.f32 %v1930, %v1994
        %v2059 = vsub.f32 %v1931, %v1995
        %v2060 = vsub.f32 %v1932, %v1996
        %v2061 = vsub.f32 %v1933, %v1997
        %v2062 = vsub.f32 %v1934, %v1998
        %v2063 = vsub.f32 %v1935, %v1999
        %v2064 = vsub.f32 %v1936, %v2000
        %v2065 = vsub.f32 %v1937, %v2001
        %v2066 = vsub.f32 %v1938, %v2002
        %v2067 = vsub.f32 %v1939, %v2003
        %v2068 = vsub.f32 %v1940, %v2004
        %v2069 = vsub.f32 %v1941, %v2005
        %v2070 = vsub.f32 %v1942, %v2006
        %v2071 = vsub.f32 %v1943, %v2007
        %v2072 = vsub.f32 %v1944, %v2008
        %v2073 = vsub.f32 %v1945, %v2009
        %v2074 = vsub.f32 %v1946, %v2010
        %v2075 = vsub.f32 %v1947, %v2011
        %v2076 = vsub.f32 %v1948, %v2012
        %v2077 = vsub.f32 %v1949, %v2013
        %v2078 = vsub.f32 %v1950, %v2014
        %v2079 = vsub.f32 %v1951, %v2015
        %v2080 = vsub.f32 %v1952, %v2016
        %v2081 = vsub.f32 %v1953, %v2017
        %v2082 = vsub.f32 %v1954, %v2018
        %v2083 = vsub.f32 %v1955, %v2019
        %v2084 = vsub.f32 %v1956, %v2020
        %v2085 = vsub.f32 %v1957, %v2021
        %v2086 = vsub.f32 %v1958, %v2022
        %v2087 = vsub.f32 %v1959, %v2023
        %v2088 = vsub.f32 %v1960, %v2024
        %v2089 = vsub.f32 %v1961, %v2025
        %v2090 = vsub.f32 %v1962, %v2026
        %v2091 = vsub.f32 %v1963, %v2027
        %v2092 = vsub.f32 %v1964, %v2028
        %v2093 = vmax.f32 %v2029, 0.0
        %v2094 = vmax.f32 %v2030, 0.0
        %v2095 = vmax.f32 %v2031, 0.0
        %v2096 = vmax.f32 %v2032, 0.0
        %v2097 = vmax.f32 %v2033, 0.0
        %v2098 = vmax.f32 %v2034, 0.0
        %v2099 = vmax.f32 %v2035, 0.0
        %v2100 = vmax.f32 %v2036, 0.0
        %v2101 = vmax.f32 %v2037, 0.0
        %v2102 = vmax.f32 %v2038, 0.0
        %v2103 = vmax.f32 %v2039, 0.0
        %v2104 = vmax.f32 %v2040, 0.0
        %v2105 = vmax.f32 %v2041, 0.0
        %v2106 = vmax.f32 %v2042, 0.0
        %v2107 = vmax.f32 %v2043, 0.0
        %v2108 = vmax.f32 %v2044, 0.0
        %v2109 = vmax.f32 %v2045, 0.0
        %v2110 = vmax.f32 %v2046, 0.0
        %v2111 = vmax.f32 %v2047, 0.0
        %v2112 = vmax.f32 %v2048, 0.0
        %v2113 = vmax.f32 %v2049, 0.0
        %v2114 = vmax.f32 %v2050, 0.0
        %v2115 = vmax.f32 %v2051, 0.0
        %v2116 = vmax.f32 %v2052, 0.0
        %v2117 = vmax.f32 %v2053, 0.0
        %v2118 = vmax.f32 %v2054, 0.0
        %v2119 = vmax.f32 %v2055, 0.0
        %v2120 = vmax.f32 %v2056, 0.0
        %v2121 = vmax.f32 %v2057, 0.0
        %v2122 = vmax.f32 %v2058, 0.0
        %v2123 = vmax.f32 %v2059, 0.0
        %v2124 = vmax.f32 %v2060, 0.0
        %v2125 = vmax.f32 %v2061, 0.0
        %v2126 = vmax.f32 %v2062, 0.0
        %v2127 = vmax.f32 %v2063, 0.0
        %v2128 = vmax.f32 %v2064, 0.0
        %v2129 = vmax.f32 %v2065, 0.0
        %v2130 = vmax.f32 %v2066, 0.0
        %v2131 = vmax.f32 %v2067, 0.0
        %v2132 = vmax.f32 %v2068, 0.0
        %v2133 = vmax.f32 %v2069, 0.0
        %v2134 = vmax.f32 %v2070, 0.0
        %v2135 = vmax.f32 %v2071, 0.0
        %v2136 = vmax.f32 %v2072, 0.0
        %v2137 = vmax.f32 %v2073, 0.0
        %v2138 = vmax.f32 %v2074, 0.0
        %v2139 = vmax.f32 %v2075, 0.0
        %v2140 = vmax.f32 %v2076, 0.0
        %v2141 = vmax.f32 %v2077, 0.0
        %v2142 = vmax.f32 %v2078, 0.0
        %v2143 = vmax.f32 %v2079, 0.0
        %v2144 = vmax.f32 %v2080, 0.0
        %v2145 = vmax.f32 %v2081, 0.0
        %v2146 = vmax.f32 %v2082, 0.0
        %v2147 = vmax.f32 %v2083, 0.0
        %v2148 = vmax.f32 %v2084, 0.0
        %v2149 = vmax.f32 %v2085, 0.0
        %v2150 = vmax.f32 %v2086, 0.0
        %v2151 = vmax.f32 %v2087, 0.0
        %v2152 = vmax.f32 %v2088, 0.0
        %v2153 = vmax.f32 %v2089, 0.0
        %v2154 = vmax.f32 %v2090, 0.0
        %v2155 = vmax.f32 %v2091, 0.0
        %v2156 = vmax.f32 %v2092, 0.0
        %v2157 = vld [vmem:[%s411] sm:$0x1]
        %v2158 = vld [vmem:[%s411 + $0x1] sm:$0x1]
        %v2159 = vld [vmem:[%s411 + $0x2] sm:$0x1]
        %v2160 = vld [vmem:[%s411 + $0x3] sm:$0x1]
        %v2161 = vld [vmem:[%s411 + $0x4] sm:$0x1]
        %v2162 = vld [vmem:[%s411 + $0x5] sm:$0x1]
        %v2163 = vld [vmem:[%s411 + $0x6] sm:$0x1]
        %v2164 = vld [vmem:[%s411 + $0x7] sm:$0x1]
        %v2165 = vld [vmem:[%s411 + $0x8] sm:$0x1]
        %v2166 = vld [vmem:[%s411 + $0x9] sm:$0x1]
        %v2167 = vld [vmem:[%s411 + $0xa] sm:$0x1]
        %v2168 = vld [vmem:[%s411 + $0xb] sm:$0x1]
        %v2169 = vld [vmem:[%s411 + $0xc] sm:$0x1]
        %v2170 = vld [vmem:[%s411 + $0xd] sm:$0x1]
        %v2171 = vld [vmem:[%s411 + $0xe] sm:$0x1]
        %v2172 = vld [vmem:[%s411 + $0xf] sm:$0x1]
        %v2173 = vld [vmem:[%s411 + $0x10] sm:$0x1]
        %v2174 = vld [vmem:[%s411 + $0x11] sm:$0x1]
        %v2175 = vld [vmem:[%s411 + $0x12] sm:$0x1]
        %v2176 = vld [vmem:[%s411 + $0x13] sm:$0x1]
        %v2177 = vld [vmem:[%s411 + $0x14] sm:$0x1]
        %v2178 = vld [vmem:[%s411 + $0x15] sm:$0x1]
        %v2179 = vld [vmem:[%s411 + $0x16] sm:$0x1]
        %v2180 = vld [vmem:[%s411 + $0x17] sm:$0x1]
        %v2181 = vld [vmem:[%s411 + $0x18] sm:$0x1]
        %v2182 = vld [vmem:[%s411 + $0x19] sm:$0x1]
        %v2183 = vld [vmem:[%s411 + $0x1a] sm:$0x1]
        %v2184 = vld [vmem:[%s411 + $0x1b] sm:$0x1]
        %v2185 = vld [vmem:[%s411 + $0x1c] sm:$0x1]
        %v2186 = vld [vmem:[%s411 + $0x1d] sm:$0x1]
        %v2187 = vld [vmem:[%s411 + $0x1e] sm:$0x1]
        %v2188 = vld [vmem:[%s411 + $0x1f] sm:$0x1]
        %v2189 = vld [vmem:[%s411 + $0x20] sm:$0x1]
        %v2190 = vld [vmem:[%s411 + $0x21] sm:$0x1]
        %v2191 = vld [vmem:[%s411 + $0x22] sm:$0x1]
        %v2192 = vld [vmem:[%s411 + $0x23] sm:$0x1]
        %v2193 = vld [vmem:[%s411 + $0x24] sm:$0x1]
        %v2194 = vld [vmem:[%s411 + $0x25] sm:$0x1]
        %v2195 = vld [vmem:[%s411 + $0x26] sm:$0x1]
        %v2196 = vld [vmem:[%s411 + $0x27] sm:$0x1]
        %v2197 = vld [vmem:[%s411 + $0x28] sm:$0x1]
        %v2198 = vld [vmem:[%s411 + $0x29] sm:$0x1]
        %v2199 = vld [vmem:[%s411 + $0x2a] sm:$0x1]
        %v2200 = vld [vmem:[%s411 + $0x2b] sm:$0x1]
        %v2201 = vld [vmem:[%s411 + $0x2c] sm:$0x1]
        %v2202 = vld [vmem:[%s411 + $0x2d] sm:$0x1]
        %v2203 = vld [vmem:[%s411 + $0x2e] sm:$0x1]
        %v2204 = vld [vmem:[%s411 + $0x2f] sm:$0x1]
        %v2205 = vld [vmem:[%s411 + $0x30] sm:$0x1]
        %v2206 = vld [vmem:[%s411 + $0x31] sm:$0x1]
        %v2207 = vld [vmem:[%s411 + $0x32] sm:$0x1]
        %v2208 = vld [vmem:[%s411 + $0x33] sm:$0x1]
        %v2209 = vld [vmem:[%s411 + $0x34] sm:$0x1]
        %v2210 = vld [vmem:[%s411 + $0x35] sm:$0x1]
        %v2211 = vld [vmem:[%s411 + $0x36] sm:$0x1]
        %v2212 = vld [vmem:[%s411 + $0x37] sm:$0x1]
        %v2213 = vld [vmem:[%s411 + $0x38] sm:$0x1]
        %v2214 = vld [vmem:[%s411 + $0x39] sm:$0x1]
        %v2215 = vld [vmem:[%s411 + $0x3a] sm:$0x1]
        %v2216 = vld [vmem:[%s411 + $0x3b] sm:$0x1]
        %v2217 = vld [vmem:[%s411 + $0x3c] sm:$0x1]
        %v2218 = vld [vmem:[%s411 + $0x3d] sm:$0x1]
        %v2219 = vld [vmem:[%s411 + $0x3e] sm:$0x1]
        %v2220 = vld [vmem:[%s411 + $0x3f] sm:$0x1]
        %v2221 = vadd.f32 %v2093, 1e-05
        %v2222 = vadd.f32 %v2094, 1e-05
        %v2223 = vadd.f32 %v2095, 1e-05
        %v2224 = vadd.f32 %v2096, 1e-05
        %v2225 = vadd.f32 %v2097, 1e-05
        %v2226 = vadd.f32 %v2098, 1e-05
        %v2227 = vadd.f32 %v2099, 1e-05
        %v2228 = vadd.f32 %v2100, 1e-05
        %v2229 = vadd.f32 %v2101, 1e-05
        %v2230 = vadd.f32 %v2102, 1e-05
        %v2231 = vadd.f32 %v2103, 1e-05
        %v2232 = vadd.f32 %v2104, 1e-05
        %v2233 = vadd.f32 %v2105, 1e-05
        %v2234 = vadd.f32 %v2106, 1e-05
        %v2235 = vadd.f32 %v2107, 1e-05
        %v2236 = vadd.f32 %v2108, 1e-05
        %v2237 = vadd.f32 %v2109, 1e-05
        %v2238 = vadd.f32 %v2110, 1e-05
        %v2239 = vadd.f32 %v2111, 1e-05
        %v2240 = vadd.f32 %v2112, 1e-05
        %v2241 = vadd.f32 %v2113, 1e-05
        %v2242 = vadd.f32 %v2114, 1e-05
        %v2243 = vadd.f32 %v2115, 1e-05
        %v2244 = vadd.f32 %v2116, 1e-05
        %v2245 = vadd.f32 %v2117, 1e-05
        %v2246 = vadd.f32 %v2118, 1e-05
        %v2247 = vadd.f32 %v2119, 1e-05
        %v2248 = vadd.f32 %v2120, 1e-05
        %v2249 = vadd.f32 %v2121, 1e-05
        %v2250 = vadd.f32 %v2122, 1e-05
        %v2251 = vadd.f32 %v2123, 1e-05
        %v2252 = vadd.f32 %v2124, 1e-05
        %v2253 = vadd.f32 %v2125, 1e-05
        %v2254 = vadd.f32 %v2126, 1e-05
        %v2255 = vadd.f32 %v2127, 1e-05
        %v2256 = vadd.f32 %v2128, 1e-05
        %v2257 = vadd.f32 %v2129, 1e-05
        %v2258 = vadd.f32 %v2130, 1e-05
        %v2259 = vadd.f32 %v2131, 1e-05
        %v2260 = vadd.f32 %v2132, 1e-05
        %v2261 = vadd.f32 %v2133, 1e-05
        %v2262 = vadd.f32 %v2134, 1e-05
        %v2263 = vadd.f32 %v2135, 1e-05
        %v2264 = vadd.f32 %v2136, 1e-05
        %v2265 = vadd.f32 %v2137, 1e-05
        %v2266 = vadd.f32 %v2138, 1e-05
        %v2267 = vadd.f32 %v2139, 1e-05
        %v2268 = vadd.f32 %v2140, 1e-05
        %v2269 = vadd.f32 %v2141, 1e-05
        %v2270 = vadd.f32 %v2142, 1e-05
        %v2271 = vadd.f32 %v2143, 1e-05
        %v2272 = vadd.f32 %v2144, 1e-05
        %v2273 = vadd.f32 %v2145, 1e-05
        %v2274 = vadd.f32 %v2146, 1e-05
        %v2275 = vadd.f32 %v2147, 1e-05
        %v2276 = vadd.f32 %v2148, 1e-05
        %v2277 = vadd.f32 %v2149, 1e-05
        %v2278 = vadd.f32 %v2150, 1e-05
        %v2279 = vadd.f32 %v2151, 1e-05
        %v2280 = vadd.f32 %v2152, 1e-05
        %v2281 = vadd.f32 %v2153, 1e-05
        %v2282 = vadd.f32 %v2154, 1e-05
        %v2283 = vadd.f32 %v2155, 1e-05
        %v2284 = vadd.f32 %v2156, 1e-05
        %v2285 = vrsqrt.pop %v2221
        %v2286 = vmul.f32 %v2285, %v2221
        %v2287 = vmul.f32 %v2286, %v2285
        %v2288 = vmul.f32 0.5, %v2287
        %v2289 = vsub.f32 1.5, %v2288
        %v2290 = vmul.f32 %v2285, %v2289
        %vm2291 = vweird.f32 %v2221
        %vm2292 = vweird.f32 %v2285
        %vm2293 = vmor %vm2291, %vm2292
        %v2294 = vsel %vm2293, %v2285, %v2290
        %v2295 = vrsqrt.pop %v2222
        %v2296 = vmul.f32 %v2295, %v2222
        %v2297 = vmul.f32 %v2296, %v2295
        %v2298 = vmul.f32 0.5, %v2297
        %v2299 = vsub.f32 1.5, %v2298
        %v2300 = vmul.f32 %v2295, %v2299
        %vm2301 = vweird.f32 %v2222
        %vm2302 = vweird.f32 %v2295
        %vm2303 = vmor %vm2301, %vm2302
        %v2304 = vsel %vm2303, %v2295, %v2300
        %v2305 = vrsqrt.pop %v2223
        %v2306 = vmul.f32 %v2305, %v2223
        %v2307 = vmul.f32 %v2306, %v2305
        %v2308 = vmul.f32 0.5, %v2307
        %v2309 = vsub.f32 1.5, %v2308
        %v2310 = vmul.f32 %v2305, %v2309
        %vm2311 = vweird.f32 %v2223
        %vm2312 = vweird.f32 %v2305
        %vm2313 = vmor %vm2311, %vm2312
        %v2314 = vsel %vm2313, %v2305, %v2310
        %v2315 = vrsqrt.pop %v2224
        %v2316 = vmul.f32 %v2315, %v2224
        %v2317 = vmul.f32 %v2316, %v2315
        %v2318 = vmul.f32 0.5, %v2317
        %v2319 = vsub.f32 1.5, %v2318
        %v2320 = vmul.f32 %v2315, %v2319
        %vm2321 = vweird.f32 %v2224
        %vm2322 = vweird.f32 %v2315
        %vm2323 = vmor %vm2321, %vm2322
        %v2324 = vsel %vm2323, %v2315, %v2320
        %v2325 = vrsqrt.pop %v2225
        %v2326 = vmul.f32 %v2325, %v2225
        %v2327 = vmul.f32 %v2326, %v2325
        %v2328 = vmul.f32 0.5, %v2327
        %v2329 = vsub.f32 1.5, %v2328
        %v2330 = vmul.f32 %v2325, %v2329
        %vm2331 = vweird.f32 %v2225
        %vm2332 = vweird.f32 %v2325
        %vm2333 = vmor %vm2331, %vm2332
        %v2334 = vsel %vm2333, %v2325, %v2330
        %v2335 = vrsqrt.pop %v2226
        %v2336 = vmul.f32 %v2335, %v2226
        %v2337 = vmul.f32 %v2336, %v2335
        %v2338 = vmul.f32 0.5, %v2337
        %v2339 = vsub.f32 1.5, %v2338
        %v2340 = vmul.f32 %v2335, %v2339
        %vm2341 = vweird.f32 %v2226
        %vm2342 = vweird.f32 %v2335
        %vm2343 = vmor %vm2341, %vm2342
        %v2344 = vsel %vm2343, %v2335, %v2340
        %v2345 = vrsqrt.pop %v2227
        %v2346 = vmul.f32 %v2345, %v2227
        %v2347 = vmul.f32 %v2346, %v2345
        %v2348 = vmul.f32 0.5, %v2347
        %v2349 = vsub.f32 1.5, %v2348
        %v2350 = vmul.f32 %v2345, %v2349
        %vm2351 = vweird.f32 %v2227
        %vm2352 = vweird.f32 %v2345
        %vm2353 = vmor %vm2351, %vm2352
        %v2354 = vsel %vm2353, %v2345, %v2350
        %v2355 = vrsqrt.pop %v2228
        %v2356 = vmul.f32 %v2355, %v2228
        %v2357 = vmul.f32 %v2356, %v2355
        %v2358 = vmul.f32 0.5, %v2357
        %v2359 = vsub.f32 1.5, %v2358
        %v2360 = vmul.f32 %v2355, %v2359
        %vm2361 = vweird.f32 %v2228
        %vm2362 = vweird.f32 %v2355
        %vm2363 = vmor %vm2361, %vm2362
        %v2364 = vsel %vm2363, %v2355, %v2360
        %v2365 = vrsqrt.pop %v2229
        %v2366 = vmul.f32 %v2365, %v2229
        %v2367 = vmul.f32 %v2366, %v2365
        %v2368 = vmul.f32 0.5, %v2367
        %v2369 = vsub.f32 1.5, %v2368
        %v2370 = vmul.f32 %v2365, %v2369
        %vm2371 = vweird.f32 %v2229
        %vm2372 = vweird.f32 %v2365
        %vm2373 = vmor %vm2371, %vm2372
        %v2374 = vsel %vm2373, %v2365, %v2370
        %v2375 = vrsqrt.pop %v2230
        %v2376 = vmul.f32 %v2375, %v2230
        %v2377 = vmul.f32 %v2376, %v2375
        %v2378 = vmul.f32 0.5, %v2377
        %v2379 = vsub.f32 1.5, %v2378
        %v2380 = vmul.f32 %v2375, %v2379
        %vm2381 = vweird.f32 %v2230
        %vm2382 = vweird.f32 %v2375
        %vm2383 = vmor %vm2381, %vm2382
        %v2384 = vsel %vm2383, %v2375, %v2380
        %v2385 = vrsqrt.pop %v2231
        %v2386 = vmul.f32 %v2385, %v2231
        %v2387 = vmul.f32 %v2386, %v2385
        %v2388 = vmul.f32 0.5, %v2387
        %v2389 = vsub.f32 1.5, %v2388
        %v2390 = vmul.f32 %v2385, %v2389
        %vm2391 = vweird.f32 %v2231
        %vm2392 = vweird.f32 %v2385
        %vm2393 = vmor %vm2391, %vm2392
        %v2394 = vsel %vm2393, %v2385, %v2390
        %v2395 = vrsqrt.pop %v2232
        %v2396 = vmul.f32 %v2395, %v2232
        %v2397 = vmul.f32 %v2396, %v2395
        %v2398 = vmul.f32 0.5, %v2397
        %v2399 = vsub.f32 1.5, %v2398
        %v2400 = vmul.f32 %v2395, %v2399
        %vm2401 = vweird.f32 %v2232
        %vm2402 = vweird.f32 %v2395
        %vm2403 = vmor %vm2401, %vm2402
        %v2404 = vsel %vm2403, %v2395, %v2400
        %v2405 = vrsqrt.pop %v2233
        %v2406 = vmul.f32 %v2405, %v2233
        %v2407 = vmul.f32 %v2406, %v2405
        %v2408 = vmul.f32 0.5, %v2407
        %v2409 = vsub.f32 1.5, %v2408
        %v2410 = vmul.f32 %v2405, %v2409
        %vm2411 = vweird.f32 %v2233
        %vm2412 = vweird.f32 %v2405
        %vm2413 = vmor %vm2411, %vm2412
        %v2414 = vsel %vm2413, %v2405, %v2410
        %v2415 = vrsqrt.pop %v2234
        %v2416 = vmul.f32 %v2415, %v2234
        %v2417 = vmul.f32 %v2416, %v2415
        %v2418 = vmul.f32 0.5, %v2417
        %v2419 = vsub.f32 1.5, %v2418
        %v2420 = vmul.f32 %v2415, %v2419
        %vm2421 = vweird.f32 %v2234
        %vm2422 = vweird.f32 %v2415
        %vm2423 = vmor %vm2421, %vm2422
        %v2424 = vsel %vm2423, %v2415, %v2420
        %v2425 = vrsqrt.pop %v2235
        %v2426 = vmul.f32 %v2425, %v2235
        %v2427 = vmul.f32 %v2426, %v2425
        %v2428 = vmul.f32 0.5, %v2427
        %v2429 = vsub.f32 1.5, %v2428
        %v2430 = vmul.f32 %v2425, %v2429
        %vm2431 = vweird.f32 %v2235
        %vm2432 = vweird.f32 %v2425
        %vm2433 = vmor %vm2431, %vm2432
        %v2434 = vsel %vm2433, %v2425, %v2430
        %v2435 = vrsqrt.pop %v2236
        %v2436 = vmul.f32 %v2435, %v2236
        %v2437 = vmul.f32 %v2436, %v2435
        %v2438 = vmul.f32 0.5, %v2437
        %v2439 = vsub.f32 1.5, %v2438
        %v2440 = vmul.f32 %v2435, %v2439
        %vm2441 = vweird.f32 %v2236
        %vm2442 = vweird.f32 %v2435
        %vm2443 = vmor %vm2441, %vm2442
        %v2444 = vsel %vm2443, %v2435, %v2440
        %v2445 = vrsqrt.pop %v2237
        %v2446 = vmul.f32 %v2445, %v2237
        %v2447 = vmul.f32 %v2446, %v2445
        %v2448 = vmul.f32 0.5, %v2447
        %v2449 = vsub.f32 1.5, %v2448
        %v2450 = vmul.f32 %v2445, %v2449
        %vm2451 = vweird.f32 %v2237
        %vm2452 = vweird.f32 %v2445
        %vm2453 = vmor %vm2451, %vm2452
        %v2454 = vsel %vm2453, %v2445, %v2450
        %v2455 = vrsqrt.pop %v2238
        %v2456 = vmul.f32 %v2455, %v2238
        %v2457 = vmul.f32 %v2456, %v2455
        %v2458 = vmul.f32 0.5, %v2457
        %v2459 = vsub.f32 1.5, %v2458
        %v2460 = vmul.f32 %v2455, %v2459
        %vm2461 = vweird.f32 %v2238
        %vm2462 = vweird.f32 %v2455
        %vm2463 = vmor %vm2461, %vm2462
        %v2464 = vsel %vm2463, %v2455, %v2460
        %v2465 = vrsqrt.pop %v2239
        %v2466 = vmul.f32 %v2465, %v2239
        %v2467 = vmul.f32 %v2466, %v2465
        %v2468 = vmul.f32 0.5, %v2467
        %v2469 = vsub.f32 1.5, %v2468
        %v2470 = vmul.f32 %v2465, %v2469
        %vm2471 = vweird.f32 %v2239
        %vm2472 = vweird.f32 %v2465
        %vm2473 = vmor %vm2471, %vm2472
        %v2474 = vsel %vm2473, %v2465, %v2470
        %v2475 = vrsqrt.pop %v2240
        %v2476 = vmul.f32 %v2475, %v2240
        %v2477 = vmul.f32 %v2476, %v2475
        %v2478 = vmul.f32 0.5, %v2477
        %v2479 = vsub.f32 1.5, %v2478
        %v2480 = vmul.f32 %v2475, %v2479
        %vm2481 = vweird.f32 %v2240
        %vm2482 = vweird.f32 %v2475
        %vm2483 = vmor %vm2481, %vm2482
        %v2484 = vsel %vm2483, %v2475, %v2480
        %v2485 = vrsqrt.pop %v2241
        %v2486 = vmul.f32 %v2485, %v2241
        %v2487 = vmul.f32 %v2486, %v2485
        %v2488 = vmul.f32 0.5, %v2487
        %v2489 = vsub.f32 1.5, %v2488
        %v2490 = vmul.f32 %v2485, %v2489
        %vm2491 = vweird.f32 %v2241
        %vm2492 = vweird.f32 %v2485
        %vm2493 = vmor %vm2491, %vm2492
        %v2494 = vsel %vm2493, %v2485, %v2490
        %v2495 = vrsqrt.pop %v2242
        %v2496 = vmul.f32 %v2495, %v2242
        %v2497 = vmul.f32 %v2496, %v2495
        %v2498 = vmul.f32 0.5, %v2497
        %v2499 = vsub.f32 1.5, %v2498
        %v2500 = vmul.f32 %v2495, %v2499
        %vm2501 = vweird.f32 %v2242
        %vm2502 = vweird.f32 %v2495
        %vm2503 = vmor %vm2501, %vm2502
        %v2504 = vsel %vm2503, %v2495, %v2500
        %v2505 = vrsqrt.pop %v2243
        %v2506 = vmul.f32 %v2505, %v2243
        %v2507 = vmul.f32 %v2506, %v2505
        %v2508 = vmul.f32 0.5, %v2507
        %v2509 = vsub.f32 1.5, %v2508
        %v2510 = vmul.f32 %v2505, %v2509
        %vm2511 = vweird.f32 %v2243
        %vm2512 = vweird.f32 %v2505
        %vm2513 = vmor %vm2511, %vm2512
        %v2514 = vsel %vm2513, %v2505, %v2510
        %v2515 = vrsqrt.pop %v2244
        %v2516 = vmul.f32 %v2515, %v2244
        %v2517 = vmul.f32 %v2516, %v2515
        %v2518 = vmul.f32 0.5, %v2517
        %v2519 = vsub.f32 1.5, %v2518
        %v2520 = vmul.f32 %v2515, %v2519
        %vm2521 = vweird.f32 %v2244
        %vm2522 = vweird.f32 %v2515
        %vm2523 = vmor %vm2521, %vm2522
        %v2524 = vsel %vm2523, %v2515, %v2520
        %v2525 = vrsqrt.pop %v2245
        %v2526 = vmul.f32 %v2525, %v2245
        %v2527 = vmul.f32 %v2526, %v2525
        %v2528 = vmul.f32 0.5, %v2527
        %v2529 = vsub.f32 1.5, %v2528
        %v2530 = vmul.f32 %v2525, %v2529
        %vm2531 = vweird.f32 %v2245
        %vm2532 = vweird.f32 %v2525
        %vm2533 = vmor %vm2531, %vm2532
        %v2534 = vsel %vm2533, %v2525, %v2530
        %v2535 = vrsqrt.pop %v2246
        %v2536 = vmul.f32 %v2535, %v2246
        %v2537 = vmul.f32 %v2536, %v2535
        %v2538 = vmul.f32 0.5, %v2537
        %v2539 = vsub.f32 1.5, %v2538
        %v2540 = vmul.f32 %v2535, %v2539
        %vm2541 = vweird.f32 %v2246
        %vm2542 = vweird.f32 %v2535
        %vm2543 = vmor %vm2541, %vm2542
        %v2544 = vsel %vm2543, %v2535, %v2540
        %v2545 = vrsqrt.pop %v2247
        %v2546 = vmul.f32 %v2545, %v2247
        %v2547 = vmul.f32 %v2546, %v2545
        %v2548 = vmul.f32 0.5, %v2547
        %v2549 = vsub.f32 1.5, %v2548
        %v2550 = vmul.f32 %v2545, %v2549
        %vm2551 = vweird.f32 %v2247
        %vm2552 = vweird.f32 %v2545
        %vm2553 = vmor %vm2551, %vm2552
        %v2554 = vsel %vm2553, %v2545, %v2550
        %v2555 = vrsqrt.pop %v2248
        %v2556 = vmul.f32 %v2555, %v2248
        %v2557 = vmul.f32 %v2556, %v2555
        %v2558 = vmul.f32 0.5, %v2557
        %v2559 = vsub.f32 1.5, %v2558
        %v2560 = vmul.f32 %v2555, %v2559
        %vm2561 = vweird.f32 %v2248
        %vm2562 = vweird.f32 %v2555
        %vm2563 = vmor %vm2561, %vm2562
        %v2564 = vsel %vm2563, %v2555, %v2560
        %v2565 = vrsqrt.pop %v2249
        %v2566 = vmul.f32 %v2565, %v2249
        %v2567 = vmul.f32 %v2566, %v2565
        %v2568 = vmul.f32 0.5, %v2567
        %v2569 = vsub.f32 1.5, %v2568
        %v2570 = vmul.f32 %v2565, %v2569
        %vm2571 = vweird.f32 %v2249
        %vm2572 = vweird.f32 %v2565
        %vm2573 = vmor %vm2571, %vm2572
        %v2574 = vsel %vm2573, %v2565, %v2570
        %v2575 = vrsqrt.pop %v2250
        %v2576 = vmul.f32 %v2575, %v2250
        %v2577 = vmul.f32 %v2576, %v2575
        %v2578 = vmul.f32 0.5, %v2577
        %v2579 = vsub.f32 1.5, %v2578
        %v2580 = vmul.f32 %v2575, %v2579
        %vm2581 = vweird.f32 %v2250
        %vm2582 = vweird.f32 %v2575
        %vm2583 = vmor %vm2581, %vm2582
        %v2584 = vsel %vm2583, %v2575, %v2580
        %v2585 = vrsqrt.pop %v2251
        %v2586 = vmul.f32 %v2585, %v2251
        %v2587 = vmul.f32 %v2586, %v2585
        %v2588 = vmul.f32 0.5, %v2587
        %v2589 = vsub.f32 1.5, %v2588
        %v2590 = vmul.f32 %v2585, %v2589
        %vm2591 = vweird.f32 %v2251
        %vm2592 = vweird.f32 %v2585
        %vm2593 = vmor %vm2591, %vm2592
        %v2594 = vsel %vm2593, %v2585, %v2590
        %v2595 = vrsqrt.pop %v2252
        %v2596 = vmul.f32 %v2595, %v2252
        %v2597 = vmul.f32 %v2596, %v2595
        %v2598 = vmul.f32 0.5, %v2597
        %v2599 = vsub.f32 1.5, %v2598
        %v2600 = vmul.f32 %v2595, %v2599
        %vm2601 = vweird.f32 %v2252
        %vm2602 = vweird.f32 %v2595
        %vm2603 = vmor %vm2601, %vm2602
        %v2604 = vsel %vm2603, %v2595, %v2600
        %v2605 = vrsqrt.pop %v2253
        %v2606 = vmul.f32 %v2605, %v2253
        %v2607 = vmul.f32 %v2606, %v2605
        %v2608 = vmul.f32 0.5, %v2607
        %v2609 = vsub.f32 1.5, %v2608
        %v2610 = vmul.f32 %v2605, %v2609
        %vm2611 = vweird.f32 %v2253
        %vm2612 = vweird.f32 %v2605
        %vm2613 = vmor %vm2611, %vm2612
        %v2614 = vsel %vm2613, %v2605, %v2610
        %v2615 = vrsqrt.pop %v2254
        %v2616 = vmul.f32 %v2615, %v2254
        %v2617 = vmul.f32 %v2616, %v2615
        %v2618 = vmul.f32 0.5, %v2617
        %v2619 = vsub.f32 1.5, %v2618
        %v2620 = vmul.f32 %v2615, %v2619
        %vm2621 = vweird.f32 %v2254
        %vm2622 = vweird.f32 %v2615
        %vm2623 = vmor %vm2621, %vm2622
        %v2624 = vsel %vm2623, %v2615, %v2620
        %v2625 = vrsqrt.pop %v2255
        %v2626 = vmul.f32 %v2625, %v2255
        %v2627 = vmul.f32 %v2626, %v2625
        %v2628 = vmul.f32 0.5, %v2627
        %v2629 = vsub.f32 1.5, %v2628
        %v2630 = vmul.f32 %v2625, %v2629
        %vm2631 = vweird.f32 %v2255
        %vm2632 = vweird.f32 %v2625
        %vm2633 = vmor %vm2631, %vm2632
        %v2634 = vsel %vm2633, %v2625, %v2630
        %v2635 = vrsqrt.pop %v2256
        %v2636 = vmul.f32 %v2635, %v2256
        %v2637 = vmul.f32 %v2636, %v2635
        %v2638 = vmul.f32 0.5, %v2637
        %v2639 = vsub.f32 1.5, %v2638
        %v2640 = vmul.f32 %v2635, %v2639
        %vm2641 = vweird.f32 %v2256
        %vm2642 = vweird.f32 %v2635
        %vm2643 = vmor %vm2641, %vm2642
        %v2644 = vsel %vm2643, %v2635, %v2640
        %v2645 = vrsqrt.pop %v2257
        %v2646 = vmul.f32 %v2645, %v2257
        %v2647 = vmul.f32 %v2646, %v2645
        %v2648 = vmul.f32 0.5, %v2647
        %v2649 = vsub.f32 1.5, %v2648
        %v2650 = vmul.f32 %v2645, %v2649
        %vm2651 = vweird.f32 %v2257
        %vm2652 = vweird.f32 %v2645
        %vm2653 = vmor %vm2651, %vm2652
        %v2654 = vsel %vm2653, %v2645, %v2650
        %v2655 = vrsqrt.pop %v2258
        %v2656 = vmul.f32 %v2655, %v2258
        %v2657 = vmul.f32 %v2656, %v2655
        %v2658 = vmul.f32 0.5, %v2657
        %v2659 = vsub.f32 1.5, %v2658
        %v2660 = vmul.f32 %v2655, %v2659
        %vm2661 = vweird.f32 %v2258
        %vm2662 = vweird.f32 %v2655
        %vm2663 = vmor %vm2661, %vm2662
        %v2664 = vsel %vm2663, %v2655, %v2660
        %v2665 = vrsqrt.pop %v2259
        %v2666 = vmul.f32 %v2665, %v2259
        %v2667 = vmul.f32 %v2666, %v2665
        %v2668 = vmul.f32 0.5, %v2667
        %v2669 = vsub.f32 1.5, %v2668
        %v2670 = vmul.f32 %v2665, %v2669
        %vm2671 = vweird.f32 %v2259
        %vm2672 = vweird.f32 %v2665
        %vm2673 = vmor %vm2671, %vm2672
        %v2674 = vsel %vm2673, %v2665, %v2670
        %v2675 = vrsqrt.pop %v2260
        %v2676 = vmul.f32 %v2675, %v2260
        %v2677 = vmul.f32 %v2676, %v2675
        %v2678 = vmul.f32 0.5, %v2677
        %v2679 = vsub.f32 1.5, %v2678
        %v2680 = vmul.f32 %v2675, %v2679
        %vm2681 = vweird.f32 %v2260
        %vm2682 = vweird.f32 %v2675
        %vm2683 = vmor %vm2681, %vm2682
        %v2684 = vsel %vm2683, %v2675, %v2680
        %v2685 = vrsqrt.pop %v2261
        %v2686 = vmul.f32 %v2685, %v2261
        %v2687 = vmul.f32 %v2686, %v2685
        %v2688 = vmul.f32 0.5, %v2687
        %v2689 = vsub.f32 1.5, %v2688
        %v2690 = vmul.f32 %v2685, %v2689
        %vm2691 = vweird.f32 %v2261
        %vm2692 = vweird.f32 %v2685
        %vm2693 = vmor %vm2691, %vm2692
        %v2694 = vsel %vm2693, %v2685, %v2690
        %v2695 = vrsqrt.pop %v2262
        %v2696 = vmul.f32 %v2695, %v2262
        %v2697 = vmul.f32 %v2696, %v2695
        %v2698 = vmul.f32 0.5, %v2697
        %v2699 = vsub.f32 1.5, %v2698
        %v2700 = vmul.f32 %v2695, %v2699
        %vm2701 = vweird.f32 %v2262
        %vm2702 = vweird.f32 %v2695
        %vm2703 = vmor %vm2701, %vm2702
        %v2704 = vsel %vm2703, %v2695, %v2700
        %v2705 = vrsqrt.pop %v2263
        %v2706 = vmul.f32 %v2705, %v2263
        %v2707 = vmul.f32 %v2706, %v2705
        %v2708 = vmul.f32 0.5, %v2707
        %v2709 = vsub.f32 1.5, %v2708
        %v2710 = vmul.f32 %v2705, %v2709
        %vm2711 = vweird.f32 %v2263
        %vm2712 = vweird.f32 %v2705
        %vm2713 = vmor %vm2711, %vm2712
        %v2714 = vsel %vm2713, %v2705, %v2710
        %v2715 = vrsqrt.pop %v2264
        %v2716 = vmul.f32 %v2715, %v2264
        %v2717 = vmul.f32 %v2716, %v2715
        %v2718 = vmul.f32 0.5, %v2717
        %v2719 = vsub.f32 1.5, %v2718
        %v2720 = vmul.f32 %v2715, %v2719
        %vm2721 = vweird.f32 %v2264
        %vm2722 = vweird.f32 %v2715
        %vm2723 = vmor %vm2721, %vm2722
        %v2724 = vsel %vm2723, %v2715, %v2720
        %v2725 = vrsqrt.pop %v2265
        %v2726 = vmul.f32 %v2725, %v2265
        %v2727 = vmul.f32 %v2726, %v2725
        %v2728 = vmul.f32 0.5, %v2727
        %v2729 = vsub.f32 1.5, %v2728
        %v2730 = vmul.f32 %v2725, %v2729
        %vm2731 = vweird.f32 %v2265
        %vm2732 = vweird.f32 %v2725
        %vm2733 = vmor %vm2731, %vm2732
        %v2734 = vsel %vm2733, %v2725, %v2730
        %v2735 = vrsqrt.pop %v2266
        %v2736 = vmul.f32 %v2735, %v2266
        %v2737 = vmul.f32 %v2736, %v2735
        %v2738 = vmul.f32 0.5, %v2737
        %v2739 = vsub.f32 1.5, %v2738
        %v2740 = vmul.f32 %v2735, %v2739
        %vm2741 = vweird.f32 %v2266
        %vm2742 = vweird.f32 %v2735
        %vm2743 = vmor %vm2741, %vm2742
        %v2744 = vsel %vm2743, %v2735, %v2740
        %v2745 = vrsqrt.pop %v2267
        %v2746 = vmul.f32 %v2745, %v2267
        %v2747 = vmul.f32 %v2746, %v2745
        %v2748 = vmul.f32 0.5, %v2747
        %v2749 = vsub.f32 1.5, %v2748
        %v2750 = vmul.f32 %v2745, %v2749
        %vm2751 = vweird.f32 %v2267
        %vm2752 = vweird.f32 %v2745
        %vm2753 = vmor %vm2751, %vm2752
        %v2754 = vsel %vm2753, %v2745, %v2750
        %v2755 = vrsqrt.pop %v2268
        %v2756 = vmul.f32 %v2755, %v2268
        %v2757 = vmul.f32 %v2756, %v2755
        %v2758 = vmul.f32 0.5, %v2757
        %v2759 = vsub.f32 1.5, %v2758
        %v2760 = vmul.f32 %v2755, %v2759
        %vm2761 = vweird.f32 %v2268
        %vm2762 = vweird.f32 %v2755
        %vm2763 = vmor %vm2761, %vm2762
        %v2764 = vsel %vm2763, %v2755, %v2760
        %v2765 = vrsqrt.pop %v2269
        %v2766 = vmul.f32 %v2765, %v2269
        %v2767 = vmul.f32 %v2766, %v2765
        %v2768 = vmul.f32 0.5, %v2767
        %v2769 = vsub.f32 1.5, %v2768
        %v2770 = vmul.f32 %v2765, %v2769
        %vm2771 = vweird.f32 %v2269
        %vm2772 = vweird.f32 %v2765
        %vm2773 = vmor %vm2771, %vm2772
        %v2774 = vsel %vm2773, %v2765, %v2770
        %v2775 = vrsqrt.pop %v2270
        %v2776 = vmul.f32 %v2775, %v2270
        %v2777 = vmul.f32 %v2776, %v2775
        %v2778 = vmul.f32 0.5, %v2777
        %v2779 = vsub.f32 1.5, %v2778
        %v2780 = vmul.f32 %v2775, %v2779
        %vm2781 = vweird.f32 %v2270
        %vm2782 = vweird.f32 %v2775
        %vm2783 = vmor %vm2781, %vm2782
        %v2784 = vsel %vm2783, %v2775, %v2780
        %v2785 = vrsqrt.pop %v2271
        %v2786 = vmul.f32 %v2785, %v2271
        %v2787 = vmul.f32 %v2786, %v2785
        %v2788 = vmul.f32 0.5, %v2787
        %v2789 = vsub.f32 1.5, %v2788
        %v2790 = vmul.f32 %v2785, %v2789
        %vm2791 = vweird.f32 %v2271
        %vm2792 = vweird.f32 %v2785
        %vm2793 = vmor %vm2791, %vm2792
        %v2794 = vsel %vm2793, %v2785, %v2790
        %v2795 = vrsqrt.pop %v2272
        %v2796 = vmul.f32 %v2795, %v2272
        %v2797 = vmul.f32 %v2796, %v2795
        %v2798 = vmul.f32 0.5, %v2797
        %v2799 = vsub.f32 1.5, %v2798
        %v2800 = vmul.f32 %v2795, %v2799
        %vm2801 = vweird.f32 %v2272
        %vm2802 = vweird.f32 %v2795
        %vm2803 = vmor %vm2801, %vm2802
        %v2804 = vsel %vm2803, %v2795, %v2800
        %v2805 = vrsqrt.pop %v2273
        %v2806 = vmul.f32 %v2805, %v2273
        %v2807 = vmul.f32 %v2806, %v2805
        %v2808 = vmul.f32 0.5, %v2807
        %v2809 = vsub.f32 1.5, %v2808
        %v2810 = vmul.f32 %v2805, %v2809
        %vm2811 = vweird.f32 %v2273
        %vm2812 = vweird.f32 %v2805
        %vm2813 = vmor %vm2811, %vm2812
        %v2814 = vsel %vm2813, %v2805, %v2810
        %v2815 = vrsqrt.pop %v2274
        %v2816 = vmul.f32 %v2815, %v2274
        %v2817 = vmul.f32 %v2816, %v2815
        %v2818 = vmul.f32 0.5, %v2817
        %v2819 = vsub.f32 1.5, %v2818
        %v2820 = vmul.f32 %v2815, %v2819
        %vm2821 = vweird.f32 %v2274
        %vm2822 = vweird.f32 %v2815
        %vm2823 = vmor %vm2821, %vm2822
        %v2824 = vsel %vm2823, %v2815, %v2820
        %v2825 = vrsqrt.pop %v2275
        %v2826 = vmul.f32 %v2825, %v2275
        %v2827 = vmul.f32 %v2826, %v2825
        %v2828 = vmul.f32 0.5, %v2827
        %v2829 = vsub.f32 1.5, %v2828
        %v2830 = vmul.f32 %v2825, %v2829
        %vm2831 = vweird.f32 %v2275
        %vm2832 = vweird.f32 %v2825
        %vm2833 = vmor %vm2831, %vm2832
        %v2834 = vsel %vm2833, %v2825, %v2830
        %v2835 = vrsqrt.pop %v2276
        %v2836 = vmul.f32 %v2835, %v2276
        %v2837 = vmul.f32 %v2836, %v2835
        %v2838 = vmul.f32 0.5, %v2837
        %v2839 = vsub.f32 1.5, %v2838
        %v2840 = vmul.f32 %v2835, %v2839
        %vm2841 = vweird.f32 %v2276
        %vm2842 = vweird.f32 %v2835
        %vm2843 = vmor %vm2841, %vm2842
        %v2844 = vsel %vm2843, %v2835, %v2840
        %v2845 = vrsqrt.pop %v2277
        %v2846 = vmul.f32 %v2845, %v2277
        %v2847 = vmul.f32 %v2846, %v2845
        %v2848 = vmul.f32 0.5, %v2847
        %v2849 = vsub.f32 1.5, %v2848
        %v2850 = vmul.f32 %v2845, %v2849
        %vm2851 = vweird.f32 %v2277
        %vm2852 = vweird.f32 %v2845
        %vm2853 = vmor %vm2851, %vm2852
        %v2854 = vsel %vm2853, %v2845, %v2850
        %v2855 = vrsqrt.pop %v2278
        %v2856 = vmul.f32 %v2855, %v2278
        %v2857 = vmul.f32 %v2856, %v2855
        %v2858 = vmul.f32 0.5, %v2857
        %v2859 = vsub.f32 1.5, %v2858
        %v2860 = vmul.f32 %v2855, %v2859
        %vm2861 = vweird.f32 %v2278
        %vm2862 = vweird.f32 %v2855
        %vm2863 = vmor %vm2861, %vm2862
        %v2864 = vsel %vm2863, %v2855, %v2860
        %v2865 = vrsqrt.pop %v2279
        %v2866 = vmul.f32 %v2865, %v2279
        %v2867 = vmul.f32 %v2866, %v2865
        %v2868 = vmul.f32 0.5, %v2867
        %v2869 = vsub.f32 1.5, %v2868
        %v2870 = vmul.f32 %v2865, %v2869
        %vm2871 = vweird.f32 %v2279
        %vm2872 = vweird.f32 %v2865
        %vm2873 = vmor %vm2871, %vm2872
        %v2874 = vsel %vm2873, %v2865, %v2870
        %v2875 = vrsqrt.pop %v2280
        %v2876 = vmul.f32 %v2875, %v2280
        %v2877 = vmul.f32 %v2876, %v2875
        %v2878 = vmul.f32 0.5, %v2877
        %v2879 = vsub.f32 1.5, %v2878
        %v2880 = vmul.f32 %v2875, %v2879
        %vm2881 = vweird.f32 %v2280
        %vm2882 = vweird.f32 %v2875
        %vm2883 = vmor %vm2881, %vm2882
        %v2884 = vsel %vm2883, %v2875, %v2880
        %v2885 = vrsqrt.pop %v2281
        %v2886 = vmul.f32 %v2885, %v2281
        %v2887 = vmul.f32 %v2886, %v2885
        %v2888 = vmul.f32 0.5, %v2887
        %v2889 = vsub.f32 1.5, %v2888
        %v2890 = vmul.f32 %v2885, %v2889
        %vm2891 = vweird.f32 %v2281
        %vm2892 = vweird.f32 %v2885
        %vm2893 = vmor %vm2891, %vm2892
        %v2894 = vsel %vm2893, %v2885, %v2890
        %v2895 = vrsqrt.pop %v2282
        %v2896 = vmul.f32 %v2895, %v2282
        %v2897 = vmul.f32 %v2896, %v2895
        %v2898 = vmul.f32 0.5, %v2897
        %v2899 = vsub.f32 1.5, %v2898
        %v2900 = vmul.f32 %v2895, %v2899
        %vm2901 = vweird.f32 %v2282
        %vm2902 = vweird.f32 %v2895
        %vm2903 = vmor %vm2901, %vm2902
        %v2904 = vsel %vm2903, %v2895, %v2900
        %v2905 = vrsqrt.pop %v2283
        %v2906 = vmul.f32 %v2905, %v2283
        %v2907 = vmul.f32 %v2906, %v2905
        %v2908 = vmul.f32 0.5, %v2907
        %v2909 = vsub.f32 1.5, %v2908
        %v2910 = vmul.f32 %v2905, %v2909
        %vm2911 = vweird.f32 %v2283
        %vm2912 = vweird.f32 %v2905
        %vm2913 = vmor %vm2911, %vm2912
        %v2914 = vsel %vm2913, %v2905, %v2910
        %v2915 = vrsqrt.pop %v2284
        %v2916 = vmul.f32 %v2915, %v2284
        %v2917 = vmul.f32 %v2916, %v2915
        %v2918 = vmul.f32 0.5, %v2917
        %v2919 = vsub.f32 1.5, %v2918
        %v2920 = vmul.f32 %v2915, %v2919
        %vm2921 = vweird.f32 %v2284
        %vm2922 = vweird.f32 %v2915
        %vm2923 = vmor %vm2921, %vm2922
        %v2924 = vsel %vm2923, %v2915, %v2920
        %v2925 = vmul.f32 %v2157, %v2294
        %v2926 = vmul.f32 %v2158, %v2304
        %v2927 = vmul.f32 %v2159, %v2314
        %v2928 = vmul.f32 %v2160, %v2324
        %v2929 = vmul.f32 %v2161, %v2334
        %v2930 = vmul.f32 %v2162, %v2344
        %v2931 = vmul.f32 %v2163, %v2354
        %v2932 = vmul.f32 %v2164, %v2364
        %v2933 = vmul.f32 %v2165, %v2374
        %v2934 = vmul.f32 %v2166, %v2384
        %v2935 = vmul.f32 %v2167, %v2394
        %v2936 = vmul.f32 %v2168, %v2404
        %v2937 = vmul.f32 %v2169, %v2414
        %v2938 = vmul.f32 %v2170, %v2424
        %v2939 = vmul.f32 %v2171, %v2434
        %v2940 = vmul.f32 %v2172, %v2444
        %v2941 = vmul.f32 %v2173, %v2454
        %v2942 = vmul.f32 %v2174, %v2464
        %v2943 = vmul.f32 %v2175, %v2474
        %v2944 = vmul.f32 %v2176, %v2484
        %v2945 = vmul.f32 %v2177, %v2494
        %v2946 = vmul.f32 %v2178, %v2504
        %v2947 = vmul.f32 %v2179, %v2514
        %v2948 = vmul.f32 %v2180, %v2524
        %v2949 = vmul.f32 %v2181, %v2534
        %v2950 = vmul.f32 %v2182, %v2544
        %v2951 = vmul.f32 %v2183, %v2554
        %v2952 = vmul.f32 %v2184, %v2564
        %v2953 = vmul.f32 %v2185, %v2574
        %v2954 = vmul.f32 %v2186, %v2584
        %v2955 = vmul.f32 %v2187, %v2594
        %v2956 = vmul.f32 %v2188, %v2604
        %v2957 = vmul.f32 %v2189, %v2614
        %v2958 = vmul.f32 %v2190, %v2624
        %v2959 = vmul.f32 %v2191, %v2634
        %v2960 = vmul.f32 %v2192, %v2644
        %v2961 = vmul.f32 %v2193, %v2654
        %v2962 = vmul.f32 %v2194, %v2664
        %v2963 = vmul.f32 %v2195, %v2674
        %v2964 = vmul.f32 %v2196, %v2684
        %v2965 = vmul.f32 %v2197, %v2694
        %v2966 = vmul.f32 %v2198, %v2704
        %v2967 = vmul.f32 %v2199, %v2714
        %v2968 = vmul.f32 %v2200, %v2724
        %v2969 = vmul.f32 %v2201, %v2734
        %v2970 = vmul.f32 %v2202, %v2744
        %v2971 = vmul.f32 %v2203, %v2754
        %v2972 = vmul.f32 %v2204, %v2764
        %v2973 = vmul.f32 %v2205, %v2774
        %v2974 = vmul.f32 %v2206, %v2784
        %v2975 = vmul.f32 %v2207, %v2794
        %v2976 = vmul.f32 %v2208, %v2804
        %v2977 = vmul.f32 %v2209, %v2814
        %v2978 = vmul.f32 %v2210, %v2824
        %v2979 = vmul.f32 %v2211, %v2834
        %v2980 = vmul.f32 %v2212, %v2844
        %v2981 = vmul.f32 %v2213, %v2854
        %v2982 = vmul.f32 %v2214, %v2864
        %v2983 = vmul.f32 %v2215, %v2874
        %v2984 = vmul.f32 %v2216, %v2884
        %v2985 = vmul.f32 %v2217, %v2894
        %v2986 = vmul.f32 %v2218, %v2904
        %v2987 = vmul.f32 %v2219, %v2914
        %v2988 = vmul.f32 %v2220, %v2924
        %v2989 = vld [vmem:[%s416] sm:$0x1]
        %v2990 = vld [vmem:[%s416 + $0x1] sm:$0x1]
        %v2991 = vld [vmem:[%s416 + $0x2] sm:$0x1]
        %v2992 = vld [vmem:[%s416 + $0x3] sm:$0x1]
        %v2993 = vld [vmem:[%s416 + $0x4] sm:$0x1]
        %v2994 = vld [vmem:[%s416 + $0x5] sm:$0x1]
        %v2995 = vld [vmem:[%s416 + $0x6] sm:$0x1]
        %v2996 = vld [vmem:[%s416 + $0x7] sm:$0x1]
        %v2997 = vld [vmem:[%s416 + $0x8] sm:$0x1]
        %v2998 = vld [vmem:[%s416 + $0x9] sm:$0x1]
        %v2999 = vld [vmem:[%s416 + $0xa] sm:$0x1]
        %v3000 = vld [vmem:[%s416 + $0xb] sm:$0x1]
        %v3001 = vld [vmem:[%s416 + $0xc] sm:$0x1]
        %v3002 = vld [vmem:[%s416 + $0xd] sm:$0x1]
        %v3003 = vld [vmem:[%s416 + $0xe] sm:$0x1]
        %v3004 = vld [vmem:[%s416 + $0xf] sm:$0x1]
        %v3005 = vld [vmem:[%s416 + $0x10] sm:$0x1]
        %v3006 = vld [vmem:[%s416 + $0x11] sm:$0x1]
        %v3007 = vld [vmem:[%s416 + $0x12] sm:$0x1]
        %v3008 = vld [vmem:[%s416 + $0x13] sm:$0x1]
        %v3009 = vld [vmem:[%s416 + $0x14] sm:$0x1]
        %v3010 = vld [vmem:[%s416 + $0x15] sm:$0x1]
        %v3011 = vld [vmem:[%s416 + $0x16] sm:$0x1]
        %v3012 = vld [vmem:[%s416 + $0x17] sm:$0x1]
        %v3013 = vld [vmem:[%s416 + $0x18] sm:$0x1]
        %v3014 = vld [vmem:[%s416 + $0x19] sm:$0x1]
        %v3015 = vld [vmem:[%s416 + $0x1a] sm:$0x1]
        %v3016 = vld [vmem:[%s416 + $0x1b] sm:$0x1]
        %v3017 = vld [vmem:[%s416 + $0x1c] sm:$0x1]
        %v3018 = vld [vmem:[%s416 + $0x1d] sm:$0x1]
        %v3019 = vld [vmem:[%s416 + $0x1e] sm:$0x1]
        %v3020 = vld [vmem:[%s416 + $0x1f] sm:$0x1]
        %v3021 = vld [vmem:[%s416 + $0x20] sm:$0x1]
        %v3022 = vld [vmem:[%s416 + $0x21] sm:$0x1]
        %v3023 = vld [vmem:[%s416 + $0x22] sm:$0x1]
        %v3024 = vld [vmem:[%s416 + $0x23] sm:$0x1]
        %v3025 = vld [vmem:[%s416 + $0x24] sm:$0x1]
        %v3026 = vld [vmem:[%s416 + $0x25] sm:$0x1]
        %v3027 = vld [vmem:[%s416 + $0x26] sm:$0x1]
        %v3028 = vld [vmem:[%s416 + $0x27] sm:$0x1]
        %v3029 = vld [vmem:[%s416 + $0x28] sm:$0x1]
        %v3030 = vld [vmem:[%s416 + $0x29] sm:$0x1]
        %v3031 = vld [vmem:[%s416 + $0x2a] sm:$0x1]
        %v3032 = vld [vmem:[%s416 + $0x2b] sm:$0x1]
        %v3033 = vld [vmem:[%s416 + $0x2c] sm:$0x1]
        %v3034 = vld [vmem:[%s416 + $0x2d] sm:$0x1]
        %v3035 = vld [vmem:[%s416 + $0x2e] sm:$0x1]
        %v3036 = vld [vmem:[%s416 + $0x2f] sm:$0x1]
        %v3037 = vld [vmem:[%s416 + $0x30] sm:$0x1]
        %v3038 = vld [vmem:[%s416 + $0x31] sm:$0x1]
        %v3039 = vld [vmem:[%s416 + $0x32] sm:$0x1]
        %v3040 = vld [vmem:[%s416 + $0x33] sm:$0x1]
        %v3041 = vld [vmem:[%s416 + $0x34] sm:$0x1]
        %v3042 = vld [vmem:[%s416 + $0x35] sm:$0x1]
        %v3043 = vld [vmem:[%s416 + $0x36] sm:$0x1]
        %v3044 = vld [vmem:[%s416 + $0x37] sm:$0x1]
        %v3045 = vld [vmem:[%s416 + $0x38] sm:$0x1]
        %v3046 = vld [vmem:[%s416 + $0x39] sm:$0x1]
        %v3047 = vld [vmem:[%s416 + $0x3a] sm:$0x1]
        %v3048 = vld [vmem:[%s416 + $0x3b] sm:$0x1]
        %v3049 = vld [vmem:[%s416 + $0x3c] sm:$0x1]
        %v3050 = vld [vmem:[%s416 + $0x3d] sm:$0x1]
        %v3051 = vld [vmem:[%s416 + $0x3e] sm:$0x1]
        %v3052 = vld [vmem:[%s416 + $0x3f] sm:$0x1]
        %v3053 = vmul.f32 %v1837, %v2925
        %v3054 = vmul.f32 %v1838, %v2926
        %v3055 = vmul.f32 %v1839, %v2927
        %v3056 = vmul.f32 %v1840, %v2928
        %v3057 = vmul.f32 %v1841, %v2929
        %v3058 = vmul.f32 %v1842, %v2930
        %v3059 = vmul.f32 %v1843, %v2931
        %v3060 = vmul.f32 %v1844, %v2932
        %v3061 = vmul.f32 %v1845, %v2933
        %v3062 = vmul.f32 %v1846, %v2934
        %v3063 = vmul.f32 %v1847, %v2935
        %v3064 = vmul.f32 %v1848, %v2936
        %v3065 = vmul.f32 %v1849, %v2937
        %v3066 = vmul.f32 %v1850, %v2938
        %v3067 = vmul.f32 %v1851, %v2939
        %v3068 = vmul.f32 %v1852, %v2940
        %v3069 = vmul.f32 %v1853, %v2941
        %v3070 = vmul.f32 %v1854, %v2942
        %v3071 = vmul.f32 %v1855, %v2943
        %v3072 = vmul.f32 %v1856, %v2944
        %v3073 = vmul.f32 %v1857, %v2945
        %v3074 = vmul.f32 %v1858, %v2946
        %v3075 = vmul.f32 %v1859, %v2947
        %v3076 = vmul.f32 %v1860, %v2948
        %v3077 = vmul.f32 %v1861, %v2949
        %v3078 = vmul.f32 %v1862, %v2950
        %v3079 = vmul.f32 %v1863, %v2951
        %v3080 = vmul.f32 %v1864, %v2952
        %v3081 = vmul.f32 %v1865, %v2953
        %v3082 = vmul.f32 %v1866, %v2954
        %v3083 = vmul.f32 %v1867, %v2955
        %v3084 = vmul.f32 %v1868, %v2956
        %v3085 = vmul.f32 %v1869, %v2957
        %v3086 = vmul.f32 %v1870, %v2958
        %v3087 = vmul.f32 %v1871, %v2959
        %v3088 = vmul.f32 %v1872, %v2960
        %v3089 = vmul.f32 %v1873, %v2961
        %v3090 = vmul.f32 %v1874, %v2962
        %v3091 = vmul.f32 %v1875, %v2963
        %v3092 = vmul.f32 %v1876, %v2964
        %v3093 = vmul.f32 %v1877, %v2965
        %v3094 = vmul.f32 %v1878, %v2966
        %v3095 = vmul.f32 %v1879, %v2967
        %v3096 = vmul.f32 %v1880, %v2968
        %v3097 = vmul.f32 %v1881, %v2969
        %v3098 = vmul.f32 %v1882, %v2970
        %v3099 = vmul.f32 %v1883, %v2971
        %v3100 = vmul.f32 %v1884, %v2972
        %v3101 = vmul.f32 %v1885, %v2973
        %v3102 = vmul.f32 %v1886, %v2974
        %v3103 = vmul.f32 %v1887, %v2975
        %v3104 = vmul.f32 %v1888, %v2976
        %v3105 = vmul.f32 %v1889, %v2977
        %v3106 = vmul.f32 %v1890, %v2978
        %v3107 = vmul.f32 %v1891, %v2979
        %v3108 = vmul.f32 %v1892, %v2980
        %v3109 = vmul.f32 %v1893, %v2981
        %v3110 = vmul.f32 %v1894, %v2982
        %v3111 = vmul.f32 %v1895, %v2983
        %v3112 = vmul.f32 %v1896, %v2984
        %v3113 = vmul.f32 %v1897, %v2985
        %v3114 = vmul.f32 %v1898, %v2986
        %v3115 = vmul.f32 %v1899, %v2987
        %v3116 = vmul.f32 %v1900, %v2988
        %v3117 = vsub.f32 %v2989, %v3053
        %v3118 = vsub.f32 %v2990, %v3054
        %v3119 = vsub.f32 %v2991, %v3055
        %v3120 = vsub.f32 %v2992, %v3056
        %v3121 = vsub.f32 %v2993, %v3057
        %v3122 = vsub.f32 %v2994, %v3058
        %v3123 = vsub.f32 %v2995, %v3059
        %v3124 = vsub.f32 %v2996, %v3060
        %v3125 = vsub.f32 %v2997, %v3061
        %v3126 = vsub.f32 %v2998, %v3062
        %v3127 = vsub.f32 %v2999, %v3063
        %v3128 = vsub.f32 %v3000, %v3064
        %v3129 = vsub.f32 %v3001, %v3065
        %v3130 = vsub.f32 %v3002, %v3066
        %v3131 = vsub.f32 %v3003, %v3067
        %v3132 = vsub.f32 %v3004, %v3068
        %v3133 = vsub.f32 %v3005, %v3069
        %v3134 = vsub.f32 %v3006, %v3070
        %v3135 = vsub.f32 %v3007, %v3071
        %v3136 = vsub.f32 %v3008, %v3072
        %v3137 = vsub.f32 %v3009, %v3073
        %v3138 = vsub.f32 %v3010, %v3074
        %v3139 = vsub.f32 %v3011, %v3075
        %v3140 = vsub.f32 %v3012, %v3076
        %v3141 = vsub.f32 %v3013, %v3077
        %v3142 = vsub.f32 %v3014, %v3078
        %v3143 = vsub.f32 %v3015, %v3079
        %v3144 = vsub.f32 %v3016, %v3080
        %v3145 = vsub.f32 %v3017, %v3081
        %v3146 = vsub.f32 %v3018, %v3082
        %v3147 = vsub.f32 %v3019, %v3083
        %v3148 = vsub.f32 %v3020, %v3084
        %v3149 = vsub.f32 %v3021, %v3085
        %v3150 = vsub.f32 %v3022, %v3086
        %v3151 = vsub.f32 %v3023, %v3087
        %v3152 = vsub.f32 %v3024, %v3088
        %v3153 = vsub.f32 %v3025, %v3089
        %v3154 = vsub.f32 %v3026, %v3090
        %v3155 = vsub.f32 %v3027, %v3091
        %v3156 = vsub.f32 %v3028, %v3092
        %v3157 = vsub.f32 %v3029, %v3093
        %v3158 = vsub.f32 %v3030, %v3094
        %v3159 = vsub.f32 %v3031, %v3095
        %v3160 = vsub.f32 %v3032, %v3096
        %v3161 = vsub.f32 %v3033, %v3097
        %v3162 = vsub.f32 %v3034, %v3098
        %v3163 = vsub.f32 %v3035, %v3099
        %v3164 = vsub.f32 %v3036, %v3100
        %v3165 = vsub.f32 %v3037, %v3101
        %v3166 = vsub.f32 %v3038, %v3102
        %v3167 = vsub.f32 %v3039, %v3103
        %v3168 = vsub.f32 %v3040, %v3104
        %v3169 = vsub.f32 %v3041, %v3105
        %v3170 = vsub.f32 %v3042, %v3106
        %v3171 = vsub.f32 %v3043, %v3107
        %v3172 = vsub.f32 %v3044, %v3108
        %v3173 = vsub.f32 %v3045, %v3109
        %v3174 = vsub.f32 %v3046, %v3110
        %v3175 = vsub.f32 %v3047, %v3111
        %v3176 = vsub.f32 %v3048, %v3112
        %v3177 = vsub.f32 %v3049, %v3113
        %v3178 = vsub.f32 %v3050, %v3114
        %v3179 = vsub.f32 %v3051, %v3115
        %v3180 = vsub.f32 %v3052, %v3116
        %v3245 = vperm.slane %v2925, 0
        %v3246 = vperm.slane %v2926, 0
        %v3247 = vperm.slane %v2927, 0
        %v3248 = vperm.slane %v2928, 0
        %v3249 = vperm.slane %v2929, 0
        %v3250 = vperm.slane %v2930, 0
        %v3251 = vperm.slane %v2931, 0
        %v3252 = vperm.slane %v2932, 0
        %v3253 = vperm.slane %v2933, 0
        %v3254 = vperm.slane %v2934, 0
        %v3255 = vperm.slane %v2935, 0
        %v3256 = vperm.slane %v2936, 0
        %v3257 = vperm.slane %v2937, 0
        %v3258 = vperm.slane %v2938, 0
        %v3259 = vperm.slane %v2939, 0
        %v3260 = vperm.slane %v2940, 0
        %v3261 = vperm.slane %v2941, 0
        %v3262 = vperm.slane %v2942, 0
        %v3263 = vperm.slane %v2943, 0
        %v3264 = vperm.slane %v2944, 0
        %v3265 = vperm.slane %v2945, 0
        %v3266 = vperm.slane %v2946, 0
        %v3267 = vperm.slane %v2947, 0
        %v3268 = vperm.slane %v2948, 0
        %v3269 = vperm.slane %v2949, 0
        %v3270 = vperm.slane %v2950, 0
        %v3271 = vperm.slane %v2951, 0
        %v3272 = vperm.slane %v2952, 0
        %v3273 = vperm.slane %v2953, 0
        %v3274 = vperm.slane %v2954, 0
        %v3275 = vperm.slane %v2955, 0
        %v3276 = vperm.slane %v2956, 0
        %v3277 = vperm.slane %v2957, 0
        %v3278 = vperm.slane %v2958, 0
        %v3279 = vperm.slane %v2959, 0
        %v3280 = vperm.slane %v2960, 0
        %v3281 = vperm.slane %v2961, 0
        %v3282 = vperm.slane %v2962, 0
        %v3283 = vperm.slane %v2963, 0
        %v3284 = vperm.slane %v2964, 0
        %v3285 = vperm.slane %v2965, 0
        %v3286 = vperm.slane %v2966, 0
        %v3287 = vperm.slane %v2967, 0
        %v3288 = vperm.slane %v2968, 0
        %v3289 = vperm.slane %v2969, 0
        %v3290 = vperm.slane %v2970, 0
        %v3291 = vperm.slane %v2971, 0
        %v3292 = vperm.slane %v2972, 0
        %v3293 = vperm.slane %v2973, 0
        %v3294 = vperm.slane %v2974, 0
        %v3295 = vperm.slane %v2975, 0
        %v3296 = vperm.slane %v2976, 0
        %v3297 = vperm.slane %v2977, 0
        %v3298 = vperm.slane %v2978, 0
        %v3299 = vperm.slane %v2979, 0
        %v3300 = vperm.slane %v2980, 0
        %v3301 = vperm.slane %v2981, 0
        %v3302 = vperm.slane %v2982, 0
        %v3303 = vperm.slane %v2983, 0
        %v3304 = vperm.slane %v2984, 0
        %v3305 = vperm.slane %v2985, 0
        %v3306 = vperm.slane %v2986, 0
        %v3307 = vperm.slane %v2987, 0
        %v3308 = vperm.slane %v2988, 0
        %3309 = vset.pattern.permute.xlu0 0
        %3310 = vperm.xlu0 %3309, %v3245
        %v3311 = vpop.permute.xlu0 %3310
        %3313 = vset.pattern.permute.xlu0 0
        %3314 = vperm.xlu0 %3313, %v3246
        %v3315 = vpop.permute.xlu0 %3314
        %3317 = vset.pattern.permute.xlu0 0
        %3318 = vperm.xlu0 %3317, %v3247
        %v3319 = vpop.permute.xlu0 %3318
        %3321 = vset.pattern.permute.xlu0 0
        %3322 = vperm.xlu0 %3321, %v3248
        %v3323 = vpop.permute.xlu0 %3322
        %3325 = vset.pattern.permute.xlu0 0
        %3326 = vperm.xlu0 %3325, %v3249
        %v3327 = vpop.permute.xlu0 %3326
        %3329 = vset.pattern.permute.xlu0 0
        %3330 = vperm.xlu0 %3329, %v3250
        %v3331 = vpop.permute.xlu0 %3330
        %3333 = vset.pattern.permute.xlu0 0
        %3334 = vperm.xlu0 %3333, %v3251
        %v3335 = vpop.permute.xlu0 %3334
        %3337 = vset.pattern.permute.xlu0 0
        %3338 = vperm.xlu0 %3337, %v3252
        %v3339 = vpop.permute.xlu0 %3338
        %3341 = vset.pattern.permute.xlu0 0
        %3342 = vperm.xlu0 %3341, %v3253
        %v3343 = vpop.permute.xlu0 %3342
        %3345 = vset.pattern.permute.xlu0 0
        %3346 = vperm.xlu0 %3345, %v3254
        %v3347 = vpop.permute.xlu0 %3346
        %3349 = vset.pattern.permute.xlu0 0
        %3350 = vperm.xlu0 %3349, %v3255
        %v3351 = vpop.permute.xlu0 %3350
        %3353 = vset.pattern.permute.xlu0 0
        %3354 = vperm.xlu0 %3353, %v3256
        %v3355 = vpop.permute.xlu0 %3354
        %3357 = vset.pattern.permute.xlu0 0
        %3358 = vperm.xlu0 %3357, %v3257
        %v3359 = vpop.permute.xlu0 %3358
        %3361 = vset.pattern.permute.xlu0 0
        %3362 = vperm.xlu0 %3361, %v3258
        %v3363 = vpop.permute.xlu0 %3362
        %3365 = vset.pattern.permute.xlu0 0
        %3366 = vperm.xlu0 %3365, %v3259
        %v3367 = vpop.permute.xlu0 %3366
        %3369 = vset.pattern.permute.xlu0 0
        %3370 = vperm.xlu0 %3369, %v3260
        %v3371 = vpop.permute.xlu0 %3370
        %3373 = vset.pattern.permute.xlu0 0
        %3374 = vperm.xlu0 %3373, %v3261
        %v3375 = vpop.permute.xlu0 %3374
        %3377 = vset.pattern.permute.xlu0 0
        %3378 = vperm.xlu0 %3377, %v3262
        %v3379 = vpop.permute.xlu0 %3378
        %3381 = vset.pattern.permute.xlu0 0
        %3382 = vperm.xlu0 %3381, %v3263
        %v3383 = vpop.permute.xlu0 %3382
        %3385 = vset.pattern.permute.xlu0 0
        %3386 = vperm.xlu0 %3385, %v3264
        %v3387 = vpop.permute.xlu0 %3386
        %3389 = vset.pattern.permute.xlu0 0
        %3390 = vperm.xlu0 %3389, %v3265
        %v3391 = vpop.permute.xlu0 %3390
        %3393 = vset.pattern.permute.xlu0 0
        %3394 = vperm.xlu0 %3393, %v3266
        %v3395 = vpop.permute.xlu0 %3394
        %3397 = vset.pattern.permute.xlu0 0
        %3398 = vperm.xlu0 %3397, %v3267
        %v3399 = vpop.permute.xlu0 %3398
        %3401 = vset.pattern.permute.xlu0 0
        %3402 = vperm.xlu0 %3401, %v3268
        %v3403 = vpop.permute.xlu0 %3402
        %3405 = vset.pattern.permute.xlu0 0
        %3406 = vperm.xlu0 %3405, %v3269
        %v3407 = vpop.permute.xlu0 %3406
        %3409 = vset.pattern.permute.xlu0 0
        %3410 = vperm.xlu0 %3409, %v3270
        %v3411 = vpop.permute.xlu0 %3410
        %3413 = vset.pattern.permute.xlu0 0
        %3414 = vperm.xlu0 %3413, %v3271
        %v3415 = vpop.permute.xlu0 %3414
        %3417 = vset.pattern.permute.xlu0 0
        %3418 = vperm.xlu0 %3417, %v3272
        %v3419 = vpop.permute.xlu0 %3418
        %3421 = vset.pattern.permute.xlu0 0
        %3422 = vperm.xlu0 %3421, %v3273
        %v3423 = vpop.permute.xlu0 %3422
        %3425 = vset.pattern.permute.xlu0 0
        %3426 = vperm.xlu0 %3425, %v3274
        %v3427 = vpop.permute.xlu0 %3426
        %3429 = vset.pattern.permute.xlu0 0
        %3430 = vperm.xlu0 %3429, %v3275
        %v3431 = vpop.permute.xlu0 %3430
        %3433 = vset.pattern.permute.xlu0 0
        %3434 = vperm.xlu0 %3433, %v3276
        %v3435 = vpop.permute.xlu0 %3434
        %3437 = vset.pattern.permute.xlu0 0
        %3438 = vperm.xlu0 %3437, %v3277
        %v3439 = vpop.permute.xlu0 %3438
        %3441 = vset.pattern.permute.xlu0 0
        %3442 = vperm.xlu0 %3441, %v3278
        %v3443 = vpop.permute.xlu0 %3442
        %3445 = vset.pattern.permute.xlu0 0
        %3446 = vperm.xlu0 %3445, %v3279
        %v3447 = vpop.permute.xlu0 %3446
        %3449 = vset.pattern.permute.xlu0 0
        %3450 = vperm.xlu0 %3449, %v3280
        %v3451 = vpop.permute.xlu0 %3450
        %3453 = vset.pattern.permute.xlu0 0
        %3454 = vperm.xlu0 %3453, %v3281
        %v3455 = vpop.permute.xlu0 %3454
        %3457 = vset.pattern.permute.xlu0 0
        %3458 = vperm.xlu0 %3457, %v3282
        %v3459 = vpop.permute.xlu0 %3458
        %3461 = vset.pattern.permute.xlu0 0
        %3462 = vperm.xlu0 %3461, %v3283
        %v3463 = vpop.permute.xlu0 %3462
        %3465 = vset.pattern.permute.xlu0 0
        %3466 = vperm.xlu0 %3465, %v3284
        %v3467 = vpop.permute.xlu0 %3466
        %3469 = vset.pattern.permute.xlu0 0
        %3470 = vperm.xlu0 %3469, %v3285
        %v3471 = vpop.permute.xlu0 %3470
        %3473 = vset.pattern.permute.xlu0 0
        %3474 = vperm.xlu0 %3473, %v3286
        %v3475 = vpop.permute.xlu0 %3474
        %3477 = vset.pattern.permute.xlu0 0
        %3478 = vperm.xlu0 %3477, %v3287
        %v3479 = vpop.permute.xlu0 %3478
        %3481 = vset.pattern.permute.xlu0 0
        %3482 = vperm.xlu0 %3481, %v3288
        %v3483 = vpop.permute.xlu0 %3482
        %3485 = vset.pattern.permute.xlu0 0
        %3486 = vperm.xlu0 %3485, %v3289
        %v3487 = vpop.permute.xlu0 %3486
        %3489 = vset.pattern.permute.xlu0 0
        %3490 = vperm.xlu0 %3489, %v3290
        %v3491 = vpop.permute.xlu0 %3490
        %3493 = vset.pattern.permute.xlu0 0
        %3494 = vperm.xlu0 %3493, %v3291
        %v3495 = vpop.permute.xlu0 %3494
        %3497 = vset.pattern.permute.xlu0 0
        %3498 = vperm.xlu0 %3497, %v3292
        %v3499 = vpop.permute.xlu0 %3498
        %3501 = vset.pattern.permute.xlu0 0
        %3502 = vperm.xlu0 %3501, %v3293
        %v3503 = vpop.permute.xlu0 %3502
        %3505 = vset.pattern.permute.xlu0 0
        %3506 = vperm.xlu0 %3505, %v3294
        %v3507 = vpop.permute.xlu0 %3506
        %3509 = vset.pattern.permute.xlu0 0
        %3510 = vperm.xlu0 %3509, %v3295
        %v3511 = vpop.permute.xlu0 %3510
        %3513 = vset.pattern.permute.xlu0 0
        %3514 = vperm.xlu0 %3513, %v3296
        %v3515 = vpop.permute.xlu0 %3514
        %3517 = vset.pattern.permute.xlu0 0
        %3518 = vperm.xlu0 %3517, %v3297
        %v3519 = vpop.permute.xlu0 %3518
        %3521 = vset.pattern.permute.xlu0 0
        %3522 = vperm.xlu0 %3521, %v3298
        %v3523 = vpop.permute.xlu0 %3522
        %3525 = vset.pattern.permute.xlu0 0
        %3526 = vperm.xlu0 %3525, %v3299
        %v3527 = vpop.permute.xlu0 %3526
        %3529 = vset.pattern.permute.xlu0 0
        %3530 = vperm.xlu0 %3529, %v3300
        %v3531 = vpop.permute.xlu0 %3530
        %3533 = vset.pattern.permute.xlu0 0
        %3534 = vperm.xlu0 %3533, %v3301
        %v3535 = vpop.permute.xlu0 %3534
        %3537 = vset.pattern.permute.xlu0 0
        %3538 = vperm.xlu0 %3537, %v3302
        %v3539 = vpop.permute.xlu0 %3538
        %3541 = vset.pattern.permute.xlu0 0
        %3542 = vperm.xlu0 %3541, %v3303
        %v3543 = vpop.permute.xlu0 %3542
        %3545 = vset.pattern.permute.xlu0 0
        %3546 = vperm.xlu0 %3545, %v3304
        %v3547 = vpop.permute.xlu0 %3546
        %3549 = vset.pattern.permute.xlu0 0
        %3550 = vperm.xlu0 %3549, %v3305
        %v3551 = vpop.permute.xlu0 %3550
        %3553 = vset.pattern.permute.xlu0 0
        %3554 = vperm.xlu0 %3553, %v3306
        %v3555 = vpop.permute.xlu0 %3554
        %3557 = vset.pattern.permute.xlu0 0
        %3558 = vperm.xlu0 %3557, %v3307
        %v3559 = vpop.permute.xlu0 %3558
        %3561 = vset.pattern.permute.xlu0 0
        %3562 = vperm.xlu0 %3561, %v3308
        %v3563 = vpop.permute.xlu0 %3562
        %v3565 = vmul.f32 %v429, %v3311
        %v3566 = vmul.f32 %v430, %v3315
        %v3567 = vmul.f32 %v431, %v3319
        %v3568 = vmul.f32 %v432, %v3323
        %v3569 = vmul.f32 %v433, %v3327
        %v3570 = vmul.f32 %v434, %v3331
        %v3571 = vmul.f32 %v435, %v3335
        %v3572 = vmul.f32 %v436, %v3339
        %v3573 = vmul.f32 %v437, %v3343
        %v3574 = vmul.f32 %v438, %v3347
        %v3575 = vmul.f32 %v439, %v3351
        %v3576 = vmul.f32 %v440, %v3355
        %v3577 = vmul.f32 %v441, %v3359
        %v3578 = vmul.f32 %v442, %v3363
        %v3579 = vmul.f32 %v443, %v3367
        %v3580 = vmul.f32 %v444, %v3371
        %v3581 = vmul.f32 %v445, %v3375
        %v3582 = vmul.f32 %v446, %v3379
        %v3583 = vmul.f32 %v447, %v3383
        %v3584 = vmul.f32 %v448, %v3387
        %v3585 = vmul.f32 %v449, %v3391
        %v3586 = vmul.f32 %v450, %v3395
        %v3587 = vmul.f32 %v451, %v3399
        %v3588 = vmul.f32 %v452, %v3403
        %v3589 = vmul.f32 %v453, %v3407
        %v3590 = vmul.f32 %v454, %v3411
        %v3591 = vmul.f32 %v455, %v3415
        %v3592 = vmul.f32 %v456, %v3419
        %v3593 = vmul.f32 %v457, %v3423
        %v3594 = vmul.f32 %v458, %v3427
        %v3595 = vmul.f32 %v459, %v3431
        %v3596 = vmul.f32 %v460, %v3435
        %v3597 = vmul.f32 %v461, %v3439
        %v3598 = vmul.f32 %v462, %v3443
        %v3599 = vmul.f32 %v463, %v3447
        %v3600 = vmul.f32 %v464, %v3451
        %v3601 = vmul.f32 %v465, %v3455
        %v3602 = vmul.f32 %v466, %v3459
        %v3603 = vmul.f32 %v467, %v3463
        %v3604 = vmul.f32 %v468, %v3467
        %v3605 = vmul.f32 %v469, %v3471
        %v3606 = vmul.f32 %v470, %v3475
        %v3607 = vmul.f32 %v471, %v3479
        %v3608 = vmul.f32 %v472, %v3483
        %v3609 = vmul.f32 %v473, %v3487
        %v3610 = vmul.f32 %v474, %v3491
        %v3611 = vmul.f32 %v475, %v3495
        %v3612 = vmul.f32 %v476, %v3499
        %v3613 = vmul.f32 %v477, %v3503
        %v3614 = vmul.f32 %v478, %v3507
        %v3615 = vmul.f32 %v479, %v3511
        %v3616 = vmul.f32 %v480, %v3515
        %v3617 = vmul.f32 %v481, %v3519
        %v3618 = vmul.f32 %v482, %v3523
        %v3619 = vmul.f32 %v483, %v3527
        %v3620 = vmul.f32 %v484, %v3531
        %v3621 = vmul.f32 %v485, %v3535
        %v3622 = vmul.f32 %v486, %v3539
        %v3623 = vmul.f32 %v487, %v3543
        %v3624 = vmul.f32 %v488, %v3547
        %v3625 = vmul.f32 %v489, %v3551
        %v3626 = vmul.f32 %v490, %v3555
        %v3627 = vmul.f32 %v491, %v3559
        %v3628 = vmul.f32 %v492, %v3563
        %v3629 = vmul.f32 %v493, %v3311
        %v3630 = vmul.f32 %v494, %v3315
        %v3631 = vmul.f32 %v495, %v3319
        %v3632 = vmul.f32 %v496, %v3323
        %v3633 = vmul.f32 %v497, %v3327
        %v3634 = vmul.f32 %v498, %v3331
        %v3635 = vmul.f32 %v499, %v3335
        %v3636 = vmul.f32 %v500, %v3339
        %v3637 = vmul.f32 %v501, %v3343
        %v3638 = vmul.f32 %v502, %v3347
        %v3639 = vmul.f32 %v503, %v3351
        %v3640 = vmul.f32 %v504, %v3355
        %v3641 = vmul.f32 %v505, %v3359
        %v3642 = vmul.f32 %v506, %v3363
        %v3643 = vmul.f32 %v507, %v3367
        %v3644 = vmul.f32 %v508, %v3371
        %v3645 = vmul.f32 %v509, %v3375
        %v3646 = vmul.f32 %v510, %v3379
        %v3647 = vmul.f32 %v511, %v3383
        %v3648 = vmul.f32 %v512, %v3387
        %v3649 = vmul.f32 %v513, %v3391
        %v3650 = vmul.f32 %v514, %v3395
        %v3651 = vmul.f32 %v515, %v3399
        %v3652 = vmul.f32 %v516, %v3403
        %v3653 = vmul.f32 %v517, %v3407
        %v3654 = vmul.f32 %v518, %v3411
        %v3655 = vmul.f32 %v519, %v3415
        %v3656 = vmul.f32 %v520, %v3419
        %v3657 = vmul.f32 %v521, %v3423
        %v3658 = vmul.f32 %v522, %v3427
        %v3659 = vmul.f32 %v523, %v3431
        %v3660 = vmul.f32 %v524, %v3435
        %v3661 = vmul.f32 %v525, %v3439
        %v3662 = vmul.f32 %v526, %v3443
        %v3663 = vmul.f32 %v527, %v3447
        %v3664 = vmul.f32 %v528, %v3451
        %v3665 = vmul.f32 %v529, %v3455
        %v3666 = vmul.f32 %v530, %v3459
        %v3667 = vmul.f32 %v531, %v3463
        %v3668 = vmul.f32 %v532, %v3467
        %v3669 = vmul.f32 %v533, %v3471
        %v3670 = vmul.f32 %v534, %v3475
        %v3671 = vmul.f32 %v535, %v3479
        %v3672 = vmul.f32 %v536, %v3483
        %v3673 = vmul.f32 %v537, %v3487
        %v3674 = vmul.f32 %v538, %v3491
        %v3675 = vmul.f32 %v539, %v3495
        %v3676 = vmul.f32 %v540, %v3499
        %v3677 = vmul.f32 %v541, %v3503
        %v3678 = vmul.f32 %v542, %v3507
        %v3679 = vmul.f32 %v543, %v3511
        %v3680 = vmul.f32 %v544, %v3515
        %v3681 = vmul.f32 %v545, %v3519
        %v3682 = vmul.f32 %v546, %v3523
        %v3683 = vmul.f32 %v547, %v3527
        %v3684 = vmul.f32 %v548, %v3531
        %v3685 = vmul.f32 %v549, %v3535
        %v3686 = vmul.f32 %v550, %v3539
        %v3687 = vmul.f32 %v551, %v3543
        %v3688 = vmul.f32 %v552, %v3547
        %v3689 = vmul.f32 %v553, %v3551
        %v3690 = vmul.f32 %v554, %v3555
        %v3691 = vmul.f32 %v555, %v3559
        %v3692 = vmul.f32 %v556, %v3563
        %v3757 = vperm.slane %v3117, 0
        %v3758 = vperm.slane %v3118, 0
        %v3759 = vperm.slane %v3119, 0
        %v3760 = vperm.slane %v3120, 0
        %v3761 = vperm.slane %v3121, 0
        %v3762 = vperm.slane %v3122, 0
        %v3763 = vperm.slane %v3123, 0
        %v3764 = vperm.slane %v3124, 0
        %v3765 = vperm.slane %v3125, 0
        %v3766 = vperm.slane %v3126, 0
        %v3767 = vperm.slane %v3127, 0
        %v3768 = vperm.slane %v3128, 0
        %v3769 = vperm.slane %v3129, 0
        %v3770 = vperm.slane %v3130, 0
        %v3771 = vperm.slane %v3131, 0
        %v3772 = vperm.slane %v3132, 0
        %v3773 = vperm.slane %v3133, 0
        %v3774 = vperm.slane %v3134, 0
        %v3775 = vperm.slane %v3135, 0
        %v3776 = vperm.slane %v3136, 0
        %v3777 = vperm.slane %v3137, 0
        %v3778 = vperm.slane %v3138, 0
        %v3779 = vperm.slane %v3139, 0
        %v3780 = vperm.slane %v3140, 0
        %v3781 = vperm.slane %v3141, 0
        %v3782 = vperm.slane %v3142, 0
        %v3783 = vperm.slane %v3143, 0
        %v3784 = vperm.slane %v3144, 0
        %v3785 = vperm.slane %v3145, 0
        %v3786 = vperm.slane %v3146, 0
        %v3787 = vperm.slane %v3147, 0
        %v3788 = vperm.slane %v3148, 0
        %v3789 = vperm.slane %v3149, 0
        %v3790 = vperm.slane %v3150, 0
        %v3791 = vperm.slane %v3151, 0
        %v3792 = vperm.slane %v3152, 0
        %v3793 = vperm.slane %v3153, 0
        %v3794 = vperm.slane %v3154, 0
        %v3795 = vperm.slane %v3155, 0
        %v3796 = vperm.slane %v3156, 0
        %v3797 = vperm.slane %v3157, 0
        %v3798 = vperm.slane %v3158, 0
        %v3799 = vperm.slane %v3159, 0
        %v3800 = vperm.slane %v3160, 0
        %v3801 = vperm.slane %v3161, 0
        %v3802 = vperm.slane %v3162, 0
        %v3803 = vperm.slane %v3163, 0
        %v3804 = vperm.slane %v3164, 0
        %v3805 = vperm.slane %v3165, 0
        %v3806 = vperm.slane %v3166, 0
        %v3807 = vperm.slane %v3167, 0
        %v3808 = vperm.slane %v3168, 0
        %v3809 = vperm.slane %v3169, 0
        %v3810 = vperm.slane %v3170, 0
        %v3811 = vperm.slane %v3171, 0
        %v3812 = vperm.slane %v3172, 0
        %v3813 = vperm.slane %v3173, 0
        %v3814 = vperm.slane %v3174, 0
        %v3815 = vperm.slane %v3175, 0
        %v3816 = vperm.slane %v3176, 0
        %v3817 = vperm.slane %v3177, 0
        %v3818 = vperm.slane %v3178, 0
        %v3819 = vperm.slane %v3179, 0
        %v3820 = vperm.slane %v3180, 0
        %3821 = vset.pattern.permute.xlu0 0
        %3822 = vperm.xlu0 %3821, %v3757
        %v3823 = vpop.permute.xlu0 %3822
        %3825 = vset.pattern.permute.xlu0 0
        %3826 = vperm.xlu0 %3825, %v3758
        %v3827 = vpop.permute.xlu0 %3826
        %3829 = vset.pattern.permute.xlu0 0
        %3830 = vperm.xlu0 %3829, %v3759
        %v3831 = vpop.permute.xlu0 %3830
        %3833 = vset.pattern.permute.xlu0 0
        %3834 = vperm.xlu0 %3833, %v3760
        %v3835 = vpop.permute.xlu0 %3834
        %3837 = vset.pattern.permute.xlu0 0
        %3838 = vperm.xlu0 %3837, %v3761
        %v3839 = vpop.permute.xlu0 %3838
        %3841 = vset.pattern.permute.xlu0 0
        %3842 = vperm.xlu0 %3841, %v3762
        %v3843 = vpop.permute.xlu0 %3842
        %3845 = vset.pattern.permute.xlu0 0
        %3846 = vperm.xlu0 %3845, %v3763
        %v3847 = vpop.permute.xlu0 %3846
        %3849 = vset.pattern.permute.xlu0 0
        %3850 = vperm.xlu0 %3849, %v3764
        %v3851 = vpop.permute.xlu0 %3850
        %3853 = vset.pattern.permute.xlu0 0
        %3854 = vperm.xlu0 %3853, %v3765
        %v3855 = vpop.permute.xlu0 %3854
        %3857 = vset.pattern.permute.xlu0 0
        %3858 = vperm.xlu0 %3857, %v3766
        %v3859 = vpop.permute.xlu0 %3858
        %3861 = vset.pattern.permute.xlu0 0
        %3862 = vperm.xlu0 %3861, %v3767
        %v3863 = vpop.permute.xlu0 %3862
        %3865 = vset.pattern.permute.xlu0 0
        %3866 = vperm.xlu0 %3865, %v3768
        %v3867 = vpop.permute.xlu0 %3866
        %3869 = vset.pattern.permute.xlu0 0
        %3870 = vperm.xlu0 %3869, %v3769
        %v3871 = vpop.permute.xlu0 %3870
        %3873 = vset.pattern.permute.xlu0 0
        %3874 = vperm.xlu0 %3873, %v3770
        %v3875 = vpop.permute.xlu0 %3874
        %3877 = vset.pattern.permute.xlu0 0
        %3878 = vperm.xlu0 %3877, %v3771
        %v3879 = vpop.permute.xlu0 %3878
        %3881 = vset.pattern.permute.xlu0 0
        %3882 = vperm.xlu0 %3881, %v3772
        %v3883 = vpop.permute.xlu0 %3882
        %3885 = vset.pattern.permute.xlu0 0
        %3886 = vperm.xlu0 %3885, %v3773
        %v3887 = vpop.permute.xlu0 %3886
        %3889 = vset.pattern.permute.xlu0 0
        %3890 = vperm.xlu0 %3889, %v3774
        %v3891 = vpop.permute.xlu0 %3890
        %3893 = vset.pattern.permute.xlu0 0
        %3894 = vperm.xlu0 %3893, %v3775
        %v3895 = vpop.permute.xlu0 %3894
        %3897 = vset.pattern.permute.xlu0 0
        %3898 = vperm.xlu0 %3897, %v3776
        %v3899 = vpop.permute.xlu0 %3898
        %3901 = vset.pattern.permute.xlu0 0
        %3902 = vperm.xlu0 %3901, %v3777
        %v3903 = vpop.permute.xlu0 %3902
        %3905 = vset.pattern.permute.xlu0 0
        %3906 = vperm.xlu0 %3905, %v3778
        %v3907 = vpop.permute.xlu0 %3906
        %3909 = vset.pattern.permute.xlu0 0
        %3910 = vperm.xlu0 %3909, %v3779
        %v3911 = vpop.permute.xlu0 %3910
        %3913 = vset.pattern.permute.xlu0 0
        %3914 = vperm.xlu0 %3913, %v3780
        %v3915 = vpop.permute.xlu0 %3914
        %3917 = vset.pattern.permute.xlu0 0
        %3918 = vperm.xlu0 %3917, %v3781
        %v3919 = vpop.permute.xlu0 %3918
        %3921 = vset.pattern.permute.xlu0 0
        %3922 = vperm.xlu0 %3921, %v3782
        %v3923 = vpop.permute.xlu0 %3922
        %3925 = vset.pattern.permute.xlu0 0
        %3926 = vperm.xlu0 %3925, %v3783
        %v3927 = vpop.permute.xlu0 %3926
        %3929 = vset.pattern.permute.xlu0 0
        %3930 = vperm.xlu0 %3929, %v3784
        %v3931 = vpop.permute.xlu0 %3930
        %3933 = vset.pattern.permute.xlu0 0
        %3934 = vperm.xlu0 %3933, %v3785
        %v3935 = vpop.permute.xlu0 %3934
        %3937 = vset.pattern.permute.xlu0 0
        %3938 = vperm.xlu0 %3937, %v3786
        %v3939 = vpop.permute.xlu0 %3938
        %3941 = vset.pattern.permute.xlu0 0
        %3942 = vperm.xlu0 %3941, %v3787
        %v3943 = vpop.permute.xlu0 %3942
        %3945 = vset.pattern.permute.xlu0 0
        %3946 = vperm.xlu0 %3945, %v3788
        %v3947 = vpop.permute.xlu0 %3946
        %3949 = vset.pattern.permute.xlu0 0
        %3950 = vperm.xlu0 %3949, %v3789
        %v3951 = vpop.permute.xlu0 %3950
        %3953 = vset.pattern.permute.xlu0 0
        %3954 = vperm.xlu0 %3953, %v3790
        %v3955 = vpop.permute.xlu0 %3954
        %3957 = vset.pattern.permute.xlu0 0
        %3958 = vperm.xlu0 %3957, %v3791
        %v3959 = vpop.permute.xlu0 %3958
        %3961 = vset.pattern.permute.xlu0 0
        %3962 = vperm.xlu0 %3961, %v3792
        %v3963 = vpop.permute.xlu0 %3962
        %3965 = vset.pattern.permute.xlu0 0
        %3966 = vperm.xlu0 %3965, %v3793
        %v3967 = vpop.permute.xlu0 %3966
        %3969 = vset.pattern.permute.xlu0 0
        %3970 = vperm.xlu0 %3969, %v3794
        %v3971 = vpop.permute.xlu0 %3970
        %3973 = vset.pattern.permute.xlu0 0
        %3974 = vperm.xlu0 %3973, %v3795
        %v3975 = vpop.permute.xlu0 %3974
        %3977 = vset.pattern.permute.xlu0 0
        %3978 = vperm.xlu0 %3977, %v3796
        %v3979 = vpop.permute.xlu0 %3978
        %3981 = vset.pattern.permute.xlu0 0
        %3982 = vperm.xlu0 %3981, %v3797
        %v3983 = vpop.permute.xlu0 %3982
        %3985 = vset.pattern.permute.xlu0 0
        %3986 = vperm.xlu0 %3985, %v3798
        %v3987 = vpop.permute.xlu0 %3986
        %3989 = vset.pattern.permute.xlu0 0
        %3990 = vperm.xlu0 %3989, %v3799
        %v3991 = vpop.permute.xlu0 %3990
        %3993 = vset.pattern.permute.xlu0 0
        %3994 = vperm.xlu0 %3993, %v3800
        %v3995 = vpop.permute.xlu0 %3994
        %3997 = vset.pattern.permute.xlu0 0
        %3998 = vperm.xlu0 %3997, %v3801
        %v3999 = vpop.permute.xlu0 %3998
        %4001 = vset.pattern.permute.xlu0 0
        %4002 = vperm.xlu0 %4001, %v3802
        %v4003 = vpop.permute.xlu0 %4002
        %4005 = vset.pattern.permute.xlu0 0
        %4006 = vperm.xlu0 %4005, %v3803
        %v4007 = vpop.permute.xlu0 %4006
        %4009 = vset.pattern.permute.xlu0 0
        %4010 = vperm.xlu0 %4009, %v3804
        %v4011 = vpop.permute.xlu0 %4010
        %4013 = vset.pattern.permute.xlu0 0
        %4014 = vperm.xlu0 %4013, %v3805
        %v4015 = vpop.permute.xlu0 %4014
        %4017 = vset.pattern.permute.xlu0 0
        %4018 = vperm.xlu0 %4017, %v3806
        %v4019 = vpop.permute.xlu0 %4018
        %4021 = vset.pattern.permute.xlu0 0
        %4022 = vperm.xlu0 %4021, %v3807
        %v4023 = vpop.permute.xlu0 %4022
        %4025 = vset.pattern.permute.xlu0 0
        %4026 = vperm.xlu0 %4025, %v3808
        %v4027 = vpop.permute.xlu0 %4026
        %4029 = vset.pattern.permute.xlu0 0
        %4030 = vperm.xlu0 %4029, %v3809
        %v4031 = vpop.permute.xlu0 %4030
        %4033 = vset.pattern.permute.xlu0 0
        %4034 = vperm.xlu0 %4033, %v3810
        %v4035 = vpop.permute.xlu0 %4034
        %4037 = vset.pattern.permute.xlu0 0
        %4038 = vperm.xlu0 %4037, %v3811
        %v4039 = vpop.permute.xlu0 %4038
        %4041 = vset.pattern.permute.xlu0 0
        %4042 = vperm.xlu0 %4041, %v3812
        %v4043 = vpop.permute.xlu0 %4042
        %4045 = vset.pattern.permute.xlu0 0
        %4046 = vperm.xlu0 %4045, %v3813
        %v4047 = vpop.permute.xlu0 %4046
        %4049 = vset.pattern.permute.xlu0 0
        %4050 = vperm.xlu0 %4049, %v3814
        %v4051 = vpop.permute.xlu0 %4050
        %4053 = vset.pattern.permute.xlu0 0
        %4054 = vperm.xlu0 %4053, %v3815
        %v4055 = vpop.permute.xlu0 %4054
        %4057 = vset.pattern.permute.xlu0 0
        %4058 = vperm.xlu0 %4057, %v3816
        %v4059 = vpop.permute.xlu0 %4058
        %4061 = vset.pattern.permute.xlu0 0
        %4062 = vperm.xlu0 %4061, %v3817
        %v4063 = vpop.permute.xlu0 %4062
        %4065 = vset.pattern.permute.xlu0 0
        %4066 = vperm.xlu0 %4065, %v3818
        %v4067 = vpop.permute.xlu0 %4066
        %4069 = vset.pattern.permute.xlu0 0
        %4070 = vperm.xlu0 %4069, %v3819
        %v4071 = vpop.permute.xlu0 %4070
        %4073 = vset.pattern.permute.xlu0 0
        %4074 = vperm.xlu0 %4073, %v3820
        %v4075 = vpop.permute.xlu0 %4074
        %v4077 = vadd.f32 %v3565, %v3823
        %v4078 = vadd.f32 %v3566, %v3827
        %v4079 = vadd.f32 %v3567, %v3831
        %v4080 = vadd.f32 %v3568, %v3835
        %v4081 = vadd.f32 %v3569, %v3839
        %v4082 = vadd.f32 %v3570, %v3843
        %v4083 = vadd.f32 %v3571, %v3847
        %v4084 = vadd.f32 %v3572, %v3851
        %v4085 = vadd.f32 %v3573, %v3855
        %v4086 = vadd.f32 %v3574, %v3859
        %v4087 = vadd.f32 %v3575, %v3863
        %v4088 = vadd.f32 %v3576, %v3867
        %v4089 = vadd.f32 %v3577, %v3871
        %v4090 = vadd.f32 %v3578, %v3875
        %v4091 = vadd.f32 %v3579, %v3879
        %v4092 = vadd.f32 %v3580, %v3883
        %v4093 = vadd.f32 %v3581, %v3887
        %v4094 = vadd.f32 %v3582, %v3891
        %v4095 = vadd.f32 %v3583, %v3895
        %v4096 = vadd.f32 %v3584, %v3899
        %v4097 = vadd.f32 %v3585, %v3903
        %v4098 = vadd.f32 %v3586, %v3907
        %v4099 = vadd.f32 %v3587, %v3911
        %v4100 = vadd.f32 %v3588, %v3915
        %v4101 = vadd.f32 %v3589, %v3919
        %v4102 = vadd.f32 %v3590, %v3923
        %v4103 = vadd.f32 %v3591, %v3927
        %v4104 = vadd.f32 %v3592, %v3931
        %v4105 = vadd.f32 %v3593, %v3935
        %v4106 = vadd.f32 %v3594, %v3939
        %v4107 = vadd.f32 %v3595, %v3943
        %v4108 = vadd.f32 %v3596, %v3947
        %v4109 = vadd.f32 %v3597, %v3951
        %v4110 = vadd.f32 %v3598, %v3955
        %v4111 = vadd.f32 %v3599, %v3959
        %v4112 = vadd.f32 %v3600, %v3963
        %v4113 = vadd.f32 %v3601, %v3967
        %v4114 = vadd.f32 %v3602, %v3971
        %v4115 = vadd.f32 %v3603, %v3975
        %v4116 = vadd.f32 %v3604, %v3979
        %v4117 = vadd.f32 %v3605, %v3983
        %v4118 = vadd.f32 %v3606, %v3987
        %v4119 = vadd.f32 %v3607, %v3991
        %v4120 = vadd.f32 %v3608, %v3995
        %v4121 = vadd.f32 %v3609, %v3999
        %v4122 = vadd.f32 %v3610, %v4003
        %v4123 = vadd.f32 %v3611, %v4007
        %v4124 = vadd.f32 %v3612, %v4011
        %v4125 = vadd.f32 %v3613, %v4015
        %v4126 = vadd.f32 %v3614, %v4019
        %v4127 = vadd.f32 %v3615, %v4023
        %v4128 = vadd.f32 %v3616, %v4027
        %v4129 = vadd.f32 %v3617, %v4031
        %v4130 = vadd.f32 %v3618, %v4035
        %v4131 = vadd.f32 %v3619, %v4039
        %v4132 = vadd.f32 %v3620, %v4043
        %v4133 = vadd.f32 %v3621, %v4047
        %v4134 = vadd.f32 %v3622, %v4051
        %v4135 = vadd.f32 %v3623, %v4055
        %v4136 = vadd.f32 %v3624, %v4059
        %v4137 = vadd.f32 %v3625, %v4063
        %v4138 = vadd.f32 %v3626, %v4067
        %v4139 = vadd.f32 %v3627, %v4071
        %v4140 = vadd.f32 %v3628, %v4075
        %v4141 = vadd.f32 %v3629, %v3823
        %v4142 = vadd.f32 %v3630, %v3827
        %v4143 = vadd.f32 %v3631, %v3831
        %v4144 = vadd.f32 %v3632, %v3835
        %v4145 = vadd.f32 %v3633, %v3839
        %v4146 = vadd.f32 %v3634, %v3843
        %v4147 = vadd.f32 %v3635, %v3847
        %v4148 = vadd.f32 %v3636, %v3851
        %v4149 = vadd.f32 %v3637, %v3855
        %v4150 = vadd.f32 %v3638, %v3859
        %v4151 = vadd.f32 %v3639, %v3863
        %v4152 = vadd.f32 %v3640, %v3867
        %v4153 = vadd.f32 %v3641, %v3871
        %v4154 = vadd.f32 %v3642, %v3875
        %v4155 = vadd.f32 %v3643, %v3879
        %v4156 = vadd.f32 %v3644, %v3883
        %v4157 = vadd.f32 %v3645, %v3887
        %v4158 = vadd.f32 %v3646, %v3891
        %v4159 = vadd.f32 %v3647, %v3895
        %v4160 = vadd.f32 %v3648, %v3899
        %v4161 = vadd.f32 %v3649, %v3903
        %v4162 = vadd.f32 %v3650, %v3907
        %v4163 = vadd.f32 %v3651, %v3911
        %v4164 = vadd.f32 %v3652, %v3915
        %v4165 = vadd.f32 %v3653, %v3919
        %v4166 = vadd.f32 %v3654, %v3923
        %v4167 = vadd.f32 %v3655, %v3927
        %v4168 = vadd.f32 %v3656, %v3931
        %v4169 = vadd.f32 %v3657, %v3935
        %v4170 = vadd.f32 %v3658, %v3939
        %v4171 = vadd.f32 %v3659, %v3943
        %v4172 = vadd.f32 %v3660, %v3947
        %v4173 = vadd.f32 %v3661, %v3951
        %v4174 = vadd.f32 %v3662, %v3955
        %v4175 = vadd.f32 %v3663, %v3959
        %v4176 = vadd.f32 %v3664, %v3963
        %v4177 = vadd.f32 %v3665, %v3967
        %v4178 = vadd.f32 %v3666, %v3971
        %v4179 = vadd.f32 %v3667, %v3975
        %v4180 = vadd.f32 %v3668, %v3979
        %v4181 = vadd.f32 %v3669, %v3983
        %v4182 = vadd.f32 %v3670, %v3987
        %v4183 = vadd.f32 %v3671, %v3991
        %v4184 = vadd.f32 %v3672, %v3995
        %v4185 = vadd.f32 %v3673, %v3999
        %v4186 = vadd.f32 %v3674, %v4003
        %v4187 = vadd.f32 %v3675, %v4007
        %v4188 = vadd.f32 %v3676, %v4011
        %v4189 = vadd.f32 %v3677, %v4015
        %v4190 = vadd.f32 %v3678, %v4019
        %v4191 = vadd.f32 %v3679, %v4023
        %v4192 = vadd.f32 %v3680, %v4027
        %v4193 = vadd.f32 %v3681, %v4031
        %v4194 = vadd.f32 %v3682, %v4035
        %v4195 = vadd.f32 %v3683, %v4039
        %v4196 = vadd.f32 %v3684, %v4043
        %v4197 = vadd.f32 %v3685, %v4047
        %v4198 = vadd.f32 %v3686, %v4051
        %v4199 = vadd.f32 %v3687, %v4055
        %v4200 = vadd.f32 %v3688, %v4059
        %v4201 = vadd.f32 %v3689, %v4063
        %v4202 = vadd.f32 %v3690, %v4067
        %v4203 = vadd.f32 %v3691, %v4071
        %v4204 = vadd.f32 %v3692, %v4075
        %v4205 = vmax.f32 %v4077, 0.0
        %v4206 = vmax.f32 %v4078, 0.0
        %v4207 = vmax.f32 %v4079, 0.0
        %v4208 = vmax.f32 %v4080, 0.0
        %v4209 = vmax.f32 %v4081, 0.0
        %v4210 = vmax.f32 %v4082, 0.0
        %v4211 = vmax.f32 %v4083, 0.0
        %v4212 = vmax.f32 %v4084, 0.0
        %v4213 = vmax.f32 %v4085, 0.0
        %v4214 = vmax.f32 %v4086, 0.0
        %v4215 = vmax.f32 %v4087, 0.0
        %v4216 = vmax.f32 %v4088, 0.0
        %v4217 = vmax.f32 %v4089, 0.0
        %v4218 = vmax.f32 %v4090, 0.0
        %v4219 = vmax.f32 %v4091, 0.0
        %v4220 = vmax.f32 %v4092, 0.0
        %v4221 = vmax.f32 %v4093, 0.0
        %v4222 = vmax.f32 %v4094, 0.0
        %v4223 = vmax.f32 %v4095, 0.0
        %v4224 = vmax.f32 %v4096, 0.0
        %v4225 = vmax.f32 %v4097, 0.0
        %v4226 = vmax.f32 %v4098, 0.0
        %v4227 = vmax.f32 %v4099, 0.0
        %v4228 = vmax.f32 %v4100, 0.0
        %v4229 = vmax.f32 %v4101, 0.0
        %v4230 = vmax.f32 %v4102, 0.0
        %v4231 = vmax.f32 %v4103, 0.0
        %v4232 = vmax.f32 %v4104, 0.0
        %v4233 = vmax.f32 %v4105, 0.0
        %v4234 = vmax.f32 %v4106, 0.0
        %v4235 = vmax.f32 %v4107, 0.0
        %v4236 = vmax.f32 %v4108, 0.0
        %v4237 = vmax.f32 %v4109, 0.0
        %v4238 = vmax.f32 %v4110, 0.0
        %v4239 = vmax.f32 %v4111, 0.0
        %v4240 = vmax.f32 %v4112, 0.0
        %v4241 = vmax.f32 %v4113, 0.0
        %v4242 = vmax.f32 %v4114, 0.0
        %v4243 = vmax.f32 %v4115, 0.0
        %v4244 = vmax.f32 %v4116, 0.0
        %v4245 = vmax.f32 %v4117, 0.0
        %v4246 = vmax.f32 %v4118, 0.0
        %v4247 = vmax.f32 %v4119, 0.0
        %v4248 = vmax.f32 %v4120, 0.0
        %v4249 = vmax.f32 %v4121, 0.0
        %v4250 = vmax.f32 %v4122, 0.0
        %v4251 = vmax.f32 %v4123, 0.0
        %v4252 = vmax.f32 %v4124, 0.0
        %v4253 = vmax.f32 %v4125, 0.0
        %v4254 = vmax.f32 %v4126, 0.0
        %v4255 = vmax.f32 %v4127, 0.0
        %v4256 = vmax.f32 %v4128, 0.0
        %v4257 = vmax.f32 %v4129, 0.0
        %v4258 = vmax.f32 %v4130, 0.0
        %v4259 = vmax.f32 %v4131, 0.0
        %v4260 = vmax.f32 %v4132, 0.0
        %v4261 = vmax.f32 %v4133, 0.0
        %v4262 = vmax.f32 %v4134, 0.0
        %v4263 = vmax.f32 %v4135, 0.0
        %v4264 = vmax.f32 %v4136, 0.0
        %v4265 = vmax.f32 %v4137, 0.0
        %v4266 = vmax.f32 %v4138, 0.0
        %v4267 = vmax.f32 %v4139, 0.0
        %v4268 = vmax.f32 %v4140, 0.0
        %v4269 = vmax.f32 %v4141, 0.0
        %v4270 = vmax.f32 %v4142, 0.0
        %v4271 = vmax.f32 %v4143, 0.0
        %v4272 = vmax.f32 %v4144, 0.0
        %v4273 = vmax.f32 %v4145, 0.0
        %v4274 = vmax.f32 %v4146, 0.0
        %v4275 = vmax.f32 %v4147, 0.0
        %v4276 = vmax.f32 %v4148, 0.0
        %v4277 = vmax.f32 %v4149, 0.0
        %v4278 = vmax.f32 %v4150, 0.0
        %v4279 = vmax.f32 %v4151, 0.0
        %v4280 = vmax.f32 %v4152, 0.0
        %v4281 = vmax.f32 %v4153, 0.0
        %v4282 = vmax.f32 %v4154, 0.0
        %v4283 = vmax.f32 %v4155, 0.0
        %v4284 = vmax.f32 %v4156, 0.0
        %v4285 = vmax.f32 %v4157, 0.0
        %v4286 = vmax.f32 %v4158, 0.0
        %v4287 = vmax.f32 %v4159, 0.0
        %v4288 = vmax.f32 %v4160, 0.0
        %v4289 = vmax.f32 %v4161, 0.0
        %v4290 = vmax.f32 %v4162, 0.0
        %v4291 = vmax.f32 %v4163, 0.0
        %v4292 = vmax.f32 %v4164, 0.0
        %v4293 = vmax.f32 %v4165, 0.0
        %v4294 = vmax.f32 %v4166, 0.0
        %v4295 = vmax.f32 %v4167, 0.0
        %v4296 = vmax.f32 %v4168, 0.0
        %v4297 = vmax.f32 %v4169, 0.0
        %v4298 = vmax.f32 %v4170, 0.0
        %v4299 = vmax.f32 %v4171, 0.0
        %v4300 = vmax.f32 %v4172, 0.0
        %v4301 = vmax.f32 %v4173, 0.0
        %v4302 = vmax.f32 %v4174, 0.0
        %v4303 = vmax.f32 %v4175, 0.0
        %v4304 = vmax.f32 %v4176, 0.0
        %v4305 = vmax.f32 %v4177, 0.0
        %v4306 = vmax.f32 %v4178, 0.0
        %v4307 = vmax.f32 %v4179, 0.0
        %v4308 = vmax.f32 %v4180, 0.0
        %v4309 = vmax.f32 %v4181, 0.0
        %v4310 = vmax.f32 %v4182, 0.0
        %v4311 = vmax.f32 %v4183, 0.0
        %v4312 = vmax.f32 %v4184, 0.0
        %v4313 = vmax.f32 %v4185, 0.0
        %v4314 = vmax.f32 %v4186, 0.0
        %v4315 = vmax.f32 %v4187, 0.0
        %v4316 = vmax.f32 %v4188, 0.0
        %v4317 = vmax.f32 %v4189, 0.0
        %v4318 = vmax.f32 %v4190, 0.0
        %v4319 = vmax.f32 %v4191, 0.0
        %v4320 = vmax.f32 %v4192, 0.0
        %v4321 = vmax.f32 %v4193, 0.0
        %v4322 = vmax.f32 %v4194, 0.0
        %v4323 = vmax.f32 %v4195, 0.0
        %v4324 = vmax.f32 %v4196, 0.0
        %v4325 = vmax.f32 %v4197, 0.0
        %v4326 = vmax.f32 %v4198, 0.0
        %v4327 = vmax.f32 %v4199, 0.0
        %v4328 = vmax.f32 %v4200, 0.0
        %v4329 = vmax.f32 %v4201, 0.0
        %v4330 = vmax.f32 %v4202, 0.0
        %v4331 = vmax.f32 %v4203, 0.0
        %v4332 = vmax.f32 %v4204, 0.0
        %v4333 = vpack.c.bf16 %v4205, %v4205
        %v4334 = vpack.c.bf16 %v4206, %v4206
        %v4335 = vpack.c.bf16 %v4207, %v4207
        %v4336 = vpack.c.bf16 %v4208, %v4208
        %v4337 = vpack.c.bf16 %v4209, %v4209
        %v4338 = vpack.c.bf16 %v4210, %v4210
        %v4339 = vpack.c.bf16 %v4211, %v4211
        %v4340 = vpack.c.bf16 %v4212, %v4212
        %v4341 = vpack.c.bf16 %v4213, %v4213
        %v4342 = vpack.c.bf16 %v4214, %v4214
        %v4343 = vpack.c.bf16 %v4215, %v4215
        %v4344 = vpack.c.bf16 %v4216, %v4216
        %v4345 = vpack.c.bf16 %v4217, %v4217
        %v4346 = vpack.c.bf16 %v4218, %v4218
        %v4347 = vpack.c.bf16 %v4219, %v4219
        %v4348 = vpack.c.bf16 %v4220, %v4220
        %v4349 = vpack.c.bf16 %v4221, %v4221
        %v4350 = vpack.c.bf16 %v4222, %v4222
        %v4351 = vpack.c.bf16 %v4223, %v4223
        %v4352 = vpack.c.bf16 %v4224, %v4224
        %v4353 = vpack.c.bf16 %v4225, %v4225
        %v4354 = vpack.c.bf16 %v4226, %v4226
        %v4355 = vpack.c.bf16 %v4227, %v4227
        %v4356 = vpack.c.bf16 %v4228, %v4228
        %v4357 = vpack.c.bf16 %v4229, %v4229
        %v4358 = vpack.c.bf16 %v4230, %v4230
        %v4359 = vpack.c.bf16 %v4231, %v4231
        %v4360 = vpack.c.bf16 %v4232, %v4232
        %v4361 = vpack.c.bf16 %v4233, %v4233
        %v4362 = vpack.c.bf16 %v4234, %v4234
        %v4363 = vpack.c.bf16 %v4235, %v4235
        %v4364 = vpack.c.bf16 %v4236, %v4236
        %v4365 = vpack.c.bf16 %v4237, %v4237
        %v4366 = vpack.c.bf16 %v4238, %v4238
        %v4367 = vpack.c.bf16 %v4239, %v4239
        %v4368 = vpack.c.bf16 %v4240, %v4240
        %v4369 = vpack.c.bf16 %v4241, %v4241
        %v4370 = vpack.c.bf16 %v4242, %v4242
        %v4371 = vpack.c.bf16 %v4243, %v4243
        %v4372 = vpack.c.bf16 %v4244, %v4244
        %v4373 = vpack.c.bf16 %v4245, %v4245
        %v4374 = vpack.c.bf16 %v4246, %v4246
        %v4375 = vpack.c.bf16 %v4247, %v4247
        %v4376 = vpack.c.bf16 %v4248, %v4248
        %v4377 = vpack.c.bf16 %v4249, %v4249
        %v4378 = vpack.c.bf16 %v4250, %v4250
        %v4379 = vpack.c.bf16 %v4251, %v4251
        %v4380 = vpack.c.bf16 %v4252, %v4252
        %v4381 = vpack.c.bf16 %v4253, %v4253
        %v4382 = vpack.c.bf16 %v4254, %v4254
        %v4383 = vpack.c.bf16 %v4255, %v4255
        %v4384 = vpack.c.bf16 %v4256, %v4256
        %v4385 = vpack.c.bf16 %v4257, %v4257
        %v4386 = vpack.c.bf16 %v4258, %v4258
        %v4387 = vpack.c.bf16 %v4259, %v4259
        %v4388 = vpack.c.bf16 %v4260, %v4260
        %v4389 = vpack.c.bf16 %v4261, %v4261
        %v4390 = vpack.c.bf16 %v4262, %v4262
        %v4391 = vpack.c.bf16 %v4263, %v4263
        %v4392 = vpack.c.bf16 %v4264, %v4264
        %v4393 = vpack.c.bf16 %v4265, %v4265
        %v4394 = vpack.c.bf16 %v4266, %v4266
        %v4395 = vpack.c.bf16 %v4267, %v4267
        %v4396 = vpack.c.bf16 %v4268, %v4268
        %v4397 = vpack.c.bf16 %v4269, %v4269
        %v4398 = vpack.c.bf16 %v4270, %v4270
        %v4399 = vpack.c.bf16 %v4271, %v4271
        %v4400 = vpack.c.bf16 %v4272, %v4272
        %v4401 = vpack.c.bf16 %v4273, %v4273
        %v4402 = vpack.c.bf16 %v4274, %v4274
        %v4403 = vpack.c.bf16 %v4275, %v4275
        %v4404 = vpack.c.bf16 %v4276, %v4276
        %v4405 = vpack.c.bf16 %v4277, %v4277
        %v4406 = vpack.c.bf16 %v4278, %v4278
        %v4407 = vpack.c.bf16 %v4279, %v4279
        %v4408 = vpack.c.bf16 %v4280, %v4280
        %v4409 = vpack.c.bf16 %v4281, %v4281
        %v4410 = vpack.c.bf16 %v4282, %v4282
        %v4411 = vpack.c.bf16 %v4283, %v4283
        %v4412 = vpack.c.bf16 %v4284, %v4284
        %v4413 = vpack.c.bf16 %v4285, %v4285
        %v4414 = vpack.c.bf16 %v4286, %v4286
        %v4415 = vpack.c.bf16 %v4287, %v4287
        %v4416 = vpack.c.bf16 %v4288, %v4288
        %v4417 = vpack.c.bf16 %v4289, %v4289
        %v4418 = vpack.c.bf16 %v4290, %v4290
        %v4419 = vpack.c.bf16 %v4291, %v4291
        %v4420 = vpack.c.bf16 %v4292, %v4292
        %v4421 = vpack.c.bf16 %v4293, %v4293
        %v4422 = vpack.c.bf16 %v4294, %v4294
        %v4423 = vpack.c.bf16 %v4295, %v4295
        %v4424 = vpack.c.bf16 %v4296, %v4296
        %v4425 = vpack.c.bf16 %v4297, %v4297
        %v4426 = vpack.c.bf16 %v4298, %v4298
        %v4427 = vpack.c.bf16 %v4299, %v4299
        %v4428 = vpack.c.bf16 %v4300, %v4300
        %v4429 = vpack.c.bf16 %v4301, %v4301
        %v4430 = vpack.c.bf16 %v4302, %v4302
        %v4431 = vpack.c.bf16 %v4303, %v4303
        %v4432 = vpack.c.bf16 %v4304, %v4304
        %v4433 = vpack.c.bf16 %v4305, %v4305
        %v4434 = vpack.c.bf16 %v4306, %v4306
        %v4435 = vpack.c.bf16 %v4307, %v4307
        %v4436 = vpack.c.bf16 %v4308, %v4308
        %v4437 = vpack.c.bf16 %v4309, %v4309
        %v4438 = vpack.c.bf16 %v4310, %v4310
        %v4439 = vpack.c.bf16 %v4311, %v4311
        %v4440 = vpack.c.bf16 %v4312, %v4312
        %v4441 = vpack.c.bf16 %v4313, %v4313
        %v4442 = vpack.c.bf16 %v4314, %v4314
        %v4443 = vpack.c.bf16 %v4315, %v4315
        %v4444 = vpack.c.bf16 %v4316, %v4316
        %v4445 = vpack.c.bf16 %v4317, %v4317
        %v4446 = vpack.c.bf16 %v4318, %v4318
        %v4447 = vpack.c.bf16 %v4319, %v4319
        %v4448 = vpack.c.bf16 %v4320, %v4320
        %v4449 = vpack.c.bf16 %v4321, %v4321
        %v4450 = vpack.c.bf16 %v4322, %v4322
        %v4451 = vpack.c.bf16 %v4323, %v4323
        %v4452 = vpack.c.bf16 %v4324, %v4324
        %v4453 = vpack.c.bf16 %v4325, %v4325
        %v4454 = vpack.c.bf16 %v4326, %v4326
        %v4455 = vpack.c.bf16 %v4327, %v4327
        %v4456 = vpack.c.bf16 %v4328, %v4328
        %v4457 = vpack.c.bf16 %v4329, %v4329
        %v4458 = vpack.c.bf16 %v4330, %v4330
        %v4459 = vpack.c.bf16 %v4331, %v4331
        %v4460 = vpack.c.bf16 %v4332, %v4332
        %v4461 = vld [vmem:[%s5] sm:$0xf]
        %v4462 = vld [vmem:[%s5 + $0x4] sm:$0xf]
        %v4463 = vld [vmem:[%s5 + $0x8] sm:$0xf]
        %v4464 = vld [vmem:[%s5 + $0xc] sm:$0xf]
        %v4465 = vld [vmem:[%s5 + $0x10] sm:$0xf]
        %v4466 = vld [vmem:[%s5 + $0x14] sm:$0xf]
        %v4467 = vld [vmem:[%s5 + $0x18] sm:$0xf]
        %v4468 = vld [vmem:[%s5 + $0x1c] sm:$0xf]
        %v4469 = vld [vmem:[%s5 + $0x20] sm:$0xf]
        %v4470 = vld [vmem:[%s5 + $0x24] sm:$0xf]
        %v4471 = vld [vmem:[%s5 + $0x28] sm:$0xf]
        %v4472 = vld [vmem:[%s5 + $0x2c] sm:$0xf]
        %v4473 = vld [vmem:[%s5 + $0x30] sm:$0xf]
        %v4474 = vld [vmem:[%s5 + $0x34] sm:$0xf]
        %v4475 = vld [vmem:[%s5 + $0x38] sm:$0xf]
        %v4476 = vld [vmem:[%s5 + $0x3c] sm:$0xf]
        %v4605 = vunpack.c.l.b16 %v4333
        %v4606 = vunpack.c.l.b16 %v4334
        %v4607 = vunpack.c.l.b16 %v4335
        %v4608 = vunpack.c.l.b16 %v4336
        %v4609 = vunpack.c.l.b16 %v4337
        %v4610 = vunpack.c.l.b16 %v4338
        %v4611 = vunpack.c.l.b16 %v4339
        %v4612 = vunpack.c.l.b16 %v4340
        %v4613 = vunpack.c.l.b16 %v4341
        %v4614 = vunpack.c.l.b16 %v4342
        %v4615 = vunpack.c.l.b16 %v4343
        %v4616 = vunpack.c.l.b16 %v4344
        %v4617 = vunpack.c.l.b16 %v4345
        %v4618 = vunpack.c.l.b16 %v4346
        %v4619 = vunpack.c.l.b16 %v4347
        %v4620 = vunpack.c.l.b16 %v4348
        %v4621 = vunpack.c.l.b16 %v4349
        %v4622 = vunpack.c.l.b16 %v4350
        %v4623 = vunpack.c.l.b16 %v4351
        %v4624 = vunpack.c.l.b16 %v4352
        %v4625 = vunpack.c.l.b16 %v4353
        %v4626 = vunpack.c.l.b16 %v4354
        %v4627 = vunpack.c.l.b16 %v4355
        %v4628 = vunpack.c.l.b16 %v4356
        %v4629 = vunpack.c.l.b16 %v4357
        %v4630 = vunpack.c.l.b16 %v4358
        %v4631 = vunpack.c.l.b16 %v4359
        %v4632 = vunpack.c.l.b16 %v4360
        %v4633 = vunpack.c.l.b16 %v4361
        %v4634 = vunpack.c.l.b16 %v4362
        %v4635 = vunpack.c.l.b16 %v4363
        %v4636 = vunpack.c.l.b16 %v4364
        %v4637 = vunpack.c.l.b16 %v4365
        %v4638 = vunpack.c.l.b16 %v4366
        %v4639 = vunpack.c.l.b16 %v4367
        %v4640 = vunpack.c.l.b16 %v4368
        %v4641 = vunpack.c.l.b16 %v4369
        %v4642 = vunpack.c.l.b16 %v4370
        %v4643 = vunpack.c.l.b16 %v4371
        %v4644 = vunpack.c.l.b16 %v4372
        %v4645 = vunpack.c.l.b16 %v4373
        %v4646 = vunpack.c.l.b16 %v4374
        %v4647 = vunpack.c.l.b16 %v4375
        %v4648 = vunpack.c.l.b16 %v4376
        %v4649 = vunpack.c.l.b16 %v4377
        %v4650 = vunpack.c.l.b16 %v4378
        %v4651 = vunpack.c.l.b16 %v4379
        %v4652 = vunpack.c.l.b16 %v4380
        %v4653 = vunpack.c.l.b16 %v4381
        %v4654 = vunpack.c.l.b16 %v4382
        %v4655 = vunpack.c.l.b16 %v4383
        %v4656 = vunpack.c.l.b16 %v4384
        %v4657 = vunpack.c.l.b16 %v4385
        %v4658 = vunpack.c.l.b16 %v4386
        %v4659 = vunpack.c.l.b16 %v4387
        %v4660 = vunpack.c.l.b16 %v4388
        %v4661 = vunpack.c.l.b16 %v4389
        %v4662 = vunpack.c.l.b16 %v4390
        %v4663 = vunpack.c.l.b16 %v4391
        %v4664 = vunpack.c.l.b16 %v4392
        %v4665 = vunpack.c.l.b16 %v4393
        %v4666 = vunpack.c.l.b16 %v4394
        %v4667 = vunpack.c.l.b16 %v4395
        %v4668 = vunpack.c.l.b16 %v4396
        %v4669 = vunpack.c.l.b16 %v4397
        %v4670 = vunpack.c.l.b16 %v4398
        %v4671 = vunpack.c.l.b16 %v4399
        %v4672 = vunpack.c.l.b16 %v4400
        %v4673 = vunpack.c.l.b16 %v4401
        %v4674 = vunpack.c.l.b16 %v4402
        %v4675 = vunpack.c.l.b16 %v4403
        %v4676 = vunpack.c.l.b16 %v4404
        %v4677 = vunpack.c.l.b16 %v4405
        %v4678 = vunpack.c.l.b16 %v4406
        %v4679 = vunpack.c.l.b16 %v4407
        %v4680 = vunpack.c.l.b16 %v4408
        %v4681 = vunpack.c.l.b16 %v4409
        %v4682 = vunpack.c.l.b16 %v4410
        %v4683 = vunpack.c.l.b16 %v4411
        %v4684 = vunpack.c.l.b16 %v4412
        %v4685 = vunpack.c.l.b16 %v4413
        %v4686 = vunpack.c.l.b16 %v4414
        %v4687 = vunpack.c.l.b16 %v4415
        %v4688 = vunpack.c.l.b16 %v4416
        %v4689 = vunpack.c.l.b16 %v4417
        %v4690 = vunpack.c.l.b16 %v4418
        %v4691 = vunpack.c.l.b16 %v4419
        %v4692 = vunpack.c.l.b16 %v4420
        %v4693 = vunpack.c.l.b16 %v4421
        %v4694 = vunpack.c.l.b16 %v4422
        %v4695 = vunpack.c.l.b16 %v4423
        %v4696 = vunpack.c.l.b16 %v4424
        %v4697 = vunpack.c.l.b16 %v4425
        %v4698 = vunpack.c.l.b16 %v4426
        %v4699 = vunpack.c.l.b16 %v4427
        %v4700 = vunpack.c.l.b16 %v4428
        %v4701 = vunpack.c.l.b16 %v4429
        %v4702 = vunpack.c.l.b16 %v4430
        %v4703 = vunpack.c.l.b16 %v4431
        %v4704 = vunpack.c.l.b16 %v4432
        %v4705 = vunpack.c.l.b16 %v4433
        %v4706 = vunpack.c.l.b16 %v4434
        %v4707 = vunpack.c.l.b16 %v4435
        %v4708 = vunpack.c.l.b16 %v4436
        %v4709 = vunpack.c.l.b16 %v4437
        %v4710 = vunpack.c.l.b16 %v4438
        %v4711 = vunpack.c.l.b16 %v4439
        %v4712 = vunpack.c.l.b16 %v4440
        %v4713 = vunpack.c.l.b16 %v4441
        %v4714 = vunpack.c.l.b16 %v4442
        %v4715 = vunpack.c.l.b16 %v4443
        %v4716 = vunpack.c.l.b16 %v4444
        %v4717 = vunpack.c.l.b16 %v4445
        %v4718 = vunpack.c.l.b16 %v4446
        %v4719 = vunpack.c.l.b16 %v4447
        %v4720 = vunpack.c.l.b16 %v4448
        %v4721 = vunpack.c.l.b16 %v4449
        %v4722 = vunpack.c.l.b16 %v4450
        %v4723 = vunpack.c.l.b16 %v4451
        %v4724 = vunpack.c.l.b16 %v4452
        %v4725 = vunpack.c.l.b16 %v4453
        %v4726 = vunpack.c.l.b16 %v4454
        %v4727 = vunpack.c.l.b16 %v4455
        %v4728 = vunpack.c.l.b16 %v4456
        %v4729 = vunpack.c.l.b16 %v4457
        %v4730 = vunpack.c.l.b16 %v4458
        %v4731 = vunpack.c.l.b16 %v4459
        %v4732 = vunpack.c.l.b16 %v4460
        %v4733 = vpack.c.b16 %v4606, %v4605
        %v4734 = vpack.c.b16 %v4608, %v4607
        %v4735 = vpack.c.b16 %v4610, %v4609
        %v4736 = vpack.c.b16 %v4612, %v4611
        %v4737 = vpack.c.b16 %v4614, %v4613
        %v4738 = vpack.c.b16 %v4616, %v4615
        %v4739 = vpack.c.b16 %v4618, %v4617
        %v4740 = vpack.c.b16 %v4620, %v4619
        %v4741 = vpack.c.b16 %v4622, %v4621
        %v4742 = vpack.c.b16 %v4624, %v4623
        %v4743 = vpack.c.b16 %v4626, %v4625
        %v4744 = vpack.c.b16 %v4628, %v4627
        %v4745 = vpack.c.b16 %v4630, %v4629
        %v4746 = vpack.c.b16 %v4632, %v4631
        %v4747 = vpack.c.b16 %v4634, %v4633
        %v4748 = vpack.c.b16 %v4636, %v4635
        %v4749 = vpack.c.b16 %v4638, %v4637
        %v4750 = vpack.c.b16 %v4640, %v4639
        %v4751 = vpack.c.b16 %v4642, %v4641
        %v4752 = vpack.c.b16 %v4644, %v4643
        %v4753 = vpack.c.b16 %v4646, %v4645
        %v4754 = vpack.c.b16 %v4648, %v4647
        %v4755 = vpack.c.b16 %v4650, %v4649
        %v4756 = vpack.c.b16 %v4652, %v4651
        %v4757 = vpack.c.b16 %v4654, %v4653
        %v4758 = vpack.c.b16 %v4656, %v4655
        %v4759 = vpack.c.b16 %v4658, %v4657
        %v4760 = vpack.c.b16 %v4660, %v4659
        %v4761 = vpack.c.b16 %v4662, %v4661
        %v4762 = vpack.c.b16 %v4664, %v4663
        %v4763 = vpack.c.b16 %v4666, %v4665
        %v4764 = vpack.c.b16 %v4668, %v4667
        %v4765 = vpack.c.b16 %v4670, %v4669
        %v4766 = vpack.c.b16 %v4672, %v4671
        %v4767 = vpack.c.b16 %v4674, %v4673
        %v4768 = vpack.c.b16 %v4676, %v4675
        %v4769 = vpack.c.b16 %v4678, %v4677
        %v4770 = vpack.c.b16 %v4680, %v4679
        %v4771 = vpack.c.b16 %v4682, %v4681
        %v4772 = vpack.c.b16 %v4684, %v4683
        %v4773 = vpack.c.b16 %v4686, %v4685
        %v4774 = vpack.c.b16 %v4688, %v4687
        %v4775 = vpack.c.b16 %v4690, %v4689
        %v4776 = vpack.c.b16 %v4692, %v4691
        %v4777 = vpack.c.b16 %v4694, %v4693
        %v4778 = vpack.c.b16 %v4696, %v4695
        %v4779 = vpack.c.b16 %v4698, %v4697
        %v4780 = vpack.c.b16 %v4700, %v4699
        %v4781 = vpack.c.b16 %v4702, %v4701
        %v4782 = vpack.c.b16 %v4704, %v4703
        %v4783 = vpack.c.b16 %v4706, %v4705
        %v4784 = vpack.c.b16 %v4708, %v4707
        %v4785 = vpack.c.b16 %v4710, %v4709
        %v4786 = vpack.c.b16 %v4712, %v4711
        %v4787 = vpack.c.b16 %v4714, %v4713
        %v4788 = vpack.c.b16 %v4716, %v4715
        %v4789 = vpack.c.b16 %v4718, %v4717
        %v4790 = vpack.c.b16 %v4720, %v4719
        %v4791 = vpack.c.b16 %v4722, %v4721
        %v4792 = vpack.c.b16 %v4724, %v4723
        %v4793 = vpack.c.b16 %v4726, %v4725
        %v4794 = vpack.c.b16 %v4728, %v4727
        %v4795 = vpack.c.b16 %v4730, %v4729
        %v4796 = vpack.c.b16 %v4732, %v4731
        %v4877 = vunpack.c.l.b16 %v4461
        %v4878 = vunpack.c.l.b16 %v4462
        %v4879 = vunpack.c.l.b16 %v4463
        %v4880 = vunpack.c.l.b16 %v4464
        %v4881 = vunpack.c.l.b16 %v4465
        %v4882 = vunpack.c.l.b16 %v4466
        %v4883 = vunpack.c.l.b16 %v4467
        %v4884 = vunpack.c.l.b16 %v4468
        %v4885 = vunpack.c.l.b16 %v4469
        %v4886 = vunpack.c.l.b16 %v4470
        %v4887 = vunpack.c.l.b16 %v4471
        %v4888 = vunpack.c.l.b16 %v4472
        %v4889 = vunpack.c.l.b16 %v4473
        %v4890 = vunpack.c.l.b16 %v4474
        %v4891 = vunpack.c.l.b16 %v4475
        %v4892 = vunpack.c.l.b16 %v4476
        %v4893 = vpack.c.b16 %v4878, %v4877
        %v4894 = vpack.c.b16 %v4880, %v4879
        %v4895 = vpack.c.b16 %v4882, %v4881
        %v4896 = vpack.c.b16 %v4884, %v4883
        %v4897 = vpack.c.b16 %v4886, %v4885
        %v4898 = vpack.c.b16 %v4888, %v4887
        %v4899 = vpack.c.b16 %v4890, %v4889
        %v4900 = vpack.c.b16 %v4892, %v4891
        %4909 = vmatpush.bf16.msra.mxu0 %v4900
        %4910 = vmatpush.bf16.msra.mxu0 %v4899
        %4911 = vmatpush.bf16.msra.mxu0 %v4898
        %4912 = vmatpush.bf16.msra.mxu0 %v4897
        %4913 = vmatpush.bf16.msra.mxu0 %v4896
        %4914 = vmatpush.bf16.msra.mxu0 %v4895
        %4915 = vmatpush.bf16.msra.mxu0 %v4894
        %4916 = vmatpush.bf16.msra.mxu0 %v4893
        %4917 = vmatmul.bf16.gmra.mxu0 %v4733
        %v4918 = vpop.f32.mrf.mxu0
        %v4919 = vadd.f32 0.0, %v4918
        %v4920 = vpop.f32.mrf.mxu0
        %v4921 = vadd.f32 0.0, %v4920
        %4922 = vmatmul.bf16.gmra.mxu0 %v4734
        %v4923 = vpop.f32.mrf.mxu0
        %v4924 = vadd.f32 0.0, %v4923
        %v4925 = vpop.f32.mrf.mxu0
        %v4926 = vadd.f32 0.0, %v4925
        %4927 = vmatmul.bf16.gmra.mxu0 %v4735
        %v4928 = vpop.f32.mrf.mxu0
        %v4929 = vadd.f32 0.0, %v4928
        %v4930 = vpop.f32.mrf.mxu0
        %v4931 = vadd.f32 0.0, %v4930
        %4932 = vmatmul.bf16.gmra.mxu0 %v4736
        %v4933 = vpop.f32.mrf.mxu0
        %v4934 = vadd.f32 0.0, %v4933
        %v4935 = vpop.f32.mrf.mxu0
        %v4936 = vadd.f32 0.0, %v4935
        %4937 = vmatmul.bf16.gmra.mxu0 %v4737
        %v4938 = vpop.f32.mrf.mxu0
        %v4939 = vadd.f32 0.0, %v4938
        %v4940 = vpop.f32.mrf.mxu0
        %v4941 = vadd.f32 0.0, %v4940
        %4942 = vmatmul.bf16.gmra.mxu0 %v4738
        %v4943 = vpop.f32.mrf.mxu0
        %v4944 = vadd.f32 0.0, %v4943
        %v4945 = vpop.f32.mrf.mxu0
        %v4946 = vadd.f32 0.0, %v4945
        %4947 = vmatmul.bf16.gmra.mxu0 %v4739
        %v4948 = vpop.f32.mrf.mxu0
        %v4949 = vadd.f32 0.0, %v4948
        %v4950 = vpop.f32.mrf.mxu0
        %v4951 = vadd.f32 0.0, %v4950
        %4952 = vmatmul.bf16.gmra.mxu0 %v4740
        %v4953 = vpop.f32.mrf.mxu0
        %v4954 = vadd.f32 0.0, %v4953
        %v4955 = vpop.f32.mrf.mxu0
        %v4956 = vadd.f32 0.0, %v4955
        %4957 = vmatmul.bf16.gmra.mxu0 %v4741
        %v4958 = vpop.f32.mrf.mxu0
        %v4959 = vadd.f32 0.0, %v4958
        %v4960 = vpop.f32.mrf.mxu0
        %v4961 = vadd.f32 0.0, %v4960
        %4962 = vmatmul.bf16.gmra.mxu0 %v4742
        %v4963 = vpop.f32.mrf.mxu0
        %v4964 = vadd.f32 0.0, %v4963
        %v4965 = vpop.f32.mrf.mxu0
        %v4966 = vadd.f32 0.0, %v4965
        %4967 = vmatmul.bf16.gmra.mxu0 %v4743
        %v4968 = vpop.f32.mrf.mxu0
        %v4969 = vadd.f32 0.0, %v4968
        %v4970 = vpop.f32.mrf.mxu0
        %v4971 = vadd.f32 0.0, %v4970
        %4972 = vmatmul.bf16.gmra.mxu0 %v4744
        %v4973 = vpop.f32.mrf.mxu0
        %v4974 = vadd.f32 0.0, %v4973
        %v4975 = vpop.f32.mrf.mxu0
        %v4976 = vadd.f32 0.0, %v4975
        %4977 = vmatmul.bf16.gmra.mxu0 %v4745
        %v4978 = vpop.f32.mrf.mxu0
        %v4979 = vadd.f32 0.0, %v4978
        %v4980 = vpop.f32.mrf.mxu0
        %v4981 = vadd.f32 0.0, %v4980
        %4982 = vmatmul.bf16.gmra.mxu0 %v4746
        %v4983 = vpop.f32.mrf.mxu0
        %v4984 = vadd.f32 0.0, %v4983
        %v4985 = vpop.f32.mrf.mxu0
        %v4986 = vadd.f32 0.0, %v4985
        %4987 = vmatmul.bf16.gmra.mxu0 %v4747
        %v4988 = vpop.f32.mrf.mxu0
        %v4989 = vadd.f32 0.0, %v4988
        %v4990 = vpop.f32.mrf.mxu0
        %v4991 = vadd.f32 0.0, %v4990
        %4992 = vmatmul.bf16.gmra.mxu0 %v4748
        %v4993 = vpop.f32.mrf.mxu0
        %v4994 = vadd.f32 0.0, %v4993
        %v4995 = vpop.f32.mrf.mxu0
        %v4996 = vadd.f32 0.0, %v4995
        %4997 = vmatmul.bf16.gmra.mxu0 %v4749
        %v4998 = vpop.f32.mrf.mxu0
        %v4999 = vadd.f32 0.0, %v4998
        %v5000 = vpop.f32.mrf.mxu0
        %v5001 = vadd.f32 0.0, %v5000
        %5002 = vmatmul.bf16.gmra.mxu0 %v4750
        %v5003 = vpop.f32.mrf.mxu0
        %v5004 = vadd.f32 0.0, %v5003
        %v5005 = vpop.f32.mrf.mxu0
        %v5006 = vadd.f32 0.0, %v5005
        %5007 = vmatmul.bf16.gmra.mxu0 %v4751
        %v5008 = vpop.f32.mrf.mxu0
        %v5009 = vadd.f32 0.0, %v5008
        %v5010 = vpop.f32.mrf.mxu0
        %v5011 = vadd.f32 0.0, %v5010
        %5012 = vmatmul.bf16.gmra.mxu0 %v4752
        %v5013 = vpop.f32.mrf.mxu0
        %v5014 = vadd.f32 0.0, %v5013
        %v5015 = vpop.f32.mrf.mxu0
        %v5016 = vadd.f32 0.0, %v5015
        %5017 = vmatmul.bf16.gmra.mxu0 %v4753
        %v5018 = vpop.f32.mrf.mxu0
        %v5019 = vadd.f32 0.0, %v5018
        %v5020 = vpop.f32.mrf.mxu0
        %v5021 = vadd.f32 0.0, %v5020
        %5022 = vmatmul.bf16.gmra.mxu0 %v4754
        %v5023 = vpop.f32.mrf.mxu0
        %v5024 = vadd.f32 0.0, %v5023
        %v5025 = vpop.f32.mrf.mxu0
        %v5026 = vadd.f32 0.0, %v5025
        %5027 = vmatmul.bf16.gmra.mxu0 %v4755
        %v5028 = vpop.f32.mrf.mxu0
        %v5029 = vadd.f32 0.0, %v5028
        %v5030 = vpop.f32.mrf.mxu0
        %v5031 = vadd.f32 0.0, %v5030
        %5032 = vmatmul.bf16.gmra.mxu0 %v4756
        %v5033 = vpop.f32.mrf.mxu0
        %v5034 = vadd.f32 0.0, %v5033
        %v5035 = vpop.f32.mrf.mxu0
        %v5036 = vadd.f32 0.0, %v5035
        %5037 = vmatmul.bf16.gmra.mxu0 %v4757
        %v5038 = vpop.f32.mrf.mxu0
        %v5039 = vadd.f32 0.0, %v5038
        %v5040 = vpop.f32.mrf.mxu0
        %v5041 = vadd.f32 0.0, %v5040
        %5042 = vmatmul.bf16.gmra.mxu0 %v4758
        %v5043 = vpop.f32.mrf.mxu0
        %v5044 = vadd.f32 0.0, %v5043
        %v5045 = vpop.f32.mrf.mxu0
        %v5046 = vadd.f32 0.0, %v5045
        %5047 = vmatmul.bf16.gmra.mxu0 %v4759
        %v5048 = vpop.f32.mrf.mxu0
        %v5049 = vadd.f32 0.0, %v5048
        %v5050 = vpop.f32.mrf.mxu0
        %v5051 = vadd.f32 0.0, %v5050
        %5052 = vmatmul.bf16.gmra.mxu0 %v4760
        %v5053 = vpop.f32.mrf.mxu0
        %v5054 = vadd.f32 0.0, %v5053
        %v5055 = vpop.f32.mrf.mxu0
        %v5056 = vadd.f32 0.0, %v5055
        %5057 = vmatmul.bf16.gmra.mxu0 %v4761
        %v5058 = vpop.f32.mrf.mxu0
        %v5059 = vadd.f32 0.0, %v5058
        %v5060 = vpop.f32.mrf.mxu0
        %v5061 = vadd.f32 0.0, %v5060
        %5062 = vmatmul.bf16.gmra.mxu0 %v4762
        %v5063 = vpop.f32.mrf.mxu0
        %v5064 = vadd.f32 0.0, %v5063
        %v5065 = vpop.f32.mrf.mxu0
        %v5066 = vadd.f32 0.0, %v5065
        %5067 = vmatmul.bf16.gmra.mxu0 %v4763
        %v5068 = vpop.f32.mrf.mxu0
        %v5069 = vadd.f32 0.0, %v5068
        %v5070 = vpop.f32.mrf.mxu0
        %v5071 = vadd.f32 0.0, %v5070
        %5072 = vmatmul.bf16.gmra.mxu0 %v4764
        %v5073 = vpop.f32.mrf.mxu0
        %v5074 = vadd.f32 0.0, %v5073
        %v5075 = vpop.f32.mrf.mxu0
        %v5076 = vadd.f32 0.0, %v5075
        %5077 = vmatmul.bf16.gmra.mxu0 %v4765
        %v5078 = vpop.f32.mrf.mxu0
        %v5079 = vadd.f32 0.0, %v5078
        %v5080 = vpop.f32.mrf.mxu0
        %v5081 = vadd.f32 0.0, %v5080
        %5082 = vmatmul.bf16.gmra.mxu0 %v4766
        %v5083 = vpop.f32.mrf.mxu0
        %v5084 = vadd.f32 0.0, %v5083
        %v5085 = vpop.f32.mrf.mxu0
        %v5086 = vadd.f32 0.0, %v5085
        %5087 = vmatmul.bf16.gmra.mxu0 %v4767
        %v5088 = vpop.f32.mrf.mxu0
        %v5089 = vadd.f32 0.0, %v5088
        %v5090 = vpop.f32.mrf.mxu0
        %v5091 = vadd.f32 0.0, %v5090
        %5092 = vmatmul.bf16.gmra.mxu0 %v4768
        %v5093 = vpop.f32.mrf.mxu0
        %v5094 = vadd.f32 0.0, %v5093
        %v5095 = vpop.f32.mrf.mxu0
        %v5096 = vadd.f32 0.0, %v5095
        %5097 = vmatmul.bf16.gmra.mxu0 %v4769
        %v5098 = vpop.f32.mrf.mxu0
        %v5099 = vadd.f32 0.0, %v5098
        %v5100 = vpop.f32.mrf.mxu0
        %v5101 = vadd.f32 0.0, %v5100
        %5102 = vmatmul.bf16.gmra.mxu0 %v4770
        %v5103 = vpop.f32.mrf.mxu0
        %v5104 = vadd.f32 0.0, %v5103
        %v5105 = vpop.f32.mrf.mxu0
        %v5106 = vadd.f32 0.0, %v5105
        %5107 = vmatmul.bf16.gmra.mxu0 %v4771
        %v5108 = vpop.f32.mrf.mxu0
        %v5109 = vadd.f32 0.0, %v5108
        %v5110 = vpop.f32.mrf.mxu0
        %v5111 = vadd.f32 0.0, %v5110
        %5112 = vmatmul.bf16.gmra.mxu0 %v4772
        %v5113 = vpop.f32.mrf.mxu0
        %v5114 = vadd.f32 0.0, %v5113
        %v5115 = vpop.f32.mrf.mxu0
        %v5116 = vadd.f32 0.0, %v5115
        %5117 = vmatmul.bf16.gmra.mxu0 %v4773
        %v5118 = vpop.f32.mrf.mxu0
        %v5119 = vadd.f32 0.0, %v5118
        %v5120 = vpop.f32.mrf.mxu0
        %v5121 = vadd.f32 0.0, %v5120
        %5122 = vmatmul.bf16.gmra.mxu0 %v4774
        %v5123 = vpop.f32.mrf.mxu0
        %v5124 = vadd.f32 0.0, %v5123
        %v5125 = vpop.f32.mrf.mxu0
        %v5126 = vadd.f32 0.0, %v5125
        %5127 = vmatmul.bf16.gmra.mxu0 %v4775
        %v5128 = vpop.f32.mrf.mxu0
        %v5129 = vadd.f32 0.0, %v5128
        %v5130 = vpop.f32.mrf.mxu0
        %v5131 = vadd.f32 0.0, %v5130
        %5132 = vmatmul.bf16.gmra.mxu0 %v4776
        %v5133 = vpop.f32.mrf.mxu0
        %v5134 = vadd.f32 0.0, %v5133
        %v5135 = vpop.f32.mrf.mxu0
        %v5136 = vadd.f32 0.0, %v5135
        %5137 = vmatmul.bf16.gmra.mxu0 %v4777
        %v5138 = vpop.f32.mrf.mxu0
        %v5139 = vadd.f32 0.0, %v5138
        %v5140 = vpop.f32.mrf.mxu0
        %v5141 = vadd.f32 0.0, %v5140
        %5142 = vmatmul.bf16.gmra.mxu0 %v4778
        %v5143 = vpop.f32.mrf.mxu0
        %v5144 = vadd.f32 0.0, %v5143
        %v5145 = vpop.f32.mrf.mxu0
        %v5146 = vadd.f32 0.0, %v5145
        %5147 = vmatmul.bf16.gmra.mxu0 %v4779
        %v5148 = vpop.f32.mrf.mxu0
        %v5149 = vadd.f32 0.0, %v5148
        %v5150 = vpop.f32.mrf.mxu0
        %v5151 = vadd.f32 0.0, %v5150
        %5152 = vmatmul.bf16.gmra.mxu0 %v4780
        %v5153 = vpop.f32.mrf.mxu0
        %v5154 = vadd.f32 0.0, %v5153
        %v5155 = vpop.f32.mrf.mxu0
        %v5156 = vadd.f32 0.0, %v5155
        %5157 = vmatmul.bf16.gmra.mxu0 %v4781
        %v5158 = vpop.f32.mrf.mxu0
        %v5159 = vadd.f32 0.0, %v5158
        %v5160 = vpop.f32.mrf.mxu0
        %v5161 = vadd.f32 0.0, %v5160
        %5162 = vmatmul.bf16.gmra.mxu0 %v4782
        %v5163 = vpop.f32.mrf.mxu0
        %v5164 = vadd.f32 0.0, %v5163
        %v5165 = vpop.f32.mrf.mxu0
        %v5166 = vadd.f32 0.0, %v5165
        %5167 = vmatmul.bf16.gmra.mxu0 %v4783
        %v5168 = vpop.f32.mrf.mxu0
        %v5169 = vadd.f32 0.0, %v5168
        %v5170 = vpop.f32.mrf.mxu0
        %v5171 = vadd.f32 0.0, %v5170
        %5172 = vmatmul.bf16.gmra.mxu0 %v4784
        %v5173 = vpop.f32.mrf.mxu0
        %v5174 = vadd.f32 0.0, %v5173
        %v5175 = vpop.f32.mrf.mxu0
        %v5176 = vadd.f32 0.0, %v5175
        %5177 = vmatmul.bf16.gmra.mxu0 %v4785
        %v5178 = vpop.f32.mrf.mxu0
        %v5179 = vadd.f32 0.0, %v5178
        %v5180 = vpop.f32.mrf.mxu0
        %v5181 = vadd.f32 0.0, %v5180
        %5182 = vmatmul.bf16.gmra.mxu0 %v4786
        %v5183 = vpop.f32.mrf.mxu0
        %v5184 = vadd.f32 0.0, %v5183
        %v5185 = vpop.f32.mrf.mxu0
        %v5186 = vadd.f32 0.0, %v5185
        %5187 = vmatmul.bf16.gmra.mxu0 %v4787
        %v5188 = vpop.f32.mrf.mxu0
        %v5189 = vadd.f32 0.0, %v5188
        %v5190 = vpop.f32.mrf.mxu0
        %v5191 = vadd.f32 0.0, %v5190
        %5192 = vmatmul.bf16.gmra.mxu0 %v4788
        %v5193 = vpop.f32.mrf.mxu0
        %v5194 = vadd.f32 0.0, %v5193
        %v5195 = vpop.f32.mrf.mxu0
        %v5196 = vadd.f32 0.0, %v5195
        %5197 = vmatmul.bf16.gmra.mxu0 %v4789
        %v5198 = vpop.f32.mrf.mxu0
        %v5199 = vadd.f32 0.0, %v5198
        %v5200 = vpop.f32.mrf.mxu0
        %v5201 = vadd.f32 0.0, %v5200
        %5202 = vmatmul.bf16.gmra.mxu0 %v4790
        %v5203 = vpop.f32.mrf.mxu0
        %v5204 = vadd.f32 0.0, %v5203
        %v5205 = vpop.f32.mrf.mxu0
        %v5206 = vadd.f32 0.0, %v5205
        %5207 = vmatmul.bf16.gmra.mxu0 %v4791
        %v5208 = vpop.f32.mrf.mxu0
        %v5209 = vadd.f32 0.0, %v5208
        %v5210 = vpop.f32.mrf.mxu0
        %v5211 = vadd.f32 0.0, %v5210
        %5212 = vmatmul.bf16.gmra.mxu0 %v4792
        %v5213 = vpop.f32.mrf.mxu0
        %v5214 = vadd.f32 0.0, %v5213
        %v5215 = vpop.f32.mrf.mxu0
        %v5216 = vadd.f32 0.0, %v5215
        %5217 = vmatmul.bf16.gmra.mxu0 %v4793
        %v5218 = vpop.f32.mrf.mxu0
        %v5219 = vadd.f32 0.0, %v5218
        %v5220 = vpop.f32.mrf.mxu0
        %v5221 = vadd.f32 0.0, %v5220
        %5222 = vmatmul.bf16.gmra.mxu0 %v4794
        %v5223 = vpop.f32.mrf.mxu0
        %v5224 = vadd.f32 0.0, %v5223
        %v5225 = vpop.f32.mrf.mxu0
        %v5226 = vadd.f32 0.0, %v5225
        %5227 = vmatmul.bf16.gmra.mxu0 %v4795
        %v5228 = vpop.f32.mrf.mxu0
        %v5229 = vadd.f32 0.0, %v5228
        %v5230 = vpop.f32.mrf.mxu0
        %v5231 = vadd.f32 0.0, %v5230
        %5232 = vmatmul.bf16.gmra.mxu0 %v4796
        %v5233 = vpop.f32.mrf.mxu0
        %v5234 = vadd.f32 0.0, %v5233
        %v5235 = vpop.f32.mrf.mxu0
        %v5236 = vadd.f32 0.0, %v5235
        %5237 = vdwg.mxu0
        %v5238 = vadd.f32 %v4919, %v5079
        %v5239 = vadd.f32 %v4921, %v5081
        %v5240 = vadd.f32 %v4924, %v5084
        %v5241 = vadd.f32 %v4926, %v5086
        %v5242 = vadd.f32 %v4929, %v5089
        %v5243 = vadd.f32 %v4931, %v5091
        %v5244 = vadd.f32 %v4934, %v5094
        %v5245 = vadd.f32 %v4936, %v5096
        %v5246 = vadd.f32 %v4939, %v5099
        %v5247 = vadd.f32 %v4941, %v5101
        %v5248 = vadd.f32 %v4944, %v5104
        %v5249 = vadd.f32 %v4946, %v5106
        %v5250 = vadd.f32 %v4949, %v5109
        %v5251 = vadd.f32 %v4951, %v5111
        %v5252 = vadd.f32 %v4954, %v5114
        %v5253 = vadd.f32 %v4956, %v5116
        %v5254 = vadd.f32 %v4959, %v5119
        %v5255 = vadd.f32 %v4961, %v5121
        %v5256 = vadd.f32 %v4964, %v5124
        %v5257 = vadd.f32 %v4966, %v5126
        %v5258 = vadd.f32 %v4969, %v5129
        %v5259 = vadd.f32 %v4971, %v5131
        %v5260 = vadd.f32 %v4974, %v5134
        %v5261 = vadd.f32 %v4976, %v5136
        %v5262 = vadd.f32 %v4979, %v5139
        %v5263 = vadd.f32 %v4981, %v5141
        %v5264 = vadd.f32 %v4984, %v5144
        %v5265 = vadd.f32 %v4986, %v5146
        %v5266 = vadd.f32 %v4989, %v5149
        %v5267 = vadd.f32 %v4991, %v5151
        %v5268 = vadd.f32 %v4994, %v5154
        %v5269 = vadd.f32 %v4996, %v5156
        %v5270 = vadd.f32 %v4999, %v5159
        %v5271 = vadd.f32 %v5001, %v5161
        %v5272 = vadd.f32 %v5004, %v5164
        %v5273 = vadd.f32 %v5006, %v5166
        %v5274 = vadd.f32 %v5009, %v5169
        %v5275 = vadd.f32 %v5011, %v5171
        %v5276 = vadd.f32 %v5014, %v5174
        %v5277 = vadd.f32 %v5016, %v5176
        %v5278 = vadd.f32 %v5019, %v5179
        %v5279 = vadd.f32 %v5021, %v5181
        %v5280 = vadd.f32 %v5024, %v5184
        %v5281 = vadd.f32 %v5026, %v5186
        %v5282 = vadd.f32 %v5029, %v5189
        %v5283 = vadd.f32 %v5031, %v5191
        %v5284 = vadd.f32 %v5034, %v5194
        %v5285 = vadd.f32 %v5036, %v5196
        %v5286 = vadd.f32 %v5039, %v5199
        %v5287 = vadd.f32 %v5041, %v5201
        %v5288 = vadd.f32 %v5044, %v5204
        %v5289 = vadd.f32 %v5046, %v5206
        %v5290 = vadd.f32 %v5049, %v5209
        %v5291 = vadd.f32 %v5051, %v5211
        %v5292 = vadd.f32 %v5054, %v5214
        %v5293 = vadd.f32 %v5056, %v5216
        %v5294 = vadd.f32 %v5059, %v5219
        %v5295 = vadd.f32 %v5061, %v5221
        %v5296 = vadd.f32 %v5064, %v5224
        %v5297 = vadd.f32 %v5066, %v5226
        %v5298 = vadd.f32 %v5069, %v5229
        %v5299 = vadd.f32 %v5071, %v5231
        %v5300 = vadd.f32 %v5074, %v5234
        %v5301 = vadd.f32 %v5076, %v5236
        %5302 = vadd.xlane.f32.xlu0 %v5238
        %v5303 = vpop.xlane.xlu0 %5302
        %5304 = vadd.xlane.f32.xlu0 %v5239
        %v5305 = vpop.xlane.xlu0 %5304
        %5306 = vadd.xlane.f32.xlu0 %v5240
        %v5307 = vpop.xlane.xlu0 %5306
        %5308 = vadd.xlane.f32.xlu0 %v5241
        %v5309 = vpop.xlane.xlu0 %5308
        %5310 = vadd.xlane.f32.xlu0 %v5242
        %v5311 = vpop.xlane.xlu0 %5310
        %5312 = vadd.xlane.f32.xlu0 %v5243
        %v5313 = vpop.xlane.xlu0 %5312
        %5314 = vadd.xlane.f32.xlu0 %v5244
        %v5315 = vpop.xlane.xlu0 %5314
        %5316 = vadd.xlane.f32.xlu0 %v5245
        %v5317 = vpop.xlane.xlu0 %5316
        %5318 = vadd.xlane.f32.xlu0 %v5246
        %v5319 = vpop.xlane.xlu0 %5318
        %5320 = vadd.xlane.f32.xlu0 %v5247
        %v5321 = vpop.xlane.xlu0 %5320
        %5322 = vadd.xlane.f32.xlu0 %v5248
        %v5323 = vpop.xlane.xlu0 %5322
        %5324 = vadd.xlane.f32.xlu0 %v5249
        %v5325 = vpop.xlane.xlu0 %5324
        %5326 = vadd.xlane.f32.xlu0 %v5250
        %v5327 = vpop.xlane.xlu0 %5326
        %5328 = vadd.xlane.f32.xlu0 %v5251
        %v5329 = vpop.xlane.xlu0 %5328
        %5330 = vadd.xlane.f32.xlu0 %v5252
        %v5331 = vpop.xlane.xlu0 %5330
        %5332 = vadd.xlane.f32.xlu0 %v5253
        %v5333 = vpop.xlane.xlu0 %5332
        %5334 = vadd.xlane.f32.xlu0 %v5254
        %v5335 = vpop.xlane.xlu0 %5334
        %5336 = vadd.xlane.f32.xlu0 %v5255
        %v5337 = vpop.xlane.xlu0 %5336
        %5338 = vadd.xlane.f32.xlu0 %v5256
        %v5339 = vpop.xlane.xlu0 %5338
        %5340 = vadd.xlane.f32.xlu0 %v5257
        %v5341 = vpop.xlane.xlu0 %5340
        %5342 = vadd.xlane.f32.xlu0 %v5258
        %v5343 = vpop.xlane.xlu0 %5342
        %5344 = vadd.xlane.f32.xlu0 %v5259
        %v5345 = vpop.xlane.xlu0 %5344
        %5346 = vadd.xlane.f32.xlu0 %v5260
        %v5347 = vpop.xlane.xlu0 %5346
        %5348 = vadd.xlane.f32.xlu0 %v5261
        %v5349 = vpop.xlane.xlu0 %5348
        %5350 = vadd.xlane.f32.xlu0 %v5262
        %v5351 = vpop.xlane.xlu0 %5350
        %5352 = vadd.xlane.f32.xlu0 %v5263
        %v5353 = vpop.xlane.xlu0 %5352
        %5354 = vadd.xlane.f32.xlu0 %v5264
        %v5355 = vpop.xlane.xlu0 %5354
        %5356 = vadd.xlane.f32.xlu0 %v5265
        %v5357 = vpop.xlane.xlu0 %5356
        %5358 = vadd.xlane.f32.xlu0 %v5266
        %v5359 = vpop.xlane.xlu0 %5358
        %5360 = vadd.xlane.f32.xlu0 %v5267
        %v5361 = vpop.xlane.xlu0 %5360
        %5362 = vadd.xlane.f32.xlu0 %v5268
        %v5363 = vpop.xlane.xlu0 %5362
        %5364 = vadd.xlane.f32.xlu0 %v5269
        %v5365 = vpop.xlane.xlu0 %5364
        %5366 = vadd.xlane.f32.xlu0 %v5270
        %v5367 = vpop.xlane.xlu0 %5366
        %5368 = vadd.xlane.f32.xlu0 %v5271
        %v5369 = vpop.xlane.xlu0 %5368
        %5370 = vadd.xlane.f32.xlu0 %v5272
        %v5371 = vpop.xlane.xlu0 %5370
        %5372 = vadd.xlane.f32.xlu0 %v5273
        %v5373 = vpop.xlane.xlu0 %5372
        %5374 = vadd.xlane.f32.xlu0 %v5274
        %v5375 = vpop.xlane.xlu0 %5374
        %5376 = vadd.xlane.f32.xlu0 %v5275
        %v5377 = vpop.xlane.xlu0 %5376
        %5378 = vadd.xlane.f32.xlu0 %v5276
        %v5379 = vpop.xlane.xlu0 %5378
        %5380 = vadd.xlane.f32.xlu0 %v5277
        %v5381 = vpop.xlane.xlu0 %5380
        %5382 = vadd.xlane.f32.xlu0 %v5278
        %v5383 = vpop.xlane.xlu0 %5382
        %5384 = vadd.xlane.f32.xlu0 %v5279
        %v5385 = vpop.xlane.xlu0 %5384
        %5386 = vadd.xlane.f32.xlu0 %v5280
        %v5387 = vpop.xlane.xlu0 %5386
        %5388 = vadd.xlane.f32.xlu0 %v5281
        %v5389 = vpop.xlane.xlu0 %5388
        %5390 = vadd.xlane.f32.xlu0 %v5282
        %v5391 = vpop.xlane.xlu0 %5390
        %5392 = vadd.xlane.f32.xlu0 %v5283
        %v5393 = vpop.xlane.xlu0 %5392
        %5394 = vadd.xlane.f32.xlu0 %v5284
        %v5395 = vpop.xlane.xlu0 %5394
        %5396 = vadd.xlane.f32.xlu0 %v5285
        %v5397 = vpop.xlane.xlu0 %5396
        %5398 = vadd.xlane.f32.xlu0 %v5286
        %v5399 = vpop.xlane.xlu0 %5398
        %5400 = vadd.xlane.f32.xlu0 %v5287
        %v5401 = vpop.xlane.xlu0 %5400
        %5402 = vadd.xlane.f32.xlu0 %v5288
        %v5403 = vpop.xlane.xlu0 %5402
        %5404 = vadd.xlane.f32.xlu0 %v5289
        %v5405 = vpop.xlane.xlu0 %5404
        %5406 = vadd.xlane.f32.xlu0 %v5290
        %v5407 = vpop.xlane.xlu0 %5406
        %5408 = vadd.xlane.f32.xlu0 %v5291
        %v5409 = vpop.xlane.xlu0 %5408
        %5410 = vadd.xlane.f32.xlu0 %v5292
        %v5411 = vpop.xlane.xlu0 %5410
        %5412 = vadd.xlane.f32.xlu0 %v5293
        %v5413 = vpop.xlane.xlu0 %5412
        %5414 = vadd.xlane.f32.xlu0 %v5294
        %v5415 = vpop.xlane.xlu0 %5414
        %5416 = vadd.xlane.f32.xlu0 %v5295
        %v5417 = vpop.xlane.xlu0 %5416
        %5418 = vadd.xlane.f32.xlu0 %v5296
        %v5419 = vpop.xlane.xlu0 %5418
        %5420 = vadd.xlane.f32.xlu0 %v5297
        %v5421 = vpop.xlane.xlu0 %5420
        %5422 = vadd.xlane.f32.xlu0 %v5298
        %v5423 = vpop.xlane.xlu0 %5422
        %5424 = vadd.xlane.f32.xlu0 %v5299
        %v5425 = vpop.xlane.xlu0 %5424
        %5426 = vadd.xlane.f32.xlu0 %v5300
        %v5427 = vpop.xlane.xlu0 %5426
        %5428 = vadd.xlane.f32.xlu0 %v5301
        %v5429 = vpop.xlane.xlu0 %5428
        %v5430 = vrot.slane %v5303, 4
        %v5431 = vadd.f32 %v5303, %v5430
        %v5432 = vrot.slane %v5431, 2
        %v5433 = vadd.f32 %v5431, %v5432
        %v5434 = vrot.slane %v5433, 1
        %v5435 = vadd.f32 %v5433, %v5434
        %v5436 = vrot.slane %v5305, 4
        %v5437 = vadd.f32 %v5305, %v5436
        %v5438 = vrot.slane %v5437, 2
        %v5439 = vadd.f32 %v5437, %v5438
        %v5440 = vrot.slane %v5439, 1
        %v5441 = vadd.f32 %v5439, %v5440
        %v5442 = vrot.slane %v5307, 4
        %v5443 = vadd.f32 %v5307, %v5442
        %v5444 = vrot.slane %v5443, 2
        %v5445 = vadd.f32 %v5443, %v5444
        %v5446 = vrot.slane %v5445, 1
        %v5447 = vadd.f32 %v5445, %v5446
        %v5448 = vrot.slane %v5309, 4
        %v5449 = vadd.f32 %v5309, %v5448
        %v5450 = vrot.slane %v5449, 2
        %v5451 = vadd.f32 %v5449, %v5450
        %v5452 = vrot.slane %v5451, 1
        %v5453 = vadd.f32 %v5451, %v5452
        %v5454 = vrot.slane %v5311, 4
        %v5455 = vadd.f32 %v5311, %v5454
        %v5456 = vrot.slane %v5455, 2
        %v5457 = vadd.f32 %v5455, %v5456
        %v5458 = vrot.slane %v5457, 1
        %v5459 = vadd.f32 %v5457, %v5458
        %v5460 = vrot.slane %v5313, 4
        %v5461 = vadd.f32 %v5313, %v5460
        %v5462 = vrot.slane %v5461, 2
        %v5463 = vadd.f32 %v5461, %v5462
        %v5464 = vrot.slane %v5463, 1
        %v5465 = vadd.f32 %v5463, %v5464
        %v5466 = vrot.slane %v5315, 4
        %v5467 = vadd.f32 %v5315, %v5466
        %v5468 = vrot.slane %v5467, 2
        %v5469 = vadd.f32 %v5467, %v5468
        %v5470 = vrot.slane %v5469, 1
        %v5471 = vadd.f32 %v5469, %v5470
        %v5472 = vrot.slane %v5317, 4
        %v5473 = vadd.f32 %v5317, %v5472
        %v5474 = vrot.slane %v5473, 2
        %v5475 = vadd.f32 %v5473, %v5474
        %v5476 = vrot.slane %v5475, 1
        %v5477 = vadd.f32 %v5475, %v5476
        %v5478 = vrot.slane %v5319, 4
        %v5479 = vadd.f32 %v5319, %v5478
        %v5480 = vrot.slane %v5479, 2
        %v5481 = vadd.f32 %v5479, %v5480
        %v5482 = vrot.slane %v5481, 1
        %v5483 = vadd.f32 %v5481, %v5482
        %v5484 = vrot.slane %v5321, 4
        %v5485 = vadd.f32 %v5321, %v5484
        %v5486 = vrot.slane %v5485, 2
        %v5487 = vadd.f32 %v5485, %v5486
        %v5488 = vrot.slane %v5487, 1
        %v5489 = vadd.f32 %v5487, %v5488
        %v5490 = vrot.slane %v5323, 4
        %v5491 = vadd.f32 %v5323, %v5490
        %v5492 = vrot.slane %v5491, 2
        %v5493 = vadd.f32 %v5491, %v5492
        %v5494 = vrot.slane %v5493, 1
        %v5495 = vadd.f32 %v5493, %v5494
        %v5496 = vrot.slane %v5325, 4
        %v5497 = vadd.f32 %v5325, %v5496
        %v5498 = vrot.slane %v5497, 2
        %v5499 = vadd.f32 %v5497, %v5498
        %v5500 = vrot.slane %v5499, 1
        %v5501 = vadd.f32 %v5499, %v5500
        %v5502 = vrot.slane %v5327, 4
        %v5503 = vadd.f32 %v5327, %v5502
        %v5504 = vrot.slane %v5503, 2
        %v5505 = vadd.f32 %v5503, %v5504
        %v5506 = vrot.slane %v5505, 1
        %v5507 = vadd.f32 %v5505, %v5506
        %v5508 = vrot.slane %v5329, 4
        %v5509 = vadd.f32 %v5329, %v5508
        %v5510 = vrot.slane %v5509, 2
        %v5511 = vadd.f32 %v5509, %v5510
        %v5512 = vrot.slane %v5511, 1
        %v5513 = vadd.f32 %v5511, %v5512
        %v5514 = vrot.slane %v5331, 4
        %v5515 = vadd.f32 %v5331, %v5514
        %v5516 = vrot.slane %v5515, 2
        %v5517 = vadd.f32 %v5515, %v5516
        %v5518 = vrot.slane %v5517, 1
        %v5519 = vadd.f32 %v5517, %v5518
        %v5520 = vrot.slane %v5333, 4
        %v5521 = vadd.f32 %v5333, %v5520
        %v5522 = vrot.slane %v5521, 2
        %v5523 = vadd.f32 %v5521, %v5522
        %v5524 = vrot.slane %v5523, 1
        %v5525 = vadd.f32 %v5523, %v5524
        %v5526 = vrot.slane %v5335, 4
        %v5527 = vadd.f32 %v5335, %v5526
        %v5528 = vrot.slane %v5527, 2
        %v5529 = vadd.f32 %v5527, %v5528
        %v5530 = vrot.slane %v5529, 1
        %v5531 = vadd.f32 %v5529, %v5530
        %v5532 = vrot.slane %v5337, 4
        %v5533 = vadd.f32 %v5337, %v5532
        %v5534 = vrot.slane %v5533, 2
        %v5535 = vadd.f32 %v5533, %v5534
        %v5536 = vrot.slane %v5535, 1
        %v5537 = vadd.f32 %v5535, %v5536
        %v5538 = vrot.slane %v5339, 4
        %v5539 = vadd.f32 %v5339, %v5538
        %v5540 = vrot.slane %v5539, 2
        %v5541 = vadd.f32 %v5539, %v5540
        %v5542 = vrot.slane %v5541, 1
        %v5543 = vadd.f32 %v5541, %v5542
        %v5544 = vrot.slane %v5341, 4
        %v5545 = vadd.f32 %v5341, %v5544
        %v5546 = vrot.slane %v5545, 2
        %v5547 = vadd.f32 %v5545, %v5546
        %v5548 = vrot.slane %v5547, 1
        %v5549 = vadd.f32 %v5547, %v5548
        %v5550 = vrot.slane %v5343, 4
        %v5551 = vadd.f32 %v5343, %v5550
        %v5552 = vrot.slane %v5551, 2
        %v5553 = vadd.f32 %v5551, %v5552
        %v5554 = vrot.slane %v5553, 1
        %v5555 = vadd.f32 %v5553, %v5554
        %v5556 = vrot.slane %v5345, 4
        %v5557 = vadd.f32 %v5345, %v5556
        %v5558 = vrot.slane %v5557, 2
        %v5559 = vadd.f32 %v5557, %v5558
        %v5560 = vrot.slane %v5559, 1
        %v5561 = vadd.f32 %v5559, %v5560
        %v5562 = vrot.slane %v5347, 4
        %v5563 = vadd.f32 %v5347, %v5562
        %v5564 = vrot.slane %v5563, 2
        %v5565 = vadd.f32 %v5563, %v5564
        %v5566 = vrot.slane %v5565, 1
        %v5567 = vadd.f32 %v5565, %v5566
        %v5568 = vrot.slane %v5349, 4
        %v5569 = vadd.f32 %v5349, %v5568
        %v5570 = vrot.slane %v5569, 2
        %v5571 = vadd.f32 %v5569, %v5570
        %v5572 = vrot.slane %v5571, 1
        %v5573 = vadd.f32 %v5571, %v5572
        %v5574 = vrot.slane %v5351, 4
        %v5575 = vadd.f32 %v5351, %v5574
        %v5576 = vrot.slane %v5575, 2
        %v5577 = vadd.f32 %v5575, %v5576
        %v5578 = vrot.slane %v5577, 1
        %v5579 = vadd.f32 %v5577, %v5578
        %v5580 = vrot.slane %v5353, 4
        %v5581 = vadd.f32 %v5353, %v5580
        %v5582 = vrot.slane %v5581, 2
        %v5583 = vadd.f32 %v5581, %v5582
        %v5584 = vrot.slane %v5583, 1
        %v5585 = vadd.f32 %v5583, %v5584
        %v5586 = vrot.slane %v5355, 4
        %v5587 = vadd.f32 %v5355, %v5586
        %v5588 = vrot.slane %v5587, 2
        %v5589 = vadd.f32 %v5587, %v5588
        %v5590 = vrot.slane %v5589, 1
        %v5591 = vadd.f32 %v5589, %v5590
        %v5592 = vrot.slane %v5357, 4
        %v5593 = vadd.f32 %v5357, %v5592
        %v5594 = vrot.slane %v5593, 2
        %v5595 = vadd.f32 %v5593, %v5594
        %v5596 = vrot.slane %v5595, 1
        %v5597 = vadd.f32 %v5595, %v5596
        %v5598 = vrot.slane %v5359, 4
        %v5599 = vadd.f32 %v5359, %v5598
        %v5600 = vrot.slane %v5599, 2
        %v5601 = vadd.f32 %v5599, %v5600
        %v5602 = vrot.slane %v5601, 1
        %v5603 = vadd.f32 %v5601, %v5602
        %v5604 = vrot.slane %v5361, 4
        %v5605 = vadd.f32 %v5361, %v5604
        %v5606 = vrot.slane %v5605, 2
        %v5607 = vadd.f32 %v5605, %v5606
        %v5608 = vrot.slane %v5607, 1
        %v5609 = vadd.f32 %v5607, %v5608
        %v5610 = vrot.slane %v5363, 4
        %v5611 = vadd.f32 %v5363, %v5610
        %v5612 = vrot.slane %v5611, 2
        %v5613 = vadd.f32 %v5611, %v5612
        %v5614 = vrot.slane %v5613, 1
        %v5615 = vadd.f32 %v5613, %v5614
        %v5616 = vrot.slane %v5365, 4
        %v5617 = vadd.f32 %v5365, %v5616
        %v5618 = vrot.slane %v5617, 2
        %v5619 = vadd.f32 %v5617, %v5618
        %v5620 = vrot.slane %v5619, 1
        %v5621 = vadd.f32 %v5619, %v5620
        %v5622 = vrot.slane %v5367, 4
        %v5623 = vadd.f32 %v5367, %v5622
        %v5624 = vrot.slane %v5623, 2
        %v5625 = vadd.f32 %v5623, %v5624
        %v5626 = vrot.slane %v5625, 1
        %v5627 = vadd.f32 %v5625, %v5626
        %v5628 = vrot.slane %v5369, 4
        %v5629 = vadd.f32 %v5369, %v5628
        %v5630 = vrot.slane %v5629, 2
        %v5631 = vadd.f32 %v5629, %v5630
        %v5632 = vrot.slane %v5631, 1
        %v5633 = vadd.f32 %v5631, %v5632
        %v5634 = vrot.slane %v5371, 4
        %v5635 = vadd.f32 %v5371, %v5634
        %v5636 = vrot.slane %v5635, 2
        %v5637 = vadd.f32 %v5635, %v5636
        %v5638 = vrot.slane %v5637, 1
        %v5639 = vadd.f32 %v5637, %v5638
        %v5640 = vrot.slane %v5373, 4
        %v5641 = vadd.f32 %v5373, %v5640
        %v5642 = vrot.slane %v5641, 2
        %v5643 = vadd.f32 %v5641, %v5642
        %v5644 = vrot.slane %v5643, 1
        %v5645 = vadd.f32 %v5643, %v5644
        %v5646 = vrot.slane %v5375, 4
        %v5647 = vadd.f32 %v5375, %v5646
        %v5648 = vrot.slane %v5647, 2
        %v5649 = vadd.f32 %v5647, %v5648
        %v5650 = vrot.slane %v5649, 1
        %v5651 = vadd.f32 %v5649, %v5650
        %v5652 = vrot.slane %v5377, 4
        %v5653 = vadd.f32 %v5377, %v5652
        %v5654 = vrot.slane %v5653, 2
        %v5655 = vadd.f32 %v5653, %v5654
        %v5656 = vrot.slane %v5655, 1
        %v5657 = vadd.f32 %v5655, %v5656
        %v5658 = vrot.slane %v5379, 4
        %v5659 = vadd.f32 %v5379, %v5658
        %v5660 = vrot.slane %v5659, 2
        %v5661 = vadd.f32 %v5659, %v5660
        %v5662 = vrot.slane %v5661, 1
        %v5663 = vadd.f32 %v5661, %v5662
        %v5664 = vrot.slane %v5381, 4
        %v5665 = vadd.f32 %v5381, %v5664
        %v5666 = vrot.slane %v5665, 2
        %v5667 = vadd.f32 %v5665, %v5666
        %v5668 = vrot.slane %v5667, 1
        %v5669 = vadd.f32 %v5667, %v5668
        %v5670 = vrot.slane %v5383, 4
        %v5671 = vadd.f32 %v5383, %v5670
        %v5672 = vrot.slane %v5671, 2
        %v5673 = vadd.f32 %v5671, %v5672
        %v5674 = vrot.slane %v5673, 1
        %v5675 = vadd.f32 %v5673, %v5674
        %v5676 = vrot.slane %v5385, 4
        %v5677 = vadd.f32 %v5385, %v5676
        %v5678 = vrot.slane %v5677, 2
        %v5679 = vadd.f32 %v5677, %v5678
        %v5680 = vrot.slane %v5679, 1
        %v5681 = vadd.f32 %v5679, %v5680
        %v5682 = vrot.slane %v5387, 4
        %v5683 = vadd.f32 %v5387, %v5682
        %v5684 = vrot.slane %v5683, 2
        %v5685 = vadd.f32 %v5683, %v5684
        %v5686 = vrot.slane %v5685, 1
        %v5687 = vadd.f32 %v5685, %v5686
        %v5688 = vrot.slane %v5389, 4
        %v5689 = vadd.f32 %v5389, %v5688
        %v5690 = vrot.slane %v5689, 2
        %v5691 = vadd.f32 %v5689, %v5690
        %v5692 = vrot.slane %v5691, 1
        %v5693 = vadd.f32 %v5691, %v5692
        %v5694 = vrot.slane %v5391, 4
        %v5695 = vadd.f32 %v5391, %v5694
        %v5696 = vrot.slane %v5695, 2
        %v5697 = vadd.f32 %v5695, %v5696
        %v5698 = vrot.slane %v5697, 1
        %v5699 = vadd.f32 %v5697, %v5698
        %v5700 = vrot.slane %v5393, 4
        %v5701 = vadd.f32 %v5393, %v5700
        %v5702 = vrot.slane %v5701, 2
        %v5703 = vadd.f32 %v5701, %v5702
        %v5704 = vrot.slane %v5703, 1
        %v5705 = vadd.f32 %v5703, %v5704
        %v5706 = vrot.slane %v5395, 4
        %v5707 = vadd.f32 %v5395, %v5706
        %v5708 = vrot.slane %v5707, 2
        %v5709 = vadd.f32 %v5707, %v5708
        %v5710 = vrot.slane %v5709, 1
        %v5711 = vadd.f32 %v5709, %v5710
        %v5712 = vrot.slane %v5397, 4
        %v5713 = vadd.f32 %v5397, %v5712
        %v5714 = vrot.slane %v5713, 2
        %v5715 = vadd.f32 %v5713, %v5714
        %v5716 = vrot.slane %v5715, 1
        %v5717 = vadd.f32 %v5715, %v5716
        %v5718 = vrot.slane %v5399, 4
        %v5719 = vadd.f32 %v5399, %v5718
        %v5720 = vrot.slane %v5719, 2
        %v5721 = vadd.f32 %v5719, %v5720
        %v5722 = vrot.slane %v5721, 1
        %v5723 = vadd.f32 %v5721, %v5722
        %v5724 = vrot.slane %v5401, 4
        %v5725 = vadd.f32 %v5401, %v5724
        %v5726 = vrot.slane %v5725, 2
        %v5727 = vadd.f32 %v5725, %v5726
        %v5728 = vrot.slane %v5727, 1
        %v5729 = vadd.f32 %v5727, %v5728
        %v5730 = vrot.slane %v5403, 4
        %v5731 = vadd.f32 %v5403, %v5730
        %v5732 = vrot.slane %v5731, 2
        %v5733 = vadd.f32 %v5731, %v5732
        %v5734 = vrot.slane %v5733, 1
        %v5735 = vadd.f32 %v5733, %v5734
        %v5736 = vrot.slane %v5405, 4
        %v5737 = vadd.f32 %v5405, %v5736
        %v5738 = vrot.slane %v5737, 2
        %v5739 = vadd.f32 %v5737, %v5738
        %v5740 = vrot.slane %v5739, 1
        %v5741 = vadd.f32 %v5739, %v5740
        %v5742 = vrot.slane %v5407, 4
        %v5743 = vadd.f32 %v5407, %v5742
        %v5744 = vrot.slane %v5743, 2
        %v5745 = vadd.f32 %v5743, %v5744
        %v5746 = vrot.slane %v5745, 1
        %v5747 = vadd.f32 %v5745, %v5746
        %v5748 = vrot.slane %v5409, 4
        %v5749 = vadd.f32 %v5409, %v5748
        %v5750 = vrot.slane %v5749, 2
        %v5751 = vadd.f32 %v5749, %v5750
        %v5752 = vrot.slane %v5751, 1
        %v5753 = vadd.f32 %v5751, %v5752
        %v5754 = vrot.slane %v5411, 4
        %v5755 = vadd.f32 %v5411, %v5754
        %v5756 = vrot.slane %v5755, 2
        %v5757 = vadd.f32 %v5755, %v5756
        %v5758 = vrot.slane %v5757, 1
        %v5759 = vadd.f32 %v5757, %v5758
        %v5760 = vrot.slane %v5413, 4
        %v5761 = vadd.f32 %v5413, %v5760
        %v5762 = vrot.slane %v5761, 2
        %v5763 = vadd.f32 %v5761, %v5762
        %v5764 = vrot.slane %v5763, 1
        %v5765 = vadd.f32 %v5763, %v5764
        %v5766 = vrot.slane %v5415, 4
        %v5767 = vadd.f32 %v5415, %v5766
        %v5768 = vrot.slane %v5767, 2
        %v5769 = vadd.f32 %v5767, %v5768
        %v5770 = vrot.slane %v5769, 1
        %v5771 = vadd.f32 %v5769, %v5770
        %v5772 = vrot.slane %v5417, 4
        %v5773 = vadd.f32 %v5417, %v5772
        %v5774 = vrot.slane %v5773, 2
        %v5775 = vadd.f32 %v5773, %v5774
        %v5776 = vrot.slane %v5775, 1
        %v5777 = vadd.f32 %v5775, %v5776
        %v5778 = vrot.slane %v5419, 4
        %v5779 = vadd.f32 %v5419, %v5778
        %v5780 = vrot.slane %v5779, 2
        %v5781 = vadd.f32 %v5779, %v5780
        %v5782 = vrot.slane %v5781, 1
        %v5783 = vadd.f32 %v5781, %v5782
        %v5784 = vrot.slane %v5421, 4
        %v5785 = vadd.f32 %v5421, %v5784
        %v5786 = vrot.slane %v5785, 2
        %v5787 = vadd.f32 %v5785, %v5786
        %v5788 = vrot.slane %v5787, 1
        %v5789 = vadd.f32 %v5787, %v5788
        %v5790 = vrot.slane %v5423, 4
        %v5791 = vadd.f32 %v5423, %v5790
        %v5792 = vrot.slane %v5791, 2
        %v5793 = vadd.f32 %v5791, %v5792
        %v5794 = vrot.slane %v5793, 1
        %v5795 = vadd.f32 %v5793, %v5794
        %v5796 = vrot.slane %v5425, 4
        %v5797 = vadd.f32 %v5425, %v5796
        %v5798 = vrot.slane %v5797, 2
        %v5799 = vadd.f32 %v5797, %v5798
        %v5800 = vrot.slane %v5799, 1
        %v5801 = vadd.f32 %v5799, %v5800
        %v5802 = vrot.slane %v5427, 4
        %v5803 = vadd.f32 %v5427, %v5802
        %v5804 = vrot.slane %v5803, 2
        %v5805 = vadd.f32 %v5803, %v5804
        %v5806 = vrot.slane %v5805, 1
        %v5807 = vadd.f32 %v5805, %v5806
        %v5808 = vrot.slane %v5429, 4
        %v5809 = vadd.f32 %v5429, %v5808
        %v5810 = vrot.slane %v5809, 2
        %v5811 = vadd.f32 %v5809, %v5810
        %v5812 = vrot.slane %v5811, 1
        %v5813 = vadd.f32 %v5811, %v5812
        %v5814 = vmul.f32 %v4919, %v4919
        %v5815 = vmul.f32 %v4921, %v4921
        %v5816 = vmul.f32 %v4924, %v4924
        %v5817 = vmul.f32 %v4926, %v4926
        %v5818 = vmul.f32 %v4929, %v4929
        %v5819 = vmul.f32 %v4931, %v4931
        %v5820 = vmul.f32 %v4934, %v4934
        %v5821 = vmul.f32 %v4936, %v4936
        %v5822 = vmul.f32 %v4939, %v4939
        %v5823 = vmul.f32 %v4941, %v4941
        %v5824 = vmul.f32 %v4944, %v4944
        %v5825 = vmul.f32 %v4946, %v4946
        %v5826 = vmul.f32 %v4949, %v4949
        %v5827 = vmul.f32 %v4951, %v4951
        %v5828 = vmul.f32 %v4954, %v4954
        %v5829 = vmul.f32 %v4956, %v4956
        %v5830 = vmul.f32 %v4959, %v4959
        %v5831 = vmul.f32 %v4961, %v4961
        %v5832 = vmul.f32 %v4964, %v4964
        %v5833 = vmul.f32 %v4966, %v4966
        %v5834 = vmul.f32 %v4969, %v4969
        %v5835 = vmul.f32 %v4971, %v4971
        %v5836 = vmul.f32 %v4974, %v4974
        %v5837 = vmul.f32 %v4976, %v4976
        %v5838 = vmul.f32 %v4979, %v4979
        %v5839 = vmul.f32 %v4981, %v4981
        %v5840 = vmul.f32 %v4984, %v4984
        %v5841 = vmul.f32 %v4986, %v4986
        %v5842 = vmul.f32 %v4989, %v4989
        %v5843 = vmul.f32 %v4991, %v4991
        %v5844 = vmul.f32 %v4994, %v4994
        %v5845 = vmul.f32 %v4996, %v4996
        %v5846 = vmul.f32 %v4999, %v4999
        %v5847 = vmul.f32 %v5001, %v5001
        %v5848 = vmul.f32 %v5004, %v5004
        %v5849 = vmul.f32 %v5006, %v5006
        %v5850 = vmul.f32 %v5009, %v5009
        %v5851 = vmul.f32 %v5011, %v5011
        %v5852 = vmul.f32 %v5014, %v5014
        %v5853 = vmul.f32 %v5016, %v5016
        %v5854 = vmul.f32 %v5019, %v5019
        %v5855 = vmul.f32 %v5021, %v5021
        %v5856 = vmul.f32 %v5024, %v5024
        %v5857 = vmul.f32 %v5026, %v5026
        %v5858 = vmul.f32 %v5029, %v5029
        %v5859 = vmul.f32 %v5031, %v5031
        %v5860 = vmul.f32 %v5034, %v5034
        %v5861 = vmul.f32 %v5036, %v5036
        %v5862 = vmul.f32 %v5039, %v5039
        %v5863 = vmul.f32 %v5041, %v5041
        %v5864 = vmul.f32 %v5044, %v5044
        %v5865 = vmul.f32 %v5046, %v5046
        %v5866 = vmul.f32 %v5049, %v5049
        %v5867 = vmul.f32 %v5051, %v5051
        %v5868 = vmul.f32 %v5054, %v5054
        %v5869 = vmul.f32 %v5056, %v5056
        %v5870 = vmul.f32 %v5059, %v5059
        %v5871 = vmul.f32 %v5061, %v5061
        %v5872 = vmul.f32 %v5064, %v5064
        %v5873 = vmul.f32 %v5066, %v5066
        %v5874 = vmul.f32 %v5069, %v5069
        %v5875 = vmul.f32 %v5071, %v5071
        %v5876 = vmul.f32 %v5074, %v5074
        %v5877 = vmul.f32 %v5076, %v5076
        %v5878 = vmul.f32 %v5079, %v5079
        %v5879 = vmul.f32 %v5081, %v5081
        %v5880 = vmul.f32 %v5084, %v5084
        %v5881 = vmul.f32 %v5086, %v5086
        %v5882 = vmul.f32 %v5089, %v5089
        %v5883 = vmul.f32 %v5091, %v5091
        %v5884 = vmul.f32 %v5094, %v5094
        %v5885 = vmul.f32 %v5096, %v5096
        %v5886 = vmul.f32 %v5099, %v5099
        %v5887 = vmul.f32 %v5101, %v5101
        %v5888 = vmul.f32 %v5104, %v5104
        %v5889 = vmul.f32 %v5106, %v5106
        %v5890 = vmul.f32 %v5109, %v5109
        %v5891 = vmul.f32 %v5111, %v5111
        %v5892 = vmul.f32 %v5114, %v5114
        %v5893 = vmul.f32 %v5116, %v5116
        %v5894 = vmul.f32 %v5119, %v5119
        %v5895 = vmul.f32 %v5121, %v5121
        %v5896 = vmul.f32 %v5124, %v5124
        %v5897 = vmul.f32 %v5126, %v5126
        %v5898 = vmul.f32 %v5129, %v5129
        %v5899 = vmul.f32 %v5131, %v5131
        %v5900 = vmul.f32 %v5134, %v5134
        %v5901 = vmul.f32 %v5136, %v5136
        %v5902 = vmul.f32 %v5139, %v5139
        %v5903 = vmul.f32 %v5141, %v5141
        %v5904 = vmul.f32 %v5144, %v5144
        %v5905 = vmul.f32 %v5146, %v5146
        %v5906 = vmul.f32 %v5149, %v5149
        %v5907 = vmul.f32 %v5151, %v5151
        %v5908 = vmul.f32 %v5154, %v5154
        %v5909 = vmul.f32 %v5156, %v5156
        %v5910 = vmul.f32 %v5159, %v5159
        %v5911 = vmul.f32 %v5161, %v5161
        %v5912 = vmul.f32 %v5164, %v5164
        %v5913 = vmul.f32 %v5166, %v5166
        %v5914 = vmul.f32 %v5169, %v5169
        %v5915 = vmul.f32 %v5171, %v5171
        %v5916 = vmul.f32 %v5174, %v5174
        %v5917 = vmul.f32 %v5176, %v5176
        %v5918 = vmul.f32 %v5179, %v5179
        %v5919 = vmul.f32 %v5181, %v5181
        %v5920 = vmul.f32 %v5184, %v5184
        %v5921 = vmul.f32 %v5186, %v5186
        %v5922 = vmul.f32 %v5189, %v5189
        %v5923 = vmul.f32 %v5191, %v5191
        %v5924 = vmul.f32 %v5194, %v5194
        %v5925 = vmul.f32 %v5196, %v5196
        %v5926 = vmul.f32 %v5199, %v5199
        %v5927 = vmul.f32 %v5201, %v5201
        %v5928 = vmul.f32 %v5204, %v5204
        %v5929 = vmul.f32 %v5206, %v5206
        %v5930 = vmul.f32 %v5209, %v5209
        %v5931 = vmul.f32 %v5211, %v5211
        %v5932 = vmul.f32 %v5214, %v5214
        %v5933 = vmul.f32 %v5216, %v5216
        %v5934 = vmul.f32 %v5219, %v5219
        %v5935 = vmul.f32 %v5221, %v5221
        %v5936 = vmul.f32 %v5224, %v5224
        %v5937 = vmul.f32 %v5226, %v5226
        %v5938 = vmul.f32 %v5229, %v5229
        %v5939 = vmul.f32 %v5231, %v5231
        %v5940 = vmul.f32 %v5234, %v5234
        %v5941 = vmul.f32 %v5236, %v5236
        %v5942 = vadd.f32 %v5814, %v5878
        %v5943 = vadd.f32 %v5815, %v5879
        %v5944 = vadd.f32 %v5816, %v5880
        %v5945 = vadd.f32 %v5817, %v5881
        %v5946 = vadd.f32 %v5818, %v5882
        %v5947 = vadd.f32 %v5819, %v5883
        %v5948 = vadd.f32 %v5820, %v5884
        %v5949 = vadd.f32 %v5821, %v5885
        %v5950 = vadd.f32 %v5822, %v5886
        %v5951 = vadd.f32 %v5823, %v5887
        %v5952 = vadd.f32 %v5824, %v5888
        %v5953 = vadd.f32 %v5825, %v5889
        %v5954 = vadd.f32 %v5826, %v5890
        %v5955 = vadd.f32 %v5827, %v5891
        %v5956 = vadd.f32 %v5828, %v5892
        %v5957 = vadd.f32 %v5829, %v5893
        %v5958 = vadd.f32 %v5830, %v5894
        %v5959 = vadd.f32 %v5831, %v5895
        %v5960 = vadd.f32 %v5832, %v5896
        %v5961 = vadd.f32 %v5833, %v5897
        %v5962 = vadd.f32 %v5834, %v5898
        %v5963 = vadd.f32 %v5835, %v5899
        %v5964 = vadd.f32 %v5836, %v5900
        %v5965 = vadd.f32 %v5837, %v5901
        %v5966 = vadd.f32 %v5838, %v5902
        %v5967 = vadd.f32 %v5839, %v5903
        %v5968 = vadd.f32 %v5840, %v5904
        %v5969 = vadd.f32 %v5841, %v5905
        %v5970 = vadd.f32 %v5842, %v5906
        %v5971 = vadd.f32 %v5843, %v5907
        %v5972 = vadd.f32 %v5844, %v5908
        %v5973 = vadd.f32 %v5845, %v5909
        %v5974 = vadd.f32 %v5846, %v5910
        %v5975 = vadd.f32 %v5847, %v5911
        %v5976 = vadd.f32 %v5848, %v5912
        %v5977 = vadd.f32 %v5849, %v5913
        %v5978 = vadd.f32 %v5850, %v5914
        %v5979 = vadd.f32 %v5851, %v5915
        %v5980 = vadd.f32 %v5852, %v5916
        %v5981 = vadd.f32 %v5853, %v5917
        %v5982 = vadd.f32 %v5854, %v5918
        %v5983 = vadd.f32 %v5855, %v5919
        %v5984 = vadd.f32 %v5856, %v5920
        %v5985 = vadd.f32 %v5857, %v5921
        %v5986 = vadd.f32 %v5858, %v5922
        %v5987 = vadd.f32 %v5859, %v5923
        %v5988 = vadd.f32 %v5860, %v5924
        %v5989 = vadd.f32 %v5861, %v5925
        %v5990 = vadd.f32 %v5862, %v5926
        %v5991 = vadd.f32 %v5863, %v5927
        %v5992 = vadd.f32 %v5864, %v5928
        %v5993 = vadd.f32 %v5865, %v5929
        %v5994 = vadd.f32 %v5866, %v5930
        %v5995 = vadd.f32 %v5867, %v5931
        %v5996 = vadd.f32 %v5868, %v5932
        %v5997 = vadd.f32 %v5869, %v5933
        %v5998 = vadd.f32 %v5870, %v5934
        %v5999 = vadd.f32 %v5871, %v5935
        %v6000 = vadd.f32 %v5872, %v5936
        %v6001 = vadd.f32 %v5873, %v5937
        %v6002 = vadd.f32 %v5874, %v5938
        %v6003 = vadd.f32 %v5875, %v5939
        %v6004 = vadd.f32 %v5876, %v5940
        %v6005 = vadd.f32 %v5877, %v5941
        %6006 = vadd.xlane.f32.xlu0 %v5942
        %v6007 = vpop.xlane.xlu0 %6006
        %6008 = vadd.xlane.f32.xlu0 %v5943
        %v6009 = vpop.xlane.xlu0 %6008
        %6010 = vadd.xlane.f32.xlu0 %v5944
        %v6011 = vpop.xlane.xlu0 %6010
        %6012 = vadd.xlane.f32.xlu0 %v5945
        %v6013 = vpop.xlane.xlu0 %6012
        %6014 = vadd.xlane.f32.xlu0 %v5946
        %v6015 = vpop.xlane.xlu0 %6014
        %6016 = vadd.xlane.f32.xlu0 %v5947
        %v6017 = vpop.xlane.xlu0 %6016
        %6018 = vadd.xlane.f32.xlu0 %v5948
        %v6019 = vpop.xlane.xlu0 %6018
        %6020 = vadd.xlane.f32.xlu0 %v5949
        %v6021 = vpop.xlane.xlu0 %6020
        %6022 = vadd.xlane.f32.xlu0 %v5950
        %v6023 = vpop.xlane.xlu0 %6022
        %6024 = vadd.xlane.f32.xlu0 %v5951
        %v6025 = vpop.xlane.xlu0 %6024
        %6026 = vadd.xlane.f32.xlu0 %v5952
        %v6027 = vpop.xlane.xlu0 %6026
        %6028 = vadd.xlane.f32.xlu0 %v5953
        %v6029 = vpop.xlane.xlu0 %6028
        %6030 = vadd.xlane.f32.xlu0 %v5954
        %v6031 = vpop.xlane.xlu0 %6030
        %6032 = vadd.xlane.f32.xlu0 %v5955
        %v6033 = vpop.xlane.xlu0 %6032
        %6034 = vadd.xlane.f32.xlu0 %v5956
        %v6035 = vpop.xlane.xlu0 %6034
        %6036 = vadd.xlane.f32.xlu0 %v5957
        %v6037 = vpop.xlane.xlu0 %6036
        %6038 = vadd.xlane.f32.xlu0 %v5958
        %v6039 = vpop.xlane.xlu0 %6038
        %6040 = vadd.xlane.f32.xlu0 %v5959
        %v6041 = vpop.xlane.xlu0 %6040
        %6042 = vadd.xlane.f32.xlu0 %v5960
        %v6043 = vpop.xlane.xlu0 %6042
        %6044 = vadd.xlane.f32.xlu0 %v5961
        %v6045 = vpop.xlane.xlu0 %6044
        %6046 = vadd.xlane.f32.xlu0 %v5962
        %v6047 = vpop.xlane.xlu0 %6046
        %6048 = vadd.xlane.f32.xlu0 %v5963
        %v6049 = vpop.xlane.xlu0 %6048
        %6050 = vadd.xlane.f32.xlu0 %v5964
        %v6051 = vpop.xlane.xlu0 %6050
        %6052 = vadd.xlane.f32.xlu0 %v5965
        %v6053 = vpop.xlane.xlu0 %6052
        %6054 = vadd.xlane.f32.xlu0 %v5966
        %v6055 = vpop.xlane.xlu0 %6054
        %6056 = vadd.xlane.f32.xlu0 %v5967
        %v6057 = vpop.xlane.xlu0 %6056
        %6058 = vadd.xlane.f32.xlu0 %v5968
        %v6059 = vpop.xlane.xlu0 %6058
        %6060 = vadd.xlane.f32.xlu0 %v5969
        %v6061 = vpop.xlane.xlu0 %6060
        %6062 = vadd.xlane.f32.xlu0 %v5970
        %v6063 = vpop.xlane.xlu0 %6062
        %6064 = vadd.xlane.f32.xlu0 %v5971
        %v6065 = vpop.xlane.xlu0 %6064
        %6066 = vadd.xlane.f32.xlu0 %v5972
        %v6067 = vpop.xlane.xlu0 %6066
        %6068 = vadd.xlane.f32.xlu0 %v5973
        %v6069 = vpop.xlane.xlu0 %6068
        %6070 = vadd.xlane.f32.xlu0 %v5974
        %v6071 = vpop.xlane.xlu0 %6070
        %6072 = vadd.xlane.f32.xlu0 %v5975
        %v6073 = vpop.xlane.xlu0 %6072
        %6074 = vadd.xlane.f32.xlu0 %v5976
        %v6075 = vpop.xlane.xlu0 %6074
        %6076 = vadd.xlane.f32.xlu0 %v5977
        %v6077 = vpop.xlane.xlu0 %6076
        %6078 = vadd.xlane.f32.xlu0 %v5978
        %v6079 = vpop.xlane.xlu0 %6078
        %6080 = vadd.xlane.f32.xlu0 %v5979
        %v6081 = vpop.xlane.xlu0 %6080
        %6082 = vadd.xlane.f32.xlu0 %v5980
        %v6083 = vpop.xlane.xlu0 %6082
        %6084 = vadd.xlane.f32.xlu0 %v5981
        %v6085 = vpop.xlane.xlu0 %6084
        %6086 = vadd.xlane.f32.xlu0 %v5982
        %v6087 = vpop.xlane.xlu0 %6086
        %6088 = vadd.xlane.f32.xlu0 %v5983
        %v6089 = vpop.xlane.xlu0 %6088
        %6090 = vadd.xlane.f32.xlu0 %v5984
        %v6091 = vpop.xlane.xlu0 %6090
        %6092 = vadd.xlane.f32.xlu0 %v5985
        %v6093 = vpop.xlane.xlu0 %6092
        %6094 = vadd.xlane.f32.xlu0 %v5986
        %v6095 = vpop.xlane.xlu0 %6094
        %6096 = vadd.xlane.f32.xlu0 %v5987
        %v6097 = vpop.xlane.xlu0 %6096
        %6098 = vadd.xlane.f32.xlu0 %v5988
        %v6099 = vpop.xlane.xlu0 %6098
        %6100 = vadd.xlane.f32.xlu0 %v5989
        %v6101 = vpop.xlane.xlu0 %6100
        %6102 = vadd.xlane.f32.xlu0 %v5990
        %v6103 = vpop.xlane.xlu0 %6102
        %6104 = vadd.xlane.f32.xlu0 %v5991
        %v6105 = vpop.xlane.xlu0 %6104
        %6106 = vadd.xlane.f32.xlu0 %v5992
        %v6107 = vpop.xlane.xlu0 %6106
        %6108 = vadd.xlane.f32.xlu0 %v5993
        %v6109 = vpop.xlane.xlu0 %6108
        %6110 = vadd.xlane.f32.xlu0 %v5994
        %v6111 = vpop.xlane.xlu0 %6110
        %6112 = vadd.xlane.f32.xlu0 %v5995
        %v6113 = vpop.xlane.xlu0 %6112
        %6114 = vadd.xlane.f32.xlu0 %v5996
        %v6115 = vpop.xlane.xlu0 %6114
        %6116 = vadd.xlane.f32.xlu0 %v5997
        %v6117 = vpop.xlane.xlu0 %6116
        %6118 = vadd.xlane.f32.xlu0 %v5998
        %v6119 = vpop.xlane.xlu0 %6118
        %6120 = vadd.xlane.f32.xlu0 %v5999
        %v6121 = vpop.xlane.xlu0 %6120
        %6122 = vadd.xlane.f32.xlu0 %v6000
        %v6123 = vpop.xlane.xlu0 %6122
        %6124 = vadd.xlane.f32.xlu0 %v6001
        %v6125 = vpop.xlane.xlu0 %6124
        %6126 = vadd.xlane.f32.xlu0 %v6002
        %v6127 = vpop.xlane.xlu0 %6126
        %6128 = vadd.xlane.f32.xlu0 %v6003
        %v6129 = vpop.xlane.xlu0 %6128
        %6130 = vadd.xlane.f32.xlu0 %v6004
        %v6131 = vpop.xlane.xlu0 %6130
        %6132 = vadd.xlane.f32.xlu0 %v6005
        %v6133 = vpop.xlane.xlu0 %6132
        %v6134 = vrot.slane %v6007, 4
        %v6135 = vadd.f32 %v6007, %v6134
        %v6136 = vrot.slane %v6135, 2
        %v6137 = vadd.f32 %v6135, %v6136
        %v6138 = vrot.slane %v6137, 1
        %v6139 = vadd.f32 %v6137, %v6138
        %v6140 = vrot.slane %v6009, 4
        %v6141 = vadd.f32 %v6009, %v6140
        %v6142 = vrot.slane %v6141, 2
        %v6143 = vadd.f32 %v6141, %v6142
        %v6144 = vrot.slane %v6143, 1
        %v6145 = vadd.f32 %v6143, %v6144
        %v6146 = vrot.slane %v6011, 4
        %v6147 = vadd.f32 %v6011, %v6146
        %v6148 = vrot.slane %v6147, 2
        %v6149 = vadd.f32 %v6147, %v6148
        %v6150 = vrot.slane %v6149, 1
        %v6151 = vadd.f32 %v6149, %v6150
        %v6152 = vrot.slane %v6013, 4
        %v6153 = vadd.f32 %v6013, %v6152
        %v6154 = vrot.slane %v6153, 2
        %v6155 = vadd.f32 %v6153, %v6154
        %v6156 = vrot.slane %v6155, 1
        %v6157 = vadd.f32 %v6155, %v6156
        %v6158 = vrot.slane %v6015, 4
        %v6159 = vadd.f32 %v6015, %v6158
        %v6160 = vrot.slane %v6159, 2
        %v6161 = vadd.f32 %v6159, %v6160
        %v6162 = vrot.slane %v6161, 1
        %v6163 = vadd.f32 %v6161, %v6162
        %v6164 = vrot.slane %v6017, 4
        %v6165 = vadd.f32 %v6017, %v6164
        %v6166 = vrot.slane %v6165, 2
        %v6167 = vadd.f32 %v6165, %v6166
        %v6168 = vrot.slane %v6167, 1
        %v6169 = vadd.f32 %v6167, %v6168
        %v6170 = vrot.slane %v6019, 4
        %v6171 = vadd.f32 %v6019, %v6170
        %v6172 = vrot.slane %v6171, 2
        %v6173 = vadd.f32 %v6171, %v6172
        %v6174 = vrot.slane %v6173, 1
        %v6175 = vadd.f32 %v6173, %v6174
        %v6176 = vrot.slane %v6021, 4
        %v6177 = vadd.f32 %v6021, %v6176
        %v6178 = vrot.slane %v6177, 2
        %v6179 = vadd.f32 %v6177, %v6178
        %v6180 = vrot.slane %v6179, 1
        %v6181 = vadd.f32 %v6179, %v6180
        %v6182 = vrot.slane %v6023, 4
        %v6183 = vadd.f32 %v6023, %v6182
        %v6184 = vrot.slane %v6183, 2
        %v6185 = vadd.f32 %v6183, %v6184
        %v6186 = vrot.slane %v6185, 1
        %v6187 = vadd.f32 %v6185, %v6186
        %v6188 = vrot.slane %v6025, 4
        %v6189 = vadd.f32 %v6025, %v6188
        %v6190 = vrot.slane %v6189, 2
        %v6191 = vadd.f32 %v6189, %v6190
        %v6192 = vrot.slane %v6191, 1
        %v6193 = vadd.f32 %v6191, %v6192
        %v6194 = vrot.slane %v6027, 4
        %v6195 = vadd.f32 %v6027, %v6194
        %v6196 = vrot.slane %v6195, 2
        %v6197 = vadd.f32 %v6195, %v6196
        %v6198 = vrot.slane %v6197, 1
        %v6199 = vadd.f32 %v6197, %v6198
        %v6200 = vrot.slane %v6029, 4
        %v6201 = vadd.f32 %v6029, %v6200
        %v6202 = vrot.slane %v6201, 2
        %v6203 = vadd.f32 %v6201, %v6202
        %v6204 = vrot.slane %v6203, 1
        %v6205 = vadd.f32 %v6203, %v6204
        %v6206 = vrot.slane %v6031, 4
        %v6207 = vadd.f32 %v6031, %v6206
        %v6208 = vrot.slane %v6207, 2
        %v6209 = vadd.f32 %v6207, %v6208
        %v6210 = vrot.slane %v6209, 1
        %v6211 = vadd.f32 %v6209, %v6210
        %v6212 = vrot.slane %v6033, 4
        %v6213 = vadd.f32 %v6033, %v6212
        %v6214 = vrot.slane %v6213, 2
        %v6215 = vadd.f32 %v6213, %v6214
        %v6216 = vrot.slane %v6215, 1
        %v6217 = vadd.f32 %v6215, %v6216
        %v6218 = vrot.slane %v6035, 4
        %v6219 = vadd.f32 %v6035, %v6218
        %v6220 = vrot.slane %v6219, 2
        %v6221 = vadd.f32 %v6219, %v6220
        %v6222 = vrot.slane %v6221, 1
        %v6223 = vadd.f32 %v6221, %v6222
        %v6224 = vrot.slane %v6037, 4
        %v6225 = vadd.f32 %v6037, %v6224
        %v6226 = vrot.slane %v6225, 2
        %v6227 = vadd.f32 %v6225, %v6226
        %v6228 = vrot.slane %v6227, 1
        %v6229 = vadd.f32 %v6227, %v6228
        %v6230 = vrot.slane %v6039, 4
        %v6231 = vadd.f32 %v6039, %v6230
        %v6232 = vrot.slane %v6231, 2
        %v6233 = vadd.f32 %v6231, %v6232
        %v6234 = vrot.slane %v6233, 1
        %v6235 = vadd.f32 %v6233, %v6234
        %v6236 = vrot.slane %v6041, 4
        %v6237 = vadd.f32 %v6041, %v6236
        %v6238 = vrot.slane %v6237, 2
        %v6239 = vadd.f32 %v6237, %v6238
        %v6240 = vrot.slane %v6239, 1
        %v6241 = vadd.f32 %v6239, %v6240
        %v6242 = vrot.slane %v6043, 4
        %v6243 = vadd.f32 %v6043, %v6242
        %v6244 = vrot.slane %v6243, 2
        %v6245 = vadd.f32 %v6243, %v6244
        %v6246 = vrot.slane %v6245, 1
        %v6247 = vadd.f32 %v6245, %v6246
        %v6248 = vrot.slane %v6045, 4
        %v6249 = vadd.f32 %v6045, %v6248
        %v6250 = vrot.slane %v6249, 2
        %v6251 = vadd.f32 %v6249, %v6250
        %v6252 = vrot.slane %v6251, 1
        %v6253 = vadd.f32 %v6251, %v6252
        %v6254 = vrot.slane %v6047, 4
        %v6255 = vadd.f32 %v6047, %v6254
        %v6256 = vrot.slane %v6255, 2
        %v6257 = vadd.f32 %v6255, %v6256
        %v6258 = vrot.slane %v6257, 1
        %v6259 = vadd.f32 %v6257, %v6258
        %v6260 = vrot.slane %v6049, 4
        %v6261 = vadd.f32 %v6049, %v6260
        %v6262 = vrot.slane %v6261, 2
        %v6263 = vadd.f32 %v6261, %v6262
        %v6264 = vrot.slane %v6263, 1
        %v6265 = vadd.f32 %v6263, %v6264
        %v6266 = vrot.slane %v6051, 4
        %v6267 = vadd.f32 %v6051, %v6266
        %v6268 = vrot.slane %v6267, 2
        %v6269 = vadd.f32 %v6267, %v6268
        %v6270 = vrot.slane %v6269, 1
        %v6271 = vadd.f32 %v6269, %v6270
        %v6272 = vrot.slane %v6053, 4
        %v6273 = vadd.f32 %v6053, %v6272
        %v6274 = vrot.slane %v6273, 2
        %v6275 = vadd.f32 %v6273, %v6274
        %v6276 = vrot.slane %v6275, 1
        %v6277 = vadd.f32 %v6275, %v6276
        %v6278 = vrot.slane %v6055, 4
        %v6279 = vadd.f32 %v6055, %v6278
        %v6280 = vrot.slane %v6279, 2
        %v6281 = vadd.f32 %v6279, %v6280
        %v6282 = vrot.slane %v6281, 1
        %v6283 = vadd.f32 %v6281, %v6282
        %v6284 = vrot.slane %v6057, 4
        %v6285 = vadd.f32 %v6057, %v6284
        %v6286 = vrot.slane %v6285, 2
        %v6287 = vadd.f32 %v6285, %v6286
        %v6288 = vrot.slane %v6287, 1
        %v6289 = vadd.f32 %v6287, %v6288
        %v6290 = vrot.slane %v6059, 4
        %v6291 = vadd.f32 %v6059, %v6290
        %v6292 = vrot.slane %v6291, 2
        %v6293 = vadd.f32 %v6291, %v6292
        %v6294 = vrot.slane %v6293, 1
        %v6295 = vadd.f32 %v6293, %v6294
        %v6296 = vrot.slane %v6061, 4
        %v6297 = vadd.f32 %v6061, %v6296
        %v6298 = vrot.slane %v6297, 2
        %v6299 = vadd.f32 %v6297, %v6298
        %v6300 = vrot.slane %v6299, 1
        %v6301 = vadd.f32 %v6299, %v6300
        %v6302 = vrot.slane %v6063, 4
        %v6303 = vadd.f32 %v6063, %v6302
        %v6304 = vrot.slane %v6303, 2
        %v6305 = vadd.f32 %v6303, %v6304
        %v6306 = vrot.slane %v6305, 1
        %v6307 = vadd.f32 %v6305, %v6306
        %v6308 = vrot.slane %v6065, 4
        %v6309 = vadd.f32 %v6065, %v6308
        %v6310 = vrot.slane %v6309, 2
        %v6311 = vadd.f32 %v6309, %v6310
        %v6312 = vrot.slane %v6311, 1
        %v6313 = vadd.f32 %v6311, %v6312
        %v6314 = vrot.slane %v6067, 4
        %v6315 = vadd.f32 %v6067, %v6314
        %v6316 = vrot.slane %v6315, 2
        %v6317 = vadd.f32 %v6315, %v6316
        %v6318 = vrot.slane %v6317, 1
        %v6319 = vadd.f32 %v6317, %v6318
        %v6320 = vrot.slane %v6069, 4
        %v6321 = vadd.f32 %v6069, %v6320
        %v6322 = vrot.slane %v6321, 2
        %v6323 = vadd.f32 %v6321, %v6322
        %v6324 = vrot.slane %v6323, 1
        %v6325 = vadd.f32 %v6323, %v6324
        %v6326 = vrot.slane %v6071, 4
        %v6327 = vadd.f32 %v6071, %v6326
        %v6328 = vrot.slane %v6327, 2
        %v6329 = vadd.f32 %v6327, %v6328
        %v6330 = vrot.slane %v6329, 1
        %v6331 = vadd.f32 %v6329, %v6330
        %v6332 = vrot.slane %v6073, 4
        %v6333 = vadd.f32 %v6073, %v6332
        %v6334 = vrot.slane %v6333, 2
        %v6335 = vadd.f32 %v6333, %v6334
        %v6336 = vrot.slane %v6335, 1
        %v6337 = vadd.f32 %v6335, %v6336
        %v6338 = vrot.slane %v6075, 4
        %v6339 = vadd.f32 %v6075, %v6338
        %v6340 = vrot.slane %v6339, 2
        %v6341 = vadd.f32 %v6339, %v6340
        %v6342 = vrot.slane %v6341, 1
        %v6343 = vadd.f32 %v6341, %v6342
        %v6344 = vrot.slane %v6077, 4
        %v6345 = vadd.f32 %v6077, %v6344
        %v6346 = vrot.slane %v6345, 2
        %v6347 = vadd.f32 %v6345, %v6346
        %v6348 = vrot.slane %v6347, 1
        %v6349 = vadd.f32 %v6347, %v6348
        %v6350 = vrot.slane %v6079, 4
        %v6351 = vadd.f32 %v6079, %v6350
        %v6352 = vrot.slane %v6351, 2
        %v6353 = vadd.f32 %v6351, %v6352
        %v6354 = vrot.slane %v6353, 1
        %v6355 = vadd.f32 %v6353, %v6354
        %v6356 = vrot.slane %v6081, 4
        %v6357 = vadd.f32 %v6081, %v6356
        %v6358 = vrot.slane %v6357, 2
        %v6359 = vadd.f32 %v6357, %v6358
        %v6360 = vrot.slane %v6359, 1
        %v6361 = vadd.f32 %v6359, %v6360
        %v6362 = vrot.slane %v6083, 4
        %v6363 = vadd.f32 %v6083, %v6362
        %v6364 = vrot.slane %v6363, 2
        %v6365 = vadd.f32 %v6363, %v6364
        %v6366 = vrot.slane %v6365, 1
        %v6367 = vadd.f32 %v6365, %v6366
        %v6368 = vrot.slane %v6085, 4
        %v6369 = vadd.f32 %v6085, %v6368
        %v6370 = vrot.slane %v6369, 2
        %v6371 = vadd.f32 %v6369, %v6370
        %v6372 = vrot.slane %v6371, 1
        %v6373 = vadd.f32 %v6371, %v6372
        %v6374 = vrot.slane %v6087, 4
        %v6375 = vadd.f32 %v6087, %v6374
        %v6376 = vrot.slane %v6375, 2
        %v6377 = vadd.f32 %v6375, %v6376
        %v6378 = vrot.slane %v6377, 1
        %v6379 = vadd.f32 %v6377, %v6378
        %v6380 = vrot.slane %v6089, 4
        %v6381 = vadd.f32 %v6089, %v6380
        %v6382 = vrot.slane %v6381, 2
        %v6383 = vadd.f32 %v6381, %v6382
        %v6384 = vrot.slane %v6383, 1
        %v6385 = vadd.f32 %v6383, %v6384
        %v6386 = vrot.slane %v6091, 4
        %v6387 = vadd.f32 %v6091, %v6386
        %v6388 = vrot.slane %v6387, 2
        %v6389 = vadd.f32 %v6387, %v6388
        %v6390 = vrot.slane %v6389, 1
        %v6391 = vadd.f32 %v6389, %v6390
        %v6392 = vrot.slane %v6093, 4
        %v6393 = vadd.f32 %v6093, %v6392
        %v6394 = vrot.slane %v6393, 2
        %v6395 = vadd.f32 %v6393, %v6394
        %v6396 = vrot.slane %v6395, 1
        %v6397 = vadd.f32 %v6395, %v6396
        %v6398 = vrot.slane %v6095, 4
        %v6399 = vadd.f32 %v6095, %v6398
        %v6400 = vrot.slane %v6399, 2
        %v6401 = vadd.f32 %v6399, %v6400
        %v6402 = vrot.slane %v6401, 1
        %v6403 = vadd.f32 %v6401, %v6402
        %v6404 = vrot.slane %v6097, 4
        %v6405 = vadd.f32 %v6097, %v6404
        %v6406 = vrot.slane %v6405, 2
        %v6407 = vadd.f32 %v6405, %v6406
        %v6408 = vrot.slane %v6407, 1
        %v6409 = vadd.f32 %v6407, %v6408
        %v6410 = vrot.slane %v6099, 4
        %v6411 = vadd.f32 %v6099, %v6410
        %v6412 = vrot.slane %v6411, 2
        %v6413 = vadd.f32 %v6411, %v6412
        %v6414 = vrot.slane %v6413, 1
        %v6415 = vadd.f32 %v6413, %v6414
        %v6416 = vrot.slane %v6101, 4
        %v6417 = vadd.f32 %v6101, %v6416
        %v6418 = vrot.slane %v6417, 2
        %v6419 = vadd.f32 %v6417, %v6418
        %v6420 = vrot.slane %v6419, 1
        %v6421 = vadd.f32 %v6419, %v6420
        %v6422 = vrot.slane %v6103, 4
        %v6423 = vadd.f32 %v6103, %v6422
        %v6424 = vrot.slane %v6423, 2
        %v6425 = vadd.f32 %v6423, %v6424
        %v6426 = vrot.slane %v6425, 1
        %v6427 = vadd.f32 %v6425, %v6426
        %v6428 = vrot.slane %v6105, 4
        %v6429 = vadd.f32 %v6105, %v6428
        %v6430 = vrot.slane %v6429, 2
        %v6431 = vadd.f32 %v6429, %v6430
        %v6432 = vrot.slane %v6431, 1
        %v6433 = vadd.f32 %v6431, %v6432
        %v6434 = vrot.slane %v6107, 4
        %v6435 = vadd.f32 %v6107, %v6434
        %v6436 = vrot.slane %v6435, 2
        %v6437 = vadd.f32 %v6435, %v6436
        %v6438 = vrot.slane %v6437, 1
        %v6439 = vadd.f32 %v6437, %v6438
        %v6440 = vrot.slane %v6109, 4
        %v6441 = vadd.f32 %v6109, %v6440
        %v6442 = vrot.slane %v6441, 2
        %v6443 = vadd.f32 %v6441, %v6442
        %v6444 = vrot.slane %v6443, 1
        %v6445 = vadd.f32 %v6443, %v6444
        %v6446 = vrot.slane %v6111, 4
        %v6447 = vadd.f32 %v6111, %v6446
        %v6448 = vrot.slane %v6447, 2
        %v6449 = vadd.f32 %v6447, %v6448
        %v6450 = vrot.slane %v6449, 1
        %v6451 = vadd.f32 %v6449, %v6450
        %v6452 = vrot.slane %v6113, 4
        %v6453 = vadd.f32 %v6113, %v6452
        %v6454 = vrot.slane %v6453, 2
        %v6455 = vadd.f32 %v6453, %v6454
        %v6456 = vrot.slane %v6455, 1
        %v6457 = vadd.f32 %v6455, %v6456
        %v6458 = vrot.slane %v6115, 4
        %v6459 = vadd.f32 %v6115, %v6458
        %v6460 = vrot.slane %v6459, 2
        %v6461 = vadd.f32 %v6459, %v6460
        %v6462 = vrot.slane %v6461, 1
        %v6463 = vadd.f32 %v6461, %v6462
        %v6464 = vrot.slane %v6117, 4
        %v6465 = vadd.f32 %v6117, %v6464
        %v6466 = vrot.slane %v6465, 2
        %v6467 = vadd.f32 %v6465, %v6466
        %v6468 = vrot.slane %v6467, 1
        %v6469 = vadd.f32 %v6467, %v6468
        %v6470 = vrot.slane %v6119, 4
        %v6471 = vadd.f32 %v6119, %v6470
        %v6472 = vrot.slane %v6471, 2
        %v6473 = vadd.f32 %v6471, %v6472
        %v6474 = vrot.slane %v6473, 1
        %v6475 = vadd.f32 %v6473, %v6474
        %v6476 = vrot.slane %v6121, 4
        %v6477 = vadd.f32 %v6121, %v6476
        %v6478 = vrot.slane %v6477, 2
        %v6479 = vadd.f32 %v6477, %v6478
        %v6480 = vrot.slane %v6479, 1
        %v6481 = vadd.f32 %v6479, %v6480
        %v6482 = vrot.slane %v6123, 4
        %v6483 = vadd.f32 %v6123, %v6482
        %v6484 = vrot.slane %v6483, 2
        %v6485 = vadd.f32 %v6483, %v6484
        %v6486 = vrot.slane %v6485, 1
        %v6487 = vadd.f32 %v6485, %v6486
        %v6488 = vrot.slane %v6125, 4
        %v6489 = vadd.f32 %v6125, %v6488
        %v6490 = vrot.slane %v6489, 2
        %v6491 = vadd.f32 %v6489, %v6490
        %v6492 = vrot.slane %v6491, 1
        %v6493 = vadd.f32 %v6491, %v6492
        %v6494 = vrot.slane %v6127, 4
        %v6495 = vadd.f32 %v6127, %v6494
        %v6496 = vrot.slane %v6495, 2
        %v6497 = vadd.f32 %v6495, %v6496
        %v6498 = vrot.slane %v6497, 1
        %v6499 = vadd.f32 %v6497, %v6498
        %v6500 = vrot.slane %v6129, 4
        %v6501 = vadd.f32 %v6129, %v6500
        %v6502 = vrot.slane %v6501, 2
        %v6503 = vadd.f32 %v6501, %v6502
        %v6504 = vrot.slane %v6503, 1
        %v6505 = vadd.f32 %v6503, %v6504
        %v6506 = vrot.slane %v6131, 4
        %v6507 = vadd.f32 %v6131, %v6506
        %v6508 = vrot.slane %v6507, 2
        %v6509 = vadd.f32 %v6507, %v6508
        %v6510 = vrot.slane %v6509, 1
        %v6511 = vadd.f32 %v6509, %v6510
        %v6512 = vrot.slane %v6133, 4
        %v6513 = vadd.f32 %v6133, %v6512
        %v6514 = vrot.slane %v6513, 2
        %v6515 = vadd.f32 %v6513, %v6514
        %v6516 = vrot.slane %v6515, 1
        %v6517 = vadd.f32 %v6515, %v6516
        %v6518 = vmul.f32 %v5435, 0.00048828125
        %v6519 = vmul.f32 %v5441, 0.00048828125
        %v6520 = vmul.f32 %v5447, 0.00048828125
        %v6521 = vmul.f32 %v5453, 0.00048828125
        %v6522 = vmul.f32 %v5459, 0.00048828125
        %v6523 = vmul.f32 %v5465, 0.00048828125
        %v6524 = vmul.f32 %v5471, 0.00048828125
        %v6525 = vmul.f32 %v5477, 0.00048828125
        %v6526 = vmul.f32 %v5483, 0.00048828125
        %v6527 = vmul.f32 %v5489, 0.00048828125
        %v6528 = vmul.f32 %v5495, 0.00048828125
        %v6529 = vmul.f32 %v5501, 0.00048828125
        %v6530 = vmul.f32 %v5507, 0.00048828125
        %v6531 = vmul.f32 %v5513, 0.00048828125
        %v6532 = vmul.f32 %v5519, 0.00048828125
        %v6533 = vmul.f32 %v5525, 0.00048828125
        %v6534 = vmul.f32 %v5531, 0.00048828125
        %v6535 = vmul.f32 %v5537, 0.00048828125
        %v6536 = vmul.f32 %v5543, 0.00048828125
        %v6537 = vmul.f32 %v5549, 0.00048828125
        %v6538 = vmul.f32 %v5555, 0.00048828125
        %v6539 = vmul.f32 %v5561, 0.00048828125
        %v6540 = vmul.f32 %v5567, 0.00048828125
        %v6541 = vmul.f32 %v5573, 0.00048828125
        %v6542 = vmul.f32 %v5579, 0.00048828125
        %v6543 = vmul.f32 %v5585, 0.00048828125
        %v6544 = vmul.f32 %v5591, 0.00048828125
        %v6545 = vmul.f32 %v5597, 0.00048828125
        %v6546 = vmul.f32 %v5603, 0.00048828125
        %v6547 = vmul.f32 %v5609, 0.00048828125
        %v6548 = vmul.f32 %v5615, 0.00048828125
        %v6549 = vmul.f32 %v5621, 0.00048828125
        %v6550 = vmul.f32 %v5627, 0.00048828125
        %v6551 = vmul.f32 %v5633, 0.00048828125
        %v6552 = vmul.f32 %v5639, 0.00048828125
        %v6553 = vmul.f32 %v5645, 0.00048828125
        %v6554 = vmul.f32 %v5651, 0.00048828125
        %v6555 = vmul.f32 %v5657, 0.00048828125
        %v6556 = vmul.f32 %v5663, 0.00048828125
        %v6557 = vmul.f32 %v5669, 0.00048828125
        %v6558 = vmul.f32 %v5675, 0.00048828125
        %v6559 = vmul.f32 %v5681, 0.00048828125
        %v6560 = vmul.f32 %v5687, 0.00048828125
        %v6561 = vmul.f32 %v5693, 0.00048828125
        %v6562 = vmul.f32 %v5699, 0.00048828125
        %v6563 = vmul.f32 %v5705, 0.00048828125
        %v6564 = vmul.f32 %v5711, 0.00048828125
        %v6565 = vmul.f32 %v5717, 0.00048828125
        %v6566 = vmul.f32 %v5723, 0.00048828125
        %v6567 = vmul.f32 %v5729, 0.00048828125
        %v6568 = vmul.f32 %v5735, 0.00048828125
        %v6569 = vmul.f32 %v5741, 0.00048828125
        %v6570 = vmul.f32 %v5747, 0.00048828125
        %v6571 = vmul.f32 %v5753, 0.00048828125
        %v6572 = vmul.f32 %v5759, 0.00048828125
        %v6573 = vmul.f32 %v5765, 0.00048828125
        %v6574 = vmul.f32 %v5771, 0.00048828125
        %v6575 = vmul.f32 %v5777, 0.00048828125
        %v6576 = vmul.f32 %v5783, 0.00048828125
        %v6577 = vmul.f32 %v5789, 0.00048828125
        %v6578 = vmul.f32 %v5795, 0.00048828125
        %v6579 = vmul.f32 %v5801, 0.00048828125
        %v6580 = vmul.f32 %v5807, 0.00048828125
        %v6581 = vmul.f32 %v5813, 0.00048828125
        %v6582 = vmul.f32 %v6139, 0.00048828125
        %v6583 = vmul.f32 %v6145, 0.00048828125
        %v6584 = vmul.f32 %v6151, 0.00048828125
        %v6585 = vmul.f32 %v6157, 0.00048828125
        %v6586 = vmul.f32 %v6163, 0.00048828125
        %v6587 = vmul.f32 %v6169, 0.00048828125
        %v6588 = vmul.f32 %v6175, 0.00048828125
        %v6589 = vmul.f32 %v6181, 0.00048828125
        %v6590 = vmul.f32 %v6187, 0.00048828125
        %v6591 = vmul.f32 %v6193, 0.00048828125
        %v6592 = vmul.f32 %v6199, 0.00048828125
        %v6593 = vmul.f32 %v6205, 0.00048828125
        %v6594 = vmul.f32 %v6211, 0.00048828125
        %v6595 = vmul.f32 %v6217, 0.00048828125
        %v6596 = vmul.f32 %v6223, 0.00048828125
        %v6597 = vmul.f32 %v6229, 0.00048828125
        %v6598 = vmul.f32 %v6235, 0.00048828125
        %v6599 = vmul.f32 %v6241, 0.00048828125
        %v6600 = vmul.f32 %v6247, 0.00048828125
        %v6601 = vmul.f32 %v6253, 0.00048828125
        %v6602 = vmul.f32 %v6259, 0.00048828125
        %v6603 = vmul.f32 %v6265, 0.00048828125
        %v6604 = vmul.f32 %v6271, 0.00048828125
        %v6605 = vmul.f32 %v6277, 0.00048828125
        %v6606 = vmul.f32 %v6283, 0.00048828125
        %v6607 = vmul.f32 %v6289, 0.00048828125
        %v6608 = vmul.f32 %v6295, 0.00048828125
        %v6609 = vmul.f32 %v6301, 0.00048828125
        %v6610 = vmul.f32 %v6307, 0.00048828125
        %v6611 = vmul.f32 %v6313, 0.00048828125
        %v6612 = vmul.f32 %v6319, 0.00048828125
        %v6613 = vmul.f32 %v6325, 0.00048828125
        %v6614 = vmul.f32 %v6331, 0.00048828125
        %v6615 = vmul.f32 %v6337, 0.00048828125
        %v6616 = vmul.f32 %v6343, 0.00048828125
        %v6617 = vmul.f32 %v6349, 0.00048828125
        %v6618 = vmul.f32 %v6355, 0.00048828125
        %v6619 = vmul.f32 %v6361, 0.00048828125
        %v6620 = vmul.f32 %v6367, 0.00048828125
        %v6621 = vmul.f32 %v6373, 0.00048828125
        %v6622 = vmul.f32 %v6379, 0.00048828125
        %v6623 = vmul.f32 %v6385, 0.00048828125
        %v6624 = vmul.f32 %v6391, 0.00048828125
        %v6625 = vmul.f32 %v6397, 0.00048828125
        %v6626 = vmul.f32 %v6403, 0.00048828125
        %v6627 = vmul.f32 %v6409, 0.00048828125
        %v6628 = vmul.f32 %v6415, 0.00048828125
        %v6629 = vmul.f32 %v6421, 0.00048828125
        %v6630 = vmul.f32 %v6427, 0.00048828125
        %v6631 = vmul.f32 %v6433, 0.00048828125
        %v6632 = vmul.f32 %v6439, 0.00048828125
        %v6633 = vmul.f32 %v6445, 0.00048828125
        %v6634 = vmul.f32 %v6451, 0.00048828125
        %v6635 = vmul.f32 %v6457, 0.00048828125
        %v6636 = vmul.f32 %v6463, 0.00048828125
        %v6637 = vmul.f32 %v6469, 0.00048828125
        %v6638 = vmul.f32 %v6475, 0.00048828125
        %v6639 = vmul.f32 %v6481, 0.00048828125
        %v6640 = vmul.f32 %v6487, 0.00048828125
        %v6641 = vmul.f32 %v6493, 0.00048828125
        %v6642 = vmul.f32 %v6499, 0.00048828125
        %v6643 = vmul.f32 %v6505, 0.00048828125
        %v6644 = vmul.f32 %v6511, 0.00048828125
        %v6645 = vmul.f32 %v6517, 0.00048828125
        %v6646 = vmul.f32 %v6518, %v6518
        %v6647 = vmul.f32 %v6519, %v6519
        %v6648 = vmul.f32 %v6520, %v6520
        %v6649 = vmul.f32 %v6521, %v6521
        %v6650 = vmul.f32 %v6522, %v6522
        %v6651 = vmul.f32 %v6523, %v6523
        %v6652 = vmul.f32 %v6524, %v6524
        %v6653 = vmul.f32 %v6525, %v6525
        %v6654 = vmul.f32 %v6526, %v6526
        %v6655 = vmul.f32 %v6527, %v6527
        %v6656 = vmul.f32 %v6528, %v6528
        %v6657 = vmul.f32 %v6529, %v6529
        %v6658 = vmul.f32 %v6530, %v6530
        %v6659 = vmul.f32 %v6531, %v6531
        %v6660 = vmul.f32 %v6532, %v6532
        %v6661 = vmul.f32 %v6533, %v6533
        %v6662 = vmul.f32 %v6534, %v6534
        %v6663 = vmul.f32 %v6535, %v6535
        %v6664 = vmul.f32 %v6536, %v6536
        %v6665 = vmul.f32 %v6537, %v6537
        %v6666 = vmul.f32 %v6538, %v6538
        %v6667 = vmul.f32 %v6539, %v6539
        %v6668 = vmul.f32 %v6540, %v6540
        %v6669 = vmul.f32 %v6541, %v6541
        %v6670 = vmul.f32 %v6542, %v6542
        %v6671 = vmul.f32 %v6543, %v6543
        %v6672 = vmul.f32 %v6544, %v6544
        %v6673 = vmul.f32 %v6545, %v6545
        %v6674 = vmul.f32 %v6546, %v6546
        %v6675 = vmul.f32 %v6547, %v6547
        %v6676 = vmul.f32 %v6548, %v6548
        %v6677 = vmul.f32 %v6549, %v6549
        %v6678 = vmul.f32 %v6550, %v6550
        %v6679 = vmul.f32 %v6551, %v6551
        %v6680 = vmul.f32 %v6552, %v6552
        %v6681 = vmul.f32 %v6553, %v6553
        %v6682 = vmul.f32 %v6554, %v6554
        %v6683 = vmul.f32 %v6555, %v6555
        %v6684 = vmul.f32 %v6556, %v6556
        %v6685 = vmul.f32 %v6557, %v6557
        %v6686 = vmul.f32 %v6558, %v6558
        %v6687 = vmul.f32 %v6559, %v6559
        %v6688 = vmul.f32 %v6560, %v6560
        %v6689 = vmul.f32 %v6561, %v6561
        %v6690 = vmul.f32 %v6562, %v6562
        %v6691 = vmul.f32 %v6563, %v6563
        %v6692 = vmul.f32 %v6564, %v6564
        %v6693 = vmul.f32 %v6565, %v6565
        %v6694 = vmul.f32 %v6566, %v6566
        %v6695 = vmul.f32 %v6567, %v6567
        %v6696 = vmul.f32 %v6568, %v6568
        %v6697 = vmul.f32 %v6569, %v6569
        %v6698 = vmul.f32 %v6570, %v6570
        %v6699 = vmul.f32 %v6571, %v6571
        %v6700 = vmul.f32 %v6572, %v6572
        %v6701 = vmul.f32 %v6573, %v6573
        %v6702 = vmul.f32 %v6574, %v6574
        %v6703 = vmul.f32 %v6575, %v6575
        %v6704 = vmul.f32 %v6576, %v6576
        %v6705 = vmul.f32 %v6577, %v6577
        %v6706 = vmul.f32 %v6578, %v6578
        %v6707 = vmul.f32 %v6579, %v6579
        %v6708 = vmul.f32 %v6580, %v6580
        %v6709 = vmul.f32 %v6581, %v6581
        %v6710 = vsub.f32 %v6582, %v6646
        %v6711 = vsub.f32 %v6583, %v6647
        %v6712 = vsub.f32 %v6584, %v6648
        %v6713 = vsub.f32 %v6585, %v6649
        %v6714 = vsub.f32 %v6586, %v6650
        %v6715 = vsub.f32 %v6587, %v6651
        %v6716 = vsub.f32 %v6588, %v6652
        %v6717 = vsub.f32 %v6589, %v6653
        %v6718 = vsub.f32 %v6590, %v6654
        %v6719 = vsub.f32 %v6591, %v6655
        %v6720 = vsub.f32 %v6592, %v6656
        %v6721 = vsub.f32 %v6593, %v6657
        %v6722 = vsub.f32 %v6594, %v6658
        %v6723 = vsub.f32 %v6595, %v6659
        %v6724 = vsub.f32 %v6596, %v6660
        %v6725 = vsub.f32 %v6597, %v6661
        %v6726 = vsub.f32 %v6598, %v6662
        %v6727 = vsub.f32 %v6599, %v6663
        %v6728 = vsub.f32 %v6600, %v6664
        %v6729 = vsub.f32 %v6601, %v6665
        %v6730 = vsub.f32 %v6602, %v6666
        %v6731 = vsub.f32 %v6603, %v6667
        %v6732 = vsub.f32 %v6604, %v6668
        %v6733 = vsub.f32 %v6605, %v6669
        %v6734 = vsub.f32 %v6606, %v6670
        %v6735 = vsub.f32 %v6607, %v6671
        %v6736 = vsub.f32 %v6608, %v6672
        %v6737 = vsub.f32 %v6609, %v6673
        %v6738 = vsub.f32 %v6610, %v6674
        %v6739 = vsub.f32 %v6611, %v6675
        %v6740 = vsub.f32 %v6612, %v6676
        %v6741 = vsub.f32 %v6613, %v6677
        %v6742 = vsub.f32 %v6614, %v6678
        %v6743 = vsub.f32 %v6615, %v6679
        %v6744 = vsub.f32 %v6616, %v6680
        %v6745 = vsub.f32 %v6617, %v6681
        %v6746 = vsub.f32 %v6618, %v6682
        %v6747 = vsub.f32 %v6619, %v6683
        %v6748 = vsub.f32 %v6620, %v6684
        %v6749 = vsub.f32 %v6621, %v6685
        %v6750 = vsub.f32 %v6622, %v6686
        %v6751 = vsub.f32 %v6623, %v6687
        %v6752 = vsub.f32 %v6624, %v6688
        %v6753 = vsub.f32 %v6625, %v6689
        %v6754 = vsub.f32 %v6626, %v6690
        %v6755 = vsub.f32 %v6627, %v6691
        %v6756 = vsub.f32 %v6628, %v6692
        %v6757 = vsub.f32 %v6629, %v6693
        %v6758 = vsub.f32 %v6630, %v6694
        %v6759 = vsub.f32 %v6631, %v6695
        %v6760 = vsub.f32 %v6632, %v6696
        %v6761 = vsub.f32 %v6633, %v6697
        %v6762 = vsub.f32 %v6634, %v6698
        %v6763 = vsub.f32 %v6635, %v6699
        %v6764 = vsub.f32 %v6636, %v6700
        %v6765 = vsub.f32 %v6637, %v6701
        %v6766 = vsub.f32 %v6638, %v6702
        %v6767 = vsub.f32 %v6639, %v6703
        %v6768 = vsub.f32 %v6640, %v6704
        %v6769 = vsub.f32 %v6641, %v6705
        %v6770 = vsub.f32 %v6642, %v6706
        %v6771 = vsub.f32 %v6643, %v6707
        %v6772 = vsub.f32 %v6644, %v6708
        %v6773 = vsub.f32 %v6645, %v6709
        %v6774 = vmax.f32 %v6710, 0.0
        %v6775 = vmax.f32 %v6711, 0.0
        %v6776 = vmax.f32 %v6712, 0.0
        %v6777 = vmax.f32 %v6713, 0.0
        %v6778 = vmax.f32 %v6714, 0.0
        %v6779 = vmax.f32 %v6715, 0.0
        %v6780 = vmax.f32 %v6716, 0.0
        %v6781 = vmax.f32 %v6717, 0.0
        %v6782 = vmax.f32 %v6718, 0.0
        %v6783 = vmax.f32 %v6719, 0.0
        %v6784 = vmax.f32 %v6720, 0.0
        %v6785 = vmax.f32 %v6721, 0.0
        %v6786 = vmax.f32 %v6722, 0.0
        %v6787 = vmax.f32 %v6723, 0.0
        %v6788 = vmax.f32 %v6724, 0.0
        %v6789 = vmax.f32 %v6725, 0.0
        %v6790 = vmax.f32 %v6726, 0.0
        %v6791 = vmax.f32 %v6727, 0.0
        %v6792 = vmax.f32 %v6728, 0.0
        %v6793 = vmax.f32 %v6729, 0.0
        %v6794 = vmax.f32 %v6730, 0.0
        %v6795 = vmax.f32 %v6731, 0.0
        %v6796 = vmax.f32 %v6732, 0.0
        %v6797 = vmax.f32 %v6733, 0.0
        %v6798 = vmax.f32 %v6734, 0.0
        %v6799 = vmax.f32 %v6735, 0.0
        %v6800 = vmax.f32 %v6736, 0.0
        %v6801 = vmax.f32 %v6737, 0.0
        %v6802 = vmax.f32 %v6738, 0.0
        %v6803 = vmax.f32 %v6739, 0.0
        %v6804 = vmax.f32 %v6740, 0.0
        %v6805 = vmax.f32 %v6741, 0.0
        %v6806 = vmax.f32 %v6742, 0.0
        %v6807 = vmax.f32 %v6743, 0.0
        %v6808 = vmax.f32 %v6744, 0.0
        %v6809 = vmax.f32 %v6745, 0.0
        %v6810 = vmax.f32 %v6746, 0.0
        %v6811 = vmax.f32 %v6747, 0.0
        %v6812 = vmax.f32 %v6748, 0.0
        %v6813 = vmax.f32 %v6749, 0.0
        %v6814 = vmax.f32 %v6750, 0.0
        %v6815 = vmax.f32 %v6751, 0.0
        %v6816 = vmax.f32 %v6752, 0.0
        %v6817 = vmax.f32 %v6753, 0.0
        %v6818 = vmax.f32 %v6754, 0.0
        %v6819 = vmax.f32 %v6755, 0.0
        %v6820 = vmax.f32 %v6756, 0.0
        %v6821 = vmax.f32 %v6757, 0.0
        %v6822 = vmax.f32 %v6758, 0.0
        %v6823 = vmax.f32 %v6759, 0.0
        %v6824 = vmax.f32 %v6760, 0.0
        %v6825 = vmax.f32 %v6761, 0.0
        %v6826 = vmax.f32 %v6762, 0.0
        %v6827 = vmax.f32 %v6763, 0.0
        %v6828 = vmax.f32 %v6764, 0.0
        %v6829 = vmax.f32 %v6765, 0.0
        %v6830 = vmax.f32 %v6766, 0.0
        %v6831 = vmax.f32 %v6767, 0.0
        %v6832 = vmax.f32 %v6768, 0.0
        %v6833 = vmax.f32 %v6769, 0.0
        %v6834 = vmax.f32 %v6770, 0.0
        %v6835 = vmax.f32 %v6771, 0.0
        %v6836 = vmax.f32 %v6772, 0.0
        %v6837 = vmax.f32 %v6773, 0.0
        %v6838 = vld [vmem:[%s421] sm:$0x1]
        %v6839 = vld [vmem:[%s421 + $0x1] sm:$0x1]
        %v6840 = vld [vmem:[%s421 + $0x2] sm:$0x1]
        %v6841 = vld [vmem:[%s421 + $0x3] sm:$0x1]
        %v6842 = vld [vmem:[%s421 + $0x4] sm:$0x1]
        %v6843 = vld [vmem:[%s421 + $0x5] sm:$0x1]
        %v6844 = vld [vmem:[%s421 + $0x6] sm:$0x1]
        %v6845 = vld [vmem:[%s421 + $0x7] sm:$0x1]
        %v6846 = vld [vmem:[%s421 + $0x8] sm:$0x1]
        %v6847 = vld [vmem:[%s421 + $0x9] sm:$0x1]
        %v6848 = vld [vmem:[%s421 + $0xa] sm:$0x1]
        %v6849 = vld [vmem:[%s421 + $0xb] sm:$0x1]
        %v6850 = vld [vmem:[%s421 + $0xc] sm:$0x1]
        %v6851 = vld [vmem:[%s421 + $0xd] sm:$0x1]
        %v6852 = vld [vmem:[%s421 + $0xe] sm:$0x1]
        %v6853 = vld [vmem:[%s421 + $0xf] sm:$0x1]
        %v6854 = vld [vmem:[%s421 + $0x10] sm:$0x1]
        %v6855 = vld [vmem:[%s421 + $0x11] sm:$0x1]
        %v6856 = vld [vmem:[%s421 + $0x12] sm:$0x1]
        %v6857 = vld [vmem:[%s421 + $0x13] sm:$0x1]
        %v6858 = vld [vmem:[%s421 + $0x14] sm:$0x1]
        %v6859 = vld [vmem:[%s421 + $0x15] sm:$0x1]
        %v6860 = vld [vmem:[%s421 + $0x16] sm:$0x1]
        %v6861 = vld [vmem:[%s421 + $0x17] sm:$0x1]
        %v6862 = vld [vmem:[%s421 + $0x18] sm:$0x1]
        %v6863 = vld [vmem:[%s421 + $0x19] sm:$0x1]
        %v6864 = vld [vmem:[%s421 + $0x1a] sm:$0x1]
        %v6865 = vld [vmem:[%s421 + $0x1b] sm:$0x1]
        %v6866 = vld [vmem:[%s421 + $0x1c] sm:$0x1]
        %v6867 = vld [vmem:[%s421 + $0x1d] sm:$0x1]
        %v6868 = vld [vmem:[%s421 + $0x1e] sm:$0x1]
        %v6869 = vld [vmem:[%s421 + $0x1f] sm:$0x1]
        %v6870 = vld [vmem:[%s421 + $0x20] sm:$0x1]
        %v6871 = vld [vmem:[%s421 + $0x21] sm:$0x1]
        %v6872 = vld [vmem:[%s421 + $0x22] sm:$0x1]
        %v6873 = vld [vmem:[%s421 + $0x23] sm:$0x1]
        %v6874 = vld [vmem:[%s421 + $0x24] sm:$0x1]
        %v6875 = vld [vmem:[%s421 + $0x25] sm:$0x1]
        %v6876 = vld [vmem:[%s421 + $0x26] sm:$0x1]
        %v6877 = vld [vmem:[%s421 + $0x27] sm:$0x1]
        %v6878 = vld [vmem:[%s421 + $0x28] sm:$0x1]
        %v6879 = vld [vmem:[%s421 + $0x29] sm:$0x1]
        %v6880 = vld [vmem:[%s421 + $0x2a] sm:$0x1]
        %v6881 = vld [vmem:[%s421 + $0x2b] sm:$0x1]
        %v6882 = vld [vmem:[%s421 + $0x2c] sm:$0x1]
        %v6883 = vld [vmem:[%s421 + $0x2d] sm:$0x1]
        %v6884 = vld [vmem:[%s421 + $0x2e] sm:$0x1]
        %v6885 = vld [vmem:[%s421 + $0x2f] sm:$0x1]
        %v6886 = vld [vmem:[%s421 + $0x30] sm:$0x1]
        %v6887 = vld [vmem:[%s421 + $0x31] sm:$0x1]
        %v6888 = vld [vmem:[%s421 + $0x32] sm:$0x1]
        %v6889 = vld [vmem:[%s421 + $0x33] sm:$0x1]
        %v6890 = vld [vmem:[%s421 + $0x34] sm:$0x1]
        %v6891 = vld [vmem:[%s421 + $0x35] sm:$0x1]
        %v6892 = vld [vmem:[%s421 + $0x36] sm:$0x1]
        %v6893 = vld [vmem:[%s421 + $0x37] sm:$0x1]
        %v6894 = vld [vmem:[%s421 + $0x38] sm:$0x1]
        %v6895 = vld [vmem:[%s421 + $0x39] sm:$0x1]
        %v6896 = vld [vmem:[%s421 + $0x3a] sm:$0x1]
        %v6897 = vld [vmem:[%s421 + $0x3b] sm:$0x1]
        %v6898 = vld [vmem:[%s421 + $0x3c] sm:$0x1]
        %v6899 = vld [vmem:[%s421 + $0x3d] sm:$0x1]
        %v6900 = vld [vmem:[%s421 + $0x3e] sm:$0x1]
        %v6901 = vld [vmem:[%s421 + $0x3f] sm:$0x1]
        %v6902 = vadd.f32 %v6774, 1e-05
        %v6903 = vadd.f32 %v6775, 1e-05
        %v6904 = vadd.f32 %v6776, 1e-05
        %v6905 = vadd.f32 %v6777, 1e-05
        %v6906 = vadd.f32 %v6778, 1e-05
        %v6907 = vadd.f32 %v6779, 1e-05
        %v6908 = vadd.f32 %v6780, 1e-05
        %v6909 = vadd.f32 %v6781, 1e-05
        %v6910 = vadd.f32 %v6782, 1e-05
        %v6911 = vadd.f32 %v6783, 1e-05
        %v6912 = vadd.f32 %v6784, 1e-05
        %v6913 = vadd.f32 %v6785, 1e-05
        %v6914 = vadd.f32 %v6786, 1e-05
        %v6915 = vadd.f32 %v6787, 1e-05
        %v6916 = vadd.f32 %v6788, 1e-05
        %v6917 = vadd.f32 %v6789, 1e-05
        %v6918 = vadd.f32 %v6790, 1e-05
        %v6919 = vadd.f32 %v6791, 1e-05
        %v6920 = vadd.f32 %v6792, 1e-05
        %v6921 = vadd.f32 %v6793, 1e-05
        %v6922 = vadd.f32 %v6794, 1e-05
        %v6923 = vadd.f32 %v6795, 1e-05
        %v6924 = vadd.f32 %v6796, 1e-05
        %v6925 = vadd.f32 %v6797, 1e-05
        %v6926 = vadd.f32 %v6798, 1e-05
        %v6927 = vadd.f32 %v6799, 1e-05
        %v6928 = vadd.f32 %v6800, 1e-05
        %v6929 = vadd.f32 %v6801, 1e-05
        %v6930 = vadd.f32 %v6802, 1e-05
        %v6931 = vadd.f32 %v6803, 1e-05
        %v6932 = vadd.f32 %v6804, 1e-05
        %v6933 = vadd.f32 %v6805, 1e-05
        %v6934 = vadd.f32 %v6806, 1e-05
        %v6935 = vadd.f32 %v6807, 1e-05
        %v6936 = vadd.f32 %v6808, 1e-05
        %v6937 = vadd.f32 %v6809, 1e-05
        %v6938 = vadd.f32 %v6810, 1e-05
        %v6939 = vadd.f32 %v6811, 1e-05
        %v6940 = vadd.f32 %v6812, 1e-05
        %v6941 = vadd.f32 %v6813, 1e-05
        %v6942 = vadd.f32 %v6814, 1e-05
        %v6943 = vadd.f32 %v6815, 1e-05
        %v6944 = vadd.f32 %v6816, 1e-05
        %v6945 = vadd.f32 %v6817, 1e-05
        %v6946 = vadd.f32 %v6818, 1e-05
        %v6947 = vadd.f32 %v6819, 1e-05
        %v6948 = vadd.f32 %v6820, 1e-05
        %v6949 = vadd.f32 %v6821, 1e-05
        %v6950 = vadd.f32 %v6822, 1e-05
        %v6951 = vadd.f32 %v6823, 1e-05
        %v6952 = vadd.f32 %v6824, 1e-05
        %v6953 = vadd.f32 %v6825, 1e-05
        %v6954 = vadd.f32 %v6826, 1e-05
        %v6955 = vadd.f32 %v6827, 1e-05
        %v6956 = vadd.f32 %v6828, 1e-05
        %v6957 = vadd.f32 %v6829, 1e-05
        %v6958 = vadd.f32 %v6830, 1e-05
        %v6959 = vadd.f32 %v6831, 1e-05
        %v6960 = vadd.f32 %v6832, 1e-05
        %v6961 = vadd.f32 %v6833, 1e-05
        %v6962 = vadd.f32 %v6834, 1e-05
        %v6963 = vadd.f32 %v6835, 1e-05
        %v6964 = vadd.f32 %v6836, 1e-05
        %v6965 = vadd.f32 %v6837, 1e-05
        %v6966 = vrsqrt.pop %v6902
        %v6967 = vmul.f32 %v6966, %v6902
        %v6968 = vmul.f32 %v6967, %v6966
        %v6969 = vmul.f32 0.5, %v6968
        %v6970 = vsub.f32 1.5, %v6969
        %v6971 = vmul.f32 %v6966, %v6970
        %vm6972 = vweird.f32 %v6902
        %vm6973 = vweird.f32 %v6966
        %vm6974 = vmor %vm6972, %vm6973
        %v6975 = vsel %vm6974, %v6966, %v6971
        %v6976 = vrsqrt.pop %v6903
        %v6977 = vmul.f32 %v6976, %v6903
        %v6978 = vmul.f32 %v6977, %v6976
        %v6979 = vmul.f32 0.5, %v6978
        %v6980 = vsub.f32 1.5, %v6979
        %v6981 = vmul.f32 %v6976, %v6980
        %vm6982 = vweird.f32 %v6903
        %vm6983 = vweird.f32 %v6976
        %vm6984 = vmor %vm6982, %vm6983
        %v6985 = vsel %vm6984, %v6976, %v6981
        %v6986 = vrsqrt.pop %v6904
        %v6987 = vmul.f32 %v6986, %v6904
        %v6988 = vmul.f32 %v6987, %v6986
        %v6989 = vmul.f32 0.5, %v6988
        %v6990 = vsub.f32 1.5, %v6989
        %v6991 = vmul.f32 %v6986, %v6990
        %vm6992 = vweird.f32 %v6904
        %vm6993 = vweird.f32 %v6986
        %vm6994 = vmor %vm6992, %vm6993
        %v6995 = vsel %vm6994, %v6986, %v6991
        %v6996 = vrsqrt.pop %v6905
        %v6997 = vmul.f32 %v6996, %v6905
        %v6998 = vmul.f32 %v6997, %v6996
        %v6999 = vmul.f32 0.5, %v6998
        %v7000 = vsub.f32 1.5, %v6999
        %v7001 = vmul.f32 %v6996, %v7000
        %vm7002 = vweird.f32 %v6905
        %vm7003 = vweird.f32 %v6996
        %vm7004 = vmor %vm7002, %vm7003
        %v7005 = vsel %vm7004, %v6996, %v7001
        %v7006 = vrsqrt.pop %v6906
        %v7007 = vmul.f32 %v7006, %v6906
        %v7008 = vmul.f32 %v7007, %v7006
        %v7009 = vmul.f32 0.5, %v7008
        %v7010 = vsub.f32 1.5, %v7009
        %v7011 = vmul.f32 %v7006, %v7010
        %vm7012 = vweird.f32 %v6906
        %vm7013 = vweird.f32 %v7006
        %vm7014 = vmor %vm7012, %vm7013
        %v7015 = vsel %vm7014, %v7006, %v7011
        %v7016 = vrsqrt.pop %v6907
        %v7017 = vmul.f32 %v7016, %v6907
        %v7018 = vmul.f32 %v7017, %v7016
        %v7019 = vmul.f32 0.5, %v7018
        %v7020 = vsub.f32 1.5, %v7019
        %v7021 = vmul.f32 %v7016, %v7020
        %vm7022 = vweird.f32 %v6907
        %vm7023 = vweird.f32 %v7016
        %vm7024 = vmor %vm7022, %vm7023
        %v7025 = vsel %vm7024, %v7016, %v7021
        %v7026 = vrsqrt.pop %v6908
        %v7027 = vmul.f32 %v7026, %v6908
        %v7028 = vmul.f32 %v7027, %v7026
        %v7029 = vmul.f32 0.5, %v7028
        %v7030 = vsub.f32 1.5, %v7029
        %v7031 = vmul.f32 %v7026, %v7030
        %vm7032 = vweird.f32 %v6908
        %vm7033 = vweird.f32 %v7026
        %vm7034 = vmor %vm7032, %vm7033
        %v7035 = vsel %vm7034, %v7026, %v7031
        %v7036 = vrsqrt.pop %v6909
        %v7037 = vmul.f32 %v7036, %v6909
        %v7038 = vmul.f32 %v7037, %v7036
        %v7039 = vmul.f32 0.5, %v7038
        %v7040 = vsub.f32 1.5, %v7039
        %v7041 = vmul.f32 %v7036, %v7040
        %vm7042 = vweird.f32 %v6909
        %vm7043 = vweird.f32 %v7036
        %vm7044 = vmor %vm7042, %vm7043
        %v7045 = vsel %vm7044, %v7036, %v7041
        %v7046 = vrsqrt.pop %v6910
        %v7047 = vmul.f32 %v7046, %v6910
        %v7048 = vmul.f32 %v7047, %v7046
        %v7049 = vmul.f32 0.5, %v7048
        %v7050 = vsub.f32 1.5, %v7049
        %v7051 = vmul.f32 %v7046, %v7050
        %vm7052 = vweird.f32 %v6910
        %vm7053 = vweird.f32 %v7046
        %vm7054 = vmor %vm7052, %vm7053
        %v7055 = vsel %vm7054, %v7046, %v7051
        %v7056 = vrsqrt.pop %v6911
        %v7057 = vmul.f32 %v7056, %v6911
        %v7058 = vmul.f32 %v7057, %v7056
        %v7059 = vmul.f32 0.5, %v7058
        %v7060 = vsub.f32 1.5, %v7059
        %v7061 = vmul.f32 %v7056, %v7060
        %vm7062 = vweird.f32 %v6911
        %vm7063 = vweird.f32 %v7056
        %vm7064 = vmor %vm7062, %vm7063
        %v7065 = vsel %vm7064, %v7056, %v7061
        %v7066 = vrsqrt.pop %v6912
        %v7067 = vmul.f32 %v7066, %v6912
        %v7068 = vmul.f32 %v7067, %v7066
        %v7069 = vmul.f32 0.5, %v7068
        %v7070 = vsub.f32 1.5, %v7069
        %v7071 = vmul.f32 %v7066, %v7070
        %vm7072 = vweird.f32 %v6912
        %vm7073 = vweird.f32 %v7066
        %vm7074 = vmor %vm7072, %vm7073
        %v7075 = vsel %vm7074, %v7066, %v7071
        %v7076 = vrsqrt.pop %v6913
        %v7077 = vmul.f32 %v7076, %v6913
        %v7078 = vmul.f32 %v7077, %v7076
        %v7079 = vmul.f32 0.5, %v7078
        %v7080 = vsub.f32 1.5, %v7079
        %v7081 = vmul.f32 %v7076, %v7080
        %vm7082 = vweird.f32 %v6913
        %vm7083 = vweird.f32 %v7076
        %vm7084 = vmor %vm7082, %vm7083
        %v7085 = vsel %vm7084, %v7076, %v7081
        %v7086 = vrsqrt.pop %v6914
        %v7087 = vmul.f32 %v7086, %v6914
        %v7088 = vmul.f32 %v7087, %v7086
        %v7089 = vmul.f32 0.5, %v7088
        %v7090 = vsub.f32 1.5, %v7089
        %v7091 = vmul.f32 %v7086, %v7090
        %vm7092 = vweird.f32 %v6914
        %vm7093 = vweird.f32 %v7086
        %vm7094 = vmor %vm7092, %vm7093
        %v7095 = vsel %vm7094, %v7086, %v7091
        %v7096 = vrsqrt.pop %v6915
        %v7097 = vmul.f32 %v7096, %v6915
        %v7098 = vmul.f32 %v7097, %v7096
        %v7099 = vmul.f32 0.5, %v7098
        %v7100 = vsub.f32 1.5, %v7099
        %v7101 = vmul.f32 %v7096, %v7100
        %vm7102 = vweird.f32 %v6915
        %vm7103 = vweird.f32 %v7096
        %vm7104 = vmor %vm7102, %vm7103
        %v7105 = vsel %vm7104, %v7096, %v7101
        %v7106 = vrsqrt.pop %v6916
        %v7107 = vmul.f32 %v7106, %v6916
        %v7108 = vmul.f32 %v7107, %v7106
        %v7109 = vmul.f32 0.5, %v7108
        %v7110 = vsub.f32 1.5, %v7109
        %v7111 = vmul.f32 %v7106, %v7110
        %vm7112 = vweird.f32 %v6916
        %vm7113 = vweird.f32 %v7106
        %vm7114 = vmor %vm7112, %vm7113
        %v7115 = vsel %vm7114, %v7106, %v7111
        %v7116 = vrsqrt.pop %v6917
        %v7117 = vmul.f32 %v7116, %v6917
        %v7118 = vmul.f32 %v7117, %v7116
        %v7119 = vmul.f32 0.5, %v7118
        %v7120 = vsub.f32 1.5, %v7119
        %v7121 = vmul.f32 %v7116, %v7120
        %vm7122 = vweird.f32 %v6917
        %vm7123 = vweird.f32 %v7116
        %vm7124 = vmor %vm7122, %vm7123
        %v7125 = vsel %vm7124, %v7116, %v7121
        %v7126 = vrsqrt.pop %v6918
        %v7127 = vmul.f32 %v7126, %v6918
        %v7128 = vmul.f32 %v7127, %v7126
        %v7129 = vmul.f32 0.5, %v7128
        %v7130 = vsub.f32 1.5, %v7129
        %v7131 = vmul.f32 %v7126, %v7130
        %vm7132 = vweird.f32 %v6918
        %vm7133 = vweird.f32 %v7126
        %vm7134 = vmor %vm7132, %vm7133
        %v7135 = vsel %vm7134, %v7126, %v7131
        %v7136 = vrsqrt.pop %v6919
        %v7137 = vmul.f32 %v7136, %v6919
        %v7138 = vmul.f32 %v7137, %v7136
        %v7139 = vmul.f32 0.5, %v7138
        %v7140 = vsub.f32 1.5, %v7139
        %v7141 = vmul.f32 %v7136, %v7140
        %vm7142 = vweird.f32 %v6919
        %vm7143 = vweird.f32 %v7136
        %vm7144 = vmor %vm7142, %vm7143
        %v7145 = vsel %vm7144, %v7136, %v7141
        %v7146 = vrsqrt.pop %v6920
        %v7147 = vmul.f32 %v7146, %v6920
        %v7148 = vmul.f32 %v7147, %v7146
        %v7149 = vmul.f32 0.5, %v7148
        %v7150 = vsub.f32 1.5, %v7149
        %v7151 = vmul.f32 %v7146, %v7150
        %vm7152 = vweird.f32 %v6920
        %vm7153 = vweird.f32 %v7146
        %vm7154 = vmor %vm7152, %vm7153
        %v7155 = vsel %vm7154, %v7146, %v7151
        %v7156 = vrsqrt.pop %v6921
        %v7157 = vmul.f32 %v7156, %v6921
        %v7158 = vmul.f32 %v7157, %v7156
        %v7159 = vmul.f32 0.5, %v7158
        %v7160 = vsub.f32 1.5, %v7159
        %v7161 = vmul.f32 %v7156, %v7160
        %vm7162 = vweird.f32 %v6921
        %vm7163 = vweird.f32 %v7156
        %vm7164 = vmor %vm7162, %vm7163
        %v7165 = vsel %vm7164, %v7156, %v7161
        %v7166 = vrsqrt.pop %v6922
        %v7167 = vmul.f32 %v7166, %v6922
        %v7168 = vmul.f32 %v7167, %v7166
        %v7169 = vmul.f32 0.5, %v7168
        %v7170 = vsub.f32 1.5, %v7169
        %v7171 = vmul.f32 %v7166, %v7170
        %vm7172 = vweird.f32 %v6922
        %vm7173 = vweird.f32 %v7166
        %vm7174 = vmor %vm7172, %vm7173
        %v7175 = vsel %vm7174, %v7166, %v7171
        %v7176 = vrsqrt.pop %v6923
        %v7177 = vmul.f32 %v7176, %v6923
        %v7178 = vmul.f32 %v7177, %v7176
        %v7179 = vmul.f32 0.5, %v7178
        %v7180 = vsub.f32 1.5, %v7179
        %v7181 = vmul.f32 %v7176, %v7180
        %vm7182 = vweird.f32 %v6923
        %vm7183 = vweird.f32 %v7176
        %vm7184 = vmor %vm7182, %vm7183
        %v7185 = vsel %vm7184, %v7176, %v7181
        %v7186 = vrsqrt.pop %v6924
        %v7187 = vmul.f32 %v7186, %v6924
        %v7188 = vmul.f32 %v7187, %v7186
        %v7189 = vmul.f32 0.5, %v7188
        %v7190 = vsub.f32 1.5, %v7189
        %v7191 = vmul.f32 %v7186, %v7190
        %vm7192 = vweird.f32 %v6924
        %vm7193 = vweird.f32 %v7186
        %vm7194 = vmor %vm7192, %vm7193
        %v7195 = vsel %vm7194, %v7186, %v7191
        %v7196 = vrsqrt.pop %v6925
        %v7197 = vmul.f32 %v7196, %v6925
        %v7198 = vmul.f32 %v7197, %v7196
        %v7199 = vmul.f32 0.5, %v7198
        %v7200 = vsub.f32 1.5, %v7199
        %v7201 = vmul.f32 %v7196, %v7200
        %vm7202 = vweird.f32 %v6925
        %vm7203 = vweird.f32 %v7196
        %vm7204 = vmor %vm7202, %vm7203
        %v7205 = vsel %vm7204, %v7196, %v7201
        %v7206 = vrsqrt.pop %v6926
        %v7207 = vmul.f32 %v7206, %v6926
        %v7208 = vmul.f32 %v7207, %v7206
        %v7209 = vmul.f32 0.5, %v7208
        %v7210 = vsub.f32 1.5, %v7209
        %v7211 = vmul.f32 %v7206, %v7210
        %vm7212 = vweird.f32 %v6926
        %vm7213 = vweird.f32 %v7206
        %vm7214 = vmor %vm7212, %vm7213
        %v7215 = vsel %vm7214, %v7206, %v7211
        %v7216 = vrsqrt.pop %v6927
        %v7217 = vmul.f32 %v7216, %v6927
        %v7218 = vmul.f32 %v7217, %v7216
        %v7219 = vmul.f32 0.5, %v7218
        %v7220 = vsub.f32 1.5, %v7219
        %v7221 = vmul.f32 %v7216, %v7220
        %vm7222 = vweird.f32 %v6927
        %vm7223 = vweird.f32 %v7216
        %vm7224 = vmor %vm7222, %vm7223
        %v7225 = vsel %vm7224, %v7216, %v7221
        %v7226 = vrsqrt.pop %v6928
        %v7227 = vmul.f32 %v7226, %v6928
        %v7228 = vmul.f32 %v7227, %v7226
        %v7229 = vmul.f32 0.5, %v7228
        %v7230 = vsub.f32 1.5, %v7229
        %v7231 = vmul.f32 %v7226, %v7230
        %vm7232 = vweird.f32 %v6928
        %vm7233 = vweird.f32 %v7226
        %vm7234 = vmor %vm7232, %vm7233
        %v7235 = vsel %vm7234, %v7226, %v7231
        %v7236 = vrsqrt.pop %v6929
        %v7237 = vmul.f32 %v7236, %v6929
        %v7238 = vmul.f32 %v7237, %v7236
        %v7239 = vmul.f32 0.5, %v7238
        %v7240 = vsub.f32 1.5, %v7239
        %v7241 = vmul.f32 %v7236, %v7240
        %vm7242 = vweird.f32 %v6929
        %vm7243 = vweird.f32 %v7236
        %vm7244 = vmor %vm7242, %vm7243
        %v7245 = vsel %vm7244, %v7236, %v7241
        %v7246 = vrsqrt.pop %v6930
        %v7247 = vmul.f32 %v7246, %v6930
        %v7248 = vmul.f32 %v7247, %v7246
        %v7249 = vmul.f32 0.5, %v7248
        %v7250 = vsub.f32 1.5, %v7249
        %v7251 = vmul.f32 %v7246, %v7250
        %vm7252 = vweird.f32 %v6930
        %vm7253 = vweird.f32 %v7246
        %vm7254 = vmor %vm7252, %vm7253
        %v7255 = vsel %vm7254, %v7246, %v7251
        %v7256 = vrsqrt.pop %v6931
        %v7257 = vmul.f32 %v7256, %v6931
        %v7258 = vmul.f32 %v7257, %v7256
        %v7259 = vmul.f32 0.5, %v7258
        %v7260 = vsub.f32 1.5, %v7259
        %v7261 = vmul.f32 %v7256, %v7260
        %vm7262 = vweird.f32 %v6931
        %vm7263 = vweird.f32 %v7256
        %vm7264 = vmor %vm7262, %vm7263
        %v7265 = vsel %vm7264, %v7256, %v7261
        %v7266 = vrsqrt.pop %v6932
        %v7267 = vmul.f32 %v7266, %v6932
        %v7268 = vmul.f32 %v7267, %v7266
        %v7269 = vmul.f32 0.5, %v7268
        %v7270 = vsub.f32 1.5, %v7269
        %v7271 = vmul.f32 %v7266, %v7270
        %vm7272 = vweird.f32 %v6932
        %vm7273 = vweird.f32 %v7266
        %vm7274 = vmor %vm7272, %vm7273
        %v7275 = vsel %vm7274, %v7266, %v7271
        %v7276 = vrsqrt.pop %v6933
        %v7277 = vmul.f32 %v7276, %v6933
        %v7278 = vmul.f32 %v7277, %v7276
        %v7279 = vmul.f32 0.5, %v7278
        %v7280 = vsub.f32 1.5, %v7279
        %v7281 = vmul.f32 %v7276, %v7280
        %vm7282 = vweird.f32 %v6933
        %vm7283 = vweird.f32 %v7276
        %vm7284 = vmor %vm7282, %vm7283
        %v7285 = vsel %vm7284, %v7276, %v7281
        %v7286 = vrsqrt.pop %v6934
        %v7287 = vmul.f32 %v7286, %v6934
        %v7288 = vmul.f32 %v7287, %v7286
        %v7289 = vmul.f32 0.5, %v7288
        %v7290 = vsub.f32 1.5, %v7289
        %v7291 = vmul.f32 %v7286, %v7290
        %vm7292 = vweird.f32 %v6934
        %vm7293 = vweird.f32 %v7286
        %vm7294 = vmor %vm7292, %vm7293
        %v7295 = vsel %vm7294, %v7286, %v7291
        %v7296 = vrsqrt.pop %v6935
        %v7297 = vmul.f32 %v7296, %v6935
        %v7298 = vmul.f32 %v7297, %v7296
        %v7299 = vmul.f32 0.5, %v7298
        %v7300 = vsub.f32 1.5, %v7299
        %v7301 = vmul.f32 %v7296, %v7300
        %vm7302 = vweird.f32 %v6935
        %vm7303 = vweird.f32 %v7296
        %vm7304 = vmor %vm7302, %vm7303
        %v7305 = vsel %vm7304, %v7296, %v7301
        %v7306 = vrsqrt.pop %v6936
        %v7307 = vmul.f32 %v7306, %v6936
        %v7308 = vmul.f32 %v7307, %v7306
        %v7309 = vmul.f32 0.5, %v7308
        %v7310 = vsub.f32 1.5, %v7309
        %v7311 = vmul.f32 %v7306, %v7310
        %vm7312 = vweird.f32 %v6936
        %vm7313 = vweird.f32 %v7306
        %vm7314 = vmor %vm7312, %vm7313
        %v7315 = vsel %vm7314, %v7306, %v7311
        %v7316 = vrsqrt.pop %v6937
        %v7317 = vmul.f32 %v7316, %v6937
        %v7318 = vmul.f32 %v7317, %v7316
        %v7319 = vmul.f32 0.5, %v7318
        %v7320 = vsub.f32 1.5, %v7319
        %v7321 = vmul.f32 %v7316, %v7320
        %vm7322 = vweird.f32 %v6937
        %vm7323 = vweird.f32 %v7316
        %vm7324 = vmor %vm7322, %vm7323
        %v7325 = vsel %vm7324, %v7316, %v7321
        %v7326 = vrsqrt.pop %v6938
        %v7327 = vmul.f32 %v7326, %v6938
        %v7328 = vmul.f32 %v7327, %v7326
        %v7329 = vmul.f32 0.5, %v7328
        %v7330 = vsub.f32 1.5, %v7329
        %v7331 = vmul.f32 %v7326, %v7330
        %vm7332 = vweird.f32 %v6938
        %vm7333 = vweird.f32 %v7326
        %vm7334 = vmor %vm7332, %vm7333
        %v7335 = vsel %vm7334, %v7326, %v7331
        %v7336 = vrsqrt.pop %v6939
        %v7337 = vmul.f32 %v7336, %v6939
        %v7338 = vmul.f32 %v7337, %v7336
        %v7339 = vmul.f32 0.5, %v7338
        %v7340 = vsub.f32 1.5, %v7339
        %v7341 = vmul.f32 %v7336, %v7340
        %vm7342 = vweird.f32 %v6939
        %vm7343 = vweird.f32 %v7336
        %vm7344 = vmor %vm7342, %vm7343
        %v7345 = vsel %vm7344, %v7336, %v7341
        %v7346 = vrsqrt.pop %v6940
        %v7347 = vmul.f32 %v7346, %v6940
        %v7348 = vmul.f32 %v7347, %v7346
        %v7349 = vmul.f32 0.5, %v7348
        %v7350 = vsub.f32 1.5, %v7349
        %v7351 = vmul.f32 %v7346, %v7350
        %vm7352 = vweird.f32 %v6940
        %vm7353 = vweird.f32 %v7346
        %vm7354 = vmor %vm7352, %vm7353
        %v7355 = vsel %vm7354, %v7346, %v7351
        %v7356 = vrsqrt.pop %v6941
        %v7357 = vmul.f32 %v7356, %v6941
        %v7358 = vmul.f32 %v7357, %v7356
        %v7359 = vmul.f32 0.5, %v7358
        %v7360 = vsub.f32 1.5, %v7359
        %v7361 = vmul.f32 %v7356, %v7360
        %vm7362 = vweird.f32 %v6941
        %vm7363 = vweird.f32 %v7356
        %vm7364 = vmor %vm7362, %vm7363
        %v7365 = vsel %vm7364, %v7356, %v7361
        %v7366 = vrsqrt.pop %v6942
        %v7367 = vmul.f32 %v7366, %v6942
        %v7368 = vmul.f32 %v7367, %v7366
        %v7369 = vmul.f32 0.5, %v7368
        %v7370 = vsub.f32 1.5, %v7369
        %v7371 = vmul.f32 %v7366, %v7370
        %vm7372 = vweird.f32 %v6942
        %vm7373 = vweird.f32 %v7366
        %vm7374 = vmor %vm7372, %vm7373
        %v7375 = vsel %vm7374, %v7366, %v7371
        %v7376 = vrsqrt.pop %v6943
        %v7377 = vmul.f32 %v7376, %v6943
        %v7378 = vmul.f32 %v7377, %v7376
        %v7379 = vmul.f32 0.5, %v7378
        %v7380 = vsub.f32 1.5, %v7379
        %v7381 = vmul.f32 %v7376, %v7380
        %vm7382 = vweird.f32 %v6943
        %vm7383 = vweird.f32 %v7376
        %vm7384 = vmor %vm7382, %vm7383
        %v7385 = vsel %vm7384, %v7376, %v7381
        %v7386 = vrsqrt.pop %v6944
        %v7387 = vmul.f32 %v7386, %v6944
        %v7388 = vmul.f32 %v7387, %v7386
        %v7389 = vmul.f32 0.5, %v7388
        %v7390 = vsub.f32 1.5, %v7389
        %v7391 = vmul.f32 %v7386, %v7390
        %vm7392 = vweird.f32 %v6944
        %vm7393 = vweird.f32 %v7386
        %vm7394 = vmor %vm7392, %vm7393
        %v7395 = vsel %vm7394, %v7386, %v7391
        %v7396 = vrsqrt.pop %v6945
        %v7397 = vmul.f32 %v7396, %v6945
        %v7398 = vmul.f32 %v7397, %v7396
        %v7399 = vmul.f32 0.5, %v7398
        %v7400 = vsub.f32 1.5, %v7399
        %v7401 = vmul.f32 %v7396, %v7400
        %vm7402 = vweird.f32 %v6945
        %vm7403 = vweird.f32 %v7396
        %vm7404 = vmor %vm7402, %vm7403
        %v7405 = vsel %vm7404, %v7396, %v7401
        %v7406 = vrsqrt.pop %v6946
        %v7407 = vmul.f32 %v7406, %v6946
        %v7408 = vmul.f32 %v7407, %v7406
        %v7409 = vmul.f32 0.5, %v7408
        %v7410 = vsub.f32 1.5, %v7409
        %v7411 = vmul.f32 %v7406, %v7410
        %vm7412 = vweird.f32 %v6946
        %vm7413 = vweird.f32 %v7406
        %vm7414 = vmor %vm7412, %vm7413
        %v7415 = vsel %vm7414, %v7406, %v7411
        %v7416 = vrsqrt.pop %v6947
        %v7417 = vmul.f32 %v7416, %v6947
        %v7418 = vmul.f32 %v7417, %v7416
        %v7419 = vmul.f32 0.5, %v7418
        %v7420 = vsub.f32 1.5, %v7419
        %v7421 = vmul.f32 %v7416, %v7420
        %vm7422 = vweird.f32 %v6947
        %vm7423 = vweird.f32 %v7416
        %vm7424 = vmor %vm7422, %vm7423
        %v7425 = vsel %vm7424, %v7416, %v7421
        %v7426 = vrsqrt.pop %v6948
        %v7427 = vmul.f32 %v7426, %v6948
        %v7428 = vmul.f32 %v7427, %v7426
        %v7429 = vmul.f32 0.5, %v7428
        %v7430 = vsub.f32 1.5, %v7429
        %v7431 = vmul.f32 %v7426, %v7430
        %vm7432 = vweird.f32 %v6948
        %vm7433 = vweird.f32 %v7426
        %vm7434 = vmor %vm7432, %vm7433
        %v7435 = vsel %vm7434, %v7426, %v7431
        %v7436 = vrsqrt.pop %v6949
        %v7437 = vmul.f32 %v7436, %v6949
        %v7438 = vmul.f32 %v7437, %v7436
        %v7439 = vmul.f32 0.5, %v7438
        %v7440 = vsub.f32 1.5, %v7439
        %v7441 = vmul.f32 %v7436, %v7440
        %vm7442 = vweird.f32 %v6949
        %vm7443 = vweird.f32 %v7436
        %vm7444 = vmor %vm7442, %vm7443
        %v7445 = vsel %vm7444, %v7436, %v7441
        %v7446 = vrsqrt.pop %v6950
        %v7447 = vmul.f32 %v7446, %v6950
        %v7448 = vmul.f32 %v7447, %v7446
        %v7449 = vmul.f32 0.5, %v7448
        %v7450 = vsub.f32 1.5, %v7449
        %v7451 = vmul.f32 %v7446, %v7450
        %vm7452 = vweird.f32 %v6950
        %vm7453 = vweird.f32 %v7446
        %vm7454 = vmor %vm7452, %vm7453
        %v7455 = vsel %vm7454, %v7446, %v7451
        %v7456 = vrsqrt.pop %v6951
        %v7457 = vmul.f32 %v7456, %v6951
        %v7458 = vmul.f32 %v7457, %v7456
        %v7459 = vmul.f32 0.5, %v7458
        %v7460 = vsub.f32 1.5, %v7459
        %v7461 = vmul.f32 %v7456, %v7460
        %vm7462 = vweird.f32 %v6951
        %vm7463 = vweird.f32 %v7456
        %vm7464 = vmor %vm7462, %vm7463
        %v7465 = vsel %vm7464, %v7456, %v7461
        %v7466 = vrsqrt.pop %v6952
        %v7467 = vmul.f32 %v7466, %v6952
        %v7468 = vmul.f32 %v7467, %v7466
        %v7469 = vmul.f32 0.5, %v7468
        %v7470 = vsub.f32 1.5, %v7469
        %v7471 = vmul.f32 %v7466, %v7470
        %vm7472 = vweird.f32 %v6952
        %vm7473 = vweird.f32 %v7466
        %vm7474 = vmor %vm7472, %vm7473
        %v7475 = vsel %vm7474, %v7466, %v7471
        %v7476 = vrsqrt.pop %v6953
        %v7477 = vmul.f32 %v7476, %v6953
        %v7478 = vmul.f32 %v7477, %v7476
        %v7479 = vmul.f32 0.5, %v7478
        %v7480 = vsub.f32 1.5, %v7479
        %v7481 = vmul.f32 %v7476, %v7480
        %vm7482 = vweird.f32 %v6953
        %vm7483 = vweird.f32 %v7476
        %vm7484 = vmor %vm7482, %vm7483
        %v7485 = vsel %vm7484, %v7476, %v7481
        %v7486 = vrsqrt.pop %v6954
        %v7487 = vmul.f32 %v7486, %v6954
        %v7488 = vmul.f32 %v7487, %v7486
        %v7489 = vmul.f32 0.5, %v7488
        %v7490 = vsub.f32 1.5, %v7489
        %v7491 = vmul.f32 %v7486, %v7490
        %vm7492 = vweird.f32 %v6954
        %vm7493 = vweird.f32 %v7486
        %vm7494 = vmor %vm7492, %vm7493
        %v7495 = vsel %vm7494, %v7486, %v7491
        %v7496 = vrsqrt.pop %v6955
        %v7497 = vmul.f32 %v7496, %v6955
        %v7498 = vmul.f32 %v7497, %v7496
        %v7499 = vmul.f32 0.5, %v7498
        %v7500 = vsub.f32 1.5, %v7499
        %v7501 = vmul.f32 %v7496, %v7500
        %vm7502 = vweird.f32 %v6955
        %vm7503 = vweird.f32 %v7496
        %vm7504 = vmor %vm7502, %vm7503
        %v7505 = vsel %vm7504, %v7496, %v7501
        %v7506 = vrsqrt.pop %v6956
        %v7507 = vmul.f32 %v7506, %v6956
        %v7508 = vmul.f32 %v7507, %v7506
        %v7509 = vmul.f32 0.5, %v7508
        %v7510 = vsub.f32 1.5, %v7509
        %v7511 = vmul.f32 %v7506, %v7510
        %vm7512 = vweird.f32 %v6956
        %vm7513 = vweird.f32 %v7506
        %vm7514 = vmor %vm7512, %vm7513
        %v7515 = vsel %vm7514, %v7506, %v7511
        %v7516 = vrsqrt.pop %v6957
        %v7517 = vmul.f32 %v7516, %v6957
        %v7518 = vmul.f32 %v7517, %v7516
        %v7519 = vmul.f32 0.5, %v7518
        %v7520 = vsub.f32 1.5, %v7519
        %v7521 = vmul.f32 %v7516, %v7520
        %vm7522 = vweird.f32 %v6957
        %vm7523 = vweird.f32 %v7516
        %vm7524 = vmor %vm7522, %vm7523
        %v7525 = vsel %vm7524, %v7516, %v7521
        %v7526 = vrsqrt.pop %v6958
        %v7527 = vmul.f32 %v7526, %v6958
        %v7528 = vmul.f32 %v7527, %v7526
        %v7529 = vmul.f32 0.5, %v7528
        %v7530 = vsub.f32 1.5, %v7529
        %v7531 = vmul.f32 %v7526, %v7530
        %vm7532 = vweird.f32 %v6958
        %vm7533 = vweird.f32 %v7526
        %vm7534 = vmor %vm7532, %vm7533
        %v7535 = vsel %vm7534, %v7526, %v7531
        %v7536 = vrsqrt.pop %v6959
        %v7537 = vmul.f32 %v7536, %v6959
        %v7538 = vmul.f32 %v7537, %v7536
        %v7539 = vmul.f32 0.5, %v7538
        %v7540 = vsub.f32 1.5, %v7539
        %v7541 = vmul.f32 %v7536, %v7540
        %vm7542 = vweird.f32 %v6959
        %vm7543 = vweird.f32 %v7536
        %vm7544 = vmor %vm7542, %vm7543
        %v7545 = vsel %vm7544, %v7536, %v7541
        %v7546 = vrsqrt.pop %v6960
        %v7547 = vmul.f32 %v7546, %v6960
        %v7548 = vmul.f32 %v7547, %v7546
        %v7549 = vmul.f32 0.5, %v7548
        %v7550 = vsub.f32 1.5, %v7549
        %v7551 = vmul.f32 %v7546, %v7550
        %vm7552 = vweird.f32 %v6960
        %vm7553 = vweird.f32 %v7546
        %vm7554 = vmor %vm7552, %vm7553
        %v7555 = vsel %vm7554, %v7546, %v7551
        %v7556 = vrsqrt.pop %v6961
        %v7557 = vmul.f32 %v7556, %v6961
        %v7558 = vmul.f32 %v7557, %v7556
        %v7559 = vmul.f32 0.5, %v7558
        %v7560 = vsub.f32 1.5, %v7559
        %v7561 = vmul.f32 %v7556, %v7560
        %vm7562 = vweird.f32 %v6961
        %vm7563 = vweird.f32 %v7556
        %vm7564 = vmor %vm7562, %vm7563
        %v7565 = vsel %vm7564, %v7556, %v7561
        %v7566 = vrsqrt.pop %v6962
        %v7567 = vmul.f32 %v7566, %v6962
        %v7568 = vmul.f32 %v7567, %v7566
        %v7569 = vmul.f32 0.5, %v7568
        %v7570 = vsub.f32 1.5, %v7569
        %v7571 = vmul.f32 %v7566, %v7570
        %vm7572 = vweird.f32 %v6962
        %vm7573 = vweird.f32 %v7566
        %vm7574 = vmor %vm7572, %vm7573
        %v7575 = vsel %vm7574, %v7566, %v7571
        %v7576 = vrsqrt.pop %v6963
        %v7577 = vmul.f32 %v7576, %v6963
        %v7578 = vmul.f32 %v7577, %v7576
        %v7579 = vmul.f32 0.5, %v7578
        %v7580 = vsub.f32 1.5, %v7579
        %v7581 = vmul.f32 %v7576, %v7580
        %vm7582 = vweird.f32 %v6963
        %vm7583 = vweird.f32 %v7576
        %vm7584 = vmor %vm7582, %vm7583
        %v7585 = vsel %vm7584, %v7576, %v7581
        %v7586 = vrsqrt.pop %v6964
        %v7587 = vmul.f32 %v7586, %v6964
        %v7588 = vmul.f32 %v7587, %v7586
        %v7589 = vmul.f32 0.5, %v7588
        %v7590 = vsub.f32 1.5, %v7589
        %v7591 = vmul.f32 %v7586, %v7590
        %vm7592 = vweird.f32 %v6964
        %vm7593 = vweird.f32 %v7586
        %vm7594 = vmor %vm7592, %vm7593
        %v7595 = vsel %vm7594, %v7586, %v7591
        %v7596 = vrsqrt.pop %v6965
        %v7597 = vmul.f32 %v7596, %v6965
        %v7598 = vmul.f32 %v7597, %v7596
        %v7599 = vmul.f32 0.5, %v7598
        %v7600 = vsub.f32 1.5, %v7599
        %v7601 = vmul.f32 %v7596, %v7600
        %vm7602 = vweird.f32 %v6965
        %vm7603 = vweird.f32 %v7596
        %vm7604 = vmor %vm7602, %vm7603
        %v7605 = vsel %vm7604, %v7596, %v7601
        %v7606 = vmul.f32 %v6838, %v6975
        %v7607 = vmul.f32 %v6839, %v6985
        %v7608 = vmul.f32 %v6840, %v6995
        %v7609 = vmul.f32 %v6841, %v7005
        %v7610 = vmul.f32 %v6842, %v7015
        %v7611 = vmul.f32 %v6843, %v7025
        %v7612 = vmul.f32 %v6844, %v7035
        %v7613 = vmul.f32 %v6845, %v7045
        %v7614 = vmul.f32 %v6846, %v7055
        %v7615 = vmul.f32 %v6847, %v7065
        %v7616 = vmul.f32 %v6848, %v7075
        %v7617 = vmul.f32 %v6849, %v7085
        %v7618 = vmul.f32 %v6850, %v7095
        %v7619 = vmul.f32 %v6851, %v7105
        %v7620 = vmul.f32 %v6852, %v7115
        %v7621 = vmul.f32 %v6853, %v7125
        %v7622 = vmul.f32 %v6854, %v7135
        %v7623 = vmul.f32 %v6855, %v7145
        %v7624 = vmul.f32 %v6856, %v7155
        %v7625 = vmul.f32 %v6857, %v7165
        %v7626 = vmul.f32 %v6858, %v7175
        %v7627 = vmul.f32 %v6859, %v7185
        %v7628 = vmul.f32 %v6860, %v7195
        %v7629 = vmul.f32 %v6861, %v7205
        %v7630 = vmul.f32 %v6862, %v7215
        %v7631 = vmul.f32 %v6863, %v7225
        %v7632 = vmul.f32 %v6864, %v7235
        %v7633 = vmul.f32 %v6865, %v7245
        %v7634 = vmul.f32 %v6866, %v7255
        %v7635 = vmul.f32 %v6867, %v7265
        %v7636 = vmul.f32 %v6868, %v7275
        %v7637 = vmul.f32 %v6869, %v7285
        %v7638 = vmul.f32 %v6870, %v7295
        %v7639 = vmul.f32 %v6871, %v7305
        %v7640 = vmul.f32 %v6872, %v7315
        %v7641 = vmul.f32 %v6873, %v7325
        %v7642 = vmul.f32 %v6874, %v7335
        %v7643 = vmul.f32 %v6875, %v7345
        %v7644 = vmul.f32 %v6876, %v7355
        %v7645 = vmul.f32 %v6877, %v7365
        %v7646 = vmul.f32 %v6878, %v7375
        %v7647 = vmul.f32 %v6879, %v7385
        %v7648 = vmul.f32 %v6880, %v7395
        %v7649 = vmul.f32 %v6881, %v7405
        %v7650 = vmul.f32 %v6882, %v7415
        %v7651 = vmul.f32 %v6883, %v7425
        %v7652 = vmul.f32 %v6884, %v7435
        %v7653 = vmul.f32 %v6885, %v7445
        %v7654 = vmul.f32 %v6886, %v7455
        %v7655 = vmul.f32 %v6887, %v7465
        %v7656 = vmul.f32 %v6888, %v7475
        %v7657 = vmul.f32 %v6889, %v7485
        %v7658 = vmul.f32 %v6890, %v7495
        %v7659 = vmul.f32 %v6891, %v7505
        %v7660 = vmul.f32 %v6892, %v7515
        %v7661 = vmul.f32 %v6893, %v7525
        %v7662 = vmul.f32 %v6894, %v7535
        %v7663 = vmul.f32 %v6895, %v7545
        %v7664 = vmul.f32 %v6896, %v7555
        %v7665 = vmul.f32 %v6897, %v7565
        %v7666 = vmul.f32 %v6898, %v7575
        %v7667 = vmul.f32 %v6899, %v7585
        %v7668 = vmul.f32 %v6900, %v7595
        %v7669 = vmul.f32 %v6901, %v7605
        %v7670 = vld [vmem:[%s426] sm:$0x1]
        %v7671 = vld [vmem:[%s426 + $0x1] sm:$0x1]
        %v7672 = vld [vmem:[%s426 + $0x2] sm:$0x1]
        %v7673 = vld [vmem:[%s426 + $0x3] sm:$0x1]
        %v7674 = vld [vmem:[%s426 + $0x4] sm:$0x1]
        %v7675 = vld [vmem:[%s426 + $0x5] sm:$0x1]
        %v7676 = vld [vmem:[%s426 + $0x6] sm:$0x1]
        %v7677 = vld [vmem:[%s426 + $0x7] sm:$0x1]
        %v7678 = vld [vmem:[%s426 + $0x8] sm:$0x1]
        %v7679 = vld [vmem:[%s426 + $0x9] sm:$0x1]
        %v7680 = vld [vmem:[%s426 + $0xa] sm:$0x1]
        %v7681 = vld [vmem:[%s426 + $0xb] sm:$0x1]
        %v7682 = vld [vmem:[%s426 + $0xc] sm:$0x1]
        %v7683 = vld [vmem:[%s426 + $0xd] sm:$0x1]
        %v7684 = vld [vmem:[%s426 + $0xe] sm:$0x1]
        %v7685 = vld [vmem:[%s426 + $0xf] sm:$0x1]
        %v7686 = vld [vmem:[%s426 + $0x10] sm:$0x1]
        %v7687 = vld [vmem:[%s426 + $0x11] sm:$0x1]
        %v7688 = vld [vmem:[%s426 + $0x12] sm:$0x1]
        %v7689 = vld [vmem:[%s426 + $0x13] sm:$0x1]
        %v7690 = vld [vmem:[%s426 + $0x14] sm:$0x1]
        %v7691 = vld [vmem:[%s426 + $0x15] sm:$0x1]
        %v7692 = vld [vmem:[%s426 + $0x16] sm:$0x1]
        %v7693 = vld [vmem:[%s426 + $0x17] sm:$0x1]
        %v7694 = vld [vmem:[%s426 + $0x18] sm:$0x1]
        %v7695 = vld [vmem:[%s426 + $0x19] sm:$0x1]
        %v7696 = vld [vmem:[%s426 + $0x1a] sm:$0x1]
        %v7697 = vld [vmem:[%s426 + $0x1b] sm:$0x1]
        %v7698 = vld [vmem:[%s426 + $0x1c] sm:$0x1]
        %v7699 = vld [vmem:[%s426 + $0x1d] sm:$0x1]
        %v7700 = vld [vmem:[%s426 + $0x1e] sm:$0x1]
        %v7701 = vld [vmem:[%s426 + $0x1f] sm:$0x1]
        %v7702 = vld [vmem:[%s426 + $0x20] sm:$0x1]
        %v7703 = vld [vmem:[%s426 + $0x21] sm:$0x1]
        %v7704 = vld [vmem:[%s426 + $0x22] sm:$0x1]
        %v7705 = vld [vmem:[%s426 + $0x23] sm:$0x1]
        %v7706 = vld [vmem:[%s426 + $0x24] sm:$0x1]
        %v7707 = vld [vmem:[%s426 + $0x25] sm:$0x1]
        %v7708 = vld [vmem:[%s426 + $0x26] sm:$0x1]
        %v7709 = vld [vmem:[%s426 + $0x27] sm:$0x1]
        %v7710 = vld [vmem:[%s426 + $0x28] sm:$0x1]
        %v7711 = vld [vmem:[%s426 + $0x29] sm:$0x1]
        %v7712 = vld [vmem:[%s426 + $0x2a] sm:$0x1]
        %v7713 = vld [vmem:[%s426 + $0x2b] sm:$0x1]
        %v7714 = vld [vmem:[%s426 + $0x2c] sm:$0x1]
        %v7715 = vld [vmem:[%s426 + $0x2d] sm:$0x1]
        %v7716 = vld [vmem:[%s426 + $0x2e] sm:$0x1]
        %v7717 = vld [vmem:[%s426 + $0x2f] sm:$0x1]
        %v7718 = vld [vmem:[%s426 + $0x30] sm:$0x1]
        %v7719 = vld [vmem:[%s426 + $0x31] sm:$0x1]
        %v7720 = vld [vmem:[%s426 + $0x32] sm:$0x1]
        %v7721 = vld [vmem:[%s426 + $0x33] sm:$0x1]
        %v7722 = vld [vmem:[%s426 + $0x34] sm:$0x1]
        %v7723 = vld [vmem:[%s426 + $0x35] sm:$0x1]
        %v7724 = vld [vmem:[%s426 + $0x36] sm:$0x1]
        %v7725 = vld [vmem:[%s426 + $0x37] sm:$0x1]
        %v7726 = vld [vmem:[%s426 + $0x38] sm:$0x1]
        %v7727 = vld [vmem:[%s426 + $0x39] sm:$0x1]
        %v7728 = vld [vmem:[%s426 + $0x3a] sm:$0x1]
        %v7729 = vld [vmem:[%s426 + $0x3b] sm:$0x1]
        %v7730 = vld [vmem:[%s426 + $0x3c] sm:$0x1]
        %v7731 = vld [vmem:[%s426 + $0x3d] sm:$0x1]
        %v7732 = vld [vmem:[%s426 + $0x3e] sm:$0x1]
        %v7733 = vld [vmem:[%s426 + $0x3f] sm:$0x1]
        %v7734 = vmul.f32 %v6518, %v7606
        %v7735 = vmul.f32 %v6519, %v7607
        %v7736 = vmul.f32 %v6520, %v7608
        %v7737 = vmul.f32 %v6521, %v7609
        %v7738 = vmul.f32 %v6522, %v7610
        %v7739 = vmul.f32 %v6523, %v7611
        %v7740 = vmul.f32 %v6524, %v7612
        %v7741 = vmul.f32 %v6525, %v7613
        %v7742 = vmul.f32 %v6526, %v7614
        %v7743 = vmul.f32 %v6527, %v7615
        %v7744 = vmul.f32 %v6528, %v7616
        %v7745 = vmul.f32 %v6529, %v7617
        %v7746 = vmul.f32 %v6530, %v7618
        %v7747 = vmul.f32 %v6531, %v7619
        %v7748 = vmul.f32 %v6532, %v7620
        %v7749 = vmul.f32 %v6533, %v7621
        %v7750 = vmul.f32 %v6534, %v7622
        %v7751 = vmul.f32 %v6535, %v7623
        %v7752 = vmul.f32 %v6536, %v7624
        %v7753 = vmul.f32 %v6537, %v7625
        %v7754 = vmul.f32 %v6538, %v7626
        %v7755 = vmul.f32 %v6539, %v7627
        %v7756 = vmul.f32 %v6540, %v7628
        %v7757 = vmul.f32 %v6541, %v7629
        %v7758 = vmul.f32 %v6542, %v7630
        %v7759 = vmul.f32 %v6543, %v7631
        %v7760 = vmul.f32 %v6544, %v7632
        %v7761 = vmul.f32 %v6545, %v7633
        %v7762 = vmul.f32 %v6546, %v7634
        %v7763 = vmul.f32 %v6547, %v7635
        %v7764 = vmul.f32 %v6548, %v7636
        %v7765 = vmul.f32 %v6549, %v7637
        %v7766 = vmul.f32 %v6550, %v7638
        %v7767 = vmul.f32 %v6551, %v7639
        %v7768 = vmul.f32 %v6552, %v7640
        %v7769 = vmul.f32 %v6553, %v7641
        %v7770 = vmul.f32 %v6554, %v7642
        %v7771 = vmul.f32 %v6555, %v7643
        %v7772 = vmul.f32 %v6556, %v7644
        %v7773 = vmul.f32 %v6557, %v7645
        %v7774 = vmul.f32 %v6558, %v7646
        %v7775 = vmul.f32 %v6559, %v7647
        %v7776 = vmul.f32 %v6560, %v7648
        %v7777 = vmul.f32 %v6561, %v7649
        %v7778 = vmul.f32 %v6562, %v7650
        %v7779 = vmul.f32 %v6563, %v7651
        %v7780 = vmul.f32 %v6564, %v7652
        %v7781 = vmul.f32 %v6565, %v7653
        %v7782 = vmul.f32 %v6566, %v7654
        %v7783 = vmul.f32 %v6567, %v7655
        %v7784 = vmul.f32 %v6568, %v7656
        %v7785 = vmul.f32 %v6569, %v7657
        %v7786 = vmul.f32 %v6570, %v7658
        %v7787 = vmul.f32 %v6571, %v7659
        %v7788 = vmul.f32 %v6572, %v7660
        %v7789 = vmul.f32 %v6573, %v7661
        %v7790 = vmul.f32 %v6574, %v7662
        %v7791 = vmul.f32 %v6575, %v7663
        %v7792 = vmul.f32 %v6576, %v7664
        %v7793 = vmul.f32 %v6577, %v7665
        %v7794 = vmul.f32 %v6578, %v7666
        %v7795 = vmul.f32 %v6579, %v7667
        %v7796 = vmul.f32 %v6580, %v7668
        %v7797 = vmul.f32 %v6581, %v7669
        %v7798 = vsub.f32 %v7670, %v7734
        %v7799 = vsub.f32 %v7671, %v7735
        %v7800 = vsub.f32 %v7672, %v7736
        %v7801 = vsub.f32 %v7673, %v7737
        %v7802 = vsub.f32 %v7674, %v7738
        %v7803 = vsub.f32 %v7675, %v7739
        %v7804 = vsub.f32 %v7676, %v7740
        %v7805 = vsub.f32 %v7677, %v7741
        %v7806 = vsub.f32 %v7678, %v7742
        %v7807 = vsub.f32 %v7679, %v7743
        %v7808 = vsub.f32 %v7680, %v7744
        %v7809 = vsub.f32 %v7681, %v7745
        %v7810 = vsub.f32 %v7682, %v7746
        %v7811 = vsub.f32 %v7683, %v7747
        %v7812 = vsub.f32 %v7684, %v7748
        %v7813 = vsub.f32 %v7685, %v7749
        %v7814 = vsub.f32 %v7686, %v7750
        %v7815 = vsub.f32 %v7687, %v7751
        %v7816 = vsub.f32 %v7688, %v7752
        %v7817 = vsub.f32 %v7689, %v7753
        %v7818 = vsub.f32 %v7690, %v7754
        %v7819 = vsub.f32 %v7691, %v7755
        %v7820 = vsub.f32 %v7692, %v7756
        %v7821 = vsub.f32 %v7693, %v7757
        %v7822 = vsub.f32 %v7694, %v7758
        %v7823 = vsub.f32 %v7695, %v7759
        %v7824 = vsub.f32 %v7696, %v7760
        %v7825 = vsub.f32 %v7697, %v7761
        %v7826 = vsub.f32 %v7698, %v7762
        %v7827 = vsub.f32 %v7699, %v7763
        %v7828 = vsub.f32 %v7700, %v7764
        %v7829 = vsub.f32 %v7701, %v7765
        %v7830 = vsub.f32 %v7702, %v7766
        %v7831 = vsub.f32 %v7703, %v7767
        %v7832 = vsub.f32 %v7704, %v7768
        %v7833 = vsub.f32 %v7705, %v7769
        %v7834 = vsub.f32 %v7706, %v7770
        %v7835 = vsub.f32 %v7707, %v7771
        %v7836 = vsub.f32 %v7708, %v7772
        %v7837 = vsub.f32 %v7709, %v7773
        %v7838 = vsub.f32 %v7710, %v7774
        %v7839 = vsub.f32 %v7711, %v7775
        %v7840 = vsub.f32 %v7712, %v7776
        %v7841 = vsub.f32 %v7713, %v7777
        %v7842 = vsub.f32 %v7714, %v7778
        %v7843 = vsub.f32 %v7715, %v7779
        %v7844 = vsub.f32 %v7716, %v7780
        %v7845 = vsub.f32 %v7717, %v7781
        %v7846 = vsub.f32 %v7718, %v7782
        %v7847 = vsub.f32 %v7719, %v7783
        %v7848 = vsub.f32 %v7720, %v7784
        %v7849 = vsub.f32 %v7721, %v7785
        %v7850 = vsub.f32 %v7722, %v7786
        %v7851 = vsub.f32 %v7723, %v7787
        %v7852 = vsub.f32 %v7724, %v7788
        %v7853 = vsub.f32 %v7725, %v7789
        %v7854 = vsub.f32 %v7726, %v7790
        %v7855 = vsub.f32 %v7727, %v7791
        %v7856 = vsub.f32 %v7728, %v7792
        %v7857 = vsub.f32 %v7729, %v7793
        %v7858 = vsub.f32 %v7730, %v7794
        %v7859 = vsub.f32 %v7731, %v7795
        %v7860 = vsub.f32 %v7732, %v7796
        %v7861 = vsub.f32 %v7733, %v7797
        %v7926 = vperm.slane %v7606, 0
        %v7927 = vperm.slane %v7607, 0
        %v7928 = vperm.slane %v7608, 0
        %v7929 = vperm.slane %v7609, 0
        %v7930 = vperm.slane %v7610, 0
        %v7931 = vperm.slane %v7611, 0
        %v7932 = vperm.slane %v7612, 0
        %v7933 = vperm.slane %v7613, 0
        %v7934 = vperm.slane %v7614, 0
        %v7935 = vperm.slane %v7615, 0
        %v7936 = vperm.slane %v7616, 0
        %v7937 = vperm.slane %v7617, 0
        %v7938 = vperm.slane %v7618, 0
        %v7939 = vperm.slane %v7619, 0
        %v7940 = vperm.slane %v7620, 0
        %v7941 = vperm.slane %v7621, 0
        %v7942 = vperm.slane %v7622, 0
        %v7943 = vperm.slane %v7623, 0
        %v7944 = vperm.slane %v7624, 0
        %v7945 = vperm.slane %v7625, 0
        %v7946 = vperm.slane %v7626, 0
        %v7947 = vperm.slane %v7627, 0
        %v7948 = vperm.slane %v7628, 0
        %v7949 = vperm.slane %v7629, 0
        %v7950 = vperm.slane %v7630, 0
        %v7951 = vperm.slane %v7631, 0
        %v7952 = vperm.slane %v7632, 0
        %v7953 = vperm.slane %v7633, 0
        %v7954 = vperm.slane %v7634, 0
        %v7955 = vperm.slane %v7635, 0
        %v7956 = vperm.slane %v7636, 0
        %v7957 = vperm.slane %v7637, 0
        %v7958 = vperm.slane %v7638, 0
        %v7959 = vperm.slane %v7639, 0
        %v7960 = vperm.slane %v7640, 0
        %v7961 = vperm.slane %v7641, 0
        %v7962 = vperm.slane %v7642, 0
        %v7963 = vperm.slane %v7643, 0
        %v7964 = vperm.slane %v7644, 0
        %v7965 = vperm.slane %v7645, 0
        %v7966 = vperm.slane %v7646, 0
        %v7967 = vperm.slane %v7647, 0
        %v7968 = vperm.slane %v7648, 0
        %v7969 = vperm.slane %v7649, 0
        %v7970 = vperm.slane %v7650, 0
        %v7971 = vperm.slane %v7651, 0
        %v7972 = vperm.slane %v7652, 0
        %v7973 = vperm.slane %v7653, 0
        %v7974 = vperm.slane %v7654, 0
        %v7975 = vperm.slane %v7655, 0
        %v7976 = vperm.slane %v7656, 0
        %v7977 = vperm.slane %v7657, 0
        %v7978 = vperm.slane %v7658, 0
        %v7979 = vperm.slane %v7659, 0
        %v7980 = vperm.slane %v7660, 0
        %v7981 = vperm.slane %v7661, 0
        %v7982 = vperm.slane %v7662, 0
        %v7983 = vperm.slane %v7663, 0
        %v7984 = vperm.slane %v7664, 0
        %v7985 = vperm.slane %v7665, 0
        %v7986 = vperm.slane %v7666, 0
        %v7987 = vperm.slane %v7667, 0
        %v7988 = vperm.slane %v7668, 0
        %v7989 = vperm.slane %v7669, 0
        %7990 = vset.pattern.permute.xlu0 0
        %7991 = vperm.xlu0 %7990, %v7926
        %v7992 = vpop.permute.xlu0 %7991
        %7994 = vset.pattern.permute.xlu0 0
        %7995 = vperm.xlu0 %7994, %v7927
        %v7996 = vpop.permute.xlu0 %7995
        %7998 = vset.pattern.permute.xlu0 0
        %7999 = vperm.xlu0 %7998, %v7928
        %v8000 = vpop.permute.xlu0 %7999
        %8002 = vset.pattern.permute.xlu0 0
        %8003 = vperm.xlu0 %8002, %v7929
        %v8004 = vpop.permute.xlu0 %8003
        %8006 = vset.pattern.permute.xlu0 0
        %8007 = vperm.xlu0 %8006, %v7930
        %v8008 = vpop.permute.xlu0 %8007
        %8010 = vset.pattern.permute.xlu0 0
        %8011 = vperm.xlu0 %8010, %v7931
        %v8012 = vpop.permute.xlu0 %8011
        %8014 = vset.pattern.permute.xlu0 0
        %8015 = vperm.xlu0 %8014, %v7932
        %v8016 = vpop.permute.xlu0 %8015
        %8018 = vset.pattern.permute.xlu0 0
        %8019 = vperm.xlu0 %8018, %v7933
        %v8020 = vpop.permute.xlu0 %8019
        %8022 = vset.pattern.permute.xlu0 0
        %8023 = vperm.xlu0 %8022, %v7934
        %v8024 = vpop.permute.xlu0 %8023
        %8026 = vset.pattern.permute.xlu0 0
        %8027 = vperm.xlu0 %8026, %v7935
        %v8028 = vpop.permute.xlu0 %8027
        %8030 = vset.pattern.permute.xlu0 0
        %8031 = vperm.xlu0 %8030, %v7936
        %v8032 = vpop.permute.xlu0 %8031
        %8034 = vset.pattern.permute.xlu0 0
        %8035 = vperm.xlu0 %8034, %v7937
        %v8036 = vpop.permute.xlu0 %8035
        %8038 = vset.pattern.permute.xlu0 0
        %8039 = vperm.xlu0 %8038, %v7938
        %v8040 = vpop.permute.xlu0 %8039
        %8042 = vset.pattern.permute.xlu0 0
        %8043 = vperm.xlu0 %8042, %v7939
        %v8044 = vpop.permute.xlu0 %8043
        %8046 = vset.pattern.permute.xlu0 0
        %8047 = vperm.xlu0 %8046, %v7940
        %v8048 = vpop.permute.xlu0 %8047
        %8050 = vset.pattern.permute.xlu0 0
        %8051 = vperm.xlu0 %8050, %v7941
        %v8052 = vpop.permute.xlu0 %8051
        %8054 = vset.pattern.permute.xlu0 0
        %8055 = vperm.xlu0 %8054, %v7942
        %v8056 = vpop.permute.xlu0 %8055
        %8058 = vset.pattern.permute.xlu0 0
        %8059 = vperm.xlu0 %8058, %v7943
        %v8060 = vpop.permute.xlu0 %8059
        %8062 = vset.pattern.permute.xlu0 0
        %8063 = vperm.xlu0 %8062, %v7944
        %v8064 = vpop.permute.xlu0 %8063
        %8066 = vset.pattern.permute.xlu0 0
        %8067 = vperm.xlu0 %8066, %v7945
        %v8068 = vpop.permute.xlu0 %8067
        %8070 = vset.pattern.permute.xlu0 0
        %8071 = vperm.xlu0 %8070, %v7946
        %v8072 = vpop.permute.xlu0 %8071
        %8074 = vset.pattern.permute.xlu0 0
        %8075 = vperm.xlu0 %8074, %v7947
        %v8076 = vpop.permute.xlu0 %8075
        %8078 = vset.pattern.permute.xlu0 0
        %8079 = vperm.xlu0 %8078, %v7948
        %v8080 = vpop.permute.xlu0 %8079
        %8082 = vset.pattern.permute.xlu0 0
        %8083 = vperm.xlu0 %8082, %v7949
        %v8084 = vpop.permute.xlu0 %8083
        %8086 = vset.pattern.permute.xlu0 0
        %8087 = vperm.xlu0 %8086, %v7950
        %v8088 = vpop.permute.xlu0 %8087
        %8090 = vset.pattern.permute.xlu0 0
        %8091 = vperm.xlu0 %8090, %v7951
        %v8092 = vpop.permute.xlu0 %8091
        %8094 = vset.pattern.permute.xlu0 0
        %8095 = vperm.xlu0 %8094, %v7952
        %v8096 = vpop.permute.xlu0 %8095
        %8098 = vset.pattern.permute.xlu0 0
        %8099 = vperm.xlu0 %8098, %v7953
        %v8100 = vpop.permute.xlu0 %8099
        %8102 = vset.pattern.permute.xlu0 0
        %8103 = vperm.xlu0 %8102, %v7954
        %v8104 = vpop.permute.xlu0 %8103
        %8106 = vset.pattern.permute.xlu0 0
        %8107 = vperm.xlu0 %8106, %v7955
        %v8108 = vpop.permute.xlu0 %8107
        %8110 = vset.pattern.permute.xlu0 0
        %8111 = vperm.xlu0 %8110, %v7956
        %v8112 = vpop.permute.xlu0 %8111
        %8114 = vset.pattern.permute.xlu0 0
        %8115 = vperm.xlu0 %8114, %v7957
        %v8116 = vpop.permute.xlu0 %8115
        %8118 = vset.pattern.permute.xlu0 0
        %8119 = vperm.xlu0 %8118, %v7958
        %v8120 = vpop.permute.xlu0 %8119
        %8122 = vset.pattern.permute.xlu0 0
        %8123 = vperm.xlu0 %8122, %v7959
        %v8124 = vpop.permute.xlu0 %8123
        %8126 = vset.pattern.permute.xlu0 0
        %8127 = vperm.xlu0 %8126, %v7960
        %v8128 = vpop.permute.xlu0 %8127
        %8130 = vset.pattern.permute.xlu0 0
        %8131 = vperm.xlu0 %8130, %v7961
        %v8132 = vpop.permute.xlu0 %8131
        %8134 = vset.pattern.permute.xlu0 0
        %8135 = vperm.xlu0 %8134, %v7962
        %v8136 = vpop.permute.xlu0 %8135
        %8138 = vset.pattern.permute.xlu0 0
        %8139 = vperm.xlu0 %8138, %v7963
        %v8140 = vpop.permute.xlu0 %8139
        %8142 = vset.pattern.permute.xlu0 0
        %8143 = vperm.xlu0 %8142, %v7964
        %v8144 = vpop.permute.xlu0 %8143
        %8146 = vset.pattern.permute.xlu0 0
        %8147 = vperm.xlu0 %8146, %v7965
        %v8148 = vpop.permute.xlu0 %8147
        %8150 = vset.pattern.permute.xlu0 0
        %8151 = vperm.xlu0 %8150, %v7966
        %v8152 = vpop.permute.xlu0 %8151
        %8154 = vset.pattern.permute.xlu0 0
        %8155 = vperm.xlu0 %8154, %v7967
        %v8156 = vpop.permute.xlu0 %8155
        %8158 = vset.pattern.permute.xlu0 0
        %8159 = vperm.xlu0 %8158, %v7968
        %v8160 = vpop.permute.xlu0 %8159
        %8162 = vset.pattern.permute.xlu0 0
        %8163 = vperm.xlu0 %8162, %v7969
        %v8164 = vpop.permute.xlu0 %8163
        %8166 = vset.pattern.permute.xlu0 0
        %8167 = vperm.xlu0 %8166, %v7970
        %v8168 = vpop.permute.xlu0 %8167
        %8170 = vset.pattern.permute.xlu0 0
        %8171 = vperm.xlu0 %8170, %v7971
        %v8172 = vpop.permute.xlu0 %8171
        %8174 = vset.pattern.permute.xlu0 0
        %8175 = vperm.xlu0 %8174, %v7972
        %v8176 = vpop.permute.xlu0 %8175
        %8178 = vset.pattern.permute.xlu0 0
        %8179 = vperm.xlu0 %8178, %v7973
        %v8180 = vpop.permute.xlu0 %8179
        %8182 = vset.pattern.permute.xlu0 0
        %8183 = vperm.xlu0 %8182, %v7974
        %v8184 = vpop.permute.xlu0 %8183
        %8186 = vset.pattern.permute.xlu0 0
        %8187 = vperm.xlu0 %8186, %v7975
        %v8188 = vpop.permute.xlu0 %8187
        %8190 = vset.pattern.permute.xlu0 0
        %8191 = vperm.xlu0 %8190, %v7976
        %v8192 = vpop.permute.xlu0 %8191
        %8194 = vset.pattern.permute.xlu0 0
        %8195 = vperm.xlu0 %8194, %v7977
        %v8196 = vpop.permute.xlu0 %8195
        %8198 = vset.pattern.permute.xlu0 0
        %8199 = vperm.xlu0 %8198, %v7978
        %v8200 = vpop.permute.xlu0 %8199
        %8202 = vset.pattern.permute.xlu0 0
        %8203 = vperm.xlu0 %8202, %v7979
        %v8204 = vpop.permute.xlu0 %8203
        %8206 = vset.pattern.permute.xlu0 0
        %8207 = vperm.xlu0 %8206, %v7980
        %v8208 = vpop.permute.xlu0 %8207
        %8210 = vset.pattern.permute.xlu0 0
        %8211 = vperm.xlu0 %8210, %v7981
        %v8212 = vpop.permute.xlu0 %8211
        %8214 = vset.pattern.permute.xlu0 0
        %8215 = vperm.xlu0 %8214, %v7982
        %v8216 = vpop.permute.xlu0 %8215
        %8218 = vset.pattern.permute.xlu0 0
        %8219 = vperm.xlu0 %8218, %v7983
        %v8220 = vpop.permute.xlu0 %8219
        %8222 = vset.pattern.permute.xlu0 0
        %8223 = vperm.xlu0 %8222, %v7984
        %v8224 = vpop.permute.xlu0 %8223
        %8226 = vset.pattern.permute.xlu0 0
        %8227 = vperm.xlu0 %8226, %v7985
        %v8228 = vpop.permute.xlu0 %8227
        %8230 = vset.pattern.permute.xlu0 0
        %8231 = vperm.xlu0 %8230, %v7986
        %v8232 = vpop.permute.xlu0 %8231
        %8234 = vset.pattern.permute.xlu0 0
        %8235 = vperm.xlu0 %8234, %v7987
        %v8236 = vpop.permute.xlu0 %8235
        %8238 = vset.pattern.permute.xlu0 0
        %8239 = vperm.xlu0 %8238, %v7988
        %v8240 = vpop.permute.xlu0 %8239
        %8242 = vset.pattern.permute.xlu0 0
        %8243 = vperm.xlu0 %8242, %v7989
        %v8244 = vpop.permute.xlu0 %8243
        %v8246 = vmul.f32 %v4919, %v7992
        %v8247 = vmul.f32 %v4921, %v7996
        %v8248 = vmul.f32 %v4924, %v8000
        %v8249 = vmul.f32 %v4926, %v8004
        %v8250 = vmul.f32 %v4929, %v8008
        %v8251 = vmul.f32 %v4931, %v8012
        %v8252 = vmul.f32 %v4934, %v8016
        %v8253 = vmul.f32 %v4936, %v8020
        %v8254 = vmul.f32 %v4939, %v8024
        %v8255 = vmul.f32 %v4941, %v8028
        %v8256 = vmul.f32 %v4944, %v8032
        %v8257 = vmul.f32 %v4946, %v8036
        %v8258 = vmul.f32 %v4949, %v8040
        %v8259 = vmul.f32 %v4951, %v8044
        %v8260 = vmul.f32 %v4954, %v8048
        %v8261 = vmul.f32 %v4956, %v8052
        %v8262 = vmul.f32 %v4959, %v8056
        %v8263 = vmul.f32 %v4961, %v8060
        %v8264 = vmul.f32 %v4964, %v8064
        %v8265 = vmul.f32 %v4966, %v8068
        %v8266 = vmul.f32 %v4969, %v8072
        %v8267 = vmul.f32 %v4971, %v8076
        %v8268 = vmul.f32 %v4974, %v8080
        %v8269 = vmul.f32 %v4976, %v8084
        %v8270 = vmul.f32 %v4979, %v8088
        %v8271 = vmul.f32 %v4981, %v8092
        %v8272 = vmul.f32 %v4984, %v8096
        %v8273 = vmul.f32 %v4986, %v8100
        %v8274 = vmul.f32 %v4989, %v8104
        %v8275 = vmul.f32 %v4991, %v8108
        %v8276 = vmul.f32 %v4994, %v8112
        %v8277 = vmul.f32 %v4996, %v8116
        %v8278 = vmul.f32 %v4999, %v8120
        %v8279 = vmul.f32 %v5001, %v8124
        %v8280 = vmul.f32 %v5004, %v8128
        %v8281 = vmul.f32 %v5006, %v8132
        %v8282 = vmul.f32 %v5009, %v8136
        %v8283 = vmul.f32 %v5011, %v8140
        %v8284 = vmul.f32 %v5014, %v8144
        %v8285 = vmul.f32 %v5016, %v8148
        %v8286 = vmul.f32 %v5019, %v8152
        %v8287 = vmul.f32 %v5021, %v8156
        %v8288 = vmul.f32 %v5024, %v8160
        %v8289 = vmul.f32 %v5026, %v8164
        %v8290 = vmul.f32 %v5029, %v8168
        %v8291 = vmul.f32 %v5031, %v8172
        %v8292 = vmul.f32 %v5034, %v8176
        %v8293 = vmul.f32 %v5036, %v8180
        %v8294 = vmul.f32 %v5039, %v8184
        %v8295 = vmul.f32 %v5041, %v8188
        %v8296 = vmul.f32 %v5044, %v8192
        %v8297 = vmul.f32 %v5046, %v8196
        %v8298 = vmul.f32 %v5049, %v8200
        %v8299 = vmul.f32 %v5051, %v8204
        %v8300 = vmul.f32 %v5054, %v8208
        %v8301 = vmul.f32 %v5056, %v8212
        %v8302 = vmul.f32 %v5059, %v8216
        %v8303 = vmul.f32 %v5061, %v8220
        %v8304 = vmul.f32 %v5064, %v8224
        %v8305 = vmul.f32 %v5066, %v8228
        %v8306 = vmul.f32 %v5069, %v8232
        %v8307 = vmul.f32 %v5071, %v8236
        %v8308 = vmul.f32 %v5074, %v8240
        %v8309 = vmul.f32 %v5076, %v8244
        %v8310 = vmul.f32 %v5079, %v7992
        %v8311 = vmul.f32 %v5081, %v7996
        %v8312 = vmul.f32 %v5084, %v8000
        %v8313 = vmul.f32 %v5086, %v8004
        %v8314 = vmul.f32 %v5089, %v8008
        %v8315 = vmul.f32 %v5091, %v8012
        %v8316 = vmul.f32 %v5094, %v8016
        %v8317 = vmul.f32 %v5096, %v8020
        %v8318 = vmul.f32 %v5099, %v8024
        %v8319 = vmul.f32 %v5101, %v8028
        %v8320 = vmul.f32 %v5104, %v8032
        %v8321 = vmul.f32 %v5106, %v8036
        %v8322 = vmul.f32 %v5109, %v8040
        %v8323 = vmul.f32 %v5111, %v8044
        %v8324 = vmul.f32 %v5114, %v8048
        %v8325 = vmul.f32 %v5116, %v8052
        %v8326 = vmul.f32 %v5119, %v8056
        %v8327 = vmul.f32 %v5121, %v8060
        %v8328 = vmul.f32 %v5124, %v8064
        %v8329 = vmul.f32 %v5126, %v8068
        %v8330 = vmul.f32 %v5129, %v8072
        %v8331 = vmul.f32 %v5131, %v8076
        %v8332 = vmul.f32 %v5134, %v8080
        %v8333 = vmul.f32 %v5136, %v8084
        %v8334 = vmul.f32 %v5139, %v8088
        %v8335 = vmul.f32 %v5141, %v8092
        %v8336 = vmul.f32 %v5144, %v8096
        %v8337 = vmul.f32 %v5146, %v8100
        %v8338 = vmul.f32 %v5149, %v8104
        %v8339 = vmul.f32 %v5151, %v8108
        %v8340 = vmul.f32 %v5154, %v8112
        %v8341 = vmul.f32 %v5156, %v8116
        %v8342 = vmul.f32 %v5159, %v8120
        %v8343 = vmul.f32 %v5161, %v8124
        %v8344 = vmul.f32 %v5164, %v8128
        %v8345 = vmul.f32 %v5166, %v8132
        %v8346 = vmul.f32 %v5169, %v8136
        %v8347 = vmul.f32 %v5171, %v8140
        %v8348 = vmul.f32 %v5174, %v8144
        %v8349 = vmul.f32 %v5176, %v8148
        %v8350 = vmul.f32 %v5179, %v8152
        %v8351 = vmul.f32 %v5181, %v8156
        %v8352 = vmul.f32 %v5184, %v8160
        %v8353 = vmul.f32 %v5186, %v8164
        %v8354 = vmul.f32 %v5189, %v8168
        %v8355 = vmul.f32 %v5191, %v8172
        %v8356 = vmul.f32 %v5194, %v8176
        %v8357 = vmul.f32 %v5196, %v8180
        %v8358 = vmul.f32 %v5199, %v8184
        %v8359 = vmul.f32 %v5201, %v8188
        %v8360 = vmul.f32 %v5204, %v8192
        %v8361 = vmul.f32 %v5206, %v8196
        %v8362 = vmul.f32 %v5209, %v8200
        %v8363 = vmul.f32 %v5211, %v8204
        %v8364 = vmul.f32 %v5214, %v8208
        %v8365 = vmul.f32 %v5216, %v8212
        %v8366 = vmul.f32 %v5219, %v8216
        %v8367 = vmul.f32 %v5221, %v8220
        %v8368 = vmul.f32 %v5224, %v8224
        %v8369 = vmul.f32 %v5226, %v8228
        %v8370 = vmul.f32 %v5229, %v8232
        %v8371 = vmul.f32 %v5231, %v8236
        %v8372 = vmul.f32 %v5234, %v8240
        %v8373 = vmul.f32 %v5236, %v8244
        %v8438 = vperm.slane %v7798, 0
        %v8439 = vperm.slane %v7799, 0
        %v8440 = vperm.slane %v7800, 0
        %v8441 = vperm.slane %v7801, 0
        %v8442 = vperm.slane %v7802, 0
        %v8443 = vperm.slane %v7803, 0
        %v8444 = vperm.slane %v7804, 0
        %v8445 = vperm.slane %v7805, 0
        %v8446 = vperm.slane %v7806, 0
        %v8447 = vperm.slane %v7807, 0
        %v8448 = vperm.slane %v7808, 0
        %v8449 = vperm.slane %v7809, 0
        %v8450 = vperm.slane %v7810, 0
        %v8451 = vperm.slane %v7811, 0
        %v8452 = vperm.slane %v7812, 0
        %v8453 = vperm.slane %v7813, 0
        %v8454 = vperm.slane %v7814, 0
        %v8455 = vperm.slane %v7815, 0
        %v8456 = vperm.slane %v7816, 0
        %v8457 = vperm.slane %v7817, 0
        %v8458 = vperm.slane %v7818, 0
        %v8459 = vperm.slane %v7819, 0
        %v8460 = vperm.slane %v7820, 0
        %v8461 = vperm.slane %v7821, 0
        %v8462 = vperm.slane %v7822, 0
        %v8463 = vperm.slane %v7823, 0
        %v8464 = vperm.slane %v7824, 0
        %v8465 = vperm.slane %v7825, 0
        %v8466 = vperm.slane %v7826, 0
        %v8467 = vperm.slane %v7827, 0
        %v8468 = vperm.slane %v7828, 0
        %v8469 = vperm.slane %v7829, 0
        %v8470 = vperm.slane %v7830, 0
        %v8471 = vperm.slane %v7831, 0
        %v8472 = vperm.slane %v7832, 0
        %v8473 = vperm.slane %v7833, 0
        %v8474 = vperm.slane %v7834, 0
        %v8475 = vperm.slane %v7835, 0
        %v8476 = vperm.slane %v7836, 0
        %v8477 = vperm.slane %v7837, 0
        %v8478 = vperm.slane %v7838, 0
        %v8479 = vperm.slane %v7839, 0
        %v8480 = vperm.slane %v7840, 0
        %v8481 = vperm.slane %v7841, 0
        %v8482 = vperm.slane %v7842, 0
        %v8483 = vperm.slane %v7843, 0
        %v8484 = vperm.slane %v7844, 0
        %v8485 = vperm.slane %v7845, 0
        %v8486 = vperm.slane %v7846, 0
        %v8487 = vperm.slane %v7847, 0
        %v8488 = vperm.slane %v7848, 0
        %v8489 = vperm.slane %v7849, 0
        %v8490 = vperm.slane %v7850, 0
        %v8491 = vperm.slane %v7851, 0
        %v8492 = vperm.slane %v7852, 0
        %v8493 = vperm.slane %v7853, 0
        %v8494 = vperm.slane %v7854, 0
        %v8495 = vperm.slane %v7855, 0
        %v8496 = vperm.slane %v7856, 0
        %v8497 = vperm.slane %v7857, 0
        %v8498 = vperm.slane %v7858, 0
        %v8499 = vperm.slane %v7859, 0
        %v8500 = vperm.slane %v7860, 0
        %v8501 = vperm.slane %v7861, 0
        %8502 = vset.pattern.permute.xlu0 0
        %8503 = vperm.xlu0 %8502, %v8438
        %v8504 = vpop.permute.xlu0 %8503
        %8506 = vset.pattern.permute.xlu0 0
        %8507 = vperm.xlu0 %8506, %v8439
        %v8508 = vpop.permute.xlu0 %8507
        %8510 = vset.pattern.permute.xlu0 0
        %8511 = vperm.xlu0 %8510, %v8440
        %v8512 = vpop.permute.xlu0 %8511
        %8514 = vset.pattern.permute.xlu0 0
        %8515 = vperm.xlu0 %8514, %v8441
        %v8516 = vpop.permute.xlu0 %8515
        %8518 = vset.pattern.permute.xlu0 0
        %8519 = vperm.xlu0 %8518, %v8442
        %v8520 = vpop.permute.xlu0 %8519
        %8522 = vset.pattern.permute.xlu0 0
        %8523 = vperm.xlu0 %8522, %v8443
        %v8524 = vpop.permute.xlu0 %8523
        %8526 = vset.pattern.permute.xlu0 0
        %8527 = vperm.xlu0 %8526, %v8444
        %v8528 = vpop.permute.xlu0 %8527
        %8530 = vset.pattern.permute.xlu0 0
        %8531 = vperm.xlu0 %8530, %v8445
        %v8532 = vpop.permute.xlu0 %8531
        %8534 = vset.pattern.permute.xlu0 0
        %8535 = vperm.xlu0 %8534, %v8446
        %v8536 = vpop.permute.xlu0 %8535
        %8538 = vset.pattern.permute.xlu0 0
        %8539 = vperm.xlu0 %8538, %v8447
        %v8540 = vpop.permute.xlu0 %8539
        %8542 = vset.pattern.permute.xlu0 0
        %8543 = vperm.xlu0 %8542, %v8448
        %v8544 = vpop.permute.xlu0 %8543
        %8546 = vset.pattern.permute.xlu0 0
        %8547 = vperm.xlu0 %8546, %v8449
        %v8548 = vpop.permute.xlu0 %8547
        %8550 = vset.pattern.permute.xlu0 0
        %8551 = vperm.xlu0 %8550, %v8450
        %v8552 = vpop.permute.xlu0 %8551
        %8554 = vset.pattern.permute.xlu0 0
        %8555 = vperm.xlu0 %8554, %v8451
        %v8556 = vpop.permute.xlu0 %8555
        %8558 = vset.pattern.permute.xlu0 0
        %8559 = vperm.xlu0 %8558, %v8452
        %v8560 = vpop.permute.xlu0 %8559
        %8562 = vset.pattern.permute.xlu0 0
        %8563 = vperm.xlu0 %8562, %v8453
        %v8564 = vpop.permute.xlu0 %8563
        %8566 = vset.pattern.permute.xlu0 0
        %8567 = vperm.xlu0 %8566, %v8454
        %v8568 = vpop.permute.xlu0 %8567
        %8570 = vset.pattern.permute.xlu0 0
        %8571 = vperm.xlu0 %8570, %v8455
        %v8572 = vpop.permute.xlu0 %8571
        %8574 = vset.pattern.permute.xlu0 0
        %8575 = vperm.xlu0 %8574, %v8456
        %v8576 = vpop.permute.xlu0 %8575
        %8578 = vset.pattern.permute.xlu0 0
        %8579 = vperm.xlu0 %8578, %v8457
        %v8580 = vpop.permute.xlu0 %8579
        %8582 = vset.pattern.permute.xlu0 0
        %8583 = vperm.xlu0 %8582, %v8458
        %v8584 = vpop.permute.xlu0 %8583
        %8586 = vset.pattern.permute.xlu0 0
        %8587 = vperm.xlu0 %8586, %v8459
        %v8588 = vpop.permute.xlu0 %8587
        %8590 = vset.pattern.permute.xlu0 0
        %8591 = vperm.xlu0 %8590, %v8460
        %v8592 = vpop.permute.xlu0 %8591
        %8594 = vset.pattern.permute.xlu0 0
        %8595 = vperm.xlu0 %8594, %v8461
        %v8596 = vpop.permute.xlu0 %8595
        %8598 = vset.pattern.permute.xlu0 0
        %8599 = vperm.xlu0 %8598, %v8462
        %v8600 = vpop.permute.xlu0 %8599
        %8602 = vset.pattern.permute.xlu0 0
        %8603 = vperm.xlu0 %8602, %v8463
        %v8604 = vpop.permute.xlu0 %8603
        %8606 = vset.pattern.permute.xlu0 0
        %8607 = vperm.xlu0 %8606, %v8464
        %v8608 = vpop.permute.xlu0 %8607
        %8610 = vset.pattern.permute.xlu0 0
        %8611 = vperm.xlu0 %8610, %v8465
        %v8612 = vpop.permute.xlu0 %8611
        %8614 = vset.pattern.permute.xlu0 0
        %8615 = vperm.xlu0 %8614, %v8466
        %v8616 = vpop.permute.xlu0 %8615
        %8618 = vset.pattern.permute.xlu0 0
        %8619 = vperm.xlu0 %8618, %v8467
        %v8620 = vpop.permute.xlu0 %8619
        %8622 = vset.pattern.permute.xlu0 0
        %8623 = vperm.xlu0 %8622, %v8468
        %v8624 = vpop.permute.xlu0 %8623
        %8626 = vset.pattern.permute.xlu0 0
        %8627 = vperm.xlu0 %8626, %v8469
        %v8628 = vpop.permute.xlu0 %8627
        %8630 = vset.pattern.permute.xlu0 0
        %8631 = vperm.xlu0 %8630, %v8470
        %v8632 = vpop.permute.xlu0 %8631
        %8634 = vset.pattern.permute.xlu0 0
        %8635 = vperm.xlu0 %8634, %v8471
        %v8636 = vpop.permute.xlu0 %8635
        %8638 = vset.pattern.permute.xlu0 0
        %8639 = vperm.xlu0 %8638, %v8472
        %v8640 = vpop.permute.xlu0 %8639
        %8642 = vset.pattern.permute.xlu0 0
        %8643 = vperm.xlu0 %8642, %v8473
        %v8644 = vpop.permute.xlu0 %8643
        %8646 = vset.pattern.permute.xlu0 0
        %8647 = vperm.xlu0 %8646, %v8474
        %v8648 = vpop.permute.xlu0 %8647
        %8650 = vset.pattern.permute.xlu0 0
        %8651 = vperm.xlu0 %8650, %v8475
        %v8652 = vpop.permute.xlu0 %8651
        %8654 = vset.pattern.permute.xlu0 0
        %8655 = vperm.xlu0 %8654, %v8476
        %v8656 = vpop.permute.xlu0 %8655
        %8658 = vset.pattern.permute.xlu0 0
        %8659 = vperm.xlu0 %8658, %v8477
        %v8660 = vpop.permute.xlu0 %8659
        %8662 = vset.pattern.permute.xlu0 0
        %8663 = vperm.xlu0 %8662, %v8478
        %v8664 = vpop.permute.xlu0 %8663
        %8666 = vset.pattern.permute.xlu0 0
        %8667 = vperm.xlu0 %8666, %v8479
        %v8668 = vpop.permute.xlu0 %8667
        %8670 = vset.pattern.permute.xlu0 0
        %8671 = vperm.xlu0 %8670, %v8480
        %v8672 = vpop.permute.xlu0 %8671
        %8674 = vset.pattern.permute.xlu0 0
        %8675 = vperm.xlu0 %8674, %v8481
        %v8676 = vpop.permute.xlu0 %8675
        %8678 = vset.pattern.permute.xlu0 0
        %8679 = vperm.xlu0 %8678, %v8482
        %v8680 = vpop.permute.xlu0 %8679
        %8682 = vset.pattern.permute.xlu0 0
        %8683 = vperm.xlu0 %8682, %v8483
        %v8684 = vpop.permute.xlu0 %8683
        %8686 = vset.pattern.permute.xlu0 0
        %8687 = vperm.xlu0 %8686, %v8484
        %v8688 = vpop.permute.xlu0 %8687
        %8690 = vset.pattern.permute.xlu0 0
        %8691 = vperm.xlu0 %8690, %v8485
        %v8692 = vpop.permute.xlu0 %8691
        %8694 = vset.pattern.permute.xlu0 0
        %8695 = vperm.xlu0 %8694, %v8486
        %v8696 = vpop.permute.xlu0 %8695
        %8698 = vset.pattern.permute.xlu0 0
        %8699 = vperm.xlu0 %8698, %v8487
        %v8700 = vpop.permute.xlu0 %8699
        %8702 = vset.pattern.permute.xlu0 0
        %8703 = vperm.xlu0 %8702, %v8488
        %v8704 = vpop.permute.xlu0 %8703
        %8706 = vset.pattern.permute.xlu0 0
        %8707 = vperm.xlu0 %8706, %v8489
        %v8708 = vpop.permute.xlu0 %8707
        %8710 = vset.pattern.permute.xlu0 0
        %8711 = vperm.xlu0 %8710, %v8490
        %v8712 = vpop.permute.xlu0 %8711
        %8714 = vset.pattern.permute.xlu0 0
        %8715 = vperm.xlu0 %8714, %v8491
        %v8716 = vpop.permute.xlu0 %8715
        %8718 = vset.pattern.permute.xlu0 0
        %8719 = vperm.xlu0 %8718, %v8492
        %v8720 = vpop.permute.xlu0 %8719
        %8722 = vset.pattern.permute.xlu0 0
        %8723 = vperm.xlu0 %8722, %v8493
        %v8724 = vpop.permute.xlu0 %8723
        %8726 = vset.pattern.permute.xlu0 0
        %8727 = vperm.xlu0 %8726, %v8494
        %v8728 = vpop.permute.xlu0 %8727
        %8730 = vset.pattern.permute.xlu0 0
        %8731 = vperm.xlu0 %8730, %v8495
        %v8732 = vpop.permute.xlu0 %8731
        %8734 = vset.pattern.permute.xlu0 0
        %8735 = vperm.xlu0 %8734, %v8496
        %v8736 = vpop.permute.xlu0 %8735
        %8738 = vset.pattern.permute.xlu0 0
        %8739 = vperm.xlu0 %8738, %v8497
        %v8740 = vpop.permute.xlu0 %8739
        %8742 = vset.pattern.permute.xlu0 0
        %8743 = vperm.xlu0 %8742, %v8498
        %v8744 = vpop.permute.xlu0 %8743
        %8746 = vset.pattern.permute.xlu0 0
        %8747 = vperm.xlu0 %8746, %v8499
        %v8748 = vpop.permute.xlu0 %8747
        %8750 = vset.pattern.permute.xlu0 0
        %8751 = vperm.xlu0 %8750, %v8500
        %v8752 = vpop.permute.xlu0 %8751
        %8754 = vset.pattern.permute.xlu0 0
        %8755 = vperm.xlu0 %8754, %v8501
        %v8756 = vpop.permute.xlu0 %8755
        %v8758 = vadd.f32 %v8246, %v8504
        %v8759 = vadd.f32 %v8247, %v8508
        %v8760 = vadd.f32 %v8248, %v8512
        %v8761 = vadd.f32 %v8249, %v8516
        %v8762 = vadd.f32 %v8250, %v8520
        %v8763 = vadd.f32 %v8251, %v8524
        %v8764 = vadd.f32 %v8252, %v8528
        %v8765 = vadd.f32 %v8253, %v8532
        %v8766 = vadd.f32 %v8254, %v8536
        %v8767 = vadd.f32 %v8255, %v8540
        %v8768 = vadd.f32 %v8256, %v8544
        %v8769 = vadd.f32 %v8257, %v8548
        %v8770 = vadd.f32 %v8258, %v8552
        %v8771 = vadd.f32 %v8259, %v8556
        %v8772 = vadd.f32 %v8260, %v8560
        %v8773 = vadd.f32 %v8261, %v8564
        %v8774 = vadd.f32 %v8262, %v8568
        %v8775 = vadd.f32 %v8263, %v8572
        %v8776 = vadd.f32 %v8264, %v8576
        %v8777 = vadd.f32 %v8265, %v8580
        %v8778 = vadd.f32 %v8266, %v8584
        %v8779 = vadd.f32 %v8267, %v8588
        %v8780 = vadd.f32 %v8268, %v8592
        %v8781 = vadd.f32 %v8269, %v8596
        %v8782 = vadd.f32 %v8270, %v8600
        %v8783 = vadd.f32 %v8271, %v8604
        %v8784 = vadd.f32 %v8272, %v8608
        %v8785 = vadd.f32 %v8273, %v8612
        %v8786 = vadd.f32 %v8274, %v8616
        %v8787 = vadd.f32 %v8275, %v8620
        %v8788 = vadd.f32 %v8276, %v8624
        %v8789 = vadd.f32 %v8277, %v8628
        %v8790 = vadd.f32 %v8278, %v8632
        %v8791 = vadd.f32 %v8279, %v8636
        %v8792 = vadd.f32 %v8280, %v8640
        %v8793 = vadd.f32 %v8281, %v8644
        %v8794 = vadd.f32 %v8282, %v8648
        %v8795 = vadd.f32 %v8283, %v8652
        %v8796 = vadd.f32 %v8284, %v8656
        %v8797 = vadd.f32 %v8285, %v8660
        %v8798 = vadd.f32 %v8286, %v8664
        %v8799 = vadd.f32 %v8287, %v8668
        %v8800 = vadd.f32 %v8288, %v8672
        %v8801 = vadd.f32 %v8289, %v8676
        %v8802 = vadd.f32 %v8290, %v8680
        %v8803 = vadd.f32 %v8291, %v8684
        %v8804 = vadd.f32 %v8292, %v8688
        %v8805 = vadd.f32 %v8293, %v8692
        %v8806 = vadd.f32 %v8294, %v8696
        %v8807 = vadd.f32 %v8295, %v8700
        %v8808 = vadd.f32 %v8296, %v8704
        %v8809 = vadd.f32 %v8297, %v8708
        %v8810 = vadd.f32 %v8298, %v8712
        %v8811 = vadd.f32 %v8299, %v8716
        %v8812 = vadd.f32 %v8300, %v8720
        %v8813 = vadd.f32 %v8301, %v8724
        %v8814 = vadd.f32 %v8302, %v8728
        %v8815 = vadd.f32 %v8303, %v8732
        %v8816 = vadd.f32 %v8304, %v8736
        %v8817 = vadd.f32 %v8305, %v8740
        %v8818 = vadd.f32 %v8306, %v8744
        %v8819 = vadd.f32 %v8307, %v8748
        %v8820 = vadd.f32 %v8308, %v8752
        %v8821 = vadd.f32 %v8309, %v8756
        %v8822 = vadd.f32 %v8310, %v8504
        %v8823 = vadd.f32 %v8311, %v8508
        %v8824 = vadd.f32 %v8312, %v8512
        %v8825 = vadd.f32 %v8313, %v8516
        %v8826 = vadd.f32 %v8314, %v8520
        %v8827 = vadd.f32 %v8315, %v8524
        %v8828 = vadd.f32 %v8316, %v8528
        %v8829 = vadd.f32 %v8317, %v8532
        %v8830 = vadd.f32 %v8318, %v8536
        %v8831 = vadd.f32 %v8319, %v8540
        %v8832 = vadd.f32 %v8320, %v8544
        %v8833 = vadd.f32 %v8321, %v8548
        %v8834 = vadd.f32 %v8322, %v8552
        %v8835 = vadd.f32 %v8323, %v8556
        %v8836 = vadd.f32 %v8324, %v8560
        %v8837 = vadd.f32 %v8325, %v8564
        %v8838 = vadd.f32 %v8326, %v8568
        %v8839 = vadd.f32 %v8327, %v8572
        %v8840 = vadd.f32 %v8328, %v8576
        %v8841 = vadd.f32 %v8329, %v8580
        %v8842 = vadd.f32 %v8330, %v8584
        %v8843 = vadd.f32 %v8331, %v8588
        %v8844 = vadd.f32 %v8332, %v8592
        %v8845 = vadd.f32 %v8333, %v8596
        %v8846 = vadd.f32 %v8334, %v8600
        %v8847 = vadd.f32 %v8335, %v8604
        %v8848 = vadd.f32 %v8336, %v8608
        %v8849 = vadd.f32 %v8337, %v8612
        %v8850 = vadd.f32 %v8338, %v8616
        %v8851 = vadd.f32 %v8339, %v8620
        %v8852 = vadd.f32 %v8340, %v8624
        %v8853 = vadd.f32 %v8341, %v8628
        %v8854 = vadd.f32 %v8342, %v8632
        %v8855 = vadd.f32 %v8343, %v8636
        %v8856 = vadd.f32 %v8344, %v8640
        %v8857 = vadd.f32 %v8345, %v8644
        %v8858 = vadd.f32 %v8346, %v8648
        %v8859 = vadd.f32 %v8347, %v8652
        %v8860 = vadd.f32 %v8348, %v8656
        %v8861 = vadd.f32 %v8349, %v8660
        %v8862 = vadd.f32 %v8350, %v8664
        %v8863 = vadd.f32 %v8351, %v8668
        %v8864 = vadd.f32 %v8352, %v8672
        %v8865 = vadd.f32 %v8353, %v8676
        %v8866 = vadd.f32 %v8354, %v8680
        %v8867 = vadd.f32 %v8355, %v8684
        %v8868 = vadd.f32 %v8356, %v8688
        %v8869 = vadd.f32 %v8357, %v8692
        %v8870 = vadd.f32 %v8358, %v8696
        %v8871 = vadd.f32 %v8359, %v8700
        %v8872 = vadd.f32 %v8360, %v8704
        %v8873 = vadd.f32 %v8361, %v8708
        %v8874 = vadd.f32 %v8362, %v8712
        %v8875 = vadd.f32 %v8363, %v8716
        %v8876 = vadd.f32 %v8364, %v8720
        %v8877 = vadd.f32 %v8365, %v8724
        %v8878 = vadd.f32 %v8366, %v8728
        %v8879 = vadd.f32 %v8367, %v8732
        %v8880 = vadd.f32 %v8368, %v8736
        %v8881 = vadd.f32 %v8369, %v8740
        %v8882 = vadd.f32 %v8370, %v8744
        %v8883 = vadd.f32 %v8371, %v8748
        %v8884 = vadd.f32 %v8372, %v8752
        %v8885 = vadd.f32 %v8373, %v8756
        %v8886 = vmax.f32 %v8758, 0.0
        %v8887 = vmax.f32 %v8759, 0.0
        %v8888 = vmax.f32 %v8760, 0.0
        %v8889 = vmax.f32 %v8761, 0.0
        %v8890 = vmax.f32 %v8762, 0.0
        %v8891 = vmax.f32 %v8763, 0.0
        %v8892 = vmax.f32 %v8764, 0.0
        %v8893 = vmax.f32 %v8765, 0.0
        %v8894 = vmax.f32 %v8766, 0.0
        %v8895 = vmax.f32 %v8767, 0.0
        %v8896 = vmax.f32 %v8768, 0.0
        %v8897 = vmax.f32 %v8769, 0.0
        %v8898 = vmax.f32 %v8770, 0.0
        %v8899 = vmax.f32 %v8771, 0.0
        %v8900 = vmax.f32 %v8772, 0.0
        %v8901 = vmax.f32 %v8773, 0.0
        %v8902 = vmax.f32 %v8774, 0.0
        %v8903 = vmax.f32 %v8775, 0.0
        %v8904 = vmax.f32 %v8776, 0.0
        %v8905 = vmax.f32 %v8777, 0.0
        %v8906 = vmax.f32 %v8778, 0.0
        %v8907 = vmax.f32 %v8779, 0.0
        %v8908 = vmax.f32 %v8780, 0.0
        %v8909 = vmax.f32 %v8781, 0.0
        %v8910 = vmax.f32 %v8782, 0.0
        %v8911 = vmax.f32 %v8783, 0.0
        %v8912 = vmax.f32 %v8784, 0.0
        %v8913 = vmax.f32 %v8785, 0.0
        %v8914 = vmax.f32 %v8786, 0.0
        %v8915 = vmax.f32 %v8787, 0.0
        %v8916 = vmax.f32 %v8788, 0.0
        %v8917 = vmax.f32 %v8789, 0.0
        %v8918 = vmax.f32 %v8790, 0.0
        %v8919 = vmax.f32 %v8791, 0.0
        %v8920 = vmax.f32 %v8792, 0.0
        %v8921 = vmax.f32 %v8793, 0.0
        %v8922 = vmax.f32 %v8794, 0.0
        %v8923 = vmax.f32 %v8795, 0.0
        %v8924 = vmax.f32 %v8796, 0.0
        %v8925 = vmax.f32 %v8797, 0.0
        %v8926 = vmax.f32 %v8798, 0.0
        %v8927 = vmax.f32 %v8799, 0.0
        %v8928 = vmax.f32 %v8800, 0.0
        %v8929 = vmax.f32 %v8801, 0.0
        %v8930 = vmax.f32 %v8802, 0.0
        %v8931 = vmax.f32 %v8803, 0.0
        %v8932 = vmax.f32 %v8804, 0.0
        %v8933 = vmax.f32 %v8805, 0.0
        %v8934 = vmax.f32 %v8806, 0.0
        %v8935 = vmax.f32 %v8807, 0.0
        %v8936 = vmax.f32 %v8808, 0.0
        %v8937 = vmax.f32 %v8809, 0.0
        %v8938 = vmax.f32 %v8810, 0.0
        %v8939 = vmax.f32 %v8811, 0.0
        %v8940 = vmax.f32 %v8812, 0.0
        %v8941 = vmax.f32 %v8813, 0.0
        %v8942 = vmax.f32 %v8814, 0.0
        %v8943 = vmax.f32 %v8815, 0.0
        %v8944 = vmax.f32 %v8816, 0.0
        %v8945 = vmax.f32 %v8817, 0.0
        %v8946 = vmax.f32 %v8818, 0.0
        %v8947 = vmax.f32 %v8819, 0.0
        %v8948 = vmax.f32 %v8820, 0.0
        %v8949 = vmax.f32 %v8821, 0.0
        %v8950 = vmax.f32 %v8822, 0.0
        %v8951 = vmax.f32 %v8823, 0.0
        %v8952 = vmax.f32 %v8824, 0.0
        %v8953 = vmax.f32 %v8825, 0.0
        %v8954 = vmax.f32 %v8826, 0.0
        %v8955 = vmax.f32 %v8827, 0.0
        %v8956 = vmax.f32 %v8828, 0.0
        %v8957 = vmax.f32 %v8829, 0.0
        %v8958 = vmax.f32 %v8830, 0.0
        %v8959 = vmax.f32 %v8831, 0.0
        %v8960 = vmax.f32 %v8832, 0.0
        %v8961 = vmax.f32 %v8833, 0.0
        %v8962 = vmax.f32 %v8834, 0.0
        %v8963 = vmax.f32 %v8835, 0.0
        %v8964 = vmax.f32 %v8836, 0.0
        %v8965 = vmax.f32 %v8837, 0.0
        %v8966 = vmax.f32 %v8838, 0.0
        %v8967 = vmax.f32 %v8839, 0.0
        %v8968 = vmax.f32 %v8840, 0.0
        %v8969 = vmax.f32 %v8841, 0.0
        %v8970 = vmax.f32 %v8842, 0.0
        %v8971 = vmax.f32 %v8843, 0.0
        %v8972 = vmax.f32 %v8844, 0.0
        %v8973 = vmax.f32 %v8845, 0.0
        %v8974 = vmax.f32 %v8846, 0.0
        %v8975 = vmax.f32 %v8847, 0.0
        %v8976 = vmax.f32 %v8848, 0.0
        %v8977 = vmax.f32 %v8849, 0.0
        %v8978 = vmax.f32 %v8850, 0.0
        %v8979 = vmax.f32 %v8851, 0.0
        %v8980 = vmax.f32 %v8852, 0.0
        %v8981 = vmax.f32 %v8853, 0.0
        %v8982 = vmax.f32 %v8854, 0.0
        %v8983 = vmax.f32 %v8855, 0.0
        %v8984 = vmax.f32 %v8856, 0.0
        %v8985 = vmax.f32 %v8857, 0.0
        %v8986 = vmax.f32 %v8858, 0.0
        %v8987 = vmax.f32 %v8859, 0.0
        %v8988 = vmax.f32 %v8860, 0.0
        %v8989 = vmax.f32 %v8861, 0.0
        %v8990 = vmax.f32 %v8862, 0.0
        %v8991 = vmax.f32 %v8863, 0.0
        %v8992 = vmax.f32 %v8864, 0.0
        %v8993 = vmax.f32 %v8865, 0.0
        %v8994 = vmax.f32 %v8866, 0.0
        %v8995 = vmax.f32 %v8867, 0.0
        %v8996 = vmax.f32 %v8868, 0.0
        %v8997 = vmax.f32 %v8869, 0.0
        %v8998 = vmax.f32 %v8870, 0.0
        %v8999 = vmax.f32 %v8871, 0.0
        %v9000 = vmax.f32 %v8872, 0.0
        %v9001 = vmax.f32 %v8873, 0.0
        %v9002 = vmax.f32 %v8874, 0.0
        %v9003 = vmax.f32 %v8875, 0.0
        %v9004 = vmax.f32 %v8876, 0.0
        %v9005 = vmax.f32 %v8877, 0.0
        %v9006 = vmax.f32 %v8878, 0.0
        %v9007 = vmax.f32 %v8879, 0.0
        %v9008 = vmax.f32 %v8880, 0.0
        %v9009 = vmax.f32 %v8881, 0.0
        %v9010 = vmax.f32 %v8882, 0.0
        %v9011 = vmax.f32 %v8883, 0.0
        %v9012 = vmax.f32 %v8884, 0.0
        %v9013 = vmax.f32 %v8885, 0.0
        %v9014 = vpack.c.bf16 %v8886, %v8886
        %v9015 = vpack.c.bf16 %v8887, %v8887
        %v9016 = vpack.c.bf16 %v8888, %v8888
        %v9017 = vpack.c.bf16 %v8889, %v8889
        %v9018 = vpack.c.bf16 %v8890, %v8890
        %v9019 = vpack.c.bf16 %v8891, %v8891
        %v9020 = vpack.c.bf16 %v8892, %v8892
        %v9021 = vpack.c.bf16 %v8893, %v8893
        %v9022 = vpack.c.bf16 %v8894, %v8894
        %v9023 = vpack.c.bf16 %v8895, %v8895
        %v9024 = vpack.c.bf16 %v8896, %v8896
        %v9025 = vpack.c.bf16 %v8897, %v8897
        %v9026 = vpack.c.bf16 %v8898, %v8898
        %v9027 = vpack.c.bf16 %v8899, %v8899
        %v9028 = vpack.c.bf16 %v8900, %v8900
        %v9029 = vpack.c.bf16 %v8901, %v8901
        %v9030 = vpack.c.bf16 %v8902, %v8902
        %v9031 = vpack.c.bf16 %v8903, %v8903
        %v9032 = vpack.c.bf16 %v8904, %v8904
        %v9033 = vpack.c.bf16 %v8905, %v8905
        %v9034 = vpack.c.bf16 %v8906, %v8906
        %v9035 = vpack.c.bf16 %v8907, %v8907
        %v9036 = vpack.c.bf16 %v8908, %v8908
        %v9037 = vpack.c.bf16 %v8909, %v8909
        %v9038 = vpack.c.bf16 %v8910, %v8910
        %v9039 = vpack.c.bf16 %v8911, %v8911
        %v9040 = vpack.c.bf16 %v8912, %v8912
        %v9041 = vpack.c.bf16 %v8913, %v8913
        %v9042 = vpack.c.bf16 %v8914, %v8914
        %v9043 = vpack.c.bf16 %v8915, %v8915
        %v9044 = vpack.c.bf16 %v8916, %v8916
        %v9045 = vpack.c.bf16 %v8917, %v8917
        %v9046 = vpack.c.bf16 %v8918, %v8918
        %v9047 = vpack.c.bf16 %v8919, %v8919
        %v9048 = vpack.c.bf16 %v8920, %v8920
        %v9049 = vpack.c.bf16 %v8921, %v8921
        %v9050 = vpack.c.bf16 %v8922, %v8922
        %v9051 = vpack.c.bf16 %v8923, %v8923
        %v9052 = vpack.c.bf16 %v8924, %v8924
        %v9053 = vpack.c.bf16 %v8925, %v8925
        %v9054 = vpack.c.bf16 %v8926, %v8926
        %v9055 = vpack.c.bf16 %v8927, %v8927
        %v9056 = vpack.c.bf16 %v8928, %v8928
        %v9057 = vpack.c.bf16 %v8929, %v8929
        %v9058 = vpack.c.bf16 %v8930, %v8930
        %v9059 = vpack.c.bf16 %v8931, %v8931
        %v9060 = vpack.c.bf16 %v8932, %v8932
        %v9061 = vpack.c.bf16 %v8933, %v8933
        %v9062 = vpack.c.bf16 %v8934, %v8934
        %v9063 = vpack.c.bf16 %v8935, %v8935
        %v9064 = vpack.c.bf16 %v8936, %v8936
        %v9065 = vpack.c.bf16 %v8937, %v8937
        %v9066 = vpack.c.bf16 %v8938, %v8938
        %v9067 = vpack.c.bf16 %v8939, %v8939
        %v9068 = vpack.c.bf16 %v8940, %v8940
        %v9069 = vpack.c.bf16 %v8941, %v8941
        %v9070 = vpack.c.bf16 %v8942, %v8942
        %v9071 = vpack.c.bf16 %v8943, %v8943
        %v9072 = vpack.c.bf16 %v8944, %v8944
        %v9073 = vpack.c.bf16 %v8945, %v8945
        %v9074 = vpack.c.bf16 %v8946, %v8946
        %v9075 = vpack.c.bf16 %v8947, %v8947
        %v9076 = vpack.c.bf16 %v8948, %v8948
        %v9077 = vpack.c.bf16 %v8949, %v8949
        %v9078 = vpack.c.bf16 %v8950, %v8950
        %v9079 = vpack.c.bf16 %v8951, %v8951
        %v9080 = vpack.c.bf16 %v8952, %v8952
        %v9081 = vpack.c.bf16 %v8953, %v8953
        %v9082 = vpack.c.bf16 %v8954, %v8954
        %v9083 = vpack.c.bf16 %v8955, %v8955
        %v9084 = vpack.c.bf16 %v8956, %v8956
        %v9085 = vpack.c.bf16 %v8957, %v8957
        %v9086 = vpack.c.bf16 %v8958, %v8958
        %v9087 = vpack.c.bf16 %v8959, %v8959
        %v9088 = vpack.c.bf16 %v8960, %v8960
        %v9089 = vpack.c.bf16 %v8961, %v8961
        %v9090 = vpack.c.bf16 %v8962, %v8962
        %v9091 = vpack.c.bf16 %v8963, %v8963
        %v9092 = vpack.c.bf16 %v8964, %v8964
        %v9093 = vpack.c.bf16 %v8965, %v8965
        %v9094 = vpack.c.bf16 %v8966, %v8966
        %v9095 = vpack.c.bf16 %v8967, %v8967
        %v9096 = vpack.c.bf16 %v8968, %v8968
        %v9097 = vpack.c.bf16 %v8969, %v8969
        %v9098 = vpack.c.bf16 %v8970, %v8970
        %v9099 = vpack.c.bf16 %v8971, %v8971
        %v9100 = vpack.c.bf16 %v8972, %v8972
        %v9101 = vpack.c.bf16 %v8973, %v8973
        %v9102 = vpack.c.bf16 %v8974, %v8974
        %v9103 = vpack.c.bf16 %v8975, %v8975
        %v9104 = vpack.c.bf16 %v8976, %v8976
        %v9105 = vpack.c.bf16 %v8977, %v8977
        %v9106 = vpack.c.bf16 %v8978, %v8978
        %v9107 = vpack.c.bf16 %v8979, %v8979
        %v9108 = vpack.c.bf16 %v8980, %v8980
        %v9109 = vpack.c.bf16 %v8981, %v8981
        %v9110 = vpack.c.bf16 %v8982, %v8982
        %v9111 = vpack.c.bf16 %v8983, %v8983
        %v9112 = vpack.c.bf16 %v8984, %v8984
        %v9113 = vpack.c.bf16 %v8985, %v8985
        %v9114 = vpack.c.bf16 %v8986, %v8986
        %v9115 = vpack.c.bf16 %v8987, %v8987
        %v9116 = vpack.c.bf16 %v8988, %v8988
        %v9117 = vpack.c.bf16 %v8989, %v8989
        %v9118 = vpack.c.bf16 %v8990, %v8990
        %v9119 = vpack.c.bf16 %v8991, %v8991
        %v9120 = vpack.c.bf16 %v8992, %v8992
        %v9121 = vpack.c.bf16 %v8993, %v8993
        %v9122 = vpack.c.bf16 %v8994, %v8994
        %v9123 = vpack.c.bf16 %v8995, %v8995
        %v9124 = vpack.c.bf16 %v8996, %v8996
        %v9125 = vpack.c.bf16 %v8997, %v8997
        %v9126 = vpack.c.bf16 %v8998, %v8998
        %v9127 = vpack.c.bf16 %v8999, %v8999
        %v9128 = vpack.c.bf16 %v9000, %v9000
        %v9129 = vpack.c.bf16 %v9001, %v9001
        %v9130 = vpack.c.bf16 %v9002, %v9002
        %v9131 = vpack.c.bf16 %v9003, %v9003
        %v9132 = vpack.c.bf16 %v9004, %v9004
        %v9133 = vpack.c.bf16 %v9005, %v9005
        %v9134 = vpack.c.bf16 %v9006, %v9006
        %v9135 = vpack.c.bf16 %v9007, %v9007
        %v9136 = vpack.c.bf16 %v9008, %v9008
        %v9137 = vpack.c.bf16 %v9009, %v9009
        %v9138 = vpack.c.bf16 %v9010, %v9010
        %v9139 = vpack.c.bf16 %v9011, %v9011
        %v9140 = vpack.c.bf16 %v9012, %v9012
        %v9141 = vpack.c.bf16 %v9013, %v9013
        %v9142 = vld [vmem:[%s6] sm:$0xf]
        %v9143 = vld [vmem:[%s6 + $0x4] sm:$0xf]
        %v9144 = vld [vmem:[%s6 + $0x8] sm:$0xf]
        %v9145 = vld [vmem:[%s6 + $0xc] sm:$0xf]
        %v9146 = vld [vmem:[%s6 + $0x10] sm:$0xf]
        %v9147 = vld [vmem:[%s6 + $0x14] sm:$0xf]
        %v9148 = vld [vmem:[%s6 + $0x18] sm:$0xf]
        %v9149 = vld [vmem:[%s6 + $0x1c] sm:$0xf]
        %v9150 = vld [vmem:[%s6 + $0x20] sm:$0xf]
        %v9151 = vld [vmem:[%s6 + $0x24] sm:$0xf]
        %v9152 = vld [vmem:[%s6 + $0x28] sm:$0xf]
        %v9153 = vld [vmem:[%s6 + $0x2c] sm:$0xf]
        %v9154 = vld [vmem:[%s6 + $0x30] sm:$0xf]
        %v9155 = vld [vmem:[%s6 + $0x34] sm:$0xf]
        %v9156 = vld [vmem:[%s6 + $0x38] sm:$0xf]
        %v9157 = vld [vmem:[%s6 + $0x3c] sm:$0xf]
        %v9158 = vld [vmem:[%s7] sm:$0x1]
        %v9160 = vperm.slane %v9158, 0
        %v9290 = vunpack.c.l.b16 %v9014
        %v9291 = vunpack.c.l.b16 %v9015
        %v9292 = vunpack.c.l.b16 %v9016
        %v9293 = vunpack.c.l.b16 %v9017
        %v9294 = vunpack.c.l.b16 %v9018
        %v9295 = vunpack.c.l.b16 %v9019
        %v9296 = vunpack.c.l.b16 %v9020
        %v9297 = vunpack.c.l.b16 %v9021
        %v9298 = vunpack.c.l.b16 %v9022
        %v9299 = vunpack.c.l.b16 %v9023
        %v9300 = vunpack.c.l.b16 %v9024
        %v9301 = vunpack.c.l.b16 %v9025
        %v9302 = vunpack.c.l.b16 %v9026
        %v9303 = vunpack.c.l.b16 %v9027
        %v9304 = vunpack.c.l.b16 %v9028
        %v9305 = vunpack.c.l.b16 %v9029
        %v9306 = vunpack.c.l.b16 %v9030
        %v9307 = vunpack.c.l.b16 %v9031
        %v9308 = vunpack.c.l.b16 %v9032
        %v9309 = vunpack.c.l.b16 %v9033
        %v9310 = vunpack.c.l.b16 %v9034
        %v9311 = vunpack.c.l.b16 %v9035
        %v9312 = vunpack.c.l.b16 %v9036
        %v9313 = vunpack.c.l.b16 %v9037
        %v9314 = vunpack.c.l.b16 %v9038
        %v9315 = vunpack.c.l.b16 %v9039
        %v9316 = vunpack.c.l.b16 %v9040
        %v9317 = vunpack.c.l.b16 %v9041
        %v9318 = vunpack.c.l.b16 %v9042
        %v9319 = vunpack.c.l.b16 %v9043
        %v9320 = vunpack.c.l.b16 %v9044
        %v9321 = vunpack.c.l.b16 %v9045
        %v9322 = vunpack.c.l.b16 %v9046
        %v9323 = vunpack.c.l.b16 %v9047
        %v9324 = vunpack.c.l.b16 %v9048
        %v9325 = vunpack.c.l.b16 %v9049
        %v9326 = vunpack.c.l.b16 %v9050
        %v9327 = vunpack.c.l.b16 %v9051
        %v9328 = vunpack.c.l.b16 %v9052
        %v9329 = vunpack.c.l.b16 %v9053
        %v9330 = vunpack.c.l.b16 %v9054
        %v9331 = vunpack.c.l.b16 %v9055
        %v9332 = vunpack.c.l.b16 %v9056
        %v9333 = vunpack.c.l.b16 %v9057
        %v9334 = vunpack.c.l.b16 %v9058
        %v9335 = vunpack.c.l.b16 %v9059
        %v9336 = vunpack.c.l.b16 %v9060
        %v9337 = vunpack.c.l.b16 %v9061
        %v9338 = vunpack.c.l.b16 %v9062
        %v9339 = vunpack.c.l.b16 %v9063
        %v9340 = vunpack.c.l.b16 %v9064
        %v9341 = vunpack.c.l.b16 %v9065
        %v9342 = vunpack.c.l.b16 %v9066
        %v9343 = vunpack.c.l.b16 %v9067
        %v9344 = vunpack.c.l.b16 %v9068
        %v9345 = vunpack.c.l.b16 %v9069
        %v9346 = vunpack.c.l.b16 %v9070
        %v9347 = vunpack.c.l.b16 %v9071
        %v9348 = vunpack.c.l.b16 %v9072
        %v9349 = vunpack.c.l.b16 %v9073
        %v9350 = vunpack.c.l.b16 %v9074
        %v9351 = vunpack.c.l.b16 %v9075
        %v9352 = vunpack.c.l.b16 %v9076
        %v9353 = vunpack.c.l.b16 %v9077
        %v9354 = vunpack.c.l.b16 %v9078
        %v9355 = vunpack.c.l.b16 %v9079
        %v9356 = vunpack.c.l.b16 %v9080
        %v9357 = vunpack.c.l.b16 %v9081
        %v9358 = vunpack.c.l.b16 %v9082
        %v9359 = vunpack.c.l.b16 %v9083
        %v9360 = vunpack.c.l.b16 %v9084
        %v9361 = vunpack.c.l.b16 %v9085
        %v9362 = vunpack.c.l.b16 %v9086
        %v9363 = vunpack.c.l.b16 %v9087
        %v9364 = vunpack.c.l.b16 %v9088
        %v9365 = vunpack.c.l.b16 %v9089
        %v9366 = vunpack.c.l.b16 %v9090
        %v9367 = vunpack.c.l.b16 %v9091
        %v9368 = vunpack.c.l.b16 %v9092
        %v9369 = vunpack.c.l.b16 %v9093
        %v9370 = vunpack.c.l.b16 %v9094
        %v9371 = vunpack.c.l.b16 %v9095
        %v9372 = vunpack.c.l.b16 %v9096
        %v9373 = vunpack.c.l.b16 %v9097
        %v9374 = vunpack.c.l.b16 %v9098
        %v9375 = vunpack.c.l.b16 %v9099
        %v9376 = vunpack.c.l.b16 %v9100
        %v9377 = vunpack.c.l.b16 %v9101
        %v9378 = vunpack.c.l.b16 %v9102
        %v9379 = vunpack.c.l.b16 %v9103
        %v9380 = vunpack.c.l.b16 %v9104
        %v9381 = vunpack.c.l.b16 %v9105
        %v9382 = vunpack.c.l.b16 %v9106
        %v9383 = vunpack.c.l.b16 %v9107
        %v9384 = vunpack.c.l.b16 %v9108
        %v9385 = vunpack.c.l.b16 %v9109
        %v9386 = vunpack.c.l.b16 %v9110
        %v9387 = vunpack.c.l.b16 %v9111
        %v9388 = vunpack.c.l.b16 %v9112
        %v9389 = vunpack.c.l.b16 %v9113
        %v9390 = vunpack.c.l.b16 %v9114
        %v9391 = vunpack.c.l.b16 %v9115
        %v9392 = vunpack.c.l.b16 %v9116
        %v9393 = vunpack.c.l.b16 %v9117
        %v9394 = vunpack.c.l.b16 %v9118
        %v9395 = vunpack.c.l.b16 %v9119
        %v9396 = vunpack.c.l.b16 %v9120
        %v9397 = vunpack.c.l.b16 %v9121
        %v9398 = vunpack.c.l.b16 %v9122
        %v9399 = vunpack.c.l.b16 %v9123
        %v9400 = vunpack.c.l.b16 %v9124
        %v9401 = vunpack.c.l.b16 %v9125
        %v9402 = vunpack.c.l.b16 %v9126
        %v9403 = vunpack.c.l.b16 %v9127
        %v9404 = vunpack.c.l.b16 %v9128
        %v9405 = vunpack.c.l.b16 %v9129
        %v9406 = vunpack.c.l.b16 %v9130
        %v9407 = vunpack.c.l.b16 %v9131
        %v9408 = vunpack.c.l.b16 %v9132
        %v9409 = vunpack.c.l.b16 %v9133
        %v9410 = vunpack.c.l.b16 %v9134
        %v9411 = vunpack.c.l.b16 %v9135
        %v9412 = vunpack.c.l.b16 %v9136
        %v9413 = vunpack.c.l.b16 %v9137
        %v9414 = vunpack.c.l.b16 %v9138
        %v9415 = vunpack.c.l.b16 %v9139
        %v9416 = vunpack.c.l.b16 %v9140
        %v9417 = vunpack.c.l.b16 %v9141
        %v9418 = vpack.c.b16 %v9291, %v9290
        %v9419 = vpack.c.b16 %v9293, %v9292
        %v9420 = vpack.c.b16 %v9295, %v9294
        %v9421 = vpack.c.b16 %v9297, %v9296
        %v9422 = vpack.c.b16 %v9299, %v9298
        %v9423 = vpack.c.b16 %v9301, %v9300
        %v9424 = vpack.c.b16 %v9303, %v9302
        %v9425 = vpack.c.b16 %v9305, %v9304
        %v9426 = vpack.c.b16 %v9307, %v9306
        %v9427 = vpack.c.b16 %v9309, %v9308
        %v9428 = vpack.c.b16 %v9311, %v9310
        %v9429 = vpack.c.b16 %v9313, %v9312
        %v9430 = vpack.c.b16 %v9315, %v9314
        %v9431 = vpack.c.b16 %v9317, %v9316
        %v9432 = vpack.c.b16 %v9319, %v9318
        %v9433 = vpack.c.b16 %v9321, %v9320
        %v9434 = vpack.c.b16 %v9323, %v9322
        %v9435 = vpack.c.b16 %v9325, %v9324
        %v9436 = vpack.c.b16 %v9327, %v9326
        %v9437 = vpack.c.b16 %v9329, %v9328
        %v9438 = vpack.c.b16 %v9331, %v9330
        %v9439 = vpack.c.b16 %v9333, %v9332
        %v9440 = vpack.c.b16 %v9335, %v9334
        %v9441 = vpack.c.b16 %v9337, %v9336
        %v9442 = vpack.c.b16 %v9339, %v9338
        %v9443 = vpack.c.b16 %v9341, %v9340
        %v9444 = vpack.c.b16 %v9343, %v9342
        %v9445 = vpack.c.b16 %v9345, %v9344
        %v9446 = vpack.c.b16 %v9347, %v9346
        %v9447 = vpack.c.b16 %v9349, %v9348
        %v9448 = vpack.c.b16 %v9351, %v9350
        %v9449 = vpack.c.b16 %v9353, %v9352
        %v9450 = vpack.c.b16 %v9355, %v9354
        %v9451 = vpack.c.b16 %v9357, %v9356
        %v9452 = vpack.c.b16 %v9359, %v9358
        %v9453 = vpack.c.b16 %v9361, %v9360
        %v9454 = vpack.c.b16 %v9363, %v9362
        %v9455 = vpack.c.b16 %v9365, %v9364
        %v9456 = vpack.c.b16 %v9367, %v9366
        %v9457 = vpack.c.b16 %v9369, %v9368
        %v9458 = vpack.c.b16 %v9371, %v9370
        %v9459 = vpack.c.b16 %v9373, %v9372
        %v9460 = vpack.c.b16 %v9375, %v9374
        %v9461 = vpack.c.b16 %v9377, %v9376
        %v9462 = vpack.c.b16 %v9379, %v9378
        %v9463 = vpack.c.b16 %v9381, %v9380
        %v9464 = vpack.c.b16 %v9383, %v9382
        %v9465 = vpack.c.b16 %v9385, %v9384
        %v9466 = vpack.c.b16 %v9387, %v9386
        %v9467 = vpack.c.b16 %v9389, %v9388
        %v9468 = vpack.c.b16 %v9391, %v9390
        %v9469 = vpack.c.b16 %v9393, %v9392
        %v9470 = vpack.c.b16 %v9395, %v9394
        %v9471 = vpack.c.b16 %v9397, %v9396
        %v9472 = vpack.c.b16 %v9399, %v9398
        %v9473 = vpack.c.b16 %v9401, %v9400
        %v9474 = vpack.c.b16 %v9403, %v9402
        %v9475 = vpack.c.b16 %v9405, %v9404
        %v9476 = vpack.c.b16 %v9407, %v9406
        %v9477 = vpack.c.b16 %v9409, %v9408
        %v9478 = vpack.c.b16 %v9411, %v9410
        %v9479 = vpack.c.b16 %v9413, %v9412
        %v9480 = vpack.c.b16 %v9415, %v9414
        %v9481 = vpack.c.b16 %v9417, %v9416
        %v9562 = vunpack.c.l.b16 %v9142
        %v9563 = vunpack.c.l.b16 %v9143
        %v9564 = vunpack.c.l.b16 %v9144
        %v9565 = vunpack.c.l.b16 %v9145
        %v9566 = vunpack.c.l.b16 %v9146
        %v9567 = vunpack.c.l.b16 %v9147
        %v9568 = vunpack.c.l.b16 %v9148
        %v9569 = vunpack.c.l.b16 %v9149
        %v9570 = vunpack.c.l.b16 %v9150
        %v9571 = vunpack.c.l.b16 %v9151
        %v9572 = vunpack.c.l.b16 %v9152
        %v9573 = vunpack.c.l.b16 %v9153
        %v9574 = vunpack.c.l.b16 %v9154
        %v9575 = vunpack.c.l.b16 %v9155
        %v9576 = vunpack.c.l.b16 %v9156
        %v9577 = vunpack.c.l.b16 %v9157
        %v9578 = vpack.c.b16 %v9563, %v9562
        %v9579 = vpack.c.b16 %v9565, %v9564
        %v9580 = vpack.c.b16 %v9567, %v9566
        %v9581 = vpack.c.b16 %v9569, %v9568
        %v9582 = vpack.c.b16 %v9571, %v9570
        %v9583 = vpack.c.b16 %v9573, %v9572
        %v9584 = vpack.c.b16 %v9575, %v9574
        %v9585 = vpack.c.b16 %v9577, %v9576
        %9594 = vmatpush.bf16.msra.mxu0 %v9585
        %9595 = vmatpush.bf16.msra.mxu0 %v9584
        %9596 = vmatpush.bf16.msra.mxu0 %v9583
        %9597 = vmatpush.bf16.msra.mxu0 %v9582
        %9598 = vmatpush.bf16.msra.mxu0 %v9581
        %9599 = vmatpush.bf16.msra.mxu0 %v9580
        %9600 = vmatpush.bf16.msra.mxu0 %v9579
        %9601 = vmatpush.bf16.msra.mxu0 %v9578
        %9602 = vmatmul.bf16.gmra.mxu0 %v9418
        %v9603 = vpop.f32.mrf.mxu0
        %v9604 = vadd.f32 %v9160, %v9603
        %v9605 = vpop.f32.mrf.mxu0
        %v9606 = vadd.f32 %v9160, %v9605
        %9607 = vmatmul.bf16.gmra.mxu0 %v9419
        %v9608 = vpop.f32.mrf.mxu0
        %v9609 = vadd.f32 %v9160, %v9608
        %v9610 = vpop.f32.mrf.mxu0
        %v9611 = vadd.f32 %v9160, %v9610
        %9612 = vmatmul.bf16.gmra.mxu0 %v9420
        %v9613 = vpop.f32.mrf.mxu0
        %v9614 = vadd.f32 %v9160, %v9613
        %v9615 = vpop.f32.mrf.mxu0
        %v9616 = vadd.f32 %v9160, %v9615
        %9617 = vmatmul.bf16.gmra.mxu0 %v9421
        %v9618 = vpop.f32.mrf.mxu0
        %v9619 = vadd.f32 %v9160, %v9618
        %v9620 = vpop.f32.mrf.mxu0
        %v9621 = vadd.f32 %v9160, %v9620
        %9622 = vmatmul.bf16.gmra.mxu0 %v9422
        %v9623 = vpop.f32.mrf.mxu0
        %v9624 = vadd.f32 %v9160, %v9623
        %v9625 = vpop.f32.mrf.mxu0
        %v9626 = vadd.f32 %v9160, %v9625
        %9627 = vmatmul.bf16.gmra.mxu0 %v9423
        %v9628 = vpop.f32.mrf.mxu0
        %v9629 = vadd.f32 %v9160, %v9628
        %v9630 = vpop.f32.mrf.mxu0
        %v9631 = vadd.f32 %v9160, %v9630
        %9632 = vmatmul.bf16.gmra.mxu0 %v9424
        %v9633 = vpop.f32.mrf.mxu0
        %v9634 = vadd.f32 %v9160, %v9633
        %v9635 = vpop.f32.mrf.mxu0
        %v9636 = vadd.f32 %v9160, %v9635
        %9637 = vmatmul.bf16.gmra.mxu0 %v9425
        %v9638 = vpop.f32.mrf.mxu0
        %v9639 = vadd.f32 %v9160, %v9638
        %v9640 = vpop.f32.mrf.mxu0
        %v9641 = vadd.f32 %v9160, %v9640
        %9642 = vmatmul.bf16.gmra.mxu0 %v9426
        %v9643 = vpop.f32.mrf.mxu0
        %v9644 = vadd.f32 %v9160, %v9643
        %v9645 = vpop.f32.mrf.mxu0
        %v9646 = vadd.f32 %v9160, %v9645
        %9647 = vmatmul.bf16.gmra.mxu0 %v9427
        %v9648 = vpop.f32.mrf.mxu0
        %v9649 = vadd.f32 %v9160, %v9648
        %v9650 = vpop.f32.mrf.mxu0
        %v9651 = vadd.f32 %v9160, %v9650
        %9652 = vmatmul.bf16.gmra.mxu0 %v9428
        %v9653 = vpop.f32.mrf.mxu0
        %v9654 = vadd.f32 %v9160, %v9653
        %v9655 = vpop.f32.mrf.mxu0
        %v9656 = vadd.f32 %v9160, %v9655
        %9657 = vmatmul.bf16.gmra.mxu0 %v9429
        %v9658 = vpop.f32.mrf.mxu0
        %v9659 = vadd.f32 %v9160, %v9658
        %v9660 = vpop.f32.mrf.mxu0
        %v9661 = vadd.f32 %v9160, %v9660
        %9662 = vmatmul.bf16.gmra.mxu0 %v9430
        %v9663 = vpop.f32.mrf.mxu0
        %v9664 = vadd.f32 %v9160, %v9663
        %v9665 = vpop.f32.mrf.mxu0
        %v9666 = vadd.f32 %v9160, %v9665
        %9667 = vmatmul.bf16.gmra.mxu0 %v9431
        %v9668 = vpop.f32.mrf.mxu0
        %v9669 = vadd.f32 %v9160, %v9668
        %v9670 = vpop.f32.mrf.mxu0
        %v9671 = vadd.f32 %v9160, %v9670
        %9672 = vmatmul.bf16.gmra.mxu0 %v9432
        %v9673 = vpop.f32.mrf.mxu0
        %v9674 = vadd.f32 %v9160, %v9673
        %v9675 = vpop.f32.mrf.mxu0
        %v9676 = vadd.f32 %v9160, %v9675
        %9677 = vmatmul.bf16.gmra.mxu0 %v9433
        %v9678 = vpop.f32.mrf.mxu0
        %v9679 = vadd.f32 %v9160, %v9678
        %v9680 = vpop.f32.mrf.mxu0
        %v9681 = vadd.f32 %v9160, %v9680
        %9682 = vmatmul.bf16.gmra.mxu0 %v9434
        %v9683 = vpop.f32.mrf.mxu0
        %v9684 = vadd.f32 %v9160, %v9683
        %v9685 = vpop.f32.mrf.mxu0
        %v9686 = vadd.f32 %v9160, %v9685
        %9687 = vmatmul.bf16.gmra.mxu0 %v9435
        %v9688 = vpop.f32.mrf.mxu0
        %v9689 = vadd.f32 %v9160, %v9688
        %v9690 = vpop.f32.mrf.mxu0
        %v9691 = vadd.f32 %v9160, %v9690
        %9692 = vmatmul.bf16.gmra.mxu0 %v9436
        %v9693 = vpop.f32.mrf.mxu0
        %v9694 = vadd.f32 %v9160, %v9693
        %v9695 = vpop.f32.mrf.mxu0
        %v9696 = vadd.f32 %v9160, %v9695
        %9697 = vmatmul.bf16.gmra.mxu0 %v9437
        %v9698 = vpop.f32.mrf.mxu0
        %v9699 = vadd.f32 %v9160, %v9698
        %v9700 = vpop.f32.mrf.mxu0
        %v9701 = vadd.f32 %v9160, %v9700
        %9702 = vmatmul.bf16.gmra.mxu0 %v9438
        %v9703 = vpop.f32.mrf.mxu0
        %v9704 = vadd.f32 %v9160, %v9703
        %v9705 = vpop.f32.mrf.mxu0
        %v9706 = vadd.f32 %v9160, %v9705
        %9707 = vmatmul.bf16.gmra.mxu0 %v9439
        %v9708 = vpop.f32.mrf.mxu0
        %v9709 = vadd.f32 %v9160, %v9708
        %v9710 = vpop.f32.mrf.mxu0
        %v9711 = vadd.f32 %v9160, %v9710
        %9712 = vmatmul.bf16.gmra.mxu0 %v9440
        %v9713 = vpop.f32.mrf.mxu0
        %v9714 = vadd.f32 %v9160, %v9713
        %v9715 = vpop.f32.mrf.mxu0
        %v9716 = vadd.f32 %v9160, %v9715
        %9717 = vmatmul.bf16.gmra.mxu0 %v9441
        %v9718 = vpop.f32.mrf.mxu0
        %v9719 = vadd.f32 %v9160, %v9718
        %v9720 = vpop.f32.mrf.mxu0
        %v9721 = vadd.f32 %v9160, %v9720
        %9722 = vmatmul.bf16.gmra.mxu0 %v9442
        %v9723 = vpop.f32.mrf.mxu0
        %v9724 = vadd.f32 %v9160, %v9723
        %v9725 = vpop.f32.mrf.mxu0
        %v9726 = vadd.f32 %v9160, %v9725
        %9727 = vmatmul.bf16.gmra.mxu0 %v9443
        %v9728 = vpop.f32.mrf.mxu0
        %v9729 = vadd.f32 %v9160, %v9728
        %v9730 = vpop.f32.mrf.mxu0
        %v9731 = vadd.f32 %v9160, %v9730
        %9732 = vmatmul.bf16.gmra.mxu0 %v9444
        %v9733 = vpop.f32.mrf.mxu0
        %v9734 = vadd.f32 %v9160, %v9733
        %v9735 = vpop.f32.mrf.mxu0
        %v9736 = vadd.f32 %v9160, %v9735
        %9737 = vmatmul.bf16.gmra.mxu0 %v9445
        %v9738 = vpop.f32.mrf.mxu0
        %v9739 = vadd.f32 %v9160, %v9738
        %v9740 = vpop.f32.mrf.mxu0
        %v9741 = vadd.f32 %v9160, %v9740
        %9742 = vmatmul.bf16.gmra.mxu0 %v9446
        %v9743 = vpop.f32.mrf.mxu0
        %v9744 = vadd.f32 %v9160, %v9743
        %v9745 = vpop.f32.mrf.mxu0
        %v9746 = vadd.f32 %v9160, %v9745
        %9747 = vmatmul.bf16.gmra.mxu0 %v9447
        %v9748 = vpop.f32.mrf.mxu0
        %v9749 = vadd.f32 %v9160, %v9748
        %v9750 = vpop.f32.mrf.mxu0
        %v9751 = vadd.f32 %v9160, %v9750
        %9752 = vmatmul.bf16.gmra.mxu0 %v9448
        %v9753 = vpop.f32.mrf.mxu0
        %v9754 = vadd.f32 %v9160, %v9753
        %v9755 = vpop.f32.mrf.mxu0
        %v9756 = vadd.f32 %v9160, %v9755
        %9757 = vmatmul.bf16.gmra.mxu0 %v9449
        %v9758 = vpop.f32.mrf.mxu0
        %v9759 = vadd.f32 %v9160, %v9758
        %v9760 = vpop.f32.mrf.mxu0
        %v9761 = vadd.f32 %v9160, %v9760
        %9762 = vmatmul.bf16.gmra.mxu0 %v9450
        %v9763 = vpop.f32.mrf.mxu0
        %v9764 = vadd.f32 %v9160, %v9763
        %v9765 = vpop.f32.mrf.mxu0
        %v9766 = vadd.f32 %v9160, %v9765
        %9767 = vmatmul.bf16.gmra.mxu0 %v9451
        %v9768 = vpop.f32.mrf.mxu0
        %v9769 = vadd.f32 %v9160, %v9768
        %v9770 = vpop.f32.mrf.mxu0
        %v9771 = vadd.f32 %v9160, %v9770
        %9772 = vmatmul.bf16.gmra.mxu0 %v9452
        %v9773 = vpop.f32.mrf.mxu0
        %v9774 = vadd.f32 %v9160, %v9773
        %v9775 = vpop.f32.mrf.mxu0
        %v9776 = vadd.f32 %v9160, %v9775
        %9777 = vmatmul.bf16.gmra.mxu0 %v9453
        %v9778 = vpop.f32.mrf.mxu0
        %v9779 = vadd.f32 %v9160, %v9778
        %v9780 = vpop.f32.mrf.mxu0
        %v9781 = vadd.f32 %v9160, %v9780
        %9782 = vmatmul.bf16.gmra.mxu0 %v9454
        %v9783 = vpop.f32.mrf.mxu0
        %v9784 = vadd.f32 %v9160, %v9783
        %v9785 = vpop.f32.mrf.mxu0
        %v9786 = vadd.f32 %v9160, %v9785
        %9787 = vmatmul.bf16.gmra.mxu0 %v9455
        %v9788 = vpop.f32.mrf.mxu0
        %v9789 = vadd.f32 %v9160, %v9788
        %v9790 = vpop.f32.mrf.mxu0
        %v9791 = vadd.f32 %v9160, %v9790
        %9792 = vmatmul.bf16.gmra.mxu0 %v9456
        %v9793 = vpop.f32.mrf.mxu0
        %v9794 = vadd.f32 %v9160, %v9793
        %v9795 = vpop.f32.mrf.mxu0
        %v9796 = vadd.f32 %v9160, %v9795
        %9797 = vmatmul.bf16.gmra.mxu0 %v9457
        %v9798 = vpop.f32.mrf.mxu0
        %v9799 = vadd.f32 %v9160, %v9798
        %v9800 = vpop.f32.mrf.mxu0
        %v9801 = vadd.f32 %v9160, %v9800
        %9802 = vmatmul.bf16.gmra.mxu0 %v9458
        %v9803 = vpop.f32.mrf.mxu0
        %v9804 = vadd.f32 %v9160, %v9803
        %v9805 = vpop.f32.mrf.mxu0
        %v9806 = vadd.f32 %v9160, %v9805
        %9807 = vmatmul.bf16.gmra.mxu0 %v9459
        %v9808 = vpop.f32.mrf.mxu0
        %v9809 = vadd.f32 %v9160, %v9808
        %v9810 = vpop.f32.mrf.mxu0
        %v9811 = vadd.f32 %v9160, %v9810
        %9812 = vmatmul.bf16.gmra.mxu0 %v9460
        %v9813 = vpop.f32.mrf.mxu0
        %v9814 = vadd.f32 %v9160, %v9813
        %v9815 = vpop.f32.mrf.mxu0
        %v9816 = vadd.f32 %v9160, %v9815
        %9817 = vmatmul.bf16.gmra.mxu0 %v9461
        %v9818 = vpop.f32.mrf.mxu0
        %v9819 = vadd.f32 %v9160, %v9818
        %v9820 = vpop.f32.mrf.mxu0
        %v9821 = vadd.f32 %v9160, %v9820
        %9822 = vmatmul.bf16.gmra.mxu0 %v9462
        %v9823 = vpop.f32.mrf.mxu0
        %v9824 = vadd.f32 %v9160, %v9823
        %v9825 = vpop.f32.mrf.mxu0
        %v9826 = vadd.f32 %v9160, %v9825
        %9827 = vmatmul.bf16.gmra.mxu0 %v9463
        %v9828 = vpop.f32.mrf.mxu0
        %v9829 = vadd.f32 %v9160, %v9828
        %v9830 = vpop.f32.mrf.mxu0
        %v9831 = vadd.f32 %v9160, %v9830
        %9832 = vmatmul.bf16.gmra.mxu0 %v9464
        %v9833 = vpop.f32.mrf.mxu0
        %v9834 = vadd.f32 %v9160, %v9833
        %v9835 = vpop.f32.mrf.mxu0
        %v9836 = vadd.f32 %v9160, %v9835
        %9837 = vmatmul.bf16.gmra.mxu0 %v9465
        %v9838 = vpop.f32.mrf.mxu0
        %v9839 = vadd.f32 %v9160, %v9838
        %v9840 = vpop.f32.mrf.mxu0
        %v9841 = vadd.f32 %v9160, %v9840
        %9842 = vmatmul.bf16.gmra.mxu0 %v9466
        %v9843 = vpop.f32.mrf.mxu0
        %v9844 = vadd.f32 %v9160, %v9843
        %v9845 = vpop.f32.mrf.mxu0
        %v9846 = vadd.f32 %v9160, %v9845
        %9847 = vmatmul.bf16.gmra.mxu0 %v9467
        %v9848 = vpop.f32.mrf.mxu0
        %v9849 = vadd.f32 %v9160, %v9848
        %v9850 = vpop.f32.mrf.mxu0
        %v9851 = vadd.f32 %v9160, %v9850
        %9852 = vmatmul.bf16.gmra.mxu0 %v9468
        %v9853 = vpop.f32.mrf.mxu0
        %v9854 = vadd.f32 %v9160, %v9853
        %v9855 = vpop.f32.mrf.mxu0
        %v9856 = vadd.f32 %v9160, %v9855
        %9857 = vmatmul.bf16.gmra.mxu0 %v9469
        %v9858 = vpop.f32.mrf.mxu0
        %v9859 = vadd.f32 %v9160, %v9858
        %v9860 = vpop.f32.mrf.mxu0
        %v9861 = vadd.f32 %v9160, %v9860
        %9862 = vmatmul.bf16.gmra.mxu0 %v9470
        %v9863 = vpop.f32.mrf.mxu0
        %v9864 = vadd.f32 %v9160, %v9863
        %v9865 = vpop.f32.mrf.mxu0
        %v9866 = vadd.f32 %v9160, %v9865
        %9867 = vmatmul.bf16.gmra.mxu0 %v9471
        %v9868 = vpop.f32.mrf.mxu0
        %v9869 = vadd.f32 %v9160, %v9868
        %v9870 = vpop.f32.mrf.mxu0
        %v9871 = vadd.f32 %v9160, %v9870
        %9872 = vmatmul.bf16.gmra.mxu0 %v9472
        %v9873 = vpop.f32.mrf.mxu0
        %v9874 = vadd.f32 %v9160, %v9873
        %v9875 = vpop.f32.mrf.mxu0
        %v9876 = vadd.f32 %v9160, %v9875
        %9877 = vmatmul.bf16.gmra.mxu0 %v9473
        %v9878 = vpop.f32.mrf.mxu0
        %v9879 = vadd.f32 %v9160, %v9878
        %v9880 = vpop.f32.mrf.mxu0
        %v9881 = vadd.f32 %v9160, %v9880
        %9882 = vmatmul.bf16.gmra.mxu0 %v9474
        %v9883 = vpop.f32.mrf.mxu0
        %v9884 = vadd.f32 %v9160, %v9883
        %v9885 = vpop.f32.mrf.mxu0
        %v9886 = vadd.f32 %v9160, %v9885
        %9887 = vmatmul.bf16.gmra.mxu0 %v9475
        %v9888 = vpop.f32.mrf.mxu0
        %v9889 = vadd.f32 %v9160, %v9888
        %v9890 = vpop.f32.mrf.mxu0
        %v9891 = vadd.f32 %v9160, %v9890
        %9892 = vmatmul.bf16.gmra.mxu0 %v9476
        %v9893 = vpop.f32.mrf.mxu0
        %v9894 = vadd.f32 %v9160, %v9893
        %v9895 = vpop.f32.mrf.mxu0
        %v9896 = vadd.f32 %v9160, %v9895
        %9897 = vmatmul.bf16.gmra.mxu0 %v9477
        %v9898 = vpop.f32.mrf.mxu0
        %v9899 = vadd.f32 %v9160, %v9898
        %v9900 = vpop.f32.mrf.mxu0
        %v9901 = vadd.f32 %v9160, %v9900
        %9902 = vmatmul.bf16.gmra.mxu0 %v9478
        %v9903 = vpop.f32.mrf.mxu0
        %v9904 = vadd.f32 %v9160, %v9903
        %v9905 = vpop.f32.mrf.mxu0
        %v9906 = vadd.f32 %v9160, %v9905
        %9907 = vmatmul.bf16.gmra.mxu0 %v9479
        %v9908 = vpop.f32.mrf.mxu0
        %v9909 = vadd.f32 %v9160, %v9908
        %v9910 = vpop.f32.mrf.mxu0
        %v9911 = vadd.f32 %v9160, %v9910
        %9912 = vmatmul.bf16.gmra.mxu0 %v9480
        %v9913 = vpop.f32.mrf.mxu0
        %v9914 = vadd.f32 %v9160, %v9913
        %v9915 = vpop.f32.mrf.mxu0
        %v9916 = vadd.f32 %v9160, %v9915
        %9917 = vmatmul.bf16.gmra.mxu0 %v9481
        %v9918 = vpop.f32.mrf.mxu0
        %v9919 = vadd.f32 %v9160, %v9918
        %v9920 = vpop.f32.mrf.mxu0
        %v9921 = vadd.f32 %v9160, %v9920
        %9922 = vdwg.mxu0
        %v9923 = vadd.f32 %v9604, %v429
        %v9924 = vadd.f32 %v9606, %v430
        %v9925 = vadd.f32 %v9609, %v431
        %v9926 = vadd.f32 %v9611, %v432
        %v9927 = vadd.f32 %v9614, %v433
        %v9928 = vadd.f32 %v9616, %v434
        %v9929 = vadd.f32 %v9619, %v435
        %v9930 = vadd.f32 %v9621, %v436
        %v9931 = vadd.f32 %v9624, %v437
        %v9932 = vadd.f32 %v9626, %v438
        %v9933 = vadd.f32 %v9629, %v439
        %v9934 = vadd.f32 %v9631, %v440
        %v9935 = vadd.f32 %v9634, %v441
        %v9936 = vadd.f32 %v9636, %v442
        %v9937 = vadd.f32 %v9639, %v443
        %v9938 = vadd.f32 %v9641, %v444
        %v9939 = vadd.f32 %v9644, %v445
        %v9940 = vadd.f32 %v9646, %v446
        %v9941 = vadd.f32 %v9649, %v447
        %v9942 = vadd.f32 %v9651, %v448
        %v9943 = vadd.f32 %v9654, %v449
        %v9944 = vadd.f32 %v9656, %v450
        %v9945 = vadd.f32 %v9659, %v451
        %v9946 = vadd.f32 %v9661, %v452
        %v9947 = vadd.f32 %v9664, %v453
        %v9948 = vadd.f32 %v9666, %v454
        %v9949 = vadd.f32 %v9669, %v455
        %v9950 = vadd.f32 %v9671, %v456
        %v9951 = vadd.f32 %v9674, %v457
        %v9952 = vadd.f32 %v9676, %v458
        %v9953 = vadd.f32 %v9679, %v459
        %v9954 = vadd.f32 %v9681, %v460
        %v9955 = vadd.f32 %v9684, %v461
        %v9956 = vadd.f32 %v9686, %v462
        %v9957 = vadd.f32 %v9689, %v463
        %v9958 = vadd.f32 %v9691, %v464
        %v9959 = vadd.f32 %v9694, %v465
        %v9960 = vadd.f32 %v9696, %v466
        %v9961 = vadd.f32 %v9699, %v467
        %v9962 = vadd.f32 %v9701, %v468
        %v9963 = vadd.f32 %v9704, %v469
        %v9964 = vadd.f32 %v9706, %v470
        %v9965 = vadd.f32 %v9709, %v471
        %v9966 = vadd.f32 %v9711, %v472
        %v9967 = vadd.f32 %v9714, %v473
        %v9968 = vadd.f32 %v9716, %v474
        %v9969 = vadd.f32 %v9719, %v475
        %v9970 = vadd.f32 %v9721, %v476
        %v9971 = vadd.f32 %v9724, %v477
        %v9972 = vadd.f32 %v9726, %v478
        %v9973 = vadd.f32 %v9729, %v479
        %v9974 = vadd.f32 %v9731, %v480
        %v9975 = vadd.f32 %v9734, %v481
        %v9976 = vadd.f32 %v9736, %v482
        %v9977 = vadd.f32 %v9739, %v483
        %v9978 = vadd.f32 %v9741, %v484
        %v9979 = vadd.f32 %v9744, %v485
        %v9980 = vadd.f32 %v9746, %v486
        %v9981 = vadd.f32 %v9749, %v487
        %v9982 = vadd.f32 %v9751, %v488
        %v9983 = vadd.f32 %v9754, %v489
        %v9984 = vadd.f32 %v9756, %v490
        %v9985 = vadd.f32 %v9759, %v491
        %v9986 = vadd.f32 %v9761, %v492
        %v9987 = vadd.f32 %v9764, %v493
        %v9988 = vadd.f32 %v9766, %v494
        %v9989 = vadd.f32 %v9769, %v495
        %v9990 = vadd.f32 %v9771, %v496
        %v9991 = vadd.f32 %v9774, %v497
        %v9992 = vadd.f32 %v9776, %v498
        %v9993 = vadd.f32 %v9779, %v499
        %v9994 = vadd.f32 %v9781, %v500
        %v9995 = vadd.f32 %v9784, %v501
        %v9996 = vadd.f32 %v9786, %v502
        %v9997 = vadd.f32 %v9789, %v503
        %v9998 = vadd.f32 %v9791, %v504
        %v9999 = vadd.f32 %v9794, %v505
        %v10000 = vadd.f32 %v9796, %v506
        %v10001 = vadd.f32 %v9799, %v507
        %v10002 = vadd.f32 %v9801, %v508
        %v10003 = vadd.f32 %v9804, %v509
        %v10004 = vadd.f32 %v9806, %v510
        %v10005 = vadd.f32 %v9809, %v511
        %v10006 = vadd.f32 %v9811, %v512
        %v10007 = vadd.f32 %v9814, %v513
        %v10008 = vadd.f32 %v9816, %v514
        %v10009 = vadd.f32 %v9819, %v515
        %v10010 = vadd.f32 %v9821, %v516
        %v10011 = vadd.f32 %v9824, %v517
        %v10012 = vadd.f32 %v9826, %v518
        %v10013 = vadd.f32 %v9829, %v519
        %v10014 = vadd.f32 %v9831, %v520
        %v10015 = vadd.f32 %v9834, %v521
        %v10016 = vadd.f32 %v9836, %v522
        %v10017 = vadd.f32 %v9839, %v523
        %v10018 = vadd.f32 %v9841, %v524
        %v10019 = vadd.f32 %v9844, %v525
        %v10020 = vadd.f32 %v9846, %v526
        %v10021 = vadd.f32 %v9849, %v527
        %v10022 = vadd.f32 %v9851, %v528
        %v10023 = vadd.f32 %v9854, %v529
        %v10024 = vadd.f32 %v9856, %v530
        %v10025 = vadd.f32 %v9859, %v531
        %v10026 = vadd.f32 %v9861, %v532
        %v10027 = vadd.f32 %v9864, %v533
        %v10028 = vadd.f32 %v9866, %v534
        %v10029 = vadd.f32 %v9869, %v535
        %v10030 = vadd.f32 %v9871, %v536
        %v10031 = vadd.f32 %v9874, %v537
        %v10032 = vadd.f32 %v9876, %v538
        %v10033 = vadd.f32 %v9879, %v539
        %v10034 = vadd.f32 %v9881, %v540
        %v10035 = vadd.f32 %v9884, %v541
        %v10036 = vadd.f32 %v9886, %v542
        %v10037 = vadd.f32 %v9889, %v543
        %v10038 = vadd.f32 %v9891, %v544
        %v10039 = vadd.f32 %v9894, %v545
        %v10040 = vadd.f32 %v9896, %v546
        %v10041 = vadd.f32 %v9899, %v547
        %v10042 = vadd.f32 %v9901, %v548
        %v10043 = vadd.f32 %v9904, %v549
        %v10044 = vadd.f32 %v9906, %v550
        %v10045 = vadd.f32 %v9909, %v551
        %v10046 = vadd.f32 %v9911, %v552
        %v10047 = vadd.f32 %v9914, %v553
        %v10048 = vadd.f32 %v9916, %v554
        %v10049 = vadd.f32 %v9919, %v555
        %v10050 = vadd.f32 %v9921, %v556
        %10051 = vst [vmem:[%s406] sm:$0xff] %v9923
        %10052 = vst [vmem:[%s406 + $0x8] sm:$0xff] %v9924
        %10053 = vst [vmem:[%s406 + $0x10] sm:$0xff] %v9925
        %10054 = vst [vmem:[%s406 + $0x18] sm:$0xff] %v9926
        %10055 = vst [vmem:[%s406 + $0x20] sm:$0xff] %v9927
        %10056 = vst [vmem:[%s406 + $0x28] sm:$0xff] %v9928
        %10057 = vst [vmem:[%s406 + $0x30] sm:$0xff] %v9929
        %10058 = vst [vmem:[%s406 + $0x38] sm:$0xff] %v9930
        %10059 = vst [vmem:[%s406 + $0x40] sm:$0xff] %v9931
        %10060 = vst [vmem:[%s406 + $0x48] sm:$0xff] %v9932
        %10061 = vst [vmem:[%s406 + $0x50] sm:$0xff] %v9933
        %10062 = vst [vmem:[%s406 + $0x58] sm:$0xff] %v9934
        %10063 = vst [vmem:[%s406 + $0x60] sm:$0xff] %v9935
        %10064 = vst [vmem:[%s406 + $0x68] sm:$0xff] %v9936
        %10065 = vst [vmem:[%s406 + $0x70] sm:$0xff] %v9937
        %10066 = vst [vmem:[%s406 + $0x78] sm:$0xff] %v9938
        %10067 = vst [vmem:[%s406 + $0x80] sm:$0xff] %v9939
        %10068 = vst [vmem:[%s406 + $0x88] sm:$0xff] %v9940
        %10069 = vst [vmem:[%s406 + $0x90] sm:$0xff] %v9941
        %10070 = vst [vmem:[%s406 + $0x98] sm:$0xff] %v9942
        %10071 = vst [vmem:[%s406 + $0xa0] sm:$0xff] %v9943
        %10072 = vst [vmem:[%s406 + $0xa8] sm:$0xff] %v9944
        %10073 = vst [vmem:[%s406 + $0xb0] sm:$0xff] %v9945
        %10074 = vst [vmem:[%s406 + $0xb8] sm:$0xff] %v9946
        %10075 = vst [vmem:[%s406 + $0xc0] sm:$0xff] %v9947
        %10076 = vst [vmem:[%s406 + $0xc8] sm:$0xff] %v9948
        %10077 = vst [vmem:[%s406 + $0xd0] sm:$0xff] %v9949
        %10078 = vst [vmem:[%s406 + $0xd8] sm:$0xff] %v9950
        %10079 = vst [vmem:[%s406 + $0xe0] sm:$0xff] %v9951
        %10080 = vst [vmem:[%s406 + $0xe8] sm:$0xff] %v9952
        %10081 = vst [vmem:[%s406 + $0xf0] sm:$0xff] %v9953
        %10082 = vst [vmem:[%s406 + $0xf8] sm:$0xff] %v9954
        %10083 = vst [vmem:[%s406 + $0x100] sm:$0xff] %v9955
        %10084 = vst [vmem:[%s406 + $0x108] sm:$0xff] %v9956
        %10085 = vst [vmem:[%s406 + $0x110] sm:$0xff] %v9957
        %10086 = vst [vmem:[%s406 + $0x118] sm:$0xff] %v9958
        %10087 = vst [vmem:[%s406 + $0x120] sm:$0xff] %v9959
        %10088 = vst [vmem:[%s406 + $0x128] sm:$0xff] %v9960
        %10089 = vst [vmem:[%s406 + $0x130] sm:$0xff] %v9961
        %10090 = vst [vmem:[%s406 + $0x138] sm:$0xff] %v9962
        %10091 = vst [vmem:[%s406 + $0x140] sm:$0xff] %v9963
        %10092 = vst [vmem:[%s406 + $0x148] sm:$0xff] %v9964
        %10093 = vst [vmem:[%s406 + $0x150] sm:$0xff] %v9965
        %10094 = vst [vmem:[%s406 + $0x158] sm:$0xff] %v9966
        %10095 = vst [vmem:[%s406 + $0x160] sm:$0xff] %v9967
        %10096 = vst [vmem:[%s406 + $0x168] sm:$0xff] %v9968
        %10097 = vst [vmem:[%s406 + $0x170] sm:$0xff] %v9969
        %10098 = vst [vmem:[%s406 + $0x178] sm:$0xff] %v9970
        %10099 = vst [vmem:[%s406 + $0x180] sm:$0xff] %v9971
        %10100 = vst [vmem:[%s406 + $0x188] sm:$0xff] %v9972
        %10101 = vst [vmem:[%s406 + $0x190] sm:$0xff] %v9973
        %10102 = vst [vmem:[%s406 + $0x198] sm:$0xff] %v9974
        %10103 = vst [vmem:[%s406 + $0x1a0] sm:$0xff] %v9975
        %10104 = vst [vmem:[%s406 + $0x1a8] sm:$0xff] %v9976
        %10105 = vst [vmem:[%s406 + $0x1b0] sm:$0xff] %v9977
        %10106 = vst [vmem:[%s406 + $0x1b8] sm:$0xff] %v9978
        %10107 = vst [vmem:[%s406 + $0x1c0] sm:$0xff] %v9979
        %10108 = vst [vmem:[%s406 + $0x1c8] sm:$0xff] %v9980
        %10109 = vst [vmem:[%s406 + $0x1d0] sm:$0xff] %v9981
        %10110 = vst [vmem:[%s406 + $0x1d8] sm:$0xff] %v9982
        %10111 = vst [vmem:[%s406 + $0x1e0] sm:$0xff] %v9983
        %10112 = vst [vmem:[%s406 + $0x1e8] sm:$0xff] %v9984
        %10113 = vst [vmem:[%s406 + $0x1f0] sm:$0xff] %v9985
        %10114 = vst [vmem:[%s406 + $0x1f8] sm:$0xff] %v9986
        %10115 = vst [vmem:[%s406 + $0x200] sm:$0xff] %v9987
        %10116 = vst [vmem:[%s406 + $0x208] sm:$0xff] %v9988
        %10117 = vst [vmem:[%s406 + $0x210] sm:$0xff] %v9989
        %10118 = vst [vmem:[%s406 + $0x218] sm:$0xff] %v9990
        %10119 = vst [vmem:[%s406 + $0x220] sm:$0xff] %v9991
        %10120 = vst [vmem:[%s406 + $0x228] sm:$0xff] %v9992
        %10121 = vst [vmem:[%s406 + $0x230] sm:$0xff] %v9993
        %10122 = vst [vmem:[%s406 + $0x238] sm:$0xff] %v9994
        %10123 = vst [vmem:[%s406 + $0x240] sm:$0xff] %v9995
        %10124 = vst [vmem:[%s406 + $0x248] sm:$0xff] %v9996
        %10125 = vst [vmem:[%s406 + $0x250] sm:$0xff] %v9997
        %10126 = vst [vmem:[%s406 + $0x258] sm:$0xff] %v9998
        %10127 = vst [vmem:[%s406 + $0x260] sm:$0xff] %v9999
        %10128 = vst [vmem:[%s406 + $0x268] sm:$0xff] %v10000
        %10129 = vst [vmem:[%s406 + $0x270] sm:$0xff] %v10001
        %10130 = vst [vmem:[%s406 + $0x278] sm:$0xff] %v10002
        %10131 = vst [vmem:[%s406 + $0x280] sm:$0xff] %v10003
        %10132 = vst [vmem:[%s406 + $0x288] sm:$0xff] %v10004
        %10133 = vst [vmem:[%s406 + $0x290] sm:$0xff] %v10005
        %10134 = vst [vmem:[%s406 + $0x298] sm:$0xff] %v10006
        %10135 = vst [vmem:[%s406 + $0x2a0] sm:$0xff] %v10007
        %10136 = vst [vmem:[%s406 + $0x2a8] sm:$0xff] %v10008
        %10137 = vst [vmem:[%s406 + $0x2b0] sm:$0xff] %v10009
        %10138 = vst [vmem:[%s406 + $0x2b8] sm:$0xff] %v10010
        %10139 = vst [vmem:[%s406 + $0x2c0] sm:$0xff] %v10011
        %10140 = vst [vmem:[%s406 + $0x2c8] sm:$0xff] %v10012
        %10141 = vst [vmem:[%s406 + $0x2d0] sm:$0xff] %v10013
        %10142 = vst [vmem:[%s406 + $0x2d8] sm:$0xff] %v10014
        %10143 = vst [vmem:[%s406 + $0x2e0] sm:$0xff] %v10015
        %10144 = vst [vmem:[%s406 + $0x2e8] sm:$0xff] %v10016
        %10145 = vst [vmem:[%s406 + $0x2f0] sm:$0xff] %v10017
        %10146 = vst [vmem:[%s406 + $0x2f8] sm:$0xff] %v10018
        %10147 = vst [vmem:[%s406 + $0x300] sm:$0xff] %v10019
        %10148 = vst [vmem:[%s406 + $0x308] sm:$0xff] %v10020
        %10149 = vst [vmem:[%s406 + $0x310] sm:$0xff] %v10021
        %10150 = vst [vmem:[%s406 + $0x318] sm:$0xff] %v10022
        %10151 = vst [vmem:[%s406 + $0x320] sm:$0xff] %v10023
        %10152 = vst [vmem:[%s406 + $0x328] sm:$0xff] %v10024
        %10153 = vst [vmem:[%s406 + $0x330] sm:$0xff] %v10025
        %10154 = vst [vmem:[%s406 + $0x338] sm:$0xff] %v10026
        %10155 = vst [vmem:[%s406 + $0x340] sm:$0xff] %v10027
        %10156 = vst [vmem:[%s406 + $0x348] sm:$0xff] %v10028
        %10157 = vst [vmem:[%s406 + $0x350] sm:$0xff] %v10029
        %10158 = vst [vmem:[%s406 + $0x358] sm:$0xff] %v10030
        %10159 = vst [vmem:[%s406 + $0x360] sm:$0xff] %v10031
        %10160 = vst [vmem:[%s406 + $0x368] sm:$0xff] %v10032
        %10161 = vst [vmem:[%s406 + $0x370] sm:$0xff] %v10033
        %10162 = vst [vmem:[%s406 + $0x378] sm:$0xff] %v10034
        %10163 = vst [vmem:[%s406 + $0x380] sm:$0xff] %v10035
        %10164 = vst [vmem:[%s406 + $0x388] sm:$0xff] %v10036
        %10165 = vst [vmem:[%s406 + $0x390] sm:$0xff] %v10037
        %10166 = vst [vmem:[%s406 + $0x398] sm:$0xff] %v10038
        %10167 = vst [vmem:[%s406 + $0x3a0] sm:$0xff] %v10039
        %10168 = vst [vmem:[%s406 + $0x3a8] sm:$0xff] %v10040
        %10169 = vst [vmem:[%s406 + $0x3b0] sm:$0xff] %v10041
        %10170 = vst [vmem:[%s406 + $0x3b8] sm:$0xff] %v10042
        %10171 = vst [vmem:[%s406 + $0x3c0] sm:$0xff] %v10043
        %10172 = vst [vmem:[%s406 + $0x3c8] sm:$0xff] %v10044
        %10173 = vst [vmem:[%s406 + $0x3d0] sm:$0xff] %v10045
        %10174 = vst [vmem:[%s406 + $0x3d8] sm:$0xff] %v10046
        %10175 = vst [vmem:[%s406 + $0x3e0] sm:$0xff] %v10047
        %10176 = vst [vmem:[%s406 + $0x3e8] sm:$0xff] %v10048
        %10177 = vst [vmem:[%s406 + $0x3f0] sm:$0xff] %v10049
        %10178 = vst [vmem:[%s406 + $0x3f8] sm:$0xff] %v10050
        %s10179 = sand.u32 %s226, 1
        %s10180 = scalar_lea.sflag [#allocation4], %s10179
        %s10181 = sand.u32 %s226, 1
        %s10182 = smul.addr %s10181, 1024
        %s10183 = scalar_lea.vmem [#allocation5], %s10182
        // Predicated region
        $region57: #{tpu_custom_call.1} parent=51 // pred_check
          %p10184 = pneg %p236
        $region58: #{tpu_custom_call.1} parent=51 // pred_check_branch
          %10186 = sbr.rel (%p10184) target = $region60
        $region59: #{tpu_custom_call.1} parent=51 // pred_region
          #allocation9 [shape = 'u32[6]{0}', space=smem, size = 0x18, scoped, tag = 'DMA stride descriptor']
          %s10187 = smul.u32 64, %s25
          %10189 = vsyncadd %s10180, 0
          %s10190 = smul.addr %s10187, 8
          %s10191 = scalar_lea.hbm %s8, %s10190
          %s10193 = sshll.u32 1, 14
          %s10194 = sxor.u32 4294967295, %s10193
          %s10197 = sshll.u32 7, 18
          %s10198 = sxor.u32 4294967295, %s10197
          %s10199 = sand.u32 0, %s10198
          %s10201 = sor.u32 %s10199, 0
          %s10202 = sshll.u32 %s10183, 4
          %s10203 = int_to_ptr.vmem [resolvable:$true] %s10202
          %s10204 = sshll.u32 %s10191, 4
          %s10205 = int_to_ptr.hbm [resolvable:$true] %s10204
          %10211 = sst [smem:[#allocation9]] 8192
          %s10212 = scalar_lea.smem [#allocation9], 1
          %10213 = sst [smem:[%s10212]] 16384
          %s10214 = scalar_lea.smem [#allocation9], 2
          %10215 = sst [smem:[%s10214]] 64
          %s10216 = scalar_lea.smem [#allocation9], 3
          %10217 = sst [smem:[%s10216]] 128
          %s10218 = scalar_lea.smem [#allocation9], 4
          %10219 = sst [smem:[%s10218]] 128
          %s10220 = scalar_lea.smem [#allocation9], 5
          %10221 = sst [smem:[%s10220]] 8
          %10223 = dma.general %s10203, 16384, %s10205, %s10180, [#allocation8], [#allocation9], %s10201, 0
        $region60: #{tpu_custom_call.1} parent=51 // pred_fallthru
          _
      $region52: #{tpu_custom_call.1} parent=5 // pred_fallthru
        _
      %p10224 = scmp.le.s32.totalorder 2, %s20
      // Predicated region
      $region61: #{tpu_custom_call.1} parent=5 // pred_check
        %p10225 = pneg %p10224
      $region62: #{tpu_custom_call.1} parent=5 // pred_check_branch
        %10227 = sbr.rel (%p10225) target = $region64
      $region63: #{tpu_custom_call.1} parent=5 // pred_region
        %s10228 = ssub.s32 %s20, 2
        // Predicated region
        $region65: #{tpu_custom_call.1} parent=63 // pred_check
          %p10229 = pneg %p242
        $region66: #{tpu_custom_call.1} parent=63 // pred_check_branch
          %10231 = sbr.rel (%p10229) target = $region68
        $region67: #{tpu_custom_call.1} parent=63 // pred_region
          %s10232 = sand.u32 %s227, 1
          %s10233 = scalar_lea.sflag [#allocation4], %s10232
          %s10234 = sand.u32 %s227, 1
          %s10235 = smul.addr %s10234, 1024
          %s10236 = scalar_lea.vmem [#allocation5], %s10235
          %10238 = dma.done %s10233, 16384
        $region68: #{tpu_custom_call.1} parent=63 // pred_fallthru
          _
      $region64: #{tpu_custom_call.1} parent=5 // pred_fallthru
        _
    $region6: #{tpu_custom_call.1} parent=1 // loop_footer
      %s24 = sadd.s32 1, %s20
    $region7: #{tpu_custom_call.1} parent=1 // loop_footer_branch
      %19 = sbr.rel target = $region3
    $region8: #{tpu_custom_call.1} parent=1 // loop_exit
      _
    %10239 = vsyncpa [#allocation3], 1
    %s10240 = scalar_lea.sflag [#allocation3], 1
    %10241 = vsyncpa %s10240, 1
    %10242 = vsyncpa [#allocation4], 1
    %s10243 = scalar_lea.sflag [#allocation4], 1
    %10244 = vsyncpa %s10243, 1

</llo_original>
